<compile_context>
chip_gen: v5e
topology: v5e:2x2
jax: 0.10.0
libtpu: 0.0.40
codegen_flags: <defaults>
</compile_context>

<pallas_src>
import functools

import jax
import jax.numpy as jnp
from jax.experimental import pallas as pl
from jax.experimental.pallas import tpu as pltpu


C_PAD = 128          # lane-dense channel padding for conv outputs
K1_PAD = 32          # conv1 im2col K (25 -> 32)
K_FC = 3200          # fc1 K padded (3136 -> 3200 = 25 * 128)


def _round_up(x, m):
    return (x + m - 1) // m * m


def _vmem_limit_bytes():
    """Generation-aware scoped-VMEM budget (~75% of physical, capped at 96 MiB)."""
    try:
        cap = int(pltpu.get_tpu_info().vmem_capacity_bytes)
        return min(cap * 3 // 4, 96 * 1024 * 1024)
    except Exception:
        return None   # fall back to the compiler's default scoped limit


_VMEM_LIMIT = _vmem_limit_bytes()


# ---------------------------------------------------------------------------
# Pallas kernels
# ---------------------------------------------------------------------------
def conv_gemm_kernel(x_ref, w_ref, b_ref, o_ref, *, activation):
    """One M-tile of act(x @ w + b); bf16 operands, f32 accumulation.
    Rows are independent spatial positions, so the row-wise softmax (over the
    128-padded channel lanes) is valid inside a tile; padded lanes carry a
    -1e30 bias so they contribute exp(.)=0 to the softmax denominator."""
    acc = jnp.dot(x_ref[...], w_ref[...], preferred_element_type=jnp.float32)
    acc = acc + b_ref[...]
    if activation == "sigmoid":
        acc = 0.5 * (jnp.tanh(0.5 * acc) + 1.0)          # EUP, overflow-safe
    elif activation == "softmax":
        m = jnp.max(acc, axis=-1, keepdims=True)
        e = jnp.exp(acc - m)
        acc = e * pl.reciprocal(jnp.sum(e, axis=-1, keepdims=True), approx=True)
    o_ref[...] = acc.astype(o_ref.dtype)


def fc_fused_kernel(x_ref, w1_ref, b1_ref, w2_ref, b2_ref, o_ref, acc_ref):
    """K-tiled fc1 (sigmoid) with fc2 fused into the last-K epilogue."""
    k = pl.program_id(1)

    @pl.when(k == 0)
    def _():
        acc_ref[...] = jnp.zeros_like(acc_ref)

    acc_ref[...] += jnp.dot(x_ref[...], w1_ref[...],
                            preferred_element_type=jnp.float32)

    @pl.when(k == pl.num_programs(1) - 1)
    def _():
        h = acc_ref[...] + b1_ref[...]
        h = 0.5 * (jnp.tanh(0.5 * h) + 1.0)              # sigmoid, f32
        logits = jnp.dot(h.astype(w2_ref.dtype), w2_ref[...],
                         preferred_element_type=jnp.float32) + b2_ref[...]
        o_ref[...] = logits.astype(o_ref.dtype)


def halfmax_kernel(x_ref, o_ref):
    """out = max(x[:, :N], x[:, N:]); N is a multiple of 128 -> pure vreg select."""
    n = o_ref.shape[-1]
    x = x_ref[...]
    o_ref[...] = jnp.maximum(x[:, :n], x[:, n:])


# ---------------------------------------------------------------------------
# Wrappers
# ---------------------------------------------------------------------------
def _pick_block_m(M, cap=512):
    """Multiple of 8, <= cap, giving >= 2 grid steps (keeps both v7x TCs busy)."""
    return max(8, min(cap, _round_up(max(M // 2, 1), 8)))


def gemm_act(x, w, b, activation):
    """act(x @ w + b), tiled over M (pads M up to a multiple of block_m)."""
    M, K = x.shape
    K2, N = w.shape
    assert K == K2 and N % 128 == 0
    block_m = _pick_block_m(M)
    Mp = _round_up(M, block_m)
    if Mp != M:
        x = jnp.pad(x, ((0, Mp - M), (0, 0)))
    out = pl.pallas_call(
        functools.partial(conv_gemm_kernel, activation=activation),
        out_shape=jax.ShapeDtypeStruct((Mp, N), jnp.bfloat16),
        grid=(Mp // block_m,),
        in_specs=[
            pl.BlockSpec((block_m, K), lambda i: (i, 0)),
            pl.BlockSpec((K, N), lambda i: (0, 0)),
            pl.BlockSpec((1, N), lambda i: (0, 0)),
        ],
        out_specs=pl.BlockSpec((block_m, N), lambda i: (i, 0)),
        compiler_params=pltpu.CompilerParams(
            dimension_semantics=("parallel",),
            vmem_limit_bytes=_VMEM_LIMIT),
    )(x, w, b.reshape(1, N))
    return out[:M]


def fc_fused(x, w1, b1, w2, b2, *, block_m=8, block_k=640):
    """out = (sigmoid(x @ w1 + b1)) @ w2 + b2, K-tiled with a VMEM accumulator."""
    M, K = x.shape
    K2, N1 = w1.shape
    N1b, N2 = w2.shape
    assert K == K2 and N1 == N1b and K % block_k == 0 and N2 % 128 == 0
    Mp = _round_up(M, block_m)
    if Mp != M:
        x = jnp.pad(x, ((0, Mp - M), (0, 0)))
    out = pl.pallas_call(
        fc_fused_kernel,
        out_shape=jax.ShapeDtypeStruct((Mp, N2), jnp.float32),
        grid=(Mp // block_m, K // block_k),
        in_specs=[
            pl.BlockSpec((block_m, block_k), lambda i, k: (i, k)),
            pl.BlockSpec((block_k, N1), lambda i, k: (k, 0)),
            pl.BlockSpec((1, N1), lambda i, k: (0, 0)),
            pl.BlockSpec((N1, N2), lambda i, k: (0, 0)),
            pl.BlockSpec((1, N2), lambda i, k: (0, 0)),
        ],
        out_specs=pl.BlockSpec((block_m, N2), lambda i, k: (i, 0)),
        scratch_shapes=[pltpu.VMEM((block_m, N1), jnp.float32)],
        compiler_params=pltpu.CompilerParams(
            dimension_semantics=("parallel", "arbitrary"),
            vmem_limit_bytes=_VMEM_LIMIT),
    )(x, w1, b1.reshape(1, N1), w2, b2.reshape(1, N2))
    return out[:M]


def _max_pairs_lanes(x2d):
    """x2d: (M, 2N) -> (M, N) elementwise max of the two N-wide lane halves."""
    M, twoN = x2d.shape
    N = twoN // 2
    assert N % 128 == 0
    block_m = _pick_block_m(M, cap=1024)
    Mp = _round_up(M, block_m)
    if Mp != M:
        x2d = jnp.pad(x2d, ((0, Mp - M), (0, 0)))
    out = pl.pallas_call(
        halfmax_kernel,
        out_shape=jax.ShapeDtypeStruct((Mp, N), x2d.dtype),
        grid=(Mp // block_m,),
        in_specs=[pl.BlockSpec((block_m, twoN), lambda i: (i, 0))],
        out_specs=pl.BlockSpec((block_m, N), lambda i: (i, 0)),
        compiler_params=pltpu.CompilerParams(
            dimension_semantics=("parallel",),
            vmem_limit_bytes=_VMEM_LIMIT),
    )(x2d)
    return out[:M]


def maxpool2x2(y):
    """2x2 / stride-2 max pool on NHWC via two lane-halving Pallas passes
    (no XLA strided copies; all slices 128-lane aligned)."""
    B, H, W, C = y.shape
    Ho, Wo = H // 2, W // 2
    t = _max_pairs_lanes(y.reshape(B * H * Wo, 2 * C))       # pool across W
    t = _max_pairs_lanes(t.reshape(B * Ho, 2 * Wo * C))      # pool across H
    return t.reshape(B, Ho, Wo, C)


def im2col_5x5_pad2(x):
    """x: (B,H,W,C) NHWC -> patches (B*H*W, 25*C), column order (kh,kw,cin).
    Plain-JAX glue (see TODO at top about fusing this into the conv kernel)."""
    B, H, W, C = x.shape
    xp = jnp.pad(x, ((0, 0), (2, 2), (2, 2), (0, 0)))
    cols = [xp[:, dy:dy + H, dx:dx + W, :] for dy in range(5) for dx in range(5)]
    patches = jnp.stack(cols, axis=3)          # (B,H,W,25,C)
    return patches.reshape(B * H * W, 25 * C)


# ---------------------------------------------------------------------------
# Params (same math as the PyTorch module; padded / bf16-packed for the kernels)
# ---------------------------------------------------------------------------
def init_params(key):
    ks = jax.random.split(key, 8)
    return {
        "w1": 0.10 * jax.random.normal(ks[0], (5, 5, 1, 32), jnp.float32),
        "b1": 0.10 * jax.random.normal(ks[1], (32,), jnp.float32),
        "w2": 0.05 * jax.random.normal(ks[2], (5, 5, 32, 64), jnp.float32),
        "b2": 0.05 * jax.random.normal(ks[3], (64,), jnp.float32),
        "fc1_w": 0.02 * jax.random.normal(ks[4], (64 * 7 * 7, 1024), jnp.float32),
        "fc1_b": 0.02 * jax.random.normal(ks[5], (1024,), jnp.float32),
        "fc2_w": 0.02 * jax.random.normal(ks[6], (1024, 2), jnp.float32),
        "fc2_b": 0.02 * jax.random.normal(ks[7], (2,), jnp.float32),
    }


def pack_params(p):
    # conv1: (5,5,1,32) -> (32, 128); K rows 25->32 and cout 32->128 zero-padded.
    w1 = jnp.pad(p["w1"].reshape(25, 32), ((0, K1_PAD - 25), (0, C_PAD - 32)))
    b1 = jnp.pad(p["b1"], (0, C_PAD - 32))     # pad lanes -> sigmoid(0)=0.5, killed by zero cin cols of w2
    # conv2: (5,5,32,64) -> (3200, 128); cin 32->128 and cout 64->128 zero-padded.
    w2 = jnp.pad(p["w2"], ((0, 0), (0, 0), (0, C_PAD - 32), (0, C_PAD - 64)))
    w2 = w2.reshape(25 * C_PAD, C_PAD)
    b2 = jnp.pad(p["b2"], (0, C_PAD - 64), constant_values=-1e30)   # mask pad lanes out of the softmax
    # fc1: (3136,1024) -> (3200,1024) with zero rows for the padded K columns.
    fc1_w = jnp.pad(p["fc1_w"], ((0, K_FC - 64 * 49), (0, 0)))
    # fc2: (1024,2) -> (1024,128) lane-dense; real logits sliced outside.
    fc2_w = jnp.pad(p["fc2_w"], ((0, 0), (0, C_PAD - 2)))
    fc2_b = jnp.pad(p["fc2_b"], (0, C_PAD - 2))
    return {
        "w1": w1.astype(jnp.bfloat16), "b1": b1.astype(jnp.float32),
        "w2": w2.astype(jnp.bfloat16), "b2": b2.astype(jnp.float32),
        "fc1_w": fc1_w.astype(jnp.bfloat16), "fc1_b": p["fc1_b"].astype(jnp.float32),
        "fc2_w": fc2_w.astype(jnp.bfloat16), "fc2_b": fc2_b.astype(jnp.float32),
    }


# ---------------------------------------------------------------------------
# m2cnn forward
# ---------------------------------------------------------------------------
@jax.jit
def m2cnn_forward(x, params):
    B = x.shape[0]
    x = x[..., None].astype(jnp.bfloat16)                      # (B,28,28,1) NHWC

    # conv1 (5x5, pad 2) + sigmoid -> (B,28,28,128) [real channels 0..31]
    p1 = jnp.pad(im2col_5x5_pad2(x), ((0, 0), (0, K1_PAD - 25)))
    y1 = gemm_act(p1, params["w1"], params["b1"], "sigmoid")
    y1 = maxpool2x2(y1.reshape(B, 28, 28, C_PAD))              # (B,14,14,128)

    # conv2 (5x5, pad 2) + softmax over channels -> (B,14,14,128) [real 0..63]
    p2 = im2col_5x5_pad2(y1)                                   # (B*196, 3200)
    y2 = gemm_act(p2, params["w2"], params["b2"], "softmax")
    y2 = maxpool2x2(y2.reshape(B, 14, 14, C_PAD))              # (B,7,7,128)

    # flatten in PyTorch's (C,H,W) order using only the 64 real channels
    feat = jnp.transpose(y2, (0, 3, 1, 2))[:, :64].reshape(B, 64 * 7 * 7)
    feat = jnp.pad(feat, ((0, 0), (0, K_FC - 64 * 49)))        # K 3136 -> 3200

    out = fc_fused(feat, params["fc1_w"], params["fc1_b"],
                   params["fc2_w"], params["fc2_b"])           # (B,128) f32
    return out[:, :2]


# ---------------------------------------------------------------------------
if __name__ == "__main__":
    key = jax.random.PRNGKey(0)
    pkey, xkey = jax.random.split(key)
    params = pack_params(init_params(pkey))
    # spatial size must be 28x28 so 64*7*7 matches the fc layer
    x = jax.random.normal(xkey, (2, 28, 28), jnp.float32)

    out = m2cnn_forward(x, params)
    out = jax.block_until_ready(out)

    assert out.shape == (2, 2), out.shape
    assert jnp.all(jnp.isfinite(out))
    print("KERNEL_OK")
</pallas_src>

<mosaic_0001>
module attributes {stable_mosaic.version = 11 : i64} {
  func.func @conv_gemm_kernel(%arg0: i32, %arg1: memref<512x32xbf16, #tpu.memory_space<vmem>>, %arg2: memref<32x128xbf16, #tpu.memory_space<vmem>>, %arg3: memref<1x128xf32, #tpu.memory_space<vmem>>, %arg4: memref<512x128xbf16, #tpu.memory_space<vmem>>) attributes {dimension_semantics = [#tpu.dimension_semantics<parallel>], iteration_bounds = array<i64: 4>, scalar_prefetch = 0 : i64, scratch_operands = 0 : i64, tpu.core_type = #tpu.core_type<tc>, window_params = [{transform_indices = @transform_0, window_bounds = array<i64: 512, 32>}, {pipeline_mode = #tpu.pipeline_mode<synchronous>, transform_indices = @transform_1, window_bounds = array<i64: 32, 128>}, {pipeline_mode = #tpu.pipeline_mode<synchronous>, transform_indices = @transform_2, window_bounds = array<i64: 1, 128>}, {transform_indices = @transform_3, window_bounds = array<i64: 512, 128>}]} {
    %c0 = arith.constant 0 : index
    %c0_0 = arith.constant 0 : index
    %0 = vector.load %arg1[%c0, %c0_0] : memref<512x32xbf16, #tpu.memory_space<vmem>>, vector<512x32xbf16>
    %c0_1 = arith.constant 0 : index
    %c0_2 = arith.constant 0 : index
    %1 = vector.load %arg2[%c0_1, %c0_2] : memref<32x128xbf16, #tpu.memory_space<vmem>>, vector<32x128xbf16>
    %cst = arith.constant dense<0.000000e+00> : vector<512x128xf32>
    %2 = tpu.matmul %0, %1, %cst {dimension_numbers = #tpu.dot_dimension_numbers<[1], [0], [0], [1], [0, 0, 1, 1], [], []>} : vector<512x32xbf16>, vector<32x128xbf16>, vector<512x128xf32> -> vector<512x128xf32>
    %c0_3 = arith.constant 0 : index
    %c0_4 = arith.constant 0 : index
    %3 = vector.load %arg3[%c0_3, %c0_4] : memref<1x128xf32, #tpu.memory_space<vmem>>, vector<1x128xf32>
    %4 = vector.broadcast %3 : vector<1x128xf32> to vector<512x128xf32>
    %5 = arith.addf %2, %4 : vector<512x128xf32>
    %cst_5 = arith.constant 5.000000e-01 : f32
    %6 = vector.broadcast %cst_5 : f32 to vector<512x128xf32>
    %7 = arith.mulf %6, %5 : vector<512x128xf32>
    %8 = math.tanh %7 : vector<512x128xf32>
    %cst_6 = arith.constant 1.000000e+00 : f32
    %9 = vector.broadcast %cst_6 : f32 to vector<512x128xf32>
    %10 = arith.addf %8, %9 : vector<512x128xf32>
    %cst_7 = arith.constant 5.000000e-01 : f32
    %11 = vector.broadcast %cst_7 : f32 to vector<512x128xf32>
    %12 = arith.mulf %11, %10 : vector<512x128xf32>
    %13 = arith.truncf %12 : vector<512x128xf32> to vector<512x128xbf16>
    %c0_8 = arith.constant 0 : index
    %c0_9 = arith.constant 0 : index
    %14 = vector.load %arg4[%c0_8, %c0_9] : memref<512x128xbf16, #tpu.memory_space<vmem>>, vector<512x128xbf16>
    tpu.vector_store %arg4[%c0_8, %c0_9], %13 {strides = array<i32>} : memref<512x128xbf16, #tpu.memory_space<vmem>>, vector<512x128xbf16>,
    return
  }
  func.func @transform_0(%arg0: i32) -> (i32, i32) {
    %c0_i32 = arith.constant 0 : i32
    %c0_i32_0 = arith.constant 0 : i32
    return %arg0, %c0_i32 : i32, i32
  }
  func.func @transform_1(%arg0: i32) -> (i32, i32) {
    %c0_i32 = arith.constant 0 : i32
    %c0_i32_0 = arith.constant 0 : i32
    %c0_i32_1 = arith.constant 0 : i32
    return %c0_i32, %c0_i32_0 : i32, i32
  }
  func.func @transform_2(%arg0: i32) -> (i32, i32) {
    %c0_i32 = arith.constant 0 : i32
    %c0_i32_0 = arith.constant 0 : i32
    %c0_i32_1 = arith.constant 0 : i32
    return %c0_i32, %c0_i32_0 : i32, i32
  }
  func.func @transform_3(%arg0: i32) -> (i32, i32) {
    %c0_i32 = arith.constant 0 : i32
    %c0_i32_0 = arith.constant 0 : i32
    return %arg0, %c0_i32 : i32, i32
  }
}

module attributes {stable_mosaic.version = 11 : i64} {
  func.func @halfmax_kernel(%arg0: i32, %arg1: memref<392x256xbf16, #tpu.memory_space<vmem>>, %arg2: memref<392x128xbf16, #tpu.memory_space<vmem>>) attributes {dimension_semantics = [#tpu.dimension_semantics<parallel>], iteration_bounds = array<i64: 2>, scalar_prefetch = 0 : i64, scratch_operands = 0 : i64, tpu.core_type = #tpu.core_type<tc>, window_params = [{transform_indices = @transform_0, window_bounds = array<i64: 392, 256>}, {transform_indices = @transform_1, window_bounds = array<i64: 392, 128>}]} {
    %c0 = arith.constant 0 : index
    %c0_0 = arith.constant 0 : index
    %0 = vector.load %arg1[%c0, %c0_0] : memref<392x256xbf16, #tpu.memory_space<vmem>>, vector<392x256xbf16>
    %1 = vector.extract_strided_slice %0 {offsets = [0, 0], sizes = [392, 128], strides = [1, 1]} : vector<392x256xbf16> to vector<392x128xbf16>
    %2 = vector.extract_strided_slice %0 {offsets = [0, 128], sizes = [392, 128], strides = [1, 1]} : vector<392x256xbf16> to vector<392x128xbf16>
    %3 = arith.maximumf %1, %2 : vector<392x128xbf16>
    %c0_1 = arith.constant 0 : index
    %c0_2 = arith.constant 0 : index
    %4 = vector.load %arg2[%c0_1, %c0_2] : memref<392x128xbf16, #tpu.memory_space<vmem>>, vector<392x128xbf16>
    tpu.vector_store %arg2[%c0_1, %c0_2], %3 {strides = array<i32>} : memref<392x128xbf16, #tpu.memory_space<vmem>>, vector<392x128xbf16>,
    return
  }
  func.func @transform_0(%arg0: i32) -> (i32, i32) {
    %c0_i32 = arith.constant 0 : i32
    %c0_i32_0 = arith.constant 0 : i32
    return %arg0, %c0_i32 : i32, i32
  }
  func.func @transform_1(%arg0: i32) -> (i32, i32) {
    %c0_i32 = arith.constant 0 : i32
    %c0_i32_0 = arith.constant 0 : i32
    return %arg0, %c0_i32 : i32, i32
  }
}

module attributes {stable_mosaic.version = 11 : i64} {
  func.func @halfmax_kernel(%arg0: i32, %arg1: memref<16x3584xbf16, #tpu.memory_space<vmem>>, %arg2: memref<16x1792xbf16, #tpu.memory_space<vmem>>) attributes {dimension_semantics = [#tpu.dimension_semantics<parallel>], iteration_bounds = array<i64: 2>, scalar_prefetch = 0 : i64, scratch_operands = 0 : i64, tpu.core_type = #tpu.core_type<tc>, window_params = [{transform_indices = @transform_0, window_bounds = array<i64: 16, 3584>}, {transform_indices = @transform_1, window_bounds = array<i64: 16, 1792>}]} {
    %c0 = arith.constant 0 : index
    %c0_0 = arith.constant 0 : index
    %0 = vector.load %arg1[%c0, %c0_0] : memref<16x3584xbf16, #tpu.memory_space<vmem>>, vector<16x3584xbf16>
    %1 = vector.extract_strided_slice %0 {offsets = [0, 0], sizes = [16, 1792], strides = [1, 1]} : vector<16x3584xbf16> to vector<16x1792xbf16>
    %2 = vector.extract_strided_slice %0 {offsets = [0, 1792], sizes = [16, 1792], strides = [1, 1]} : vector<16x3584xbf16> to vector<16x1792xbf16>
    %3 = arith.maximumf %1, %2 : vector<16x1792xbf16>
    %c0_1 = arith.constant 0 : index
    %c0_2 = arith.constant 0 : index
    %4 = vector.load %arg2[%c0_1, %c0_2] : memref<16x1792xbf16, #tpu.memory_space<vmem>>, vector<16x1792xbf16>
    tpu.vector_store %arg2[%c0_1, %c0_2], %3 {strides = array<i32>} : memref<16x1792xbf16, #tpu.memory_space<vmem>>, vector<16x1792xbf16>,
    return
  }
  func.func @transform_0(%arg0: i32) -> (i32, i32) {
    %c0_i32 = arith.constant 0 : i32
    %c0_i32_0 = arith.constant 0 : i32
    return %arg0, %c0_i32 : i32, i32
  }
  func.func @transform_1(%arg0: i32) -> (i32, i32) {
    %c0_i32 = arith.constant 0 : i32
    %c0_i32_0 = arith.constant 0 : i32
    return %arg0, %c0_i32 : i32, i32
  }
}

module attributes {stable_mosaic.version = 11 : i64} {
  func.func @conv_gemm_kernel(%arg0: i32, %arg1: memref<200x3200xbf16, #tpu.memory_space<vmem>>, %arg2: memref<3200x128xbf16, #tpu.memory_space<vmem>>, %arg3: memref<1x128xf32, #tpu.memory_space<vmem>>, %arg4: memref<200x128xbf16, #tpu.memory_space<vmem>>) attributes {dimension_semantics = [#tpu.dimension_semantics<parallel>], iteration_bounds = array<i64: 2>, scalar_prefetch = 0 : i64, scratch_operands = 0 : i64, tpu.core_type = #tpu.core_type<tc>, window_params = [{transform_indices = @transform_0, window_bounds = array<i64: 200, 3200>}, {pipeline_mode = #tpu.pipeline_mode<synchronous>, transform_indices = @transform_1, window_bounds = array<i64: 3200, 128>}, {pipeline_mode = #tpu.pipeline_mode<synchronous>, transform_indices = @transform_2, window_bounds = array<i64: 1, 128>}, {transform_indices = @transform_3, window_bounds = array<i64: 200, 128>}]} {
    %c0 = arith.constant 0 : index
    %c0_0 = arith.constant 0 : index
    %0 = vector.load %arg1[%c0, %c0_0] : memref<200x3200xbf16, #tpu.memory_space<vmem>>, vector<200x3200xbf16>
    %c0_1 = arith.constant 0 : index
    %c0_2 = arith.constant 0 : index
    %1 = vector.load %arg2[%c0_1, %c0_2] : memref<3200x128xbf16, #tpu.memory_space<vmem>>, vector<3200x128xbf16>
    %cst = arith.constant dense<0.000000e+00> : vector<200x128xf32>
    %2 = tpu.matmul %0, %1, %cst {dimension_numbers = #tpu.dot_dimension_numbers<[1], [0], [0], [1], [0, 0, 1, 1], [], []>} : vector<200x3200xbf16>, vector<3200x128xbf16>, vector<200x128xf32> -> vector<200x128xf32>
    %c0_3 = arith.constant 0 : index
    %c0_4 = arith.constant 0 : index
    %3 = vector.load %arg3[%c0_3, %c0_4] : memref<1x128xf32, #tpu.memory_space<vmem>>, vector<1x128xf32>
    %4 = vector.broadcast %3 : vector<1x128xf32> to vector<200x128xf32>
    %5 = arith.addf %2, %4 : vector<200x128xf32>
    %cst_5 = arith.constant dense<0xFF800000> : vector<200xf32>
    %6 = vector.multi_reduction <maximumf>, %5, %cst_5 [1] : vector<200x128xf32> to vector<200xf32>
    %7 = vector.shape_cast %6 : vector<200xf32> to vector<200x1xf32>
    %8 = vector.broadcast %7 : vector<200x1xf32> to vector<200x128xf32>
    %9 = arith.subf %5, %8 : vector<200x128xf32>
    %10 = math.exp %9 : vector<200x128xf32>
    %cst_6 = arith.constant dense<0.000000e+00> : vector<200xf32>
    %11 = vector.multi_reduction <add>, %10, %cst_6 [1] : vector<200x128xf32> to vector<200xf32>
    %12 = vector.shape_cast %11 : vector<200xf32> to vector<200x1xf32>
    %13 = tpu.reciprocal %12 {approx = true} : vector<200x1xf32> -> vector<200x1xf32>
    %14 = vector.broadcast %13 : vector<200x1xf32> to vector<200x128xf32>
    %15 = arith.mulf %10, %14 : vector<200x128xf32>
    %16 = arith.truncf %15 : vector<200x128xf32> to vector<200x128xbf16>
    %c0_7 = arith.constant 0 : index
    %c0_8 = arith.constant 0 : index
    %17 = vector.load %arg4[%c0_7, %c0_8] : memref<200x128xbf16, #tpu.memory_space<vmem>>, vector<200x128xbf16>
    tpu.vector_store %arg4[%c0_7, %c0_8], %16 {strides = array<i32>} : memref<200x128xbf16, #tpu.memory_space<vmem>>, vector<200x128xbf16>,
    return
  }
  func.func @transform_0(%arg0: i32) -> (i32, i32) {
    %c0_i32 = arith.constant 0 : i32
    %c0_i32_0 = arith.constant 0 : i32
    return %arg0, %c0_i32 : i32, i32
  }
  func.func @transform_1(%arg0: i32) -> (i32, i32) {
    %c0_i32 = arith.constant 0 : i32
    %c0_i32_0 = arith.constant 0 : i32
    %c0_i32_1 = arith.constant 0 : i32
    return %c0_i32, %c0_i32_0 : i32, i32
  }
  func.func @transform_2(%arg0: i32) -> (i32, i32) {
    %c0_i32 = arith.constant 0 : i32
    %c0_i32_0 = arith.constant 0 : i32
    %c0_i32_1 = arith.constant 0 : i32
    return %c0_i32, %c0_i32_0 : i32, i32
  }
  func.func @transform_3(%arg0: i32) -> (i32, i32) {
    %c0_i32 = arith.constant 0 : i32
    %c0_i32_0 = arith.constant 0 : i32
    return %arg0, %c0_i32 : i32, i32
  }
}

module attributes {stable_mosaic.version = 11 : i64} {
  func.func @halfmax_kernel(%arg0: i32, %arg1: memref<104x256xbf16, #tpu.memory_space<vmem>>, %arg2: memref<104x128xbf16, #tpu.memory_space<vmem>>) attributes {dimension_semantics = [#tpu.dimension_semantics<parallel>], iteration_bounds = array<i64: 2>, scalar_prefetch = 0 : i64, scratch_operands = 0 : i64, tpu.core_type = #tpu.core_type<tc>, window_params = [{transform_indices = @transform_0, window_bounds = array<i64: 104, 256>}, {transform_indices = @transform_1, window_bounds = array<i64: 104, 128>}]} {
    %c0 = arith.constant 0 : index
    %c0_0 = arith.constant 0 : index
    %0 = vector.load %arg1[%c0, %c0_0] : memref<104x256xbf16, #tpu.memory_space<vmem>>, vector<104x256xbf16>
    %1 = vector.extract_strided_slice %0 {offsets = [0, 0], sizes = [104, 128], strides = [1, 1]} : vector<104x256xbf16> to vector<104x128xbf16>
    %2 = vector.extract_strided_slice %0 {offsets = [0, 128], sizes = [104, 128], strides = [1, 1]} : vector<104x256xbf16> to vector<104x128xbf16>
    %3 = arith.maximumf %1, %2 : vector<104x128xbf16>
    %c0_1 = arith.constant 0 : index
    %c0_2 = arith.constant 0 : index
    %4 = vector.load %arg2[%c0_1, %c0_2] : memref<104x128xbf16, #tpu.memory_space<vmem>>, vector<104x128xbf16>
    tpu.vector_store %arg2[%c0_1, %c0_2], %3 {strides = array<i32>} : memref<104x128xbf16, #tpu.memory_space<vmem>>, vector<104x128xbf16>,
    return
  }
  func.func @transform_0(%arg0: i32) -> (i32, i32) {
    %c0_i32 = arith.constant 0 : i32
    %c0_i32_0 = arith.constant 0 : i32
    return %arg0, %c0_i32 : i32, i32
  }
  func.func @transform_1(%arg0: i32) -> (i32, i32) {
    %c0_i32 = arith.constant 0 : i32
    %c0_i32_0 = arith.constant 0 : i32
    return %arg0, %c0_i32 : i32, i32
  }
}

module attributes {stable_mosaic.version = 11 : i64} {
  func.func @halfmax_kernel(%arg0: i32, %arg1: memref<8x1792xbf16, #tpu.memory_space<vmem>>, %arg2: memref<8x896xbf16, #tpu.memory_space<vmem>>) attributes {dimension_semantics = [#tpu.dimension_semantics<parallel>], iteration_bounds = array<i64: 2>, scalar_prefetch = 0 : i64, scratch_operands = 0 : i64, tpu.core_type = #tpu.core_type<tc>, window_params = [{transform_indices = @transform_0, window_bounds = array<i64: 8, 1792>}, {transform_indices = @transform_1, window_bounds = array<i64: 8, 896>}]} {
    %c0 = arith.constant 0 : index
    %c0_0 = arith.constant 0 : index
    %0 = vector.load %arg1[%c0, %c0_0] : memref<8x1792xbf16, #tpu.memory_space<vmem>>, vector<8x1792xbf16>
    %1 = vector.extract_strided_slice %0 {offsets = [0, 0], sizes = [8, 896], strides = [1, 1]} : vector<8x1792xbf16> to vector<8x896xbf16>
    %2 = vector.extract_strided_slice %0 {offsets = [0, 896], sizes = [8, 896], strides = [1, 1]} : vector<8x1792xbf16> to vector<8x896xbf16>
    %3 = arith.maximumf %1, %2 : vector<8x896xbf16>
    %c0_1 = arith.constant 0 : index
    %c0_2 = arith.constant 0 : index
    %4 = vector.load %arg2[%c0_1, %c0_2] : memref<8x896xbf16, #tpu.memory_space<vmem>>, vector<8x896xbf16>
    tpu.vector_store %arg2[%c0_1, %c0_2], %3 {strides = array<i32>} : memref<8x896xbf16, #tpu.memory_space<vmem>>, vector<8x896xbf16>,
    return
  }
  func.func @transform_0(%arg0: i32) -> (i32, i32) {
    %c0_i32 = arith.constant 0 : i32
    %c0_i32_0 = arith.constant 0 : i32
    return %arg0, %c0_i32 : i32, i32
  }
  func.func @transform_1(%arg0: i32) -> (i32, i32) {
    %c0_i32 = arith.constant 0 : i32
    %c0_i32_0 = arith.constant 0 : i32
    return %arg0, %c0_i32 : i32, i32
  }
}

module attributes {stable_mosaic.version = 11 : i64} {
  func.func @fc_fused_kernel(%arg0: i32, %arg1: i32, %arg2: memref<8x640xbf16, #tpu.memory_space<vmem>>, %arg3: memref<640x1024xbf16, #tpu.memory_space<vmem>>, %arg4: memref<1x1024xf32, #tpu.memory_space<vmem>>, %arg5: memref<1024x128xbf16, #tpu.memory_space<vmem>>, %arg6: memref<1x128xf32, #tpu.memory_space<vmem>>, %arg7: memref<8x128xf32, #tpu.memory_space<vmem>>, %arg8: memref<8x1024xf32, #tpu.memory_space<vmem>>) attributes {dimension_semantics = [#tpu.dimension_semantics<parallel>, #tpu.dimension_semantics<arbitrary>], iteration_bounds = array<i64: 1, 5>, scalar_prefetch = 0 : i64, scratch_operands = 1 : i64, tpu.core_type = #tpu.core_type<tc>, window_params = [{transform_indices = @transform_0, window_bounds = array<i64: 8, 640>}, {transform_indices = @transform_1, window_bounds = array<i64: 640, 1024>}, {pipeline_mode = #tpu.pipeline_mode<synchronous>, transform_indices = @transform_2, window_bounds = array<i64: 1, 1024>}, {pipeline_mode = #tpu.pipeline_mode<synchronous>, transform_indices = @transform_3, window_bounds = array<i64: 1024, 128>}, {pipeline_mode = #tpu.pipeline_mode<synchronous>, transform_indices = @transform_4, window_bounds = array<i64: 1, 128>}, {transform_indices = @transform_5, window_bounds = array<i64: 8, 128>}]} {
    %c0_i32 = arith.constant 0 : i32
    %0 = arith.cmpi eq, %arg1, %c0_i32 : i32
    %1 = arith.extui %0 : i1 to i32
    %c0_i32_0 = arith.constant 0 : i32
    %2 = arith.cmpi ne, %1, %c0_i32_0 : i32
    scf.if %2 {
      %cst_9 = arith.constant 0.000000e+00 : f32
      %12 = vector.broadcast %cst_9 : f32 to vector<8x1024xf32>
      %c0_10 = arith.constant 0 : index
      %c0_11 = arith.constant 0 : index
      %13 = vector.load %arg8[%c0_10, %c0_11] : memref<8x1024xf32, #tpu.memory_space<vmem>>, vector<8x1024xf32>
      tpu.vector_store %arg8[%c0_10, %c0_11], %12 {strides = array<i32>} : memref<8x1024xf32, #tpu.memory_space<vmem>>, vector<8x1024xf32>,
    } else {
    }
    %c0 = arith.constant 0 : index
    %c0_1 = arith.constant 0 : index
    %3 = vector.load %arg8[%c0, %c0_1] : memref<8x1024xf32, #tpu.memory_space<vmem>>, vector<8x1024xf32>
    %c0_2 = arith.constant 0 : index
    %c0_3 = arith.constant 0 : index
    %4 = vector.load %arg2[%c0_2, %c0_3] : memref<8x640xbf16, #tpu.memory_space<vmem>>, vector<8x640xbf16>
    %c0_4 = arith.constant 0 : index
    %c0_5 = arith.constant 0 : index
    %5 = vector.load %arg3[%c0_4, %c0_5] : memref<640x1024xbf16, #tpu.memory_space<vmem>>, vector<640x1024xbf16>
    %cst = arith.constant dense<0.000000e+00> : vector<8x1024xf32>
    %6 = tpu.matmul %4, %5, %cst {dimension_numbers = #tpu.dot_dimension_numbers<[1], [0], [0], [1], [0, 0, 1, 1], [], []>} : vector<8x640xbf16>, vector<640x1024xbf16>, vector<8x1024xf32> -> vector<8x1024xf32>
    %7 = arith.addf %3, %6 : vector<8x1024xf32>
    %c0_6 = arith.constant 0 : index
    %c0_7 = arith.constant 0 : index
    %8 = vector.load %arg8[%c0_6, %c0_7] : memref<8x1024xf32, #tpu.memory_space<vmem>>, vector<8x1024xf32>
    tpu.vector_store %arg8[%c0_6, %c0_7], %7 {strides = array<i32>} : memref<8x1024xf32, #tpu.memory_space<vmem>>, vector<8x1024xf32>,
    %c4_i32 = arith.constant 4 : i32
    %9 = arith.cmpi eq, %arg1, %c4_i32 : i32
    %10 = arith.extui %9 : i1 to i32
    %c0_i32_8 = arith.constant 0 : i32
    %11 = arith.cmpi ne, %10, %c0_i32_8 : i32
    scf.if %11 {
      %c0_9 = arith.constant 0 : index
      %c0_10 = arith.constant 0 : index
      %12 = vector.load %arg8[%c0_9, %c0_10] : memref<8x1024xf32, #tpu.memory_space<vmem>>, vector<8x1024xf32>
      %c0_11 = arith.constant 0 : index
      %c0_12 = arith.constant 0 : index
      %13 = vector.load %arg4[%c0_11, %c0_12] : memref<1x1024xf32, #tpu.memory_space<vmem>>, vector<1x1024xf32>
      %14 = vector.broadcast %13 : vector<1x1024xf32> to vector<8x1024xf32>
      %15 = arith.addf %12, %14 : vector<8x1024xf32>
      %cst_13 = arith.constant 5.000000e-01 : f32
      %16 = vector.broadcast %cst_13 : f32 to vector<8x1024xf32>
      %17 = arith.mulf %16, %15 : vector<8x1024xf32>
      %18 = math.tanh %17 : vector<8x1024xf32>
      %cst_14 = arith.constant 1.000000e+00 : f32
      %19 = vector.broadcast %cst_14 : f32 to vector<8x1024xf32>
      %20 = arith.addf %18, %19 : vector<8x1024xf32>
      %cst_15 = arith.constant 5.000000e-01 : f32
      %21 = vector.broadcast %cst_15 : f32 to vector<8x1024xf32>
      %22 = arith.mulf %21, %20 : vector<8x1024xf32>
      %23 = arith.truncf %22 : vector<8x1024xf32> to vector<8x1024xbf16>
      %c0_16 = arith.constant 0 : index
      %c0_17 = arith.constant 0 : index
      %24 = vector.load %arg5[%c0_16, %c0_17] : memref<1024x128xbf16, #tpu.memory_space<vmem>>, vector<1024x128xbf16>
      %cst_18 = arith.constant dense<0.000000e+00> : vector<8x128xf32>
      %25 = tpu.matmul %23, %24, %cst_18 {dimension_numbers = #tpu.dot_dimension_numbers<[1], [0], [0], [1], [0, 0, 1, 1], [], []>} : vector<8x1024xbf16>, vector<1024x128xbf16>, vector<8x128xf32> -> vector<8x128xf32>
      %c0_19 = arith.constant 0 : index
      %c0_20 = arith.constant 0 : index
      %26 = vector.load %arg6[%c0_19, %c0_20] : memref<1x128xf32, #tpu.memory_space<vmem>>, vector<1x128xf32>
      %27 = vector.broadcast %26 : vector<1x128xf32> to vector<8x128xf32>
      %28 = arith.addf %25, %27 : vector<8x128xf32>
      %c0_21 = arith.constant 0 : index
      %c0_22 = arith.constant 0 : index
      %29 = vector.load %arg7[%c0_21, %c0_22] : memref<8x128xf32, #tpu.memory_space<vmem>>, vector<8x128xf32>
      tpu.vector_store %arg7[%c0_21, %c0_22], %28 {strides = array<i32>} : memref<8x128xf32, #tpu.memory_space<vmem>>, vector<8x128xf32>,
    } else {
    }
    return
  }
  func.func @transform_0(%arg0: i32, %arg1: i32) -> (i32, i32) {
    %c0_i32 = arith.constant 0 : i32
    return %arg0, %arg1 : i32, i32
  }
  func.func @transform_1(%arg0: i32, %arg1: i32) -> (i32, i32) {
    %c0_i32 = arith.constant 0 : i32
    %c0_i32_0 = arith.constant 0 : i32
    return %arg1, %c0_i32 : i32, i32
  }
  func.func @transform_2(%arg0: i32, %arg1: i32) -> (i32, i32) {
    %c0_i32 = arith.constant 0 : i32
    %c0_i32_0 = arith.constant 0 : i32
    %c0_i32_1 = arith.constant 0 : i32
    return %c0_i32, %c0_i32_0 : i32, i32
  }
  func.func @transform_3(%arg0: i32, %arg1: i32) -> (i32, i32) {
    %c0_i32 = arith.constant 0 : i32
    %c0_i32_0 = arith.constant 0 : i32
    %c0_i32_1 = arith.constant 0 : i32
    return %c0_i32, %c0_i32_0 : i32, i32
  }
  func.func @transform_4(%arg0: i32, %arg1: i32) -> (i32, i32) {
    %c0_i32 = arith.constant 0 : i32
    %c0_i32_0 = arith.constant 0 : i32
    %c0_i32_1 = arith.constant 0 : i32
    return %c0_i32, %c0_i32_0 : i32, i32
  }
  func.func @transform_5(%arg0: i32, %arg1: i32) -> (i32, i32) {
    %c0_i32 = arith.constant 0 : i32
    %c0_i32_0 = arith.constant 0 : i32
    return %arg0, %c0_i32 : i32, i32
  }
}

</mosaic_0001>

<llo_original>
// kernel: m2cnn_forward.7
$region0: #{m2cnn_forward.7}
  #allocation0 [shape = 'u32[]', space=smem, size = 0x4, offset = 0x4, fixed_abs, tag = 'smem constant byte address 0x4 - core index']
  #allocation1 [shape = 'u32[72,128]{1,0:T(1,128)}', space=vmem, size = 0x9000, scoped, tag = 'internal scratch']
  %s0 = inlined_call_operand.vmem [shape: bf16[2048,32], index: 0, kind: input, shape index: {}]
  %s1 = inlined_call_operand.vmem [shape: bf16[32,128], index: 1, kind: input, shape index: {}]
  %s2 = inlined_call_operand.vmem [shape: f32[1,128], index: 2, kind: input, shape index: {}]
  %s3 = inlined_call_operand.vmem [shape: bf16[2048,128], index: 3, kind: output, shape index: {}]
  %s4 = sld [smem:[#allocation0]]
  $region45: #{m2cnn_forward.7} parent=0
    _
  %s6 = ssub.s32 1, %s4
  %s7 = scalar_select 0, %s6, %s4
  loop: start=0, step=1, limit=6
  $region2: #{m2cnn_forward.7} parent=0 // loop_pre_header
    _
  $region3: #{m2cnn_forward.7} parent=0 // loop_header
    %s9 = sphi 0, %s13
    %p10 = scmp.ge.s32.totalorder %s9, 6
    %s19 = sphi 0, %s21
    %s22 = sphi 0, %s19
    %s23 = sphi 0, %s22
    %s39 = sphi 0, %s23
    %s43 = sphi 0, %s43
    %s45 = sphi 0, %s43
    %s46 = sphi 0, %s45
    %s60 = sphi 0, %s46
    %s64 = sphi 0, %s64
    %s66 = sphi 0, %s64
    %s67 = sphi 0, %s66
    %s81 = sphi 0, %s67
    %s87 = sphi 0, %s89
    %s90 = sphi 0, %s87
    %s91 = sphi 0, %s90
    %s107 = sphi 0, %s91
  $region4: #{m2cnn_forward.7} parent=0 // loop_header_branch
    %12 = sbr.rel (%p10) target = $region8
  $region5: #{m2cnn_forward.7} parent=0 // loop_body
    %s14 = ssub.s32 %s9, 1
    %s15 = ssub.s32 %s9, 2
    %s16 = sadd.s32 %s9, 1
    %s17 = ssub.s32 %s9, %s16
    %p18 = scmp.eq.s32.totalorder %s17, 0
    %s20 = sadd.s32 %s19, 1
    %s21 = scalar_select %p18, %s19, %s20
    %p24 = pneg %p18
    %p25 = scmp.eq.s32.totalorder %s9, 3
    %p26 = por %p24, %p25
    %p27 = scmp.ne.s32.totalorder %s19, %s22
    %p28 = scmp.eq.s32.totalorder %s9, 0
    %p29 = por %p27, %p28
    %p30 = scmp.ne.s32.totalorder %s19, %s22
    %p31 = scmp.eq.s32.totalorder %s14, 3
    %p32 = por %p30, %p31
    %p33 = scmp.ne.s32.totalorder %s22, %s23
    %p34 = scmp.eq.s32.totalorder %s14, 0
    %p35 = por %p33, %p34
    %p36 = scmp.ne.s32.totalorder %s22, %s23
    %p37 = scmp.eq.s32.totalorder %s15, 3
    %p38 = por %p36, %p37
    %p40 = scmp.ne.s32.totalorder %s23, %s39
    %p41 = scmp.eq.s32.totalorder %s15, 0
    %p42 = por %p40, %p41
    %s44 = sadd.s32 %s43, 1
    %p47 = scmp.eq.s32.totalorder %s9, 3
    %p48 = scmp.ne.s32.totalorder %s43, %s45
    %p49 = scmp.eq.s32.totalorder %s9, 0
    %p50 = por %p48, %p49
    %p51 = scmp.ne.s32.totalorder %s43, %s45
    %p52 = scmp.eq.s32.totalorder %s14, 3
    %p53 = por %p51, %p52
    %p54 = scmp.ne.s32.totalorder %s45, %s46
    %p55 = scmp.eq.s32.totalorder %s14, 0
    %p56 = por %p54, %p55
    %p57 = scmp.ne.s32.totalorder %s45, %s46
    %p58 = scmp.eq.s32.totalorder %s15, 3
    %p59 = por %p57, %p58
    %p61 = scmp.ne.s32.totalorder %s46, %s60
    %p62 = scmp.eq.s32.totalorder %s15, 0
    %p63 = por %p61, %p62
    %s65 = sadd.s32 %s64, 1
    %p68 = scmp.eq.s32.totalorder %s9, 3
    %p69 = scmp.ne.s32.totalorder %s64, %s66
    %p70 = scmp.eq.s32.totalorder %s9, 0
    %p71 = por %p69, %p70
    %p72 = scmp.ne.s32.totalorder %s64, %s66
    %p73 = scmp.eq.s32.totalorder %s14, 3
    %p74 = por %p72, %p73
    %p75 = scmp.ne.s32.totalorder %s66, %s67
    %p76 = scmp.eq.s32.totalorder %s14, 0
    %p77 = por %p75, %p76
    %p78 = scmp.ne.s32.totalorder %s66, %s67
    %p79 = scmp.eq.s32.totalorder %s15, 3
    %p80 = por %p78, %p79
    %p82 = scmp.ne.s32.totalorder %s67, %s81
    %p83 = scmp.eq.s32.totalorder %s15, 0
    %p84 = por %p82, %p83
    %s85 = ssub.s32 %s9, %s16
    %p86 = scmp.eq.s32.totalorder %s85, 0
    %s88 = sadd.s32 %s87, 1
    %s89 = scalar_select %p86, %s87, %s88
    %p92 = pneg %p86
    %p93 = scmp.eq.s32.totalorder %s9, 3
    %p94 = por %p92, %p93
    %p95 = scmp.ne.s32.totalorder %s87, %s90
    %p96 = scmp.eq.s32.totalorder %s9, 0
    %p97 = por %p95, %p96
    %p98 = scmp.ne.s32.totalorder %s87, %s90
    %p99 = scmp.eq.s32.totalorder %s14, 3
    %p100 = por %p98, %p99
    %p101 = scmp.ne.s32.totalorder %s90, %s91
    %p102 = scmp.eq.s32.totalorder %s14, 0
    %p103 = por %p101, %p102
    %p104 = scmp.ne.s32.totalorder %s90, %s91
    %p105 = scmp.eq.s32.totalorder %s15, 3
    %p106 = por %p104, %p105
    %p108 = scmp.ne.s32.totalorder %s91, %s107
    %p109 = scmp.eq.s32.totalorder %s15, 0
    %p110 = por %p108, %p109
    %p111 = scmp.le.s32.totalorder 1, %s9
    %p112 = scmp.lt.s32.totalorder %s9, 5
    %p113 = pnand %p111, %p112
    %p114 = pneg %p113
    // Predicated region
    $region9: #{m2cnn_forward.7} parent=5 // pred_check
      _
    $region10: #{m2cnn_forward.7} parent=5 // pred_check_branch
      %116 = sbr.rel (%p113) target = $region12
    $region11: #{m2cnn_forward.7} parent=5 // pred_region
      %s117 = ssub.s32 %s9, 1
      // Predicated region
      $region13: #{m2cnn_forward.7} parent=11 // pred_check
        %p118 = pneg %p56
      $region14: #{m2cnn_forward.7} parent=11 // pred_check_branch
        %120 = sbr.rel (%p118) target = $region16
      $region15: #{m2cnn_forward.7} parent=11 // pred_region
        _
      $region16: #{m2cnn_forward.7} parent=11 // pred_fallthru
        _
      // Predicated region
      $region17: #{m2cnn_forward.7} parent=11 // pred_check
        %p121 = pneg %p77
      $region18: #{m2cnn_forward.7} parent=11 // pred_check_branch
        %123 = sbr.rel (%p121) target = $region20
      $region19: #{m2cnn_forward.7} parent=11 // pred_region
        _
      $region20: #{m2cnn_forward.7} parent=11 // pred_fallthru
        _
    $region12: #{m2cnn_forward.7} parent=5 // pred_fallthru
      _
    %p124 = scmp.lt.s32.totalorder %s9, 4
    // Predicated region
    $region21: #{m2cnn_forward.7} parent=5 // pred_check
      %p125 = pneg %p124
    $region22: #{m2cnn_forward.7} parent=5 // pred_check_branch
      %127 = sbr.rel (%p125) target = $region24
    $region23: #{m2cnn_forward.7} parent=5 // pred_region
      // Predicated region
      $region25: #{m2cnn_forward.7} parent=23 // pred_check
        %p128 = pneg %p29
      $region26: #{m2cnn_forward.7} parent=23 // pred_check_branch
        %130 = sbr.rel (%p128) target = $region28
      $region27: #{m2cnn_forward.7} parent=23 // pred_region
        %s131 = smul.u32 64, %s9
        %p132 = scmp.lt.s32.totalorder %s131, 255
        %s133 = scalar_select %p132, %s131, 255
        %s134 = smul.addr %s133, 4
        %s135 = scalar_lea.vmem %s0, %s134
        %s136 = smul.u32 64, %s9
      $region28: #{m2cnn_forward.7} parent=23 // pred_fallthru
        _
    $region24: #{m2cnn_forward.7} parent=5 // pred_fallthru
      _
    %p137 = scmp.le.s32.totalorder 1, %s9
    %p138 = scmp.lt.s32.totalorder %s9, 5
    %p139 = pnand %p137, %p138
    %p140 = pneg %p139
    // Predicated region
    $region29: #{m2cnn_forward.7} parent=5 // pred_check
      _
    $region30: #{m2cnn_forward.7} parent=5 // pred_check_branch
      %142 = sbr.rel (%p139) target = $region32
    $region31: #{m2cnn_forward.7} parent=5 // pred_region
      %s143 = ssub.s32 %s9, 1
      %s144 = smul.u32 64, %s14
      %p145 = scmp.lt.s32.totalorder %s144, 255
      %s146 = scalar_select %p145, %s144, 255
      %s147 = smul.addr %s146, 4
      %s148 = scalar_lea.vmem %s0, %s147
      %p149 = pneg %p35
      %p150 = pneg %p32
      %p151 = pneg %p56
      %p152 = pneg %p53
      %p153 = pneg %p77
      %p154 = pneg %p74
      %p155 = pneg %p103
      %p156 = pneg %p100
      %s157 = smul.u32 64, %s14
      %p158 = scmp.lt.s32.totalorder %s157, 255
      %s159 = scalar_select %p158, %s157, 255
      %s160 = smul.addr %s159, 4
      %s161 = scalar_lea.vmem %s3, %s160
      %s162 = smul.u32 64, %s14
      %p163 = scmp.lt.s32.totalorder %s162, 255
      %s164 = scalar_select %p163, %s162, 255
      %s165 = smul.addr %s164, 4
      %s166 = scalar_lea.vmem %s0, %s165
      %s167 = smul.u32 64, %s14
      %s168 = smul.u32 64, %s14
      %p169 = scmp.lt.s32.totalorder %s168, 255
      %s170 = scalar_select %p169, %s168, 255
      %s171 = smul.addr %s170, 4
      %s172 = scalar_lea.vmem %s3, %s171
      %s173 = smul.u32 64, %s14
      %v175 = vld [vmem:[%s166] sm:$0xf]
      %v176 = vld [vmem:[%s166 + $0x4] sm:$0xf]
      %v177 = vld [vmem:[%s166 + $0x8] sm:$0xf]
      %v178 = vld [vmem:[%s166 + $0xc] sm:$0xf]
      %v179 = vld [vmem:[%s166 + $0x10] sm:$0xf]
      %v180 = vld [vmem:[%s166 + $0x14] sm:$0xf]
      %v181 = vld [vmem:[%s166 + $0x18] sm:$0xf]
      %v182 = vld [vmem:[%s166 + $0x1c] sm:$0xf]
      %v183 = vld [vmem:[%s166 + $0x20] sm:$0xf]
      %v184 = vld [vmem:[%s166 + $0x24] sm:$0xf]
      %v185 = vld [vmem:[%s166 + $0x28] sm:$0xf]
      %v186 = vld [vmem:[%s166 + $0x2c] sm:$0xf]
      %v187 = vld [vmem:[%s166 + $0x30] sm:$0xf]
      %v188 = vld [vmem:[%s166 + $0x34] sm:$0xf]
      %v189 = vld [vmem:[%s166 + $0x38] sm:$0xf]
      %v190 = vld [vmem:[%s166 + $0x3c] sm:$0xf]
      %v191 = vld [vmem:[%s166 + $0x40] sm:$0xf]
      %v192 = vld [vmem:[%s166 + $0x44] sm:$0xf]
      %v193 = vld [vmem:[%s166 + $0x48] sm:$0xf]
      %v194 = vld [vmem:[%s166 + $0x4c] sm:$0xf]
      %v195 = vld [vmem:[%s166 + $0x50] sm:$0xf]
      %v196 = vld [vmem:[%s166 + $0x54] sm:$0xf]
      %v197 = vld [vmem:[%s166 + $0x58] sm:$0xf]
      %v198 = vld [vmem:[%s166 + $0x5c] sm:$0xf]
      %v199 = vld [vmem:[%s166 + $0x60] sm:$0xf]
      %v200 = vld [vmem:[%s166 + $0x64] sm:$0xf]
      %v201 = vld [vmem:[%s166 + $0x68] sm:$0xf]
      %v202 = vld [vmem:[%s166 + $0x6c] sm:$0xf]
      %v203 = vld [vmem:[%s166 + $0x70] sm:$0xf]
      %v204 = vld [vmem:[%s166 + $0x74] sm:$0xf]
      %v205 = vld [vmem:[%s166 + $0x78] sm:$0xf]
      %v206 = vld [vmem:[%s166 + $0x7c] sm:$0xf]
      %v207 = vld [vmem:[%s166 + $0x80] sm:$0xf]
      %v208 = vld [vmem:[%s166 + $0x84] sm:$0xf]
      %v209 = vld [vmem:[%s166 + $0x88] sm:$0xf]
      %v210 = vld [vmem:[%s166 + $0x8c] sm:$0xf]
      %v211 = vld [vmem:[%s166 + $0x90] sm:$0xf]
      %v212 = vld [vmem:[%s166 + $0x94] sm:$0xf]
      %v213 = vld [vmem:[%s166 + $0x98] sm:$0xf]
      %v214 = vld [vmem:[%s166 + $0x9c] sm:$0xf]
      %v215 = vld [vmem:[%s166 + $0xa0] sm:$0xf]
      %v216 = vld [vmem:[%s166 + $0xa4] sm:$0xf]
      %v217 = vld [vmem:[%s166 + $0xa8] sm:$0xf]
      %v218 = vld [vmem:[%s166 + $0xac] sm:$0xf]
      %v219 = vld [vmem:[%s166 + $0xb0] sm:$0xf]
      %v220 = vld [vmem:[%s166 + $0xb4] sm:$0xf]
      %v221 = vld [vmem:[%s166 + $0xb8] sm:$0xf]
      %v222 = vld [vmem:[%s166 + $0xbc] sm:$0xf]
      %v223 = vld [vmem:[%s166 + $0xc0] sm:$0xf]
      %v224 = vld [vmem:[%s166 + $0xc4] sm:$0xf]
      %v225 = vld [vmem:[%s166 + $0xc8] sm:$0xf]
      %v226 = vld [vmem:[%s166 + $0xcc] sm:$0xf]
      %v227 = vld [vmem:[%s166 + $0xd0] sm:$0xf]
      %v228 = vld [vmem:[%s166 + $0xd4] sm:$0xf]
      %v229 = vld [vmem:[%s166 + $0xd8] sm:$0xf]
      %v230 = vld [vmem:[%s166 + $0xdc] sm:$0xf]
      %v231 = vld [vmem:[%s166 + $0xe0] sm:$0xf]
      %v232 = vld [vmem:[%s166 + $0xe4] sm:$0xf]
      %v233 = vld [vmem:[%s166 + $0xe8] sm:$0xf]
      %v234 = vld [vmem:[%s166 + $0xec] sm:$0xf]
      %v235 = vld [vmem:[%s166 + $0xf0] sm:$0xf]
      %v236 = vld [vmem:[%s166 + $0xf4] sm:$0xf]
      %v237 = vld [vmem:[%s166 + $0xf8] sm:$0xf]
      %v238 = vld [vmem:[%s166 + $0xfc] sm:$0xf]
      %v239 = vld [vmem:[%s1] sm:$0xf]
      %v240 = vld [vmem:[%s1 + $0x4] sm:$0xf]
      %v241 = vld [vmem:[%s1 + $0x8] sm:$0xf]
      %v242 = vld [vmem:[%s1 + $0xc] sm:$0xf]
      %v243 = vld [vmem:[%s2] sm:$0x1]
      %v245 = vperm.slane %v243, 0
      %v311 = vunpack.c.l.b16 %v175
      %v312 = vunpack.c.l.b16 %v176
      %v313 = vunpack.c.l.b16 %v177
      %v314 = vunpack.c.l.b16 %v178
      %v315 = vunpack.c.l.b16 %v179
      %v316 = vunpack.c.l.b16 %v180
      %v317 = vunpack.c.l.b16 %v181
      %v318 = vunpack.c.l.b16 %v182
      %v319 = vunpack.c.l.b16 %v183
      %v320 = vunpack.c.l.b16 %v184
      %v321 = vunpack.c.l.b16 %v185
      %v322 = vunpack.c.l.b16 %v186
      %v323 = vunpack.c.l.b16 %v187
      %v324 = vunpack.c.l.b16 %v188
      %v325 = vunpack.c.l.b16 %v189
      %v326 = vunpack.c.l.b16 %v190
      %v327 = vunpack.c.l.b16 %v191
      %v328 = vunpack.c.l.b16 %v192
      %v329 = vunpack.c.l.b16 %v193
      %v330 = vunpack.c.l.b16 %v194
      %v331 = vunpack.c.l.b16 %v195
      %v332 = vunpack.c.l.b16 %v196
      %v333 = vunpack.c.l.b16 %v197
      %v334 = vunpack.c.l.b16 %v198
      %v335 = vunpack.c.l.b16 %v199
      %v336 = vunpack.c.l.b16 %v200
      %v337 = vunpack.c.l.b16 %v201
      %v338 = vunpack.c.l.b16 %v202
      %v339 = vunpack.c.l.b16 %v203
      %v340 = vunpack.c.l.b16 %v204
      %v341 = vunpack.c.l.b16 %v205
      %v342 = vunpack.c.l.b16 %v206
      %v343 = vunpack.c.l.b16 %v207
      %v344 = vunpack.c.l.b16 %v208
      %v345 = vunpack.c.l.b16 %v209
      %v346 = vunpack.c.l.b16 %v210
      %v347 = vunpack.c.l.b16 %v211
      %v348 = vunpack.c.l.b16 %v212
      %v349 = vunpack.c.l.b16 %v213
      %v350 = vunpack.c.l.b16 %v214
      %v351 = vunpack.c.l.b16 %v215
      %v352 = vunpack.c.l.b16 %v216
      %v353 = vunpack.c.l.b16 %v217
      %v354 = vunpack.c.l.b16 %v218
      %v355 = vunpack.c.l.b16 %v219
      %v356 = vunpack.c.l.b16 %v220
      %v357 = vunpack.c.l.b16 %v221
      %v358 = vunpack.c.l.b16 %v222
      %v359 = vunpack.c.l.b16 %v223
      %v360 = vunpack.c.l.b16 %v224
      %v361 = vunpack.c.l.b16 %v225
      %v362 = vunpack.c.l.b16 %v226
      %v363 = vunpack.c.l.b16 %v227
      %v364 = vunpack.c.l.b16 %v228
      %v365 = vunpack.c.l.b16 %v229
      %v366 = vunpack.c.l.b16 %v230
      %v367 = vunpack.c.l.b16 %v231
      %v368 = vunpack.c.l.b16 %v232
      %v369 = vunpack.c.l.b16 %v233
      %v370 = vunpack.c.l.b16 %v234
      %v371 = vunpack.c.l.b16 %v235
      %v372 = vunpack.c.l.b16 %v236
      %v373 = vunpack.c.l.b16 %v237
      %v374 = vunpack.c.l.b16 %v238
      %v375 = vpack.c.b16 %v312, %v311
      %v376 = vpack.c.b16 %v314, %v313
      %v377 = vpack.c.b16 %v316, %v315
      %v378 = vpack.c.b16 %v318, %v317
      %v379 = vpack.c.b16 %v320, %v319
      %v380 = vpack.c.b16 %v322, %v321
      %v381 = vpack.c.b16 %v324, %v323
      %v382 = vpack.c.b16 %v326, %v325
      %v383 = vpack.c.b16 %v328, %v327
      %v384 = vpack.c.b16 %v330, %v329
      %v385 = vpack.c.b16 %v332, %v331
      %v386 = vpack.c.b16 %v334, %v333
      %v387 = vpack.c.b16 %v336, %v335
      %v388 = vpack.c.b16 %v338, %v337
      %v389 = vpack.c.b16 %v340, %v339
      %v390 = vpack.c.b16 %v342, %v341
      %v391 = vpack.c.b16 %v344, %v343
      %v392 = vpack.c.b16 %v346, %v345
      %v393 = vpack.c.b16 %v348, %v347
      %v394 = vpack.c.b16 %v350, %v349
      %v395 = vpack.c.b16 %v352, %v351
      %v396 = vpack.c.b16 %v354, %v353
      %v397 = vpack.c.b16 %v356, %v355
      %v398 = vpack.c.b16 %v358, %v357
      %v399 = vpack.c.b16 %v360, %v359
      %v400 = vpack.c.b16 %v362, %v361
      %v401 = vpack.c.b16 %v364, %v363
      %v402 = vpack.c.b16 %v366, %v365
      %v403 = vpack.c.b16 %v368, %v367
      %v404 = vpack.c.b16 %v370, %v369
      %v405 = vpack.c.b16 %v372, %v371
      %v406 = vpack.c.b16 %v374, %v373
      %v411 = vunpack.c.l.b16 %v239
      %v412 = vunpack.c.l.b16 %v240
      %v413 = vunpack.c.l.b16 %v241
      %v414 = vunpack.c.l.b16 %v242
      %v415 = vpack.c.b16 %v412, %v411
      %v416 = vpack.c.b16 %v414, %v413
      %vm419 = vcmask 261120
      %v421 = vsel %vm419, %v375, 0
      %v424 = vsel %vm419, %v376, 0
      %v427 = vsel %vm419, %v377, 0
      %v430 = vsel %vm419, %v378, 0
      %v433 = vsel %vm419, %v379, 0
      %v436 = vsel %vm419, %v380, 0
      %v439 = vsel %vm419, %v381, 0
      %v442 = vsel %vm419, %v382, 0
      %v445 = vsel %vm419, %v383, 0
      %v448 = vsel %vm419, %v384, 0
      %v451 = vsel %vm419, %v385, 0
      %v454 = vsel %vm419, %v386, 0
      %v457 = vsel %vm419, %v387, 0
      %v460 = vsel %vm419, %v388, 0
      %v463 = vsel %vm419, %v389, 0
      %v466 = vsel %vm419, %v390, 0
      %v469 = vsel %vm419, %v391, 0
      %v472 = vsel %vm419, %v392, 0
      %v475 = vsel %vm419, %v393, 0
      %v478 = vsel %vm419, %v394, 0
      %v481 = vsel %vm419, %v395, 0
      %v484 = vsel %vm419, %v396, 0
      %v487 = vsel %vm419, %v397, 0
      %v490 = vsel %vm419, %v398, 0
      %v493 = vsel %vm419, %v399, 0
      %v496 = vsel %vm419, %v400, 0
      %v499 = vsel %vm419, %v401, 0
      %v502 = vsel %vm419, %v402, 0
      %v505 = vsel %vm419, %v403, 0
      %v508 = vsel %vm419, %v404, 0
      %v511 = vsel %vm419, %v405, 0
      %v514 = vsel %vm419, %v406, 0
      %516 = vmatpush.bf16.msra.mxu0 0
      %517 = vmatpush.bf16.msra.mxu0 0
      %518 = vmatpush.bf16.msra.mxu0 0
      %519 = vmatpush.bf16.msra.mxu0 0
      %520 = vmatpush.bf16.msra.mxu0 0
      %521 = vmatpush.bf16.msra.mxu0 0
      %522 = vmatpush.bf16.msra.mxu0 %v416
      %523 = vmatpush.bf16.msra.mxu0 %v415
      %524 = vmatmul.bf16.gmra.mxu0 %v421
      %v525 = vpop.f32.mrf.mxu0
      %v526 = vadd.f32 %v245, %v525
      %v527 = vpop.f32.mrf.mxu0
      %v528 = vadd.f32 %v245, %v527
      %529 = vmatmul.bf16.gmra.mxu0 %v424
      %v530 = vpop.f32.mrf.mxu0
      %v531 = vadd.f32 %v245, %v530
      %v532 = vpop.f32.mrf.mxu0
      %v533 = vadd.f32 %v245, %v532
      %534 = vmatmul.bf16.gmra.mxu0 %v427
      %v535 = vpop.f32.mrf.mxu0
      %v536 = vadd.f32 %v245, %v535
      %v537 = vpop.f32.mrf.mxu0
      %v538 = vadd.f32 %v245, %v537
      %539 = vmatmul.bf16.gmra.mxu0 %v430
      %v540 = vpop.f32.mrf.mxu0
      %v541 = vadd.f32 %v245, %v540
      %v542 = vpop.f32.mrf.mxu0
      %v543 = vadd.f32 %v245, %v542
      %544 = vmatmul.bf16.gmra.mxu0 %v433
      %v545 = vpop.f32.mrf.mxu0
      %v546 = vadd.f32 %v245, %v545
      %v547 = vpop.f32.mrf.mxu0
      %v548 = vadd.f32 %v245, %v547
      %549 = vmatmul.bf16.gmra.mxu0 %v436
      %v550 = vpop.f32.mrf.mxu0
      %v551 = vadd.f32 %v245, %v550
      %v552 = vpop.f32.mrf.mxu0
      %v553 = vadd.f32 %v245, %v552
      %554 = vmatmul.bf16.gmra.mxu0 %v439
      %v555 = vpop.f32.mrf.mxu0
      %v556 = vadd.f32 %v245, %v555
      %v557 = vpop.f32.mrf.mxu0
      %v558 = vadd.f32 %v245, %v557
      %559 = vmatmul.bf16.gmra.mxu0 %v442
      %v560 = vpop.f32.mrf.mxu0
      %v561 = vadd.f32 %v245, %v560
      %v562 = vpop.f32.mrf.mxu0
      %v563 = vadd.f32 %v245, %v562
      %564 = vmatmul.bf16.gmra.mxu0 %v445
      %v565 = vpop.f32.mrf.mxu0
      %v566 = vadd.f32 %v245, %v565
      %v567 = vpop.f32.mrf.mxu0
      %v568 = vadd.f32 %v245, %v567
      %569 = vmatmul.bf16.gmra.mxu0 %v448
      %v570 = vpop.f32.mrf.mxu0
      %v571 = vadd.f32 %v245, %v570
      %v572 = vpop.f32.mrf.mxu0
      %v573 = vadd.f32 %v245, %v572
      %574 = vmatmul.bf16.gmra.mxu0 %v451
      %v575 = vpop.f32.mrf.mxu0
      %v576 = vadd.f32 %v245, %v575
      %v577 = vpop.f32.mrf.mxu0
      %v578 = vadd.f32 %v245, %v577
      %579 = vmatmul.bf16.gmra.mxu0 %v454
      %v580 = vpop.f32.mrf.mxu0
      %v581 = vadd.f32 %v245, %v580
      %v582 = vpop.f32.mrf.mxu0
      %v583 = vadd.f32 %v245, %v582
      %584 = vmatmul.bf16.gmra.mxu0 %v457
      %v585 = vpop.f32.mrf.mxu0
      %v586 = vadd.f32 %v245, %v585
      %v587 = vpop.f32.mrf.mxu0
      %v588 = vadd.f32 %v245, %v587
      %589 = vmatmul.bf16.gmra.mxu0 %v460
      %v590 = vpop.f32.mrf.mxu0
      %v591 = vadd.f32 %v245, %v590
      %v592 = vpop.f32.mrf.mxu0
      %v593 = vadd.f32 %v245, %v592
      %594 = vmatmul.bf16.gmra.mxu0 %v463
      %v595 = vpop.f32.mrf.mxu0
      %v596 = vadd.f32 %v245, %v595
      %v597 = vpop.f32.mrf.mxu0
      %v598 = vadd.f32 %v245, %v597
      %599 = vmatmul.bf16.gmra.mxu0 %v466
      %v600 = vpop.f32.mrf.mxu0
      %v601 = vadd.f32 %v245, %v600
      %v602 = vpop.f32.mrf.mxu0
      %v603 = vadd.f32 %v245, %v602
      %604 = vmatmul.bf16.gmra.mxu0 %v469
      %v605 = vpop.f32.mrf.mxu0
      %v606 = vadd.f32 %v245, %v605
      %v607 = vpop.f32.mrf.mxu0
      %v608 = vadd.f32 %v245, %v607
      %609 = vmatmul.bf16.gmra.mxu0 %v472
      %v610 = vpop.f32.mrf.mxu0
      %v611 = vadd.f32 %v245, %v610
      %v612 = vpop.f32.mrf.mxu0
      %v613 = vadd.f32 %v245, %v612
      %614 = vmatmul.bf16.gmra.mxu0 %v475
      %v615 = vpop.f32.mrf.mxu0
      %v616 = vadd.f32 %v245, %v615
      %v617 = vpop.f32.mrf.mxu0
      %v618 = vadd.f32 %v245, %v617
      %619 = vmatmul.bf16.gmra.mxu0 %v478
      %v620 = vpop.f32.mrf.mxu0
      %v621 = vadd.f32 %v245, %v620
      %v622 = vpop.f32.mrf.mxu0
      %v623 = vadd.f32 %v245, %v622
      %624 = vmatmul.bf16.gmra.mxu0 %v481
      %v625 = vpop.f32.mrf.mxu0
      %v626 = vadd.f32 %v245, %v625
      %v627 = vpop.f32.mrf.mxu0
      %v628 = vadd.f32 %v245, %v627
      %629 = vmatmul.bf16.gmra.mxu0 %v484
      %v630 = vpop.f32.mrf.mxu0
      %v631 = vadd.f32 %v245, %v630
      %v632 = vpop.f32.mrf.mxu0
      %v633 = vadd.f32 %v245, %v632
      %634 = vmatmul.bf16.gmra.mxu0 %v487
      %v635 = vpop.f32.mrf.mxu0
      %v636 = vadd.f32 %v245, %v635
      %v637 = vpop.f32.mrf.mxu0
      %v638 = vadd.f32 %v245, %v637
      %639 = vmatmul.bf16.gmra.mxu0 %v490
      %v640 = vpop.f32.mrf.mxu0
      %v641 = vadd.f32 %v245, %v640
      %v642 = vpop.f32.mrf.mxu0
      %v643 = vadd.f32 %v245, %v642
      %644 = vmatmul.bf16.gmra.mxu0 %v493
      %v645 = vpop.f32.mrf.mxu0
      %v646 = vadd.f32 %v245, %v645
      %v647 = vpop.f32.mrf.mxu0
      %v648 = vadd.f32 %v245, %v647
      %649 = vmatmul.bf16.gmra.mxu0 %v496
      %v650 = vpop.f32.mrf.mxu0
      %v651 = vadd.f32 %v245, %v650
      %v652 = vpop.f32.mrf.mxu0
      %v653 = vadd.f32 %v245, %v652
      %654 = vmatmul.bf16.gmra.mxu0 %v499
      %v655 = vpop.f32.mrf.mxu0
      %v656 = vadd.f32 %v245, %v655
      %v657 = vpop.f32.mrf.mxu0
      %v658 = vadd.f32 %v245, %v657
      %659 = vmatmul.bf16.gmra.mxu0 %v502
      %v660 = vpop.f32.mrf.mxu0
      %v661 = vadd.f32 %v245, %v660
      %v662 = vpop.f32.mrf.mxu0
      %v663 = vadd.f32 %v245, %v662
      %664 = vmatmul.bf16.gmra.mxu0 %v505
      %v665 = vpop.f32.mrf.mxu0
      %v666 = vadd.f32 %v245, %v665
      %v667 = vpop.f32.mrf.mxu0
      %v668 = vadd.f32 %v245, %v667
      %669 = vmatmul.bf16.gmra.mxu0 %v508
      %v670 = vpop.f32.mrf.mxu0
      %v671 = vadd.f32 %v245, %v670
      %v672 = vpop.f32.mrf.mxu0
      %v673 = vadd.f32 %v245, %v672
      %674 = vmatmul.bf16.gmra.mxu0 %v511
      %v675 = vpop.f32.mrf.mxu0
      %v676 = vadd.f32 %v245, %v675
      %v677 = vpop.f32.mrf.mxu0
      %v678 = vadd.f32 %v245, %v677
      %679 = vmatmul.bf16.gmra.mxu0 %v514
      %v680 = vpop.f32.mrf.mxu0
      %v681 = vadd.f32 %v245, %v680
      %v682 = vpop.f32.mrf.mxu0
      %v683 = vadd.f32 %v245, %v682
      %684 = vdwg.mxu0
      %v685 = vmul.f32 %v526, 0.5
      %v686 = vmul.f32 %v528, 0.5
      %v687 = vmul.f32 %v531, 0.5
      %v688 = vmul.f32 %v533, 0.5
      %v689 = vmul.f32 %v536, 0.5
      %v690 = vmul.f32 %v538, 0.5
      %v691 = vmul.f32 %v541, 0.5
      %v692 = vmul.f32 %v543, 0.5
      %v693 = vmul.f32 %v546, 0.5
      %v694 = vmul.f32 %v548, 0.5
      %v695 = vmul.f32 %v551, 0.5
      %v696 = vmul.f32 %v553, 0.5
      %v697 = vmul.f32 %v556, 0.5
      %v698 = vmul.f32 %v558, 0.5
      %v699 = vmul.f32 %v561, 0.5
      %v700 = vmul.f32 %v563, 0.5
      %v701 = vmul.f32 %v566, 0.5
      %v702 = vmul.f32 %v568, 0.5
      %v703 = vmul.f32 %v571, 0.5
      %v704 = vmul.f32 %v573, 0.5
      %v705 = vmul.f32 %v576, 0.5
      %v706 = vmul.f32 %v578, 0.5
      %v707 = vmul.f32 %v581, 0.5
      %v708 = vmul.f32 %v583, 0.5
      %v709 = vmul.f32 %v586, 0.5
      %v710 = vmul.f32 %v588, 0.5
      %v711 = vmul.f32 %v591, 0.5
      %v712 = vmul.f32 %v593, 0.5
      %v713 = vmul.f32 %v596, 0.5
      %v714 = vmul.f32 %v598, 0.5
      %v715 = vmul.f32 %v601, 0.5
      %v716 = vmul.f32 %v603, 0.5
      %v717 = vmul.f32 %v606, 0.5
      %v718 = vmul.f32 %v608, 0.5
      %v719 = vmul.f32 %v611, 0.5
      %v720 = vmul.f32 %v613, 0.5
      %v721 = vmul.f32 %v616, 0.5
      %v722 = vmul.f32 %v618, 0.5
      %v723 = vmul.f32 %v621, 0.5
      %v724 = vmul.f32 %v623, 0.5
      %v725 = vmul.f32 %v626, 0.5
      %v726 = vmul.f32 %v628, 0.5
      %v727 = vmul.f32 %v631, 0.5
      %v728 = vmul.f32 %v633, 0.5
      %v729 = vmul.f32 %v636, 0.5
      %v730 = vmul.f32 %v638, 0.5
      %v731 = vmul.f32 %v641, 0.5
      %v732 = vmul.f32 %v643, 0.5
      %v733 = vmul.f32 %v646, 0.5
      %v734 = vmul.f32 %v648, 0.5
      %v735 = vmul.f32 %v651, 0.5
      %v736 = vmul.f32 %v653, 0.5
      %v737 = vmul.f32 %v656, 0.5
      %v738 = vmul.f32 %v658, 0.5
      %v739 = vmul.f32 %v661, 0.5
      %v740 = vmul.f32 %v663, 0.5
      %v741 = vmul.f32 %v666, 0.5
      %v742 = vmul.f32 %v668, 0.5
      %v743 = vmul.f32 %v671, 0.5
      %v744 = vmul.f32 %v673, 0.5
      %v745 = vmul.f32 %v676, 0.5
      %v746 = vmul.f32 %v678, 0.5
      %v747 = vmul.f32 %v681, 0.5
      %v748 = vmul.f32 %v683, 0.5
      %v749 = vtanh.pop %v685
      %v750 = vtanh.pop %v686
      %v751 = vtanh.pop %v687
      %v752 = vtanh.pop %v688
      %v753 = vtanh.pop %v689
      %v754 = vtanh.pop %v690
      %v755 = vtanh.pop %v691
      %v756 = vtanh.pop %v692
      %v757 = vtanh.pop %v693
      %v758 = vtanh.pop %v694
      %v759 = vtanh.pop %v695
      %v760 = vtanh.pop %v696
      %v761 = vtanh.pop %v697
      %v762 = vtanh.pop %v698
      %v763 = vtanh.pop %v699
      %v764 = vtanh.pop %v700
      %v765 = vtanh.pop %v701
      %v766 = vtanh.pop %v702
      %v767 = vtanh.pop %v703
      %v768 = vtanh.pop %v704
      %v769 = vtanh.pop %v705
      %v770 = vtanh.pop %v706
      %v771 = vtanh.pop %v707
      %v772 = vtanh.pop %v708
      %v773 = vtanh.pop %v709
      %v774 = vtanh.pop %v710
      %v775 = vtanh.pop %v711
      %v776 = vtanh.pop %v712
      %v777 = vtanh.pop %v713
      %v778 = vtanh.pop %v714
      %v779 = vtanh.pop %v715
      %v780 = vtanh.pop %v716
      %v781 = vtanh.pop %v717
      %v782 = vtanh.pop %v718
      %v783 = vtanh.pop %v719
      %v784 = vtanh.pop %v720
      %v785 = vtanh.pop %v721
      %v786 = vtanh.pop %v722
      %v787 = vtanh.pop %v723
      %v788 = vtanh.pop %v724
      %v789 = vtanh.pop %v725
      %v790 = vtanh.pop %v726
      %v791 = vtanh.pop %v727
      %v792 = vtanh.pop %v728
      %v793 = vtanh.pop %v729
      %v794 = vtanh.pop %v730
      %v795 = vtanh.pop %v731
      %v796 = vtanh.pop %v732
      %v797 = vtanh.pop %v733
      %v798 = vtanh.pop %v734
      %v799 = vtanh.pop %v735
      %v800 = vtanh.pop %v736
      %v801 = vtanh.pop %v737
      %v802 = vtanh.pop %v738
      %v803 = vtanh.pop %v739
      %v804 = vtanh.pop %v740
      %v805 = vtanh.pop %v741
      %v806 = vtanh.pop %v742
      %v807 = vtanh.pop %v743
      %v808 = vtanh.pop %v744
      %v809 = vtanh.pop %v745
      %v810 = vtanh.pop %v746
      %v811 = vtanh.pop %v747
      %v812 = vtanh.pop %v748
      %v813 = vadd.f32 %v749, 1.0
      %v814 = vadd.f32 %v750, 1.0
      %v815 = vadd.f32 %v751, 1.0
      %v816 = vadd.f32 %v752, 1.0
      %v817 = vadd.f32 %v753, 1.0
      %v818 = vadd.f32 %v754, 1.0
      %v819 = vadd.f32 %v755, 1.0
      %v820 = vadd.f32 %v756, 1.0
      %v821 = vadd.f32 %v757, 1.0
      %v822 = vadd.f32 %v758, 1.0
      %v823 = vadd.f32 %v759, 1.0
      %v824 = vadd.f32 %v760, 1.0
      %v825 = vadd.f32 %v761, 1.0
      %v826 = vadd.f32 %v762, 1.0
      %v827 = vadd.f32 %v763, 1.0
      %v828 = vadd.f32 %v764, 1.0
      %v829 = vadd.f32 %v765, 1.0
      %v830 = vadd.f32 %v766, 1.0
      %v831 = vadd.f32 %v767, 1.0
      %v832 = vadd.f32 %v768, 1.0
      %v833 = vadd.f32 %v769, 1.0
      %v834 = vadd.f32 %v770, 1.0
      %v835 = vadd.f32 %v771, 1.0
      %v836 = vadd.f32 %v772, 1.0
      %v837 = vadd.f32 %v773, 1.0
      %v838 = vadd.f32 %v774, 1.0
      %v839 = vadd.f32 %v775, 1.0
      %v840 = vadd.f32 %v776, 1.0
      %v841 = vadd.f32 %v777, 1.0
      %v842 = vadd.f32 %v778, 1.0
      %v843 = vadd.f32 %v779, 1.0
      %v844 = vadd.f32 %v780, 1.0
      %v845 = vadd.f32 %v781, 1.0
      %v846 = vadd.f32 %v782, 1.0
      %v847 = vadd.f32 %v783, 1.0
      %v848 = vadd.f32 %v784, 1.0
      %v849 = vadd.f32 %v785, 1.0
      %v850 = vadd.f32 %v786, 1.0
      %v851 = vadd.f32 %v787, 1.0
      %v852 = vadd.f32 %v788, 1.0
      %v853 = vadd.f32 %v789, 1.0
      %v854 = vadd.f32 %v790, 1.0
      %v855 = vadd.f32 %v791, 1.0
      %v856 = vadd.f32 %v792, 1.0
      %v857 = vadd.f32 %v793, 1.0
      %v858 = vadd.f32 %v794, 1.0
      %v859 = vadd.f32 %v795, 1.0
      %v860 = vadd.f32 %v796, 1.0
      %v861 = vadd.f32 %v797, 1.0
      %v862 = vadd.f32 %v798, 1.0
      %v863 = vadd.f32 %v799, 1.0
      %v864 = vadd.f32 %v800, 1.0
      %v865 = vadd.f32 %v801, 1.0
      %v866 = vadd.f32 %v802, 1.0
      %v867 = vadd.f32 %v803, 1.0
      %v868 = vadd.f32 %v804, 1.0
      %v869 = vadd.f32 %v805, 1.0
      %v870 = vadd.f32 %v806, 1.0
      %v871 = vadd.f32 %v807, 1.0
      %v872 = vadd.f32 %v808, 1.0
      %v873 = vadd.f32 %v809, 1.0
      %v874 = vadd.f32 %v810, 1.0
      %v875 = vadd.f32 %v811, 1.0
      %v876 = vadd.f32 %v812, 1.0
      %v877 = vmul.f32 %v813, 0.5
      %v878 = vmul.f32 %v814, 0.5
      %v879 = vmul.f32 %v815, 0.5
      %v880 = vmul.f32 %v816, 0.5
      %v881 = vmul.f32 %v817, 0.5
      %v882 = vmul.f32 %v818, 0.5
      %v883 = vmul.f32 %v819, 0.5
      %v884 = vmul.f32 %v820, 0.5
      %v885 = vmul.f32 %v821, 0.5
      %v886 = vmul.f32 %v822, 0.5
      %v887 = vmul.f32 %v823, 0.5
      %v888 = vmul.f32 %v824, 0.5
      %v889 = vmul.f32 %v825, 0.5
      %v890 = vmul.f32 %v826, 0.5
      %v891 = vmul.f32 %v827, 0.5
      %v892 = vmul.f32 %v828, 0.5
      %v893 = vmul.f32 %v829, 0.5
      %v894 = vmul.f32 %v830, 0.5
      %v895 = vmul.f32 %v831, 0.5
      %v896 = vmul.f32 %v832, 0.5
      %v897 = vmul.f32 %v833, 0.5
      %v898 = vmul.f32 %v834, 0.5
      %v899 = vmul.f32 %v835, 0.5
      %v900 = vmul.f32 %v836, 0.5
      %v901 = vmul.f32 %v837, 0.5
      %v902 = vmul.f32 %v838, 0.5
      %v903 = vmul.f32 %v839, 0.5
      %v904 = vmul.f32 %v840, 0.5
      %v905 = vmul.f32 %v841, 0.5
      %v906 = vmul.f32 %v842, 0.5
      %v907 = vmul.f32 %v843, 0.5
      %v908 = vmul.f32 %v844, 0.5
      %v909 = vmul.f32 %v845, 0.5
      %v910 = vmul.f32 %v846, 0.5
      %v911 = vmul.f32 %v847, 0.5
      %v912 = vmul.f32 %v848, 0.5
      %v913 = vmul.f32 %v849, 0.5
      %v914 = vmul.f32 %v850, 0.5
      %v915 = vmul.f32 %v851, 0.5
      %v916 = vmul.f32 %v852, 0.5
      %v917 = vmul.f32 %v853, 0.5
      %v918 = vmul.f32 %v854, 0.5
      %v919 = vmul.f32 %v855, 0.5
      %v920 = vmul.f32 %v856, 0.5
      %v921 = vmul.f32 %v857, 0.5
      %v922 = vmul.f32 %v858, 0.5
      %v923 = vmul.f32 %v859, 0.5
      %v924 = vmul.f32 %v860, 0.5
      %v925 = vmul.f32 %v861, 0.5
      %v926 = vmul.f32 %v862, 0.5
      %v927 = vmul.f32 %v863, 0.5
      %v928 = vmul.f32 %v864, 0.5
      %v929 = vmul.f32 %v865, 0.5
      %v930 = vmul.f32 %v866, 0.5
      %v931 = vmul.f32 %v867, 0.5
      %v932 = vmul.f32 %v868, 0.5
      %v933 = vmul.f32 %v869, 0.5
      %v934 = vmul.f32 %v870, 0.5
      %v935 = vmul.f32 %v871, 0.5
      %v936 = vmul.f32 %v872, 0.5
      %v937 = vmul.f32 %v873, 0.5
      %v938 = vmul.f32 %v874, 0.5
      %v939 = vmul.f32 %v875, 0.5
      %v940 = vmul.f32 %v876, 0.5
      %v941 = vpack.c.bf16 %v877, %v877
      %v942 = vpack.c.bf16 %v878, %v878
      %v943 = vpack.c.bf16 %v879, %v879
      %v944 = vpack.c.bf16 %v880, %v880
      %v945 = vpack.c.bf16 %v881, %v881
      %v946 = vpack.c.bf16 %v882, %v882
      %v947 = vpack.c.bf16 %v883, %v883
      %v948 = vpack.c.bf16 %v884, %v884
      %v949 = vpack.c.bf16 %v885, %v885
      %v950 = vpack.c.bf16 %v886, %v886
      %v951 = vpack.c.bf16 %v887, %v887
      %v952 = vpack.c.bf16 %v888, %v888
      %v953 = vpack.c.bf16 %v889, %v889
      %v954 = vpack.c.bf16 %v890, %v890
      %v955 = vpack.c.bf16 %v891, %v891
      %v956 = vpack.c.bf16 %v892, %v892
      %v957 = vpack.c.bf16 %v893, %v893
      %v958 = vpack.c.bf16 %v894, %v894
      %v959 = vpack.c.bf16 %v895, %v895
      %v960 = vpack.c.bf16 %v896, %v896
      %v961 = vpack.c.bf16 %v897, %v897
      %v962 = vpack.c.bf16 %v898, %v898
      %v963 = vpack.c.bf16 %v899, %v899
      %v964 = vpack.c.bf16 %v900, %v900
      %v965 = vpack.c.bf16 %v901, %v901
      %v966 = vpack.c.bf16 %v902, %v902
      %v967 = vpack.c.bf16 %v903, %v903
      %v968 = vpack.c.bf16 %v904, %v904
      %v969 = vpack.c.bf16 %v905, %v905
      %v970 = vpack.c.bf16 %v906, %v906
      %v971 = vpack.c.bf16 %v907, %v907
      %v972 = vpack.c.bf16 %v908, %v908
      %v973 = vpack.c.bf16 %v909, %v909
      %v974 = vpack.c.bf16 %v910, %v910
      %v975 = vpack.c.bf16 %v911, %v911
      %v976 = vpack.c.bf16 %v912, %v912
      %v977 = vpack.c.bf16 %v913, %v913
      %v978 = vpack.c.bf16 %v914, %v914
      %v979 = vpack.c.bf16 %v915, %v915
      %v980 = vpack.c.bf16 %v916, %v916
      %v981 = vpack.c.bf16 %v917, %v917
      %v982 = vpack.c.bf16 %v918, %v918
      %v983 = vpack.c.bf16 %v919, %v919
      %v984 = vpack.c.bf16 %v920, %v920
      %v985 = vpack.c.bf16 %v921, %v921
      %v986 = vpack.c.bf16 %v922, %v922
      %v987 = vpack.c.bf16 %v923, %v923
      %v988 = vpack.c.bf16 %v924, %v924
      %v989 = vpack.c.bf16 %v925, %v925
      %v990 = vpack.c.bf16 %v926, %v926
      %v991 = vpack.c.bf16 %v927, %v927
      %v992 = vpack.c.bf16 %v928, %v928
      %v993 = vpack.c.bf16 %v929, %v929
      %v994 = vpack.c.bf16 %v930, %v930
      %v995 = vpack.c.bf16 %v931, %v931
      %v996 = vpack.c.bf16 %v932, %v932
      %v997 = vpack.c.bf16 %v933, %v933
      %v998 = vpack.c.bf16 %v934, %v934
      %v999 = vpack.c.bf16 %v935, %v935
      %v1000 = vpack.c.bf16 %v936, %v936
      %v1001 = vpack.c.bf16 %v937, %v937
      %v1002 = vpack.c.bf16 %v938, %v938
      %v1003 = vpack.c.bf16 %v939, %v939
      %v1004 = vpack.c.bf16 %v940, %v940
      %1005 = vst [vmem:[%s172] sm:$0xf] %v941
      %1006 = vst [vmem:[%s172 + $0x4] sm:$0xf] %v942
      %1007 = vst [vmem:[%s172 + $0x8] sm:$0xf] %v943
      %1008 = vst [vmem:[%s172 + $0xc] sm:$0xf] %v944
      %1009 = vst [vmem:[%s172 + $0x10] sm:$0xf] %v945
      %1010 = vst [vmem:[%s172 + $0x14] sm:$0xf] %v946
      %1011 = vst [vmem:[%s172 + $0x18] sm:$0xf] %v947
      %1012 = vst [vmem:[%s172 + $0x1c] sm:$0xf] %v948
      %1013 = vst [vmem:[%s172 + $0x20] sm:$0xf] %v949
      %1014 = vst [vmem:[%s172 + $0x24] sm:$0xf] %v950
      %1015 = vst [vmem:[%s172 + $0x28] sm:$0xf] %v951
      %1016 = vst [vmem:[%s172 + $0x2c] sm:$0xf] %v952
      %1017 = vst [vmem:[%s172 + $0x30] sm:$0xf] %v953
      %1018 = vst [vmem:[%s172 + $0x34] sm:$0xf] %v954
      %1019 = vst [vmem:[%s172 + $0x38] sm:$0xf] %v955
      %1020 = vst [vmem:[%s172 + $0x3c] sm:$0xf] %v956
      %1021 = vst [vmem:[%s172 + $0x40] sm:$0xf] %v957
      %1022 = vst [vmem:[%s172 + $0x44] sm:$0xf] %v958
      %1023 = vst [vmem:[%s172 + $0x48] sm:$0xf] %v959
      %1024 = vst [vmem:[%s172 + $0x4c] sm:$0xf] %v960
      %1025 = vst [vmem:[%s172 + $0x50] sm:$0xf] %v961
      %1026 = vst [vmem:[%s172 + $0x54] sm:$0xf] %v962
      %1027 = vst [vmem:[%s172 + $0x58] sm:$0xf] %v963
      %1028 = vst [vmem:[%s172 + $0x5c] sm:$0xf] %v964
      %1029 = vst [vmem:[%s172 + $0x60] sm:$0xf] %v965
      %1030 = vst [vmem:[%s172 + $0x64] sm:$0xf] %v966
      %1031 = vst [vmem:[%s172 + $0x68] sm:$0xf] %v967
      %1032 = vst [vmem:[%s172 + $0x6c] sm:$0xf] %v968
      %1033 = vst [vmem:[%s172 + $0x70] sm:$0xf] %v969
      %1034 = vst [vmem:[%s172 + $0x74] sm:$0xf] %v970
      %1035 = vst [vmem:[%s172 + $0x78] sm:$0xf] %v971
      %1036 = vst [vmem:[%s172 + $0x7c] sm:$0xf] %v972
      %1037 = vst [vmem:[%s172 + $0x80] sm:$0xf] %v973
      %1038 = vst [vmem:[%s172 + $0x84] sm:$0xf] %v974
      %1039 = vst [vmem:[%s172 + $0x88] sm:$0xf] %v975
      %1040 = vst [vmem:[%s172 + $0x8c] sm:$0xf] %v976
      %1041 = vst [vmem:[%s172 + $0x90] sm:$0xf] %v977
      %1042 = vst [vmem:[%s172 + $0x94] sm:$0xf] %v978
      %1043 = vst [vmem:[%s172 + $0x98] sm:$0xf] %v979
      %1044 = vst [vmem:[%s172 + $0x9c] sm:$0xf] %v980
      %1045 = vst [vmem:[%s172 + $0xa0] sm:$0xf] %v981
      %1046 = vst [vmem:[%s172 + $0xa4] sm:$0xf] %v982
      %1047 = vst [vmem:[%s172 + $0xa8] sm:$0xf] %v983
      %1048 = vst [vmem:[%s172 + $0xac] sm:$0xf] %v984
      %1049 = vst [vmem:[%s172 + $0xb0] sm:$0xf] %v985
      %1050 = vst [vmem:[%s172 + $0xb4] sm:$0xf] %v986
      %1051 = vst [vmem:[%s172 + $0xb8] sm:$0xf] %v987
      %1052 = vst [vmem:[%s172 + $0xbc] sm:$0xf] %v988
      %1053 = vst [vmem:[%s172 + $0xc0] sm:$0xf] %v989
      %1054 = vst [vmem:[%s172 + $0xc4] sm:$0xf] %v990
      %1055 = vst [vmem:[%s172 + $0xc8] sm:$0xf] %v991
      %1056 = vst [vmem:[%s172 + $0xcc] sm:$0xf] %v992
      %1057 = vst [vmem:[%s172 + $0xd0] sm:$0xf] %v993
      %1058 = vst [vmem:[%s172 + $0xd4] sm:$0xf] %v994
      %1059 = vst [vmem:[%s172 + $0xd8] sm:$0xf] %v995
      %1060 = vst [vmem:[%s172 + $0xdc] sm:$0xf] %v996
      %1061 = vst [vmem:[%s172 + $0xe0] sm:$0xf] %v997
      %1062 = vst [vmem:[%s172 + $0xe4] sm:$0xf] %v998
      %1063 = vst [vmem:[%s172 + $0xe8] sm:$0xf] %v999
      %1064 = vst [vmem:[%s172 + $0xec] sm:$0xf] %v1000
      %1065 = vst [vmem:[%s172 + $0xf0] sm:$0xf] %v1001
      %1066 = vst [vmem:[%s172 + $0xf4] sm:$0xf] %v1002
      %1067 = vst [vmem:[%s172 + $0xf8] sm:$0xf] %v1003
      %1068 = vst [vmem:[%s172 + $0xfc] sm:$0xf] %v1004
      %s1069 = smul.u32 64, %s14
      %p1070 = scmp.lt.s32.totalorder %s1069, 255
      %s1071 = scalar_select %p1070, %s1069, 255
      %s1072 = smul.addr %s1071, 4
      %s1073 = scalar_lea.vmem %s3, %s1072
      // Predicated region
      $region33: #{m2cnn_forward.7} parent=31 // pred_check
        %p1074 = pneg %p100
      $region34: #{m2cnn_forward.7} parent=31 // pred_check_branch
        %1076 = sbr.rel (%p1074) target = $region36
      $region35: #{m2cnn_forward.7} parent=31 // pred_region
        %s1077 = smul.u32 64, %s14
      $region36: #{m2cnn_forward.7} parent=31 // pred_fallthru
        _
    $region32: #{m2cnn_forward.7} parent=5 // pred_fallthru
      _
    %p1078 = scmp.le.s32.totalorder 2, %s9
    // Predicated region
    $region37: #{m2cnn_forward.7} parent=5 // pred_check
      %p1079 = pneg %p1078
    $region38: #{m2cnn_forward.7} parent=5 // pred_check_branch
      %1081 = sbr.rel (%p1079) target = $region40
    $region39: #{m2cnn_forward.7} parent=5 // pred_region
      %s1082 = ssub.s32 %s9, 2
      // Predicated region
      $region41: #{m2cnn_forward.7} parent=39 // pred_check
        %p1083 = pneg %p106
      $region42: #{m2cnn_forward.7} parent=39 // pred_check_branch
        %1085 = sbr.rel (%p1083) target = $region44
      $region43: #{m2cnn_forward.7} parent=39 // pred_region
        %s1086 = smul.u32 64, %s15
        %p1087 = scmp.lt.s32.totalorder %s1086, 255
        %s1088 = scalar_select %p1087, %s1086, 255
        %s1089 = smul.addr %s1088, 4
        %s1090 = scalar_lea.vmem %s3, %s1089
      $region44: #{m2cnn_forward.7} parent=39 // pred_fallthru
        _
    $region40: #{m2cnn_forward.7} parent=5 // pred_fallthru
      _
  $region6: #{m2cnn_forward.7} parent=0 // loop_footer
    %s13 = sadd.s32 1, %s9
  $region7: #{m2cnn_forward.7} parent=0 // loop_footer_branch
    %8 = sbr.rel target = $region3
  $region8: #{m2cnn_forward.7} parent=0 // loop_exit
    _

// kernel: m2cnn_forward.8
$region0: #{m2cnn_forward.8}
  #allocation0 [shape = 'u32[]', space=smem, size = 0x4, offset = 0x4, fixed_abs, tag = 'smem constant byte address 0x4 - core index']
  #allocation1 [shape = 'u32[72,128]{1,0:T(1,128)}', space=vmem, size = 0x9000, scoped, tag = 'internal scratch']
  %s0 = inlined_call_operand.vmem [shape: bf16[784,256], index: 0, kind: input, shape index: {}]
  %s1 = inlined_call_operand.vmem [shape: bf16[784,128], index: 1, kind: output, shape index: {}]
  %s2 = sld [smem:[#allocation0]]
  $region37: #{m2cnn_forward.8} parent=0
    _
  %s4 = ssub.s32 1, %s2
  %s5 = scalar_select 0, %s4, %s2
  loop: start=0, step=1, limit=4
  $region2: #{m2cnn_forward.8} parent=0 // loop_pre_header
    _
  $region3: #{m2cnn_forward.8} parent=0 // loop_header
    %s7 = sphi 0, %s11
    %p8 = scmp.ge.s32.totalorder %s7, 4
    %s17 = sphi 0, %s19
    %s20 = sphi 0, %s17
    %s21 = sphi 0, %s20
    %s37 = sphi 0, %s21
    %s43 = sphi 0, %s45
    %s46 = sphi 0, %s43
    %s47 = sphi 0, %s46
    %s63 = sphi 0, %s47
  $region4: #{m2cnn_forward.8} parent=0 // loop_header_branch
    %10 = sbr.rel (%p8) target = $region8
  $region5: #{m2cnn_forward.8} parent=0 // loop_body
    %s12 = ssub.s32 %s7, 1
    %s13 = ssub.s32 %s7, 2
    %s14 = sadd.s32 %s7, 1
    %s15 = ssub.s32 %s7, %s14
    %p16 = scmp.eq.s32.totalorder %s15, 0
    %s18 = sadd.s32 %s17, 1
    %s19 = scalar_select %p16, %s17, %s18
    %p22 = pneg %p16
    %p23 = scmp.eq.s32.totalorder %s7, 1
    %p24 = por %p22, %p23
    %p25 = scmp.ne.s32.totalorder %s17, %s20
    %p26 = scmp.eq.s32.totalorder %s7, 0
    %p27 = por %p25, %p26
    %p28 = scmp.ne.s32.totalorder %s17, %s20
    %p29 = scmp.eq.s32.totalorder %s12, 1
    %p30 = por %p28, %p29
    %p31 = scmp.ne.s32.totalorder %s20, %s21
    %p32 = scmp.eq.s32.totalorder %s12, 0
    %p33 = por %p31, %p32
    %p34 = scmp.ne.s32.totalorder %s20, %s21
    %p35 = scmp.eq.s32.totalorder %s13, 1
    %p36 = por %p34, %p35
    %p38 = scmp.ne.s32.totalorder %s21, %s37
    %p39 = scmp.eq.s32.totalorder %s13, 0
    %p40 = por %p38, %p39
    %s41 = ssub.s32 %s7, %s14
    %p42 = scmp.eq.s32.totalorder %s41, 0
    %s44 = sadd.s32 %s43, 1
    %s45 = scalar_select %p42, %s43, %s44
    %p48 = pneg %p42
    %p49 = scmp.eq.s32.totalorder %s7, 1
    %p50 = por %p48, %p49
    %p51 = scmp.ne.s32.totalorder %s43, %s46
    %p52 = scmp.eq.s32.totalorder %s7, 0
    %p53 = por %p51, %p52
    %p54 = scmp.ne.s32.totalorder %s43, %s46
    %p55 = scmp.eq.s32.totalorder %s12, 1
    %p56 = por %p54, %p55
    %p57 = scmp.ne.s32.totalorder %s46, %s47
    %p58 = scmp.eq.s32.totalorder %s12, 0
    %p59 = por %p57, %p58
    %p60 = scmp.ne.s32.totalorder %s46, %s47
    %p61 = scmp.eq.s32.totalorder %s13, 1
    %p62 = por %p60, %p61
    %p64 = scmp.ne.s32.totalorder %s47, %s63
    %p65 = scmp.eq.s32.totalorder %s13, 0
    %p66 = por %p64, %p65
    %p67 = scmp.le.s32.totalorder 1, %s7
    %p68 = scmp.lt.s32.totalorder %s7, 3
    %p69 = pnand %p67, %p68
    %p70 = pneg %p69
    // Predicated region
    $region9: #{m2cnn_forward.8} parent=5 // pred_check
      _
    $region10: #{m2cnn_forward.8} parent=5 // pred_check_branch
      %72 = sbr.rel (%p69) target = $region12
    $region11: #{m2cnn_forward.8} parent=5 // pred_region
      %s73 = ssub.s32 %s7, 1
    $region12: #{m2cnn_forward.8} parent=5 // pred_fallthru
      _
    %p74 = scmp.lt.s32.totalorder %s7, 2
    // Predicated region
    $region13: #{m2cnn_forward.8} parent=5 // pred_check
      %p75 = pneg %p74
    $region14: #{m2cnn_forward.8} parent=5 // pred_check_branch
      %77 = sbr.rel (%p75) target = $region16
    $region15: #{m2cnn_forward.8} parent=5 // pred_region
      // Predicated region
      $region17: #{m2cnn_forward.8} parent=15 // pred_check
        %p78 = pneg %p27
      $region18: #{m2cnn_forward.8} parent=15 // pred_check_branch
        %80 = sbr.rel (%p78) target = $region20
      $region19: #{m2cnn_forward.8} parent=15 // pred_region
        %s81 = smul.u32 49, %s7
        %p82 = scmp.lt.s32.totalorder %s81, 97
        %s83 = scalar_select %p82, %s81, 97
        %s84 = smul.addr %s83, 2
        %s85 = smul.addr %s84, 4
        %s86 = scalar_lea.vmem %s0, %s85
        %s87 = smul.u32 49, %s7
      $region20: #{m2cnn_forward.8} parent=15 // pred_fallthru
        _
    $region16: #{m2cnn_forward.8} parent=5 // pred_fallthru
      _
    %p88 = scmp.le.s32.totalorder 1, %s7
    %p89 = scmp.lt.s32.totalorder %s7, 3
    %p90 = pnand %p88, %p89
    %p91 = pneg %p90
    // Predicated region
    $region21: #{m2cnn_forward.8} parent=5 // pred_check
      _
    $region22: #{m2cnn_forward.8} parent=5 // pred_check_branch
      %93 = sbr.rel (%p90) target = $region24
    $region23: #{m2cnn_forward.8} parent=5 // pred_region
      %s94 = ssub.s32 %s7, 1
      %s95 = smul.u32 49, %s12
      %p96 = scmp.lt.s32.totalorder %s95, 97
      %s97 = scalar_select %p96, %s95, 97
      %s98 = smul.addr %s97, 2
      %s99 = smul.addr %s98, 4
      %s100 = scalar_lea.vmem %s0, %s99
      %p101 = pneg %p33
      %p102 = pneg %p30
      %p103 = pneg %p59
      %p104 = pneg %p56
      %s105 = smul.u32 49, %s12
      %p106 = scmp.lt.s32.totalorder %s105, 97
      %s107 = scalar_select %p106, %s105, 97
      %s108 = smul.addr %s107, 4
      %s109 = scalar_lea.vmem %s1, %s108
      %s110 = smul.u32 49, %s12
      %p111 = scmp.lt.s32.totalorder %s110, 97
      %s112 = scalar_select %p111, %s110, 97
      %s113 = smul.addr %s112, 2
      %s114 = smul.addr %s113, 4
      %s115 = scalar_lea.vmem %s0, %s114
      %s116 = smul.u32 49, %s12
      %s117 = smul.u32 49, %s12
      %p118 = scmp.lt.s32.totalorder %s117, 97
      %s119 = scalar_select %p118, %s117, 97
      %s120 = smul.addr %s119, 4
      %s121 = scalar_lea.vmem %s1, %s120
      %s122 = smul.u32 49, %s12
      %v123 = vld [vmem:[%s115] sm:$0xff]
      %v124 = vld [vmem:[%s115 + $0x8] sm:$0xff]
      %v125 = vld [vmem:[%s115 + $0x10] sm:$0xff]
      %v126 = vld [vmem:[%s115 + $0x18] sm:$0xff]
      %v127 = vld [vmem:[%s115 + $0x20] sm:$0xff]
      %v128 = vld [vmem:[%s115 + $0x28] sm:$0xff]
      %v129 = vld [vmem:[%s115 + $0x30] sm:$0xff]
      %v130 = vld [vmem:[%s115 + $0x38] sm:$0xff]
      %v131 = vld [vmem:[%s115 + $0x40] sm:$0xff]
      %v132 = vld [vmem:[%s115 + $0x48] sm:$0xff]
      %v133 = vld [vmem:[%s115 + $0x50] sm:$0xff]
      %v134 = vld [vmem:[%s115 + $0x58] sm:$0xff]
      %v135 = vld [vmem:[%s115 + $0x60] sm:$0xff]
      %v136 = vld [vmem:[%s115 + $0x68] sm:$0xff]
      %v137 = vld [vmem:[%s115 + $0x70] sm:$0xff]
      %v138 = vld [vmem:[%s115 + $0x78] sm:$0xff]
      %v139 = vld [vmem:[%s115 + $0x80] sm:$0xff]
      %v140 = vld [vmem:[%s115 + $0x88] sm:$0xff]
      %v141 = vld [vmem:[%s115 + $0x90] sm:$0xff]
      %v142 = vld [vmem:[%s115 + $0x98] sm:$0xff]
      %v143 = vld [vmem:[%s115 + $0xa0] sm:$0xff]
      %v144 = vld [vmem:[%s115 + $0xa8] sm:$0xff]
      %v145 = vld [vmem:[%s115 + $0xb0] sm:$0xff]
      %v146 = vld [vmem:[%s115 + $0xb8] sm:$0xff]
      %v147 = vld [vmem:[%s115 + $0xc0] sm:$0xff]
      %v148 = vld [vmem:[%s115 + $0xc8] sm:$0xff]
      %v149 = vld [vmem:[%s115 + $0xd0] sm:$0xff]
      %v150 = vld [vmem:[%s115 + $0xd8] sm:$0xff]
      %v151 = vld [vmem:[%s115 + $0xe0] sm:$0xff]
      %v152 = vld [vmem:[%s115 + $0xe8] sm:$0xff]
      %v153 = vld [vmem:[%s115 + $0xf0] sm:$0xff]
      %v154 = vld [vmem:[%s115 + $0xf8] sm:$0xff]
      %v155 = vld [vmem:[%s115 + $0x100] sm:$0xff]
      %v156 = vld [vmem:[%s115 + $0x108] sm:$0xff]
      %v157 = vld [vmem:[%s115 + $0x110] sm:$0xff]
      %v158 = vld [vmem:[%s115 + $0x118] sm:$0xff]
      %v159 = vld [vmem:[%s115 + $0x120] sm:$0xff]
      %v160 = vld [vmem:[%s115 + $0x128] sm:$0xff]
      %v161 = vld [vmem:[%s115 + $0x130] sm:$0xff]
      %v162 = vld [vmem:[%s115 + $0x138] sm:$0xff]
      %v163 = vld [vmem:[%s115 + $0x140] sm:$0xff]
      %v164 = vld [vmem:[%s115 + $0x148] sm:$0xff]
      %v165 = vld [vmem:[%s115 + $0x150] sm:$0xff]
      %v166 = vld [vmem:[%s115 + $0x158] sm:$0xff]
      %v167 = vld [vmem:[%s115 + $0x160] sm:$0xff]
      %v168 = vld [vmem:[%s115 + $0x168] sm:$0xff]
      %v169 = vld [vmem:[%s115 + $0x170] sm:$0xff]
      %v170 = vld [vmem:[%s115 + $0x178] sm:$0xff]
      %v171 = vld [vmem:[%s115 + $0x180] sm:$0xff]
      %v172 = vunpack.c.l.bf16 %v123
      %v173 = vunpack.c.l.bf16 %v124
      %v174 = vunpack.c.l.bf16 %v125
      %v175 = vunpack.c.l.bf16 %v126
      %v176 = vunpack.c.l.bf16 %v127
      %v177 = vunpack.c.l.bf16 %v128
      %v178 = vunpack.c.l.bf16 %v129
      %v179 = vunpack.c.l.bf16 %v130
      %v180 = vunpack.c.l.bf16 %v131
      %v181 = vunpack.c.l.bf16 %v132
      %v182 = vunpack.c.l.bf16 %v133
      %v183 = vunpack.c.l.bf16 %v134
      %v184 = vunpack.c.l.bf16 %v135
      %v185 = vunpack.c.l.bf16 %v136
      %v186 = vunpack.c.l.bf16 %v137
      %v187 = vunpack.c.l.bf16 %v138
      %v188 = vunpack.c.l.bf16 %v139
      %v189 = vunpack.c.l.bf16 %v140
      %v190 = vunpack.c.l.bf16 %v141
      %v191 = vunpack.c.l.bf16 %v142
      %v192 = vunpack.c.l.bf16 %v143
      %v193 = vunpack.c.l.bf16 %v144
      %v194 = vunpack.c.l.bf16 %v145
      %v195 = vunpack.c.l.bf16 %v146
      %v196 = vunpack.c.l.bf16 %v147
      %v197 = vunpack.c.l.bf16 %v148
      %v198 = vunpack.c.l.bf16 %v149
      %v199 = vunpack.c.l.bf16 %v150
      %v200 = vunpack.c.l.bf16 %v151
      %v201 = vunpack.c.l.bf16 %v152
      %v202 = vunpack.c.l.bf16 %v153
      %v203 = vunpack.c.l.bf16 %v154
      %v204 = vunpack.c.l.bf16 %v155
      %v205 = vunpack.c.l.bf16 %v156
      %v206 = vunpack.c.l.bf16 %v157
      %v207 = vunpack.c.l.bf16 %v158
      %v208 = vunpack.c.l.bf16 %v159
      %v209 = vunpack.c.l.bf16 %v160
      %v210 = vunpack.c.l.bf16 %v161
      %v211 = vunpack.c.l.bf16 %v162
      %v212 = vunpack.c.l.bf16 %v163
      %v213 = vunpack.c.l.bf16 %v164
      %v214 = vunpack.c.l.bf16 %v165
      %v215 = vunpack.c.l.bf16 %v166
      %v216 = vunpack.c.l.bf16 %v167
      %v217 = vunpack.c.l.bf16 %v168
      %v218 = vunpack.c.l.bf16 %v169
      %v219 = vunpack.c.l.bf16 %v170
      %v220 = vunpack.c.l.bf16 %v171
      %v270 = vrot.slane %v123, 4
      %v271 = vrot.slane %v124, 4
      %v272 = vrot.slane %v125, 4
      %v273 = vrot.slane %v126, 4
      %v274 = vrot.slane %v127, 4
      %v275 = vrot.slane %v128, 4
      %v276 = vrot.slane %v129, 4
      %v277 = vrot.slane %v130, 4
      %v278 = vrot.slane %v131, 4
      %v279 = vrot.slane %v132, 4
      %v280 = vrot.slane %v133, 4
      %v281 = vrot.slane %v134, 4
      %v282 = vrot.slane %v135, 4
      %v283 = vrot.slane %v136, 4
      %v284 = vrot.slane %v137, 4
      %v285 = vrot.slane %v138, 4
      %v286 = vrot.slane %v139, 4
      %v287 = vrot.slane %v140, 4
      %v288 = vrot.slane %v141, 4
      %v289 = vrot.slane %v142, 4
      %v290 = vrot.slane %v143, 4
      %v291 = vrot.slane %v144, 4
      %v292 = vrot.slane %v145, 4
      %v293 = vrot.slane %v146, 4
      %v294 = vrot.slane %v147, 4
      %v295 = vrot.slane %v148, 4
      %v296 = vrot.slane %v149, 4
      %v297 = vrot.slane %v150, 4
      %v298 = vrot.slane %v151, 4
      %v299 = vrot.slane %v152, 4
      %v300 = vrot.slane %v153, 4
      %v301 = vrot.slane %v154, 4
      %v302 = vrot.slane %v155, 4
      %v303 = vrot.slane %v156, 4
      %v304 = vrot.slane %v157, 4
      %v305 = vrot.slane %v158, 4
      %v306 = vrot.slane %v159, 4
      %v307 = vrot.slane %v160, 4
      %v308 = vrot.slane %v161, 4
      %v309 = vrot.slane %v162, 4
      %v310 = vrot.slane %v163, 4
      %v311 = vrot.slane %v164, 4
      %v312 = vrot.slane %v165, 4
      %v313 = vrot.slane %v166, 4
      %v314 = vrot.slane %v167, 4
      %v315 = vrot.slane %v168, 4
      %v316 = vrot.slane %v169, 4
      %v317 = vrot.slane %v170, 4
      %v318 = vrot.slane %v171, 4
      %v368 = vunpack.c.l.bf16 %v270
      %v369 = vunpack.c.l.bf16 %v271
      %v370 = vunpack.c.l.bf16 %v272
      %v371 = vunpack.c.l.bf16 %v273
      %v372 = vunpack.c.l.bf16 %v274
      %v373 = vunpack.c.l.bf16 %v275
      %v374 = vunpack.c.l.bf16 %v276
      %v375 = vunpack.c.l.bf16 %v277
      %v376 = vunpack.c.l.bf16 %v278
      %v377 = vunpack.c.l.bf16 %v279
      %v378 = vunpack.c.l.bf16 %v280
      %v379 = vunpack.c.l.bf16 %v281
      %v380 = vunpack.c.l.bf16 %v282
      %v381 = vunpack.c.l.bf16 %v283
      %v382 = vunpack.c.l.bf16 %v284
      %v383 = vunpack.c.l.bf16 %v285
      %v384 = vunpack.c.l.bf16 %v286
      %v385 = vunpack.c.l.bf16 %v287
      %v386 = vunpack.c.l.bf16 %v288
      %v387 = vunpack.c.l.bf16 %v289
      %v388 = vunpack.c.l.bf16 %v290
      %v389 = vunpack.c.l.bf16 %v291
      %v390 = vunpack.c.l.bf16 %v292
      %v391 = vunpack.c.l.bf16 %v293
      %v392 = vunpack.c.l.bf16 %v294
      %v393 = vunpack.c.l.bf16 %v295
      %v394 = vunpack.c.l.bf16 %v296
      %v395 = vunpack.c.l.bf16 %v297
      %v396 = vunpack.c.l.bf16 %v298
      %v397 = vunpack.c.l.bf16 %v299
      %v398 = vunpack.c.l.bf16 %v300
      %v399 = vunpack.c.l.bf16 %v301
      %v400 = vunpack.c.l.bf16 %v302
      %v401 = vunpack.c.l.bf16 %v303
      %v402 = vunpack.c.l.bf16 %v304
      %v403 = vunpack.c.l.bf16 %v305
      %v404 = vunpack.c.l.bf16 %v306
      %v405 = vunpack.c.l.bf16 %v307
      %v406 = vunpack.c.l.bf16 %v308
      %v407 = vunpack.c.l.bf16 %v309
      %v408 = vunpack.c.l.bf16 %v310
      %v409 = vunpack.c.l.bf16 %v311
      %v410 = vunpack.c.l.bf16 %v312
      %v411 = vunpack.c.l.bf16 %v313
      %v412 = vunpack.c.l.bf16 %v314
      %v413 = vunpack.c.l.bf16 %v315
      %v414 = vunpack.c.l.bf16 %v316
      %v415 = vunpack.c.l.bf16 %v317
      %v416 = vunpack.c.l.bf16 %v318
      %v417 = vmax.f32 %v172, %v368
      %v418 = vmax.f32 %v173, %v369
      %v419 = vmax.f32 %v174, %v370
      %v420 = vmax.f32 %v175, %v371
      %v421 = vmax.f32 %v176, %v372
      %v422 = vmax.f32 %v177, %v373
      %v423 = vmax.f32 %v178, %v374
      %v424 = vmax.f32 %v179, %v375
      %v425 = vmax.f32 %v180, %v376
      %v426 = vmax.f32 %v181, %v377
      %v427 = vmax.f32 %v182, %v378
      %v428 = vmax.f32 %v183, %v379
      %v429 = vmax.f32 %v184, %v380
      %v430 = vmax.f32 %v185, %v381
      %v431 = vmax.f32 %v186, %v382
      %v432 = vmax.f32 %v187, %v383
      %v433 = vmax.f32 %v188, %v384
      %v434 = vmax.f32 %v189, %v385
      %v435 = vmax.f32 %v190, %v386
      %v436 = vmax.f32 %v191, %v387
      %v437 = vmax.f32 %v192, %v388
      %v438 = vmax.f32 %v193, %v389
      %v439 = vmax.f32 %v194, %v390
      %v440 = vmax.f32 %v195, %v391
      %v441 = vmax.f32 %v196, %v392
      %v442 = vmax.f32 %v197, %v393
      %v443 = vmax.f32 %v198, %v394
      %v444 = vmax.f32 %v199, %v395
      %v445 = vmax.f32 %v200, %v396
      %v446 = vmax.f32 %v201, %v397
      %v447 = vmax.f32 %v202, %v398
      %v448 = vmax.f32 %v203, %v399
      %v449 = vmax.f32 %v204, %v400
      %v450 = vmax.f32 %v205, %v401
      %v451 = vmax.f32 %v206, %v402
      %v452 = vmax.f32 %v207, %v403
      %v453 = vmax.f32 %v208, %v404
      %v454 = vmax.f32 %v209, %v405
      %v455 = vmax.f32 %v210, %v406
      %v456 = vmax.f32 %v211, %v407
      %v457 = vmax.f32 %v212, %v408
      %v458 = vmax.f32 %v213, %v409
      %v459 = vmax.f32 %v214, %v410
      %v460 = vmax.f32 %v215, %v411
      %v461 = vmax.f32 %v216, %v412
      %v462 = vmax.f32 %v217, %v413
      %v463 = vmax.f32 %v218, %v414
      %v464 = vmax.f32 %v219, %v415
      %v465 = vmax.f32 %v220, %v416
      %v466 = vpack.c.bf16 %v417, %v417
      %v467 = vpack.c.bf16 %v418, %v418
      %v468 = vpack.c.bf16 %v419, %v419
      %v469 = vpack.c.bf16 %v420, %v420
      %v470 = vpack.c.bf16 %v421, %v421
      %v471 = vpack.c.bf16 %v422, %v422
      %v472 = vpack.c.bf16 %v423, %v423
      %v473 = vpack.c.bf16 %v424, %v424
      %v474 = vpack.c.bf16 %v425, %v425
      %v475 = vpack.c.bf16 %v426, %v426
      %v476 = vpack.c.bf16 %v427, %v427
      %v477 = vpack.c.bf16 %v428, %v428
      %v478 = vpack.c.bf16 %v429, %v429
      %v479 = vpack.c.bf16 %v430, %v430
      %v480 = vpack.c.bf16 %v431, %v431
      %v481 = vpack.c.bf16 %v432, %v432
      %v482 = vpack.c.bf16 %v433, %v433
      %v483 = vpack.c.bf16 %v434, %v434
      %v484 = vpack.c.bf16 %v435, %v435
      %v485 = vpack.c.bf16 %v436, %v436
      %v486 = vpack.c.bf16 %v437, %v437
      %v487 = vpack.c.bf16 %v438, %v438
      %v488 = vpack.c.bf16 %v439, %v439
      %v489 = vpack.c.bf16 %v440, %v440
      %v490 = vpack.c.bf16 %v441, %v441
      %v491 = vpack.c.bf16 %v442, %v442
      %v492 = vpack.c.bf16 %v443, %v443
      %v493 = vpack.c.bf16 %v444, %v444
      %v494 = vpack.c.bf16 %v445, %v445
      %v495 = vpack.c.bf16 %v446, %v446
      %v496 = vpack.c.bf16 %v447, %v447
      %v497 = vpack.c.bf16 %v448, %v448
      %v498 = vpack.c.bf16 %v449, %v449
      %v499 = vpack.c.bf16 %v450, %v450
      %v500 = vpack.c.bf16 %v451, %v451
      %v501 = vpack.c.bf16 %v452, %v452
      %v502 = vpack.c.bf16 %v453, %v453
      %v503 = vpack.c.bf16 %v454, %v454
      %v504 = vpack.c.bf16 %v455, %v455
      %v505 = vpack.c.bf16 %v456, %v456
      %v506 = vpack.c.bf16 %v457, %v457
      %v507 = vpack.c.bf16 %v458, %v458
      %v508 = vpack.c.bf16 %v459, %v459
      %v509 = vpack.c.bf16 %v460, %v460
      %v510 = vpack.c.bf16 %v461, %v461
      %v511 = vpack.c.bf16 %v462, %v462
      %v512 = vpack.c.bf16 %v463, %v463
      %v513 = vpack.c.bf16 %v464, %v464
      %v514 = vpack.c.bf16 %v465, %v465
      %515 = vst [vmem:[%s121] sm:$0xf] %v466
      %516 = vst [vmem:[%s121 + $0x4] sm:$0xf] %v467
      %517 = vst [vmem:[%s121 + $0x8] sm:$0xf] %v468
      %518 = vst [vmem:[%s121 + $0xc] sm:$0xf] %v469
      %519 = vst [vmem:[%s121 + $0x10] sm:$0xf] %v470
      %520 = vst [vmem:[%s121 + $0x14] sm:$0xf] %v471
      %521 = vst [vmem:[%s121 + $0x18] sm:$0xf] %v472
      %522 = vst [vmem:[%s121 + $0x1c] sm:$0xf] %v473
      %523 = vst [vmem:[%s121 + $0x20] sm:$0xf] %v474
      %524 = vst [vmem:[%s121 + $0x24] sm:$0xf] %v475
      %525 = vst [vmem:[%s121 + $0x28] sm:$0xf] %v476
      %526 = vst [vmem:[%s121 + $0x2c] sm:$0xf] %v477
      %527 = vst [vmem:[%s121 + $0x30] sm:$0xf] %v478
      %528 = vst [vmem:[%s121 + $0x34] sm:$0xf] %v479
      %529 = vst [vmem:[%s121 + $0x38] sm:$0xf] %v480
      %530 = vst [vmem:[%s121 + $0x3c] sm:$0xf] %v481
      %531 = vst [vmem:[%s121 + $0x40] sm:$0xf] %v482
      %532 = vst [vmem:[%s121 + $0x44] sm:$0xf] %v483
      %533 = vst [vmem:[%s121 + $0x48] sm:$0xf] %v484
      %534 = vst [vmem:[%s121 + $0x4c] sm:$0xf] %v485
      %535 = vst [vmem:[%s121 + $0x50] sm:$0xf] %v486
      %536 = vst [vmem:[%s121 + $0x54] sm:$0xf] %v487
      %537 = vst [vmem:[%s121 + $0x58] sm:$0xf] %v488
      %538 = vst [vmem:[%s121 + $0x5c] sm:$0xf] %v489
      %539 = vst [vmem:[%s121 + $0x60] sm:$0xf] %v490
      %540 = vst [vmem:[%s121 + $0x64] sm:$0xf] %v491
      %541 = vst [vmem:[%s121 + $0x68] sm:$0xf] %v492
      %542 = vst [vmem:[%s121 + $0x6c] sm:$0xf] %v493
      %543 = vst [vmem:[%s121 + $0x70] sm:$0xf] %v494
      %544 = vst [vmem:[%s121 + $0x74] sm:$0xf] %v495
      %545 = vst [vmem:[%s121 + $0x78] sm:$0xf] %v496
      %546 = vst [vmem:[%s121 + $0x7c] sm:$0xf] %v497
      %547 = vst [vmem:[%s121 + $0x80] sm:$0xf] %v498
      %548 = vst [vmem:[%s121 + $0x84] sm:$0xf] %v499
      %549 = vst [vmem:[%s121 + $0x88] sm:$0xf] %v500
      %550 = vst [vmem:[%s121 + $0x8c] sm:$0xf] %v501
      %551 = vst [vmem:[%s121 + $0x90] sm:$0xf] %v502
      %552 = vst [vmem:[%s121 + $0x94] sm:$0xf] %v503
      %553 = vst [vmem:[%s121 + $0x98] sm:$0xf] %v504
      %554 = vst [vmem:[%s121 + $0x9c] sm:$0xf] %v505
      %555 = vst [vmem:[%s121 + $0xa0] sm:$0xf] %v506
      %556 = vst [vmem:[%s121 + $0xa4] sm:$0xf] %v507
      %557 = vst [vmem:[%s121 + $0xa8] sm:$0xf] %v508
      %558 = vst [vmem:[%s121 + $0xac] sm:$0xf] %v509
      %559 = vst [vmem:[%s121 + $0xb0] sm:$0xf] %v510
      %560 = vst [vmem:[%s121 + $0xb4] sm:$0xf] %v511
      %561 = vst [vmem:[%s121 + $0xb8] sm:$0xf] %v512
      %562 = vst [vmem:[%s121 + $0xbc] sm:$0xf] %v513
      %563 = vst [vmem:[%s121 + $0xc0] sm:$0xf] %v514
      %s564 = smul.u32 49, %s12
      %p565 = scmp.lt.s32.totalorder %s564, 97
      %s566 = scalar_select %p565, %s564, 97
      %s567 = smul.addr %s566, 4
      %s568 = scalar_lea.vmem %s1, %s567
      // Predicated region
      $region25: #{m2cnn_forward.8} parent=23 // pred_check
        %p569 = pneg %p56
      $region26: #{m2cnn_forward.8} parent=23 // pred_check_branch
        %571 = sbr.rel (%p569) target = $region28
      $region27: #{m2cnn_forward.8} parent=23 // pred_region
        %s572 = smul.u32 49, %s12
      $region28: #{m2cnn_forward.8} parent=23 // pred_fallthru
        _
    $region24: #{m2cnn_forward.8} parent=5 // pred_fallthru
      _
    %p573 = scmp.le.s32.totalorder 2, %s7
    // Predicated region
    $region29: #{m2cnn_forward.8} parent=5 // pred_check
      %p574 = pneg %p573
    $region30: #{m2cnn_forward.8} parent=5 // pred_check_branch
      %576 = sbr.rel (%p574) target = $region32
    $region31: #{m2cnn_forward.8} parent=5 // pred_region
      %s577 = ssub.s32 %s7, 2
      // Predicated region
      $region33: #{m2cnn_forward.8} parent=31 // pred_check
        %p578 = pneg %p62
      $region34: #{m2cnn_forward.8} parent=31 // pred_check_branch
        %580 = sbr.rel (%p578) target = $region36
      $region35: #{m2cnn_forward.8} parent=31 // pred_region
        %s581 = smul.u32 49, %s13
        %p582 = scmp.lt.s32.totalorder %s581, 97
        %s583 = scalar_select %p582, %s581, 97
        %s584 = smul.addr %s583, 4
        %s585 = scalar_lea.vmem %s1, %s584
      $region36: #{m2cnn_forward.8} parent=31 // pred_fallthru
        _
    $region32: #{m2cnn_forward.8} parent=5 // pred_fallthru
      _
  $region6: #{m2cnn_forward.8} parent=0 // loop_footer
    %s11 = sadd.s32 1, %s7
  $region7: #{m2cnn_forward.8} parent=0 // loop_footer_branch
    %6 = sbr.rel target = $region3
  $region8: #{m2cnn_forward.8} parent=0 // loop_exit
    _

// kernel: m2cnn_forward.9
$region0: #{m2cnn_forward.9}
  #allocation0 [shape = 'u32[]', space=smem, size = 0x4, offset = 0x4, fixed_abs, tag = 'smem constant byte address 0x4 - core index']
  #allocation1 [shape = 'u32[72,128]{1,0:T(1,128)}', space=vmem, size = 0x9000, scoped, tag = 'internal scratch']
  %s0 = inlined_call_operand.vmem [shape: bf16[32,3584], index: 0, kind: input, shape index: {}]
  %s1 = inlined_call_operand.vmem [shape: bf16[32,1792], index: 1, kind: output, shape index: {}]
  %s2 = sld [smem:[#allocation0]]
  $region37: #{m2cnn_forward.9} parent=0
    _
  %s4 = ssub.s32 1, %s2
  %s5 = scalar_select 0, %s4, %s2
  loop: start=0, step=1, limit=4
  $region2: #{m2cnn_forward.9} parent=0 // loop_pre_header
    _
  $region3: #{m2cnn_forward.9} parent=0 // loop_header
    %s7 = sphi 0, %s11
    %p8 = scmp.ge.s32.totalorder %s7, 4
    %s17 = sphi 0, %s19
    %s20 = sphi 0, %s17
    %s21 = sphi 0, %s20
    %s37 = sphi 0, %s21
    %s43 = sphi 0, %s45
    %s46 = sphi 0, %s43
    %s47 = sphi 0, %s46
    %s63 = sphi 0, %s47
  $region4: #{m2cnn_forward.9} parent=0 // loop_header_branch
    %10 = sbr.rel (%p8) target = $region8
  $region5: #{m2cnn_forward.9} parent=0 // loop_body
    %s12 = ssub.s32 %s7, 1
    %s13 = ssub.s32 %s7, 2
    %s14 = sadd.s32 %s7, 1
    %s15 = ssub.s32 %s7, %s14
    %p16 = scmp.eq.s32.totalorder %s15, 0
    %s18 = sadd.s32 %s17, 1
    %s19 = scalar_select %p16, %s17, %s18
    %p22 = pneg %p16
    %p23 = scmp.eq.s32.totalorder %s7, 1
    %p24 = por %p22, %p23
    %p25 = scmp.ne.s32.totalorder %s17, %s20
    %p26 = scmp.eq.s32.totalorder %s7, 0
    %p27 = por %p25, %p26
    %p28 = scmp.ne.s32.totalorder %s17, %s20
    %p29 = scmp.eq.s32.totalorder %s12, 1
    %p30 = por %p28, %p29
    %p31 = scmp.ne.s32.totalorder %s20, %s21
    %p32 = scmp.eq.s32.totalorder %s12, 0
    %p33 = por %p31, %p32
    %p34 = scmp.ne.s32.totalorder %s20, %s21
    %p35 = scmp.eq.s32.totalorder %s13, 1
    %p36 = por %p34, %p35
    %p38 = scmp.ne.s32.totalorder %s21, %s37
    %p39 = scmp.eq.s32.totalorder %s13, 0
    %p40 = por %p38, %p39
    %s41 = ssub.s32 %s7, %s14
    %p42 = scmp.eq.s32.totalorder %s41, 0
    %s44 = sadd.s32 %s43, 1
    %s45 = scalar_select %p42, %s43, %s44
    %p48 = pneg %p42
    %p49 = scmp.eq.s32.totalorder %s7, 1
    %p50 = por %p48, %p49
    %p51 = scmp.ne.s32.totalorder %s43, %s46
    %p52 = scmp.eq.s32.totalorder %s7, 0
    %p53 = por %p51, %p52
    %p54 = scmp.ne.s32.totalorder %s43, %s46
    %p55 = scmp.eq.s32.totalorder %s12, 1
    %p56 = por %p54, %p55
    %p57 = scmp.ne.s32.totalorder %s46, %s47
    %p58 = scmp.eq.s32.totalorder %s12, 0
    %p59 = por %p57, %p58
    %p60 = scmp.ne.s32.totalorder %s46, %s47
    %p61 = scmp.eq.s32.totalorder %s13, 1
    %p62 = por %p60, %p61
    %p64 = scmp.ne.s32.totalorder %s47, %s63
    %p65 = scmp.eq.s32.totalorder %s13, 0
    %p66 = por %p64, %p65
    %p67 = scmp.le.s32.totalorder 1, %s7
    %p68 = scmp.lt.s32.totalorder %s7, 3
    %p69 = pnand %p67, %p68
    %p70 = pneg %p69
    // Predicated region
    $region9: #{m2cnn_forward.9} parent=5 // pred_check
      _
    $region10: #{m2cnn_forward.9} parent=5 // pred_check_branch
      %72 = sbr.rel (%p69) target = $region12
    $region11: #{m2cnn_forward.9} parent=5 // pred_region
      %s73 = ssub.s32 %s7, 1
    $region12: #{m2cnn_forward.9} parent=5 // pred_fallthru
      _
    %p74 = scmp.lt.s32.totalorder %s7, 2
    // Predicated region
    $region13: #{m2cnn_forward.9} parent=5 // pred_check
      %p75 = pneg %p74
    $region14: #{m2cnn_forward.9} parent=5 // pred_check_branch
      %77 = sbr.rel (%p75) target = $region16
    $region15: #{m2cnn_forward.9} parent=5 // pred_region
      // Predicated region
      $region17: #{m2cnn_forward.9} parent=15 // pred_check
        %p78 = pneg %p27
      $region18: #{m2cnn_forward.9} parent=15 // pred_check_branch
        %80 = sbr.rel (%p78) target = $region20
      $region19: #{m2cnn_forward.9} parent=15 // pred_region
        %s81 = smul.u32 2, %s7
        %p82 = scmp.lt.s32.totalorder %s81, 3
        %s83 = scalar_select %p82, %s81, 3
        %s84 = smul.addr %s83, 28
        %s85 = smul.addr %s84, 4
        %s86 = scalar_lea.vmem %s0, %s85
        %s87 = smul.u32 2, %s7
      $region20: #{m2cnn_forward.9} parent=15 // pred_fallthru
        _
    $region16: #{m2cnn_forward.9} parent=5 // pred_fallthru
      _
    %p88 = scmp.le.s32.totalorder 1, %s7
    %p89 = scmp.lt.s32.totalorder %s7, 3
    %p90 = pnand %p88, %p89
    %p91 = pneg %p90
    // Predicated region
    $region21: #{m2cnn_forward.9} parent=5 // pred_check
      _
    $region22: #{m2cnn_forward.9} parent=5 // pred_check_branch
      %93 = sbr.rel (%p90) target = $region24
    $region23: #{m2cnn_forward.9} parent=5 // pred_region
      %s94 = ssub.s32 %s7, 1
      %s95 = smul.u32 2, %s12
      %p96 = scmp.lt.s32.totalorder %s95, 3
      %s97 = scalar_select %p96, %s95, 3
      %s98 = smul.addr %s97, 28
      %s99 = smul.addr %s98, 4
      %s100 = scalar_lea.vmem %s0, %s99
      %p101 = pneg %p33
      %p102 = pneg %p30
      %p103 = pneg %p59
      %p104 = pneg %p56
      %s105 = smul.u32 2, %s12
      %p106 = scmp.lt.s32.totalorder %s105, 3
      %s107 = scalar_select %p106, %s105, 3
      %s108 = smul.addr %s107, 14
      %s109 = smul.addr %s108, 4
      %s110 = scalar_lea.vmem %s1, %s109
      %s111 = smul.u32 2, %s12
      %p112 = scmp.lt.s32.totalorder %s111, 3
      %s113 = scalar_select %p112, %s111, 3
      %s114 = smul.addr %s113, 28
      %s115 = smul.addr %s114, 4
      %s116 = scalar_lea.vmem %s0, %s115
      %s117 = smul.u32 2, %s12
      %s118 = smul.u32 2, %s12
      %p119 = scmp.lt.s32.totalorder %s118, 3
      %s120 = scalar_select %p119, %s118, 3
      %s121 = smul.addr %s120, 14
      %s122 = smul.addr %s121, 4
      %s123 = scalar_lea.vmem %s1, %s122
      %s124 = smul.u32 2, %s12
      %v125 = vld [vmem:[%s116] sm:$0xff]
      %v126 = vld [vmem:[%s116 + $0x8] sm:$0xff]
      %v127 = vld [vmem:[%s116 + $0x10] sm:$0xff]
      %v128 = vld [vmem:[%s116 + $0x18] sm:$0xff]
      %v129 = vld [vmem:[%s116 + $0x20] sm:$0xff]
      %v130 = vld [vmem:[%s116 + $0x28] sm:$0xff]
      %v131 = vld [vmem:[%s116 + $0x30] sm:$0xff]
      %v132 = vld [vmem:[%s116 + $0x38] sm:$0xff]
      %v133 = vld [vmem:[%s116 + $0x40] sm:$0xff]
      %v134 = vld [vmem:[%s116 + $0x48] sm:$0xff]
      %v135 = vld [vmem:[%s116 + $0x50] sm:$0xff]
      %v136 = vld [vmem:[%s116 + $0x58] sm:$0xff]
      %v137 = vld [vmem:[%s116 + $0x60] sm:$0xff]
      %v138 = vld [vmem:[%s116 + $0x68] sm:$0xff]
      %v139 = vld [vmem:[%s116 + $0x70] sm:$0xff]
      %v140 = vld [vmem:[%s116 + $0x78] sm:$0xff]
      %v141 = vld [vmem:[%s116 + $0x80] sm:$0xff]
      %v142 = vld [vmem:[%s116 + $0x88] sm:$0xff]
      %v143 = vld [vmem:[%s116 + $0x90] sm:$0xff]
      %v144 = vld [vmem:[%s116 + $0x98] sm:$0xff]
      %v145 = vld [vmem:[%s116 + $0xa0] sm:$0xff]
      %v146 = vld [vmem:[%s116 + $0xa8] sm:$0xff]
      %v147 = vld [vmem:[%s116 + $0xb0] sm:$0xff]
      %v148 = vld [vmem:[%s116 + $0xb8] sm:$0xff]
      %v149 = vld [vmem:[%s116 + $0xc0] sm:$0xff]
      %v150 = vld [vmem:[%s116 + $0xc8] sm:$0xff]
      %v151 = vld [vmem:[%s116 + $0xd0] sm:$0xff]
      %v152 = vld [vmem:[%s116 + $0xd8] sm:$0xff]
      %v153 = vunpack.c.l.bf16 %v125
      %v154 = vunpack.c.h.bf16 %v125
      %v155 = vunpack.c.l.bf16 %v126
      %v156 = vunpack.c.h.bf16 %v126
      %v157 = vunpack.c.l.bf16 %v127
      %v158 = vunpack.c.h.bf16 %v127
      %v159 = vunpack.c.l.bf16 %v128
      %v160 = vunpack.c.h.bf16 %v128
      %v161 = vunpack.c.l.bf16 %v129
      %v162 = vunpack.c.h.bf16 %v129
      %v163 = vunpack.c.l.bf16 %v130
      %v164 = vunpack.c.h.bf16 %v130
      %v165 = vunpack.c.l.bf16 %v131
      %v166 = vunpack.c.h.bf16 %v131
      %v167 = vunpack.c.l.bf16 %v139
      %v168 = vunpack.c.h.bf16 %v139
      %v169 = vunpack.c.l.bf16 %v140
      %v170 = vunpack.c.h.bf16 %v140
      %v171 = vunpack.c.l.bf16 %v141
      %v172 = vunpack.c.h.bf16 %v141
      %v173 = vunpack.c.l.bf16 %v142
      %v174 = vunpack.c.h.bf16 %v142
      %v175 = vunpack.c.l.bf16 %v143
      %v176 = vunpack.c.h.bf16 %v143
      %v177 = vunpack.c.l.bf16 %v144
      %v178 = vunpack.c.h.bf16 %v144
      %v179 = vunpack.c.l.bf16 %v145
      %v180 = vunpack.c.h.bf16 %v145
      %v181 = vunpack.c.l.bf16 %v132
      %v182 = vunpack.c.h.bf16 %v132
      %v183 = vunpack.c.l.bf16 %v133
      %v184 = vunpack.c.h.bf16 %v133
      %v185 = vunpack.c.l.bf16 %v134
      %v186 = vunpack.c.h.bf16 %v134
      %v187 = vunpack.c.l.bf16 %v135
      %v188 = vunpack.c.h.bf16 %v135
      %v189 = vunpack.c.l.bf16 %v136
      %v190 = vunpack.c.h.bf16 %v136
      %v191 = vunpack.c.l.bf16 %v137
      %v192 = vunpack.c.h.bf16 %v137
      %v193 = vunpack.c.l.bf16 %v138
      %v194 = vunpack.c.h.bf16 %v138
      %v195 = vunpack.c.l.bf16 %v146
      %v196 = vunpack.c.h.bf16 %v146
      %v197 = vunpack.c.l.bf16 %v147
      %v198 = vunpack.c.h.bf16 %v147
      %v199 = vunpack.c.l.bf16 %v148
      %v200 = vunpack.c.h.bf16 %v148
      %v201 = vunpack.c.l.bf16 %v149
      %v202 = vunpack.c.h.bf16 %v149
      %v203 = vunpack.c.l.bf16 %v150
      %v204 = vunpack.c.h.bf16 %v150
      %v205 = vunpack.c.l.bf16 %v151
      %v206 = vunpack.c.h.bf16 %v151
      %v207 = vunpack.c.l.bf16 %v152
      %v208 = vunpack.c.h.bf16 %v152
      %v209 = vmax.f32 %v153, %v181
      %v210 = vmax.f32 %v154, %v182
      %v211 = vmax.f32 %v155, %v183
      %v212 = vmax.f32 %v156, %v184
      %v213 = vmax.f32 %v157, %v185
      %v214 = vmax.f32 %v158, %v186
      %v215 = vmax.f32 %v159, %v187
      %v216 = vmax.f32 %v160, %v188
      %v217 = vmax.f32 %v161, %v189
      %v218 = vmax.f32 %v162, %v190
      %v219 = vmax.f32 %v163, %v191
      %v220 = vmax.f32 %v164, %v192
      %v221 = vmax.f32 %v165, %v193
      %v222 = vmax.f32 %v166, %v194
      %v223 = vmax.f32 %v167, %v195
      %v224 = vmax.f32 %v168, %v196
      %v225 = vmax.f32 %v169, %v197
      %v226 = vmax.f32 %v170, %v198
      %v227 = vmax.f32 %v171, %v199
      %v228 = vmax.f32 %v172, %v200
      %v229 = vmax.f32 %v173, %v201
      %v230 = vmax.f32 %v174, %v202
      %v231 = vmax.f32 %v175, %v203
      %v232 = vmax.f32 %v176, %v204
      %v233 = vmax.f32 %v177, %v205
      %v234 = vmax.f32 %v178, %v206
      %v235 = vmax.f32 %v179, %v207
      %v236 = vmax.f32 %v180, %v208
      %v237 = vpack.c.bf16 %v210, %v209
      %v238 = vpack.c.bf16 %v212, %v211
      %v239 = vpack.c.bf16 %v214, %v213
      %v240 = vpack.c.bf16 %v216, %v215
      %v241 = vpack.c.bf16 %v218, %v217
      %v242 = vpack.c.bf16 %v220, %v219
      %v243 = vpack.c.bf16 %v222, %v221
      %v244 = vpack.c.bf16 %v224, %v223
      %v245 = vpack.c.bf16 %v226, %v225
      %v246 = vpack.c.bf16 %v228, %v227
      %v247 = vpack.c.bf16 %v230, %v229
      %v248 = vpack.c.bf16 %v232, %v231
      %v249 = vpack.c.bf16 %v234, %v233
      %v250 = vpack.c.bf16 %v236, %v235
      %251 = vst [vmem:[%s123] sm:$0xff] %v237
      %252 = vst [vmem:[%s123 + $0x8] sm:$0xff] %v238
      %253 = vst [vmem:[%s123 + $0x10] sm:$0xff] %v239
      %254 = vst [vmem:[%s123 + $0x18] sm:$0xff] %v240
      %255 = vst [vmem:[%s123 + $0x20] sm:$0xff] %v241
      %256 = vst [vmem:[%s123 + $0x28] sm:$0xff] %v242
      %257 = vst [vmem:[%s123 + $0x30] sm:$0xff] %v243
      %258 = vst [vmem:[%s123 + $0x38] sm:$0xff] %v244
      %259 = vst [vmem:[%s123 + $0x40] sm:$0xff] %v245
      %260 = vst [vmem:[%s123 + $0x48] sm:$0xff] %v246
      %261 = vst [vmem:[%s123 + $0x50] sm:$0xff] %v247
      %262 = vst [vmem:[%s123 + $0x58] sm:$0xff] %v248
      %263 = vst [vmem:[%s123 + $0x60] sm:$0xff] %v249
      %264 = vst [vmem:[%s123 + $0x68] sm:$0xff] %v250
      %s265 = smul.u32 2, %s12
      %p266 = scmp.lt.s32.totalorder %s265, 3
      %s267 = scalar_select %p266, %s265, 3
      %s268 = smul.addr %s267, 14
      %s269 = smul.addr %s268, 4
      %s270 = scalar_lea.vmem %s1, %s269
      // Predicated region
      $region25: #{m2cnn_forward.9} parent=23 // pred_check
        %p271 = pneg %p56
      $region26: #{m2cnn_forward.9} parent=23 // pred_check_branch
        %273 = sbr.rel (%p271) target = $region28
      $region27: #{m2cnn_forward.9} parent=23 // pred_region
        %s274 = smul.u32 2, %s12
      $region28: #{m2cnn_forward.9} parent=23 // pred_fallthru
        _
    $region24: #{m2cnn_forward.9} parent=5 // pred_fallthru
      _
    %p275 = scmp.le.s32.totalorder 2, %s7
    // Predicated region
    $region29: #{m2cnn_forward.9} parent=5 // pred_check
      %p276 = pneg %p275
    $region30: #{m2cnn_forward.9} parent=5 // pred_check_branch
      %278 = sbr.rel (%p276) target = $region32
    $region31: #{m2cnn_forward.9} parent=5 // pred_region
      %s279 = ssub.s32 %s7, 2
      // Predicated region
      $region33: #{m2cnn_forward.9} parent=31 // pred_check
        %p280 = pneg %p62
      $region34: #{m2cnn_forward.9} parent=31 // pred_check_branch
        %282 = sbr.rel (%p280) target = $region36
      $region35: #{m2cnn_forward.9} parent=31 // pred_region
        %s283 = smul.u32 2, %s13
        %p284 = scmp.lt.s32.totalorder %s283, 3
        %s285 = scalar_select %p284, %s283, 3
        %s286 = smul.addr %s285, 14
        %s287 = smul.addr %s286, 4
        %s288 = scalar_lea.vmem %s1, %s287
      $region36: #{m2cnn_forward.9} parent=31 // pred_fallthru
        _
    $region32: #{m2cnn_forward.9} parent=5 // pred_fallthru
      _
  $region6: #{m2cnn_forward.9} parent=0 // loop_footer
    %s11 = sadd.s32 1, %s7
  $region7: #{m2cnn_forward.9} parent=0 // loop_footer_branch
    %6 = sbr.rel target = $region3
  $region8: #{m2cnn_forward.9} parent=0 // loop_exit
    _

// kernel: m2cnn_forward.11
$region0: #{m2cnn_forward.11}
  #allocation0 [shape = 'u32[]', space=smem, size = 0x4, offset = 0x4, fixed_abs, tag = 'smem constant byte address 0x4 - core index']
  #allocation1 [shape = 'u32[72,128]{1,0:T(1,128)}', space=vmem, size = 0x9000, scoped, tag = 'internal scratch']
  %s0 = inlined_call_operand.vmem [shape: bf16[208,256], index: 0, kind: input, shape index: {}]
  %s1 = inlined_call_operand.vmem [shape: bf16[208,128], index: 1, kind: output, shape index: {}]
  %s2 = sld [smem:[#allocation0]]
  $region37: #{m2cnn_forward.11} parent=0
    _
  %s4 = ssub.s32 1, %s2
  %s5 = scalar_select 0, %s4, %s2
  loop: start=0, step=1, limit=4
  $region2: #{m2cnn_forward.11} parent=0 // loop_pre_header
    _
  $region3: #{m2cnn_forward.11} parent=0 // loop_header
    %s7 = sphi 0, %s11
    %p8 = scmp.ge.s32.totalorder %s7, 4
    %s17 = sphi 0, %s19
    %s20 = sphi 0, %s17
    %s21 = sphi 0, %s20
    %s37 = sphi 0, %s21
    %s43 = sphi 0, %s45
    %s46 = sphi 0, %s43
    %s47 = sphi 0, %s46
    %s63 = sphi 0, %s47
  $region4: #{m2cnn_forward.11} parent=0 // loop_header_branch
    %10 = sbr.rel (%p8) target = $region8
  $region5: #{m2cnn_forward.11} parent=0 // loop_body
    %s12 = ssub.s32 %s7, 1
    %s13 = ssub.s32 %s7, 2
    %s14 = sadd.s32 %s7, 1
    %s15 = ssub.s32 %s7, %s14
    %p16 = scmp.eq.s32.totalorder %s15, 0
    %s18 = sadd.s32 %s17, 1
    %s19 = scalar_select %p16, %s17, %s18
    %p22 = pneg %p16
    %p23 = scmp.eq.s32.totalorder %s7, 1
    %p24 = por %p22, %p23
    %p25 = scmp.ne.s32.totalorder %s17, %s20
    %p26 = scmp.eq.s32.totalorder %s7, 0
    %p27 = por %p25, %p26
    %p28 = scmp.ne.s32.totalorder %s17, %s20
    %p29 = scmp.eq.s32.totalorder %s12, 1
    %p30 = por %p28, %p29
    %p31 = scmp.ne.s32.totalorder %s20, %s21
    %p32 = scmp.eq.s32.totalorder %s12, 0
    %p33 = por %p31, %p32
    %p34 = scmp.ne.s32.totalorder %s20, %s21
    %p35 = scmp.eq.s32.totalorder %s13, 1
    %p36 = por %p34, %p35
    %p38 = scmp.ne.s32.totalorder %s21, %s37
    %p39 = scmp.eq.s32.totalorder %s13, 0
    %p40 = por %p38, %p39
    %s41 = ssub.s32 %s7, %s14
    %p42 = scmp.eq.s32.totalorder %s41, 0
    %s44 = sadd.s32 %s43, 1
    %s45 = scalar_select %p42, %s43, %s44
    %p48 = pneg %p42
    %p49 = scmp.eq.s32.totalorder %s7, 1
    %p50 = por %p48, %p49
    %p51 = scmp.ne.s32.totalorder %s43, %s46
    %p52 = scmp.eq.s32.totalorder %s7, 0
    %p53 = por %p51, %p52
    %p54 = scmp.ne.s32.totalorder %s43, %s46
    %p55 = scmp.eq.s32.totalorder %s12, 1
    %p56 = por %p54, %p55
    %p57 = scmp.ne.s32.totalorder %s46, %s47
    %p58 = scmp.eq.s32.totalorder %s12, 0
    %p59 = por %p57, %p58
    %p60 = scmp.ne.s32.totalorder %s46, %s47
    %p61 = scmp.eq.s32.totalorder %s13, 1
    %p62 = por %p60, %p61
    %p64 = scmp.ne.s32.totalorder %s47, %s63
    %p65 = scmp.eq.s32.totalorder %s13, 0
    %p66 = por %p64, %p65
    %p67 = scmp.le.s32.totalorder 1, %s7
    %p68 = scmp.lt.s32.totalorder %s7, 3
    %p69 = pnand %p67, %p68
    %p70 = pneg %p69
    // Predicated region
    $region9: #{m2cnn_forward.11} parent=5 // pred_check
      _
    $region10: #{m2cnn_forward.11} parent=5 // pred_check_branch
      %72 = sbr.rel (%p69) target = $region12
    $region11: #{m2cnn_forward.11} parent=5 // pred_region
      %s73 = ssub.s32 %s7, 1
    $region12: #{m2cnn_forward.11} parent=5 // pred_fallthru
      _
    %p74 = scmp.lt.s32.totalorder %s7, 2
    // Predicated region
    $region13: #{m2cnn_forward.11} parent=5 // pred_check
      %p75 = pneg %p74
    $region14: #{m2cnn_forward.11} parent=5 // pred_check_branch
      %77 = sbr.rel (%p75) target = $region16
    $region15: #{m2cnn_forward.11} parent=5 // pred_region
      // Predicated region
      $region17: #{m2cnn_forward.11} parent=15 // pred_check
        %p78 = pneg %p27
      $region18: #{m2cnn_forward.11} parent=15 // pred_check_branch
        %80 = sbr.rel (%p78) target = $region20
      $region19: #{m2cnn_forward.11} parent=15 // pred_region
        %s81 = smul.u32 13, %s7
        %p82 = scmp.lt.s32.totalorder %s81, 25
        %s83 = scalar_select %p82, %s81, 25
        %s84 = smul.addr %s83, 2
        %s85 = smul.addr %s84, 4
        %s86 = scalar_lea.vmem %s0, %s85
        %s87 = smul.u32 13, %s7
      $region20: #{m2cnn_forward.11} parent=15 // pred_fallthru
        _
    $region16: #{m2cnn_forward.11} parent=5 // pred_fallthru
      _
    %p88 = scmp.le.s32.totalorder 1, %s7
    %p89 = scmp.lt.s32.totalorder %s7, 3
    %p90 = pnand %p88, %p89
    %p91 = pneg %p90
    // Predicated region
    $region21: #{m2cnn_forward.11} parent=5 // pred_check
      _
    $region22: #{m2cnn_forward.11} parent=5 // pred_check_branch
      %93 = sbr.rel (%p90) target = $region24
    $region23: #{m2cnn_forward.11} parent=5 // pred_region
      %s94 = ssub.s32 %s7, 1
      %s95 = smul.u32 13, %s12
      %p96 = scmp.lt.s32.totalorder %s95, 25
      %s97 = scalar_select %p96, %s95, 25
      %s98 = smul.addr %s97, 2
      %s99 = smul.addr %s98, 4
      %s100 = scalar_lea.vmem %s0, %s99
      %p101 = pneg %p33
      %p102 = pneg %p30
      %p103 = pneg %p59
      %p104 = pneg %p56
      %s105 = smul.u32 13, %s12
      %p106 = scmp.lt.s32.totalorder %s105, 25
      %s107 = scalar_select %p106, %s105, 25
      %s108 = smul.addr %s107, 4
      %s109 = scalar_lea.vmem %s1, %s108
      %s110 = smul.u32 13, %s12
      %p111 = scmp.lt.s32.totalorder %s110, 25
      %s112 = scalar_select %p111, %s110, 25
      %s113 = smul.addr %s112, 2
      %s114 = smul.addr %s113, 4
      %s115 = scalar_lea.vmem %s0, %s114
      %s116 = smul.u32 13, %s12
      %s117 = smul.u32 13, %s12
      %p118 = scmp.lt.s32.totalorder %s117, 25
      %s119 = scalar_select %p118, %s117, 25
      %s120 = smul.addr %s119, 4
      %s121 = scalar_lea.vmem %s1, %s120
      %s122 = smul.u32 13, %s12
      %v123 = vld [vmem:[%s115] sm:$0xff]
      %v124 = vld [vmem:[%s115 + $0x8] sm:$0xff]
      %v125 = vld [vmem:[%s115 + $0x10] sm:$0xff]
      %v126 = vld [vmem:[%s115 + $0x18] sm:$0xff]
      %v127 = vld [vmem:[%s115 + $0x20] sm:$0xff]
      %v128 = vld [vmem:[%s115 + $0x28] sm:$0xff]
      %v129 = vld [vmem:[%s115 + $0x30] sm:$0xff]
      %v130 = vld [vmem:[%s115 + $0x38] sm:$0xff]
      %v131 = vld [vmem:[%s115 + $0x40] sm:$0xff]
      %v132 = vld [vmem:[%s115 + $0x48] sm:$0xff]
      %v133 = vld [vmem:[%s115 + $0x50] sm:$0xff]
      %v134 = vld [vmem:[%s115 + $0x58] sm:$0xff]
      %v135 = vld [vmem:[%s115 + $0x60] sm:$0xff]
      %v136 = vunpack.c.l.bf16 %v123
      %v137 = vunpack.c.l.bf16 %v124
      %v138 = vunpack.c.l.bf16 %v125
      %v139 = vunpack.c.l.bf16 %v126
      %v140 = vunpack.c.l.bf16 %v127
      %v141 = vunpack.c.l.bf16 %v128
      %v142 = vunpack.c.l.bf16 %v129
      %v143 = vunpack.c.l.bf16 %v130
      %v144 = vunpack.c.l.bf16 %v131
      %v145 = vunpack.c.l.bf16 %v132
      %v146 = vunpack.c.l.bf16 %v133
      %v147 = vunpack.c.l.bf16 %v134
      %v148 = vunpack.c.l.bf16 %v135
      %v162 = vrot.slane %v123, 4
      %v163 = vrot.slane %v124, 4
      %v164 = vrot.slane %v125, 4
      %v165 = vrot.slane %v126, 4
      %v166 = vrot.slane %v127, 4
      %v167 = vrot.slane %v128, 4
      %v168 = vrot.slane %v129, 4
      %v169 = vrot.slane %v130, 4
      %v170 = vrot.slane %v131, 4
      %v171 = vrot.slane %v132, 4
      %v172 = vrot.slane %v133, 4
      %v173 = vrot.slane %v134, 4
      %v174 = vrot.slane %v135, 4
      %v188 = vunpack.c.l.bf16 %v162
      %v189 = vunpack.c.l.bf16 %v163
      %v190 = vunpack.c.l.bf16 %v164
      %v191 = vunpack.c.l.bf16 %v165
      %v192 = vunpack.c.l.bf16 %v166
      %v193 = vunpack.c.l.bf16 %v167
      %v194 = vunpack.c.l.bf16 %v168
      %v195 = vunpack.c.l.bf16 %v169
      %v196 = vunpack.c.l.bf16 %v170
      %v197 = vunpack.c.l.bf16 %v171
      %v198 = vunpack.c.l.bf16 %v172
      %v199 = vunpack.c.l.bf16 %v173
      %v200 = vunpack.c.l.bf16 %v174
      %v201 = vmax.f32 %v136, %v188
      %v202 = vmax.f32 %v137, %v189
      %v203 = vmax.f32 %v138, %v190
      %v204 = vmax.f32 %v139, %v191
      %v205 = vmax.f32 %v140, %v192
      %v206 = vmax.f32 %v141, %v193
      %v207 = vmax.f32 %v142, %v194
      %v208 = vmax.f32 %v143, %v195
      %v209 = vmax.f32 %v144, %v196
      %v210 = vmax.f32 %v145, %v197
      %v211 = vmax.f32 %v146, %v198
      %v212 = vmax.f32 %v147, %v199
      %v213 = vmax.f32 %v148, %v200
      %v214 = vpack.c.bf16 %v201, %v201
      %v215 = vpack.c.bf16 %v202, %v202
      %v216 = vpack.c.bf16 %v203, %v203
      %v217 = vpack.c.bf16 %v204, %v204
      %v218 = vpack.c.bf16 %v205, %v205
      %v219 = vpack.c.bf16 %v206, %v206
      %v220 = vpack.c.bf16 %v207, %v207
      %v221 = vpack.c.bf16 %v208, %v208
      %v222 = vpack.c.bf16 %v209, %v209
      %v223 = vpack.c.bf16 %v210, %v210
      %v224 = vpack.c.bf16 %v211, %v211
      %v225 = vpack.c.bf16 %v212, %v212
      %v226 = vpack.c.bf16 %v213, %v213
      %227 = vst [vmem:[%s121] sm:$0xf] %v214
      %228 = vst [vmem:[%s121 + $0x4] sm:$0xf] %v215
      %229 = vst [vmem:[%s121 + $0x8] sm:$0xf] %v216
      %230 = vst [vmem:[%s121 + $0xc] sm:$0xf] %v217
      %231 = vst [vmem:[%s121 + $0x10] sm:$0xf] %v218
      %232 = vst [vmem:[%s121 + $0x14] sm:$0xf] %v219
      %233 = vst [vmem:[%s121 + $0x18] sm:$0xf] %v220
      %234 = vst [vmem:[%s121 + $0x1c] sm:$0xf] %v221
      %235 = vst [vmem:[%s121 + $0x20] sm:$0xf] %v222
      %236 = vst [vmem:[%s121 + $0x24] sm:$0xf] %v223
      %237 = vst [vmem:[%s121 + $0x28] sm:$0xf] %v224
      %238 = vst [vmem:[%s121 + $0x2c] sm:$0xf] %v225
      %239 = vst [vmem:[%s121 + $0x30] sm:$0xf] %v226
      %s240 = smul.u32 13, %s12
      %p241 = scmp.lt.s32.totalorder %s240, 25
      %s242 = scalar_select %p241, %s240, 25
      %s243 = smul.addr %s242, 4
      %s244 = scalar_lea.vmem %s1, %s243
      // Predicated region
      $region25: #{m2cnn_forward.11} parent=23 // pred_check
        %p245 = pneg %p56
      $region26: #{m2cnn_forward.11} parent=23 // pred_check_branch
        %247 = sbr.rel (%p245) target = $region28
      $region27: #{m2cnn_forward.11} parent=23 // pred_region
        %s248 = smul.u32 13, %s12
      $region28: #{m2cnn_forward.11} parent=23 // pred_fallthru
        _
    $region24: #{m2cnn_forward.11} parent=5 // pred_fallthru
      _
    %p249 = scmp.le.s32.totalorder 2, %s7
    // Predicated region
    $region29: #{m2cnn_forward.11} parent=5 // pred_check
      %p250 = pneg %p249
    $region30: #{m2cnn_forward.11} parent=5 // pred_check_branch
      %252 = sbr.rel (%p250) target = $region32
    $region31: #{m2cnn_forward.11} parent=5 // pred_region
      %s253 = ssub.s32 %s7, 2
      // Predicated region
      $region33: #{m2cnn_forward.11} parent=31 // pred_check
        %p254 = pneg %p62
      $region34: #{m2cnn_forward.11} parent=31 // pred_check_branch
        %256 = sbr.rel (%p254) target = $region36
      $region35: #{m2cnn_forward.11} parent=31 // pred_region
        %s257 = smul.u32 13, %s13
        %p258 = scmp.lt.s32.totalorder %s257, 25
        %s259 = scalar_select %p258, %s257, 25
        %s260 = smul.addr %s259, 4
        %s261 = scalar_lea.vmem %s1, %s260
      $region36: #{m2cnn_forward.11} parent=31 // pred_fallthru
        _
    $region32: #{m2cnn_forward.11} parent=5 // pred_fallthru
      _
  $region6: #{m2cnn_forward.11} parent=0 // loop_footer
    %s11 = sadd.s32 1, %s7
  $region7: #{m2cnn_forward.11} parent=0 // loop_footer_branch
    %6 = sbr.rel target = $region3
  $region8: #{m2cnn_forward.11} parent=0 // loop_exit
    _

// kernel: m2cnn_forward.12
$region0: #{m2cnn_forward.12}
  #allocation0 [shape = 'u32[]', space=smem, size = 0x4, offset = 0x4, fixed_abs, tag = 'smem constant byte address 0x4 - core index']
  #allocation1 [shape = 'u32[72,128]{1,0:T(1,128)}', space=vmem, size = 0x9000, scoped, tag = 'internal scratch']
  %s0 = inlined_call_operand.vmem [shape: bf16[16,1792], index: 0, kind: input, shape index: {}]
  %s1 = inlined_call_operand.vmem [shape: bf16[16,896], index: 1, kind: output, shape index: {}]
  %s2 = sld [smem:[#allocation0]]
  $region37: #{m2cnn_forward.12} parent=0
    _
  %s4 = ssub.s32 1, %s2
  %s5 = scalar_select 0, %s4, %s2
  loop: start=0, step=1, limit=4
  $region2: #{m2cnn_forward.12} parent=0 // loop_pre_header
    _
  $region3: #{m2cnn_forward.12} parent=0 // loop_header
    %s7 = sphi 0, %s11
    %p8 = scmp.ge.s32.totalorder %s7, 4
    %s17 = sphi 0, %s19
    %s20 = sphi 0, %s17
    %s21 = sphi 0, %s20
    %s37 = sphi 0, %s21
    %s43 = sphi 0, %s45
    %s46 = sphi 0, %s43
    %s47 = sphi 0, %s46
    %s63 = sphi 0, %s47
  $region4: #{m2cnn_forward.12} parent=0 // loop_header_branch
    %10 = sbr.rel (%p8) target = $region8
  $region5: #{m2cnn_forward.12} parent=0 // loop_body
    %s12 = ssub.s32 %s7, 1
    %s13 = ssub.s32 %s7, 2
    %s14 = sadd.s32 %s7, 1
    %s15 = ssub.s32 %s7, %s14
    %p16 = scmp.eq.s32.totalorder %s15, 0
    %s18 = sadd.s32 %s17, 1
    %s19 = scalar_select %p16, %s17, %s18
    %p22 = pneg %p16
    %p23 = scmp.eq.s32.totalorder %s7, 1
    %p24 = por %p22, %p23
    %p25 = scmp.ne.s32.totalorder %s17, %s20
    %p26 = scmp.eq.s32.totalorder %s7, 0
    %p27 = por %p25, %p26
    %p28 = scmp.ne.s32.totalorder %s17, %s20
    %p29 = scmp.eq.s32.totalorder %s12, 1
    %p30 = por %p28, %p29
    %p31 = scmp.ne.s32.totalorder %s20, %s21
    %p32 = scmp.eq.s32.totalorder %s12, 0
    %p33 = por %p31, %p32
    %p34 = scmp.ne.s32.totalorder %s20, %s21
    %p35 = scmp.eq.s32.totalorder %s13, 1
    %p36 = por %p34, %p35
    %p38 = scmp.ne.s32.totalorder %s21, %s37
    %p39 = scmp.eq.s32.totalorder %s13, 0
    %p40 = por %p38, %p39
    %s41 = ssub.s32 %s7, %s14
    %p42 = scmp.eq.s32.totalorder %s41, 0
    %s44 = sadd.s32 %s43, 1
    %s45 = scalar_select %p42, %s43, %s44
    %p48 = pneg %p42
    %p49 = scmp.eq.s32.totalorder %s7, 1
    %p50 = por %p48, %p49
    %p51 = scmp.ne.s32.totalorder %s43, %s46
    %p52 = scmp.eq.s32.totalorder %s7, 0
    %p53 = por %p51, %p52
    %p54 = scmp.ne.s32.totalorder %s43, %s46
    %p55 = scmp.eq.s32.totalorder %s12, 1
    %p56 = por %p54, %p55
    %p57 = scmp.ne.s32.totalorder %s46, %s47
    %p58 = scmp.eq.s32.totalorder %s12, 0
    %p59 = por %p57, %p58
    %p60 = scmp.ne.s32.totalorder %s46, %s47
    %p61 = scmp.eq.s32.totalorder %s13, 1
    %p62 = por %p60, %p61
    %p64 = scmp.ne.s32.totalorder %s47, %s63
    %p65 = scmp.eq.s32.totalorder %s13, 0
    %p66 = por %p64, %p65
    %p67 = scmp.le.s32.totalorder 1, %s7
    %p68 = scmp.lt.s32.totalorder %s7, 3
    %p69 = pnand %p67, %p68
    %p70 = pneg %p69
    // Predicated region
    $region9: #{m2cnn_forward.12} parent=5 // pred_check
      _
    $region10: #{m2cnn_forward.12} parent=5 // pred_check_branch
      %72 = sbr.rel (%p69) target = $region12
    $region11: #{m2cnn_forward.12} parent=5 // pred_region
      %s73 = ssub.s32 %s7, 1
    $region12: #{m2cnn_forward.12} parent=5 // pred_fallthru
      _
    %p74 = scmp.lt.s32.totalorder %s7, 2
    // Predicated region
    $region13: #{m2cnn_forward.12} parent=5 // pred_check
      %p75 = pneg %p74
    $region14: #{m2cnn_forward.12} parent=5 // pred_check_branch
      %77 = sbr.rel (%p75) target = $region16
    $region15: #{m2cnn_forward.12} parent=5 // pred_region
      // Predicated region
      $region17: #{m2cnn_forward.12} parent=15 // pred_check
        %p78 = pneg %p27
      $region18: #{m2cnn_forward.12} parent=15 // pred_check_branch
        %80 = sbr.rel (%p78) target = $region20
      $region19: #{m2cnn_forward.12} parent=15 // pred_region
        %p81 = scmp.lt.s32.totalorder %s7, 1
        %s82 = scalar_select %p81, %s7, 1
        %s83 = smul.addr %s82, 14
        %s84 = smul.addr %s83, 4
        %s85 = scalar_lea.vmem %s0, %s84
      $region20: #{m2cnn_forward.12} parent=15 // pred_fallthru
        _
    $region16: #{m2cnn_forward.12} parent=5 // pred_fallthru
      _
    %p86 = scmp.le.s32.totalorder 1, %s7
    %p87 = scmp.lt.s32.totalorder %s7, 3
    %p88 = pnand %p86, %p87
    %p89 = pneg %p88
    // Predicated region
    $region21: #{m2cnn_forward.12} parent=5 // pred_check
      _
    $region22: #{m2cnn_forward.12} parent=5 // pred_check_branch
      %91 = sbr.rel (%p88) target = $region24
    $region23: #{m2cnn_forward.12} parent=5 // pred_region
      %s92 = ssub.s32 %s7, 1
      %p93 = scmp.lt.s32.totalorder %s12, 1
      %s94 = scalar_select %p93, %s12, 1
      %s95 = smul.addr %s94, 14
      %s96 = smul.addr %s95, 4
      %s97 = scalar_lea.vmem %s0, %s96
      %p98 = pneg %p33
      %p99 = pneg %p30
      %p100 = pneg %p59
      %p101 = pneg %p56
      %p102 = scmp.lt.s32.totalorder %s12, 1
      %s103 = scalar_select %p102, %s12, 1
      %s104 = smul.addr %s103, 7
      %s105 = smul.addr %s104, 4
      %s106 = scalar_lea.vmem %s1, %s105
      %p107 = scmp.lt.s32.totalorder %s12, 1
      %s108 = scalar_select %p107, %s12, 1
      %s109 = smul.addr %s108, 14
      %s110 = smul.addr %s109, 4
      %s111 = scalar_lea.vmem %s0, %s110
      %p112 = scmp.lt.s32.totalorder %s12, 1
      %s113 = scalar_select %p112, %s12, 1
      %s114 = smul.addr %s113, 7
      %s115 = smul.addr %s114, 4
      %s116 = scalar_lea.vmem %s1, %s115
      %v117 = vld [vmem:[%s111] sm:$0xff]
      %v118 = vld [vmem:[%s111 + $0x8] sm:$0xff]
      %v119 = vld [vmem:[%s111 + $0x10] sm:$0xff]
      %v120 = vld [vmem:[%s111 + $0x18] sm:$0xff]
      %v121 = vld [vmem:[%s111 + $0x20] sm:$0xff]
      %v122 = vld [vmem:[%s111 + $0x28] sm:$0xff]
      %v123 = vld [vmem:[%s111 + $0x30] sm:$0xff]
      %v124 = vunpack.c.l.bf16 %v117
      %v125 = vunpack.c.h.bf16 %v117
      %v126 = vunpack.c.l.bf16 %v118
      %v127 = vunpack.c.h.bf16 %v118
      %v128 = vunpack.c.l.bf16 %v119
      %v129 = vunpack.c.h.bf16 %v119
      %v130 = vunpack.c.l.bf16 %v120
      %v135 = vrot.slane %v120, 4
      %v136 = vrot.slane %v121, 4
      %v137 = vrot.slane %v122, 4
      %v138 = vrot.slane %v123, 4
      %vm139 = vcmask 1043456
      %v140 = vsel %vm139, %v135, %v136
      %v141 = vsel %vm139, %v136, %v137
      %v142 = vsel %vm139, %v137, %v138
      %v147 = vunpack.c.l.bf16 %v140
      %v148 = vunpack.c.h.bf16 %v140
      %v149 = vunpack.c.l.bf16 %v141
      %v150 = vunpack.c.h.bf16 %v141
      %v151 = vunpack.c.l.bf16 %v142
      %v152 = vunpack.c.h.bf16 %v142
      %v153 = vunpack.c.l.bf16 %v138
      %v154 = vmax.f32 %v124, %v147
      %v155 = vmax.f32 %v125, %v148
      %v156 = vmax.f32 %v126, %v149
      %v157 = vmax.f32 %v127, %v150
      %v158 = vmax.f32 %v128, %v151
      %v159 = vmax.f32 %v129, %v152
      %v160 = vmax.f32 %v130, %v153
      %v161 = vpack.c.bf16 %v155, %v154
      %v162 = vpack.c.bf16 %v157, %v156
      %v163 = vpack.c.bf16 %v159, %v158
      %v164 = vpack.c.bf16 %v160, %v160
      %165 = vst [vmem:[%s116] sm:$0xff] %v161
      %166 = vst [vmem:[%s116 + $0x8] sm:$0xff] %v162
      %167 = vst [vmem:[%s116 + $0x10] sm:$0xff] %v163
      %168 = vst [vmem:[%s116 + $0x18] sm:$0xf] %v164
      %p169 = scmp.lt.s32.totalorder %s12, 1
      %s170 = scalar_select %p169, %s12, 1
      %s171 = smul.addr %s170, 7
      %s172 = smul.addr %s171, 4
      %s173 = scalar_lea.vmem %s1, %s172
      // Predicated region
      $region25: #{m2cnn_forward.12} parent=23 // pred_check
        %p174 = pneg %p56
      $region26: #{m2cnn_forward.12} parent=23 // pred_check_branch
        %176 = sbr.rel (%p174) target = $region28
      $region27: #{m2cnn_forward.12} parent=23 // pred_region
        _
      $region28: #{m2cnn_forward.12} parent=23 // pred_fallthru
        _
    $region24: #{m2cnn_forward.12} parent=5 // pred_fallthru
      _
    %p177 = scmp.le.s32.totalorder 2, %s7
    // Predicated region
    $region29: #{m2cnn_forward.12} parent=5 // pred_check
      %p178 = pneg %p177
    $region30: #{m2cnn_forward.12} parent=5 // pred_check_branch
      %180 = sbr.rel (%p178) target = $region32
    $region31: #{m2cnn_forward.12} parent=5 // pred_region
      %s181 = ssub.s32 %s7, 2
      // Predicated region
      $region33: #{m2cnn_forward.12} parent=31 // pred_check
        %p182 = pneg %p62
      $region34: #{m2cnn_forward.12} parent=31 // pred_check_branch
        %184 = sbr.rel (%p182) target = $region36
      $region35: #{m2cnn_forward.12} parent=31 // pred_region
        %p185 = scmp.lt.s32.totalorder %s13, 1
        %s186 = scalar_select %p185, %s13, 1
        %s187 = smul.addr %s186, 7
        %s188 = smul.addr %s187, 4
        %s189 = scalar_lea.vmem %s1, %s188
      $region36: #{m2cnn_forward.12} parent=31 // pred_fallthru
        _
    $region32: #{m2cnn_forward.12} parent=5 // pred_fallthru
      _
  $region6: #{m2cnn_forward.12} parent=0 // loop_footer
    %s11 = sadd.s32 1, %s7
  $region7: #{m2cnn_forward.12} parent=0 // loop_footer_branch
    %6 = sbr.rel target = $region3
  $region8: #{m2cnn_forward.12} parent=0 // loop_exit
    _

// kernel: m2cnn_forward.10
$region0: #{m2cnn_forward.10}
  #allocation0 [shape = 'u32[]', space=smem, size = 0x4, offset = 0x4, fixed_abs, tag = 'smem constant byte address 0x4 - core index']
  #allocation1 [shape = 'u32[72,128]{1,0:T(1,128)}', space=vmem, size = 0x9000, scoped, tag = 'internal scratch']
  %s0 = inlined_call_operand.vmem [shape: bf16[400,3200], index: 0, kind: input, shape index: {}]
  %s1 = inlined_call_operand.vmem [shape: bf16[3200,128], index: 1, kind: input, shape index: {}]
  %s2 = inlined_call_operand.vmem [shape: f32[1,128], index: 2, kind: input, shape index: {}]
  %s3 = inlined_call_operand.vmem [shape: bf16[400,128], index: 3, kind: output, shape index: {}]
  %s4 = sld [smem:[#allocation0]]
  $region45: #{m2cnn_forward.10} parent=0
    _
  %s6 = ssub.s32 1, %s4
  %s7 = scalar_select 0, %s6, %s4
  loop: start=0, step=1, limit=4
  $region2: #{m2cnn_forward.10} parent=0 // loop_pre_header
    _
  $region3: #{m2cnn_forward.10} parent=0 // loop_header
    %s9 = sphi 0, %s13
    %p10 = scmp.ge.s32.totalorder %s9, 4
    %s19 = sphi 0, %s21
    %s22 = sphi 0, %s19
    %s23 = sphi 0, %s22
    %s39 = sphi 0, %s23
    %s43 = sphi 0, %s43
    %s45 = sphi 0, %s43
    %s46 = sphi 0, %s45
    %s60 = sphi 0, %s46
    %s64 = sphi 0, %s64
    %s66 = sphi 0, %s64
    %s67 = sphi 0, %s66
    %s81 = sphi 0, %s67
    %s87 = sphi 0, %s89
    %s90 = sphi 0, %s87
    %s91 = sphi 0, %s90
    %s107 = sphi 0, %s91
  $region4: #{m2cnn_forward.10} parent=0 // loop_header_branch
    %12 = sbr.rel (%p10) target = $region8
  $region5: #{m2cnn_forward.10} parent=0 // loop_body
    %s14 = ssub.s32 %s9, 1
    %s15 = ssub.s32 %s9, 2
    %s16 = sadd.s32 %s9, 1
    %s17 = ssub.s32 %s9, %s16
    %p18 = scmp.eq.s32.totalorder %s17, 0
    %s20 = sadd.s32 %s19, 1
    %s21 = scalar_select %p18, %s19, %s20
    %p24 = pneg %p18
    %p25 = scmp.eq.s32.totalorder %s9, 1
    %p26 = por %p24, %p25
    %p27 = scmp.ne.s32.totalorder %s19, %s22
    %p28 = scmp.eq.s32.totalorder %s9, 0
    %p29 = por %p27, %p28
    %p30 = scmp.ne.s32.totalorder %s19, %s22
    %p31 = scmp.eq.s32.totalorder %s14, 1
    %p32 = por %p30, %p31
    %p33 = scmp.ne.s32.totalorder %s22, %s23
    %p34 = scmp.eq.s32.totalorder %s14, 0
    %p35 = por %p33, %p34
    %p36 = scmp.ne.s32.totalorder %s22, %s23
    %p37 = scmp.eq.s32.totalorder %s15, 1
    %p38 = por %p36, %p37
    %p40 = scmp.ne.s32.totalorder %s23, %s39
    %p41 = scmp.eq.s32.totalorder %s15, 0
    %p42 = por %p40, %p41
    %s44 = sadd.s32 %s43, 1
    %p47 = scmp.eq.s32.totalorder %s9, 1
    %p48 = scmp.ne.s32.totalorder %s43, %s45
    %p49 = scmp.eq.s32.totalorder %s9, 0
    %p50 = por %p48, %p49
    %p51 = scmp.ne.s32.totalorder %s43, %s45
    %p52 = scmp.eq.s32.totalorder %s14, 1
    %p53 = por %p51, %p52
    %p54 = scmp.ne.s32.totalorder %s45, %s46
    %p55 = scmp.eq.s32.totalorder %s14, 0
    %p56 = por %p54, %p55
    %p57 = scmp.ne.s32.totalorder %s45, %s46
    %p58 = scmp.eq.s32.totalorder %s15, 1
    %p59 = por %p57, %p58
    %p61 = scmp.ne.s32.totalorder %s46, %s60
    %p62 = scmp.eq.s32.totalorder %s15, 0
    %p63 = por %p61, %p62
    %s65 = sadd.s32 %s64, 1
    %p68 = scmp.eq.s32.totalorder %s9, 1
    %p69 = scmp.ne.s32.totalorder %s64, %s66
    %p70 = scmp.eq.s32.totalorder %s9, 0
    %p71 = por %p69, %p70
    %p72 = scmp.ne.s32.totalorder %s64, %s66
    %p73 = scmp.eq.s32.totalorder %s14, 1
    %p74 = por %p72, %p73
    %p75 = scmp.ne.s32.totalorder %s66, %s67
    %p76 = scmp.eq.s32.totalorder %s14, 0
    %p77 = por %p75, %p76
    %p78 = scmp.ne.s32.totalorder %s66, %s67
    %p79 = scmp.eq.s32.totalorder %s15, 1
    %p80 = por %p78, %p79
    %p82 = scmp.ne.s32.totalorder %s67, %s81
    %p83 = scmp.eq.s32.totalorder %s15, 0
    %p84 = por %p82, %p83
    %s85 = ssub.s32 %s9, %s16
    %p86 = scmp.eq.s32.totalorder %s85, 0
    %s88 = sadd.s32 %s87, 1
    %s89 = scalar_select %p86, %s87, %s88
    %p92 = pneg %p86
    %p93 = scmp.eq.s32.totalorder %s9, 1
    %p94 = por %p92, %p93
    %p95 = scmp.ne.s32.totalorder %s87, %s90
    %p96 = scmp.eq.s32.totalorder %s9, 0
    %p97 = por %p95, %p96
    %p98 = scmp.ne.s32.totalorder %s87, %s90
    %p99 = scmp.eq.s32.totalorder %s14, 1
    %p100 = por %p98, %p99
    %p101 = scmp.ne.s32.totalorder %s90, %s91
    %p102 = scmp.eq.s32.totalorder %s14, 0
    %p103 = por %p101, %p102
    %p104 = scmp.ne.s32.totalorder %s90, %s91
    %p105 = scmp.eq.s32.totalorder %s15, 1
    %p106 = por %p104, %p105
    %p108 = scmp.ne.s32.totalorder %s91, %s107
    %p109 = scmp.eq.s32.totalorder %s15, 0
    %p110 = por %p108, %p109
    %p111 = scmp.le.s32.totalorder 1, %s9
    %p112 = scmp.lt.s32.totalorder %s9, 3
    %p113 = pnand %p111, %p112
    %p114 = pneg %p113
    // Predicated region
    $region9: #{m2cnn_forward.10} parent=5 // pred_check
      _
    $region10: #{m2cnn_forward.10} parent=5 // pred_check_branch
      %116 = sbr.rel (%p113) target = $region12
    $region11: #{m2cnn_forward.10} parent=5 // pred_region
      %s117 = ssub.s32 %s9, 1
      // Predicated region
      $region13: #{m2cnn_forward.10} parent=11 // pred_check
        %p118 = pneg %p56
      $region14: #{m2cnn_forward.10} parent=11 // pred_check_branch
        %120 = sbr.rel (%p118) target = $region16
      $region15: #{m2cnn_forward.10} parent=11 // pred_region
        _
      $region16: #{m2cnn_forward.10} parent=11 // pred_fallthru
        _
      // Predicated region
      $region17: #{m2cnn_forward.10} parent=11 // pred_check
        %p121 = pneg %p77
      $region18: #{m2cnn_forward.10} parent=11 // pred_check_branch
        %123 = sbr.rel (%p121) target = $region20
      $region19: #{m2cnn_forward.10} parent=11 // pred_region
        _
      $region20: #{m2cnn_forward.10} parent=11 // pred_fallthru
        _
    $region12: #{m2cnn_forward.10} parent=5 // pred_fallthru
      _
    %p124 = scmp.lt.s32.totalorder %s9, 2
    // Predicated region
    $region21: #{m2cnn_forward.10} parent=5 // pred_check
      %p125 = pneg %p124
    $region22: #{m2cnn_forward.10} parent=5 // pred_check_branch
      %127 = sbr.rel (%p125) target = $region24
    $region23: #{m2cnn_forward.10} parent=5 // pred_region
      // Predicated region
      $region25: #{m2cnn_forward.10} parent=23 // pred_check
        %p128 = pneg %p29
      $region26: #{m2cnn_forward.10} parent=23 // pred_check_branch
        %130 = sbr.rel (%p128) target = $region28
      $region27: #{m2cnn_forward.10} parent=23 // pred_region
        %s131 = smul.u32 25, %s9
        %p132 = scmp.lt.s32.totalorder %s131, 49
        %s133 = scalar_select %p132, %s131, 49
        %s134 = smul.addr %s133, 25
        %s135 = smul.addr %s134, 4
        %s136 = scalar_lea.vmem %s0, %s135
        %s137 = smul.u32 25, %s9
      $region28: #{m2cnn_forward.10} parent=23 // pred_fallthru
        _
    $region24: #{m2cnn_forward.10} parent=5 // pred_fallthru
      _
    %p138 = scmp.le.s32.totalorder 1, %s9
    %p139 = scmp.lt.s32.totalorder %s9, 3
    %p140 = pnand %p138, %p139
    %p141 = pneg %p140
    // Predicated region
    $region29: #{m2cnn_forward.10} parent=5 // pred_check
      _
    $region30: #{m2cnn_forward.10} parent=5 // pred_check_branch
      %143 = sbr.rel (%p140) target = $region32
    $region31: #{m2cnn_forward.10} parent=5 // pred_region
      %s144 = ssub.s32 %s9, 1
      %s145 = smul.u32 25, %s14
      %p146 = scmp.lt.s32.totalorder %s145, 49
      %s147 = scalar_select %p146, %s145, 49
      %s148 = smul.addr %s147, 25
      %s149 = smul.addr %s148, 4
      %s150 = scalar_lea.vmem %s0, %s149
      %p151 = pneg %p35
      %p152 = pneg %p32
      %p153 = pneg %p56
      %p154 = pneg %p53
      %p155 = pneg %p77
      %p156 = pneg %p74
      %p157 = pneg %p103
      %p158 = pneg %p100
      %s159 = smul.u32 25, %s14
      %p160 = scmp.lt.s32.totalorder %s159, 49
      %s161 = scalar_select %p160, %s159, 49
      %s162 = smul.addr %s161, 4
      %s163 = scalar_lea.vmem %s3, %s162
      %s164 = smul.u32 25, %s14
      %p165 = scmp.lt.s32.totalorder %s164, 49
      %s166 = scalar_select %p165, %s164, 49
      %s167 = smul.addr %s166, 25
      %s168 = smul.addr %s167, 4
      %s169 = scalar_lea.vmem %s0, %s168
      %s170 = smul.u32 25, %s14
      %s171 = smul.u32 25, %s14
      %p172 = scmp.lt.s32.totalorder %s171, 49
      %s173 = scalar_select %p172, %s171, 49
      %s174 = smul.addr %s173, 4
      %s175 = scalar_lea.vmem %s3, %s174
      %s176 = smul.u32 25, %s14
      %v177 = vld [vmem:[%s169] sm:$0xff]
      %v178 = vld [vmem:[%s169 + $0x8] sm:$0xff]
      %v179 = vld [vmem:[%s169 + $0x10] sm:$0xff]
      %v180 = vld [vmem:[%s169 + $0x18] sm:$0xff]
      %v181 = vld [vmem:[%s169 + $0x20] sm:$0xff]
      %v182 = vld [vmem:[%s169 + $0x28] sm:$0xff]
      %v183 = vld [vmem:[%s169 + $0x30] sm:$0xff]
      %v184 = vld [vmem:[%s169 + $0x38] sm:$0xff]
      %v185 = vld [vmem:[%s169 + $0x40] sm:$0xff]
      %v186 = vld [vmem:[%s169 + $0x48] sm:$0xff]
      %v187 = vld [vmem:[%s169 + $0x50] sm:$0xff]
      %v188 = vld [vmem:[%s169 + $0x58] sm:$0xff]
      %v189 = vld [vmem:[%s169 + $0x60] sm:$0xf]
      %v190 = vld [vmem:[%s169 + $0x64] sm:$0xff]
      %v191 = vld [vmem:[%s169 + $0x6c] sm:$0xff]
      %v192 = vld [vmem:[%s169 + $0x74] sm:$0xff]
      %v193 = vld [vmem:[%s169 + $0x7c] sm:$0xff]
      %v194 = vld [vmem:[%s169 + $0x84] sm:$0xff]
      %v195 = vld [vmem:[%s169 + $0x8c] sm:$0xff]
      %v196 = vld [vmem:[%s169 + $0x94] sm:$0xff]
      %v197 = vld [vmem:[%s169 + $0x9c] sm:$0xff]
      %v198 = vld [vmem:[%s169 + $0xa4] sm:$0xff]
      %v199 = vld [vmem:[%s169 + $0xac] sm:$0xff]
      %v200 = vld [vmem:[%s169 + $0xb4] sm:$0xff]
      %v201 = vld [vmem:[%s169 + $0xbc] sm:$0xff]
      %v202 = vld [vmem:[%s169 + $0xc4] sm:$0xf]
      %v203 = vld [vmem:[%s169 + $0xc8] sm:$0xff]
      %v204 = vld [vmem:[%s169 + $0xd0] sm:$0xff]
      %v205 = vld [vmem:[%s169 + $0xd8] sm:$0xff]
      %v206 = vld [vmem:[%s169 + $0xe0] sm:$0xff]
      %v207 = vld [vmem:[%s169 + $0xe8] sm:$0xff]
      %v208 = vld [vmem:[%s169 + $0xf0] sm:$0xff]
      %v209 = vld [vmem:[%s169 + $0xf8] sm:$0xff]
      %v210 = vld [vmem:[%s169 + $0x100] sm:$0xff]
      %v211 = vld [vmem:[%s169 + $0x108] sm:$0xff]
      %v212 = vld [vmem:[%s169 + $0x110] sm:$0xff]
      %v213 = vld [vmem:[%s169 + $0x118] sm:$0xff]
      %v214 = vld [vmem:[%s169 + $0x120] sm:$0xff]
      %v215 = vld [vmem:[%s169 + $0x128] sm:$0xf]
      %v216 = vld [vmem:[%s169 + $0x12c] sm:$0xff]
      %v217 = vld [vmem:[%s169 + $0x134] sm:$0xff]
      %v218 = vld [vmem:[%s169 + $0x13c] sm:$0xff]
      %v219 = vld [vmem:[%s169 + $0x144] sm:$0xff]
      %v220 = vld [vmem:[%s169 + $0x14c] sm:$0xff]
      %v221 = vld [vmem:[%s169 + $0x154] sm:$0xff]
      %v222 = vld [vmem:[%s169 + $0x15c] sm:$0xff]
      %v223 = vld [vmem:[%s169 + $0x164] sm:$0xff]
      %v224 = vld [vmem:[%s169 + $0x16c] sm:$0xff]
      %v225 = vld [vmem:[%s169 + $0x174] sm:$0xff]
      %v226 = vld [vmem:[%s169 + $0x17c] sm:$0xff]
      %v227 = vld [vmem:[%s169 + $0x184] sm:$0xff]
      %v228 = vld [vmem:[%s169 + $0x18c] sm:$0xf]
      %v229 = vld [vmem:[%s169 + $0x190] sm:$0xff]
      %v230 = vld [vmem:[%s169 + $0x198] sm:$0xff]
      %v231 = vld [vmem:[%s169 + $0x1a0] sm:$0xff]
      %v232 = vld [vmem:[%s169 + $0x1a8] sm:$0xff]
      %v233 = vld [vmem:[%s169 + $0x1b0] sm:$0xff]
      %v234 = vld [vmem:[%s169 + $0x1b8] sm:$0xff]
      %v235 = vld [vmem:[%s169 + $0x1c0] sm:$0xff]
      %v236 = vld [vmem:[%s169 + $0x1c8] sm:$0xff]
      %v237 = vld [vmem:[%s169 + $0x1d0] sm:$0xff]
      %v238 = vld [vmem:[%s169 + $0x1d8] sm:$0xff]
      %v239 = vld [vmem:[%s169 + $0x1e0] sm:$0xff]
      %v240 = vld [vmem:[%s169 + $0x1e8] sm:$0xff]
      %v241 = vld [vmem:[%s169 + $0x1f0] sm:$0xf]
      %v242 = vld [vmem:[%s169 + $0x1f4] sm:$0xff]
      %v243 = vld [vmem:[%s169 + $0x1fc] sm:$0xff]
      %v244 = vld [vmem:[%s169 + $0x204] sm:$0xff]
      %v245 = vld [vmem:[%s169 + $0x20c] sm:$0xff]
      %v246 = vld [vmem:[%s169 + $0x214] sm:$0xff]
      %v247 = vld [vmem:[%s169 + $0x21c] sm:$0xff]
      %v248 = vld [vmem:[%s169 + $0x224] sm:$0xff]
      %v249 = vld [vmem:[%s169 + $0x22c] sm:$0xff]
      %v250 = vld [vmem:[%s169 + $0x234] sm:$0xff]
      %v251 = vld [vmem:[%s169 + $0x23c] sm:$0xff]
      %v252 = vld [vmem:[%s169 + $0x244] sm:$0xff]
      %v253 = vld [vmem:[%s169 + $0x24c] sm:$0xff]
      %v254 = vld [vmem:[%s169 + $0x254] sm:$0xf]
      %v255 = vld [vmem:[%s169 + $0x258] sm:$0xff]
      %v256 = vld [vmem:[%s169 + $0x260] sm:$0xff]
      %v257 = vld [vmem:[%s169 + $0x268] sm:$0xff]
      %v258 = vld [vmem:[%s169 + $0x270] sm:$0xff]
      %v259 = vld [vmem:[%s169 + $0x278] sm:$0xff]
      %v260 = vld [vmem:[%s169 + $0x280] sm:$0xff]
      %v261 = vld [vmem:[%s169 + $0x288] sm:$0xff]
      %v262 = vld [vmem:[%s169 + $0x290] sm:$0xff]
      %v263 = vld [vmem:[%s169 + $0x298] sm:$0xff]
      %v264 = vld [vmem:[%s169 + $0x2a0] sm:$0xff]
      %v265 = vld [vmem:[%s169 + $0x2a8] sm:$0xff]
      %v266 = vld [vmem:[%s169 + $0x2b0] sm:$0xff]
      %v267 = vld [vmem:[%s169 + $0x2b8] sm:$0xf]
      %v268 = vld [vmem:[%s169 + $0x2bc] sm:$0xff]
      %v269 = vld [vmem:[%s169 + $0x2c4] sm:$0xff]
      %v270 = vld [vmem:[%s169 + $0x2cc] sm:$0xff]
      %v271 = vld [vmem:[%s169 + $0x2d4] sm:$0xff]
      %v272 = vld [vmem:[%s169 + $0x2dc] sm:$0xff]
      %v273 = vld [vmem:[%s169 + $0x2e4] sm:$0xff]
      %v274 = vld [vmem:[%s169 + $0x2ec] sm:$0xff]
      %v275 = vld [vmem:[%s169 + $0x2f4] sm:$0xff]
      %v276 = vld [vmem:[%s169 + $0x2fc] sm:$0xff]
      %v277 = vld [vmem:[%s169 + $0x304] sm:$0xff]
      %v278 = vld [vmem:[%s169 + $0x30c] sm:$0xff]
      %v279 = vld [vmem:[%s169 + $0x314] sm:$0xff]
      %v280 = vld [vmem:[%s169 + $0x31c] sm:$0xf]
      %v281 = vld [vmem:[%s169 + $0x320] sm:$0xff]
      %v282 = vld [vmem:[%s169 + $0x328] sm:$0xff]
      %v283 = vld [vmem:[%s169 + $0x330] sm:$0xff]
      %v284 = vld [vmem:[%s169 + $0x338] sm:$0xff]
      %v285 = vld [vmem:[%s169 + $0x340] sm:$0xff]
      %v286 = vld [vmem:[%s169 + $0x348] sm:$0xff]
      %v287 = vld [vmem:[%s169 + $0x350] sm:$0xff]
      %v288 = vld [vmem:[%s169 + $0x358] sm:$0xff]
      %v289 = vld [vmem:[%s169 + $0x360] sm:$0xff]
      %v290 = vld [vmem:[%s169 + $0x368] sm:$0xff]
      %v291 = vld [vmem:[%s169 + $0x370] sm:$0xff]
      %v292 = vld [vmem:[%s169 + $0x378] sm:$0xff]
      %v293 = vld [vmem:[%s169 + $0x380] sm:$0xf]
      %v294 = vld [vmem:[%s169 + $0x384] sm:$0xff]
      %v295 = vld [vmem:[%s169 + $0x38c] sm:$0xff]
      %v296 = vld [vmem:[%s169 + $0x394] sm:$0xff]
      %v297 = vld [vmem:[%s169 + $0x39c] sm:$0xff]
      %v298 = vld [vmem:[%s169 + $0x3a4] sm:$0xff]
      %v299 = vld [vmem:[%s169 + $0x3ac] sm:$0xff]
      %v300 = vld [vmem:[%s169 + $0x3b4] sm:$0xff]
      %v301 = vld [vmem:[%s169 + $0x3bc] sm:$0xff]
      %v302 = vld [vmem:[%s169 + $0x3c4] sm:$0xff]
      %v303 = vld [vmem:[%s169 + $0x3cc] sm:$0xff]
      %v304 = vld [vmem:[%s169 + $0x3d4] sm:$0xff]
      %v305 = vld [vmem:[%s169 + $0x3dc] sm:$0xff]
      %v306 = vld [vmem:[%s169 + $0x3e4] sm:$0xf]
      %v307 = vld [vmem:[%s169 + $0x3e8] sm:$0xff]
      %v308 = vld [vmem:[%s169 + $0x3f0] sm:$0xff]
      %v309 = vld [vmem:[%s169 + $0x3f8] sm:$0xff]
      %v310 = vld [vmem:[%s169 + $0x400] sm:$0xff]
      %v311 = vld [vmem:[%s169 + $0x408] sm:$0xff]
      %v312 = vld [vmem:[%s169 + $0x410] sm:$0xff]
      %v313 = vld [vmem:[%s169 + $0x418] sm:$0xff]
      %v314 = vld [vmem:[%s169 + $0x420] sm:$0xff]
      %v315 = vld [vmem:[%s169 + $0x428] sm:$0xff]
      %v316 = vld [vmem:[%s169 + $0x430] sm:$0xff]
      %v317 = vld [vmem:[%s169 + $0x438] sm:$0xff]
      %v318 = vld [vmem:[%s169 + $0x440] sm:$0xff]
      %v319 = vld [vmem:[%s169 + $0x448] sm:$0xf]
      %v320 = vld [vmem:[%s169 + $0x44c] sm:$0xff]
      %v321 = vld [vmem:[%s169 + $0x454] sm:$0xff]
      %v322 = vld [vmem:[%s169 + $0x45c] sm:$0xff]
      %v323 = vld [vmem:[%s169 + $0x464] sm:$0xff]
      %v324 = vld [vmem:[%s169 + $0x46c] sm:$0xff]
      %v325 = vld [vmem:[%s169 + $0x474] sm:$0xff]
      %v326 = vld [vmem:[%s169 + $0x47c] sm:$0xff]
      %v327 = vld [vmem:[%s169 + $0x484] sm:$0xff]
      %v328 = vld [vmem:[%s169 + $0x48c] sm:$0xff]
      %v329 = vld [vmem:[%s169 + $0x494] sm:$0xff]
      %v330 = vld [vmem:[%s169 + $0x49c] sm:$0xff]
      %v331 = vld [vmem:[%s169 + $0x4a4] sm:$0xff]
      %v332 = vld [vmem:[%s169 + $0x4ac] sm:$0xf]
      %v333 = vld [vmem:[%s169 + $0x4b0] sm:$0xff]
      %v334 = vld [vmem:[%s169 + $0x4b8] sm:$0xff]
      %v335 = vld [vmem:[%s169 + $0x4c0] sm:$0xff]
      %v336 = vld [vmem:[%s169 + $0x4c8] sm:$0xff]
      %v337 = vld [vmem:[%s169 + $0x4d0] sm:$0xff]
      %v338 = vld [vmem:[%s169 + $0x4d8] sm:$0xff]
      %v339 = vld [vmem:[%s169 + $0x4e0] sm:$0xff]
      %v340 = vld [vmem:[%s169 + $0x4e8] sm:$0xff]
      %v341 = vld [vmem:[%s169 + $0x4f0] sm:$0xff]
      %v342 = vld [vmem:[%s169 + $0x4f8] sm:$0xff]
      %v343 = vld [vmem:[%s169 + $0x500] sm:$0xff]
      %v344 = vld [vmem:[%s169 + $0x508] sm:$0xff]
      %v345 = vld [vmem:[%s169 + $0x510] sm:$0xf]
      %v346 = vld [vmem:[%s169 + $0x514] sm:$0xff]
      %v347 = vld [vmem:[%s169 + $0x51c] sm:$0xff]
      %v348 = vld [vmem:[%s169 + $0x524] sm:$0xff]
      %v349 = vld [vmem:[%s169 + $0x52c] sm:$0xff]
      %v350 = vld [vmem:[%s169 + $0x534] sm:$0xff]
      %v351 = vld [vmem:[%s169 + $0x53c] sm:$0xff]
      %v352 = vld [vmem:[%s169 + $0x544] sm:$0xff]
      %v353 = vld [vmem:[%s169 + $0x54c] sm:$0xff]
      %v354 = vld [vmem:[%s169 + $0x554] sm:$0xff]
      %v355 = vld [vmem:[%s169 + $0x55c] sm:$0xff]
      %v356 = vld [vmem:[%s169 + $0x564] sm:$0xff]
      %v357 = vld [vmem:[%s169 + $0x56c] sm:$0xff]
      %v358 = vld [vmem:[%s169 + $0x574] sm:$0xf]
      %v359 = vld [vmem:[%s169 + $0x578] sm:$0xff]
      %v360 = vld [vmem:[%s169 + $0x580] sm:$0xff]
      %v361 = vld [vmem:[%s169 + $0x588] sm:$0xff]
      %v362 = vld [vmem:[%s169 + $0x590] sm:$0xff]
      %v363 = vld [vmem:[%s169 + $0x598] sm:$0xff]
      %v364 = vld [vmem:[%s169 + $0x5a0] sm:$0xff]
      %v365 = vld [vmem:[%s169 + $0x5a8] sm:$0xff]
      %v366 = vld [vmem:[%s169 + $0x5b0] sm:$0xff]
      %v367 = vld [vmem:[%s169 + $0x5b8] sm:$0xff]
      %v368 = vld [vmem:[%s169 + $0x5c0] sm:$0xff]
      %v369 = vld [vmem:[%s169 + $0x5c8] sm:$0xff]
      %v370 = vld [vmem:[%s169 + $0x5d0] sm:$0xff]
      %v371 = vld [vmem:[%s169 + $0x5d8] sm:$0xf]
      %v372 = vld [vmem:[%s169 + $0x5dc] sm:$0xff]
      %v373 = vld [vmem:[%s169 + $0x5e4] sm:$0xff]
      %v374 = vld [vmem:[%s169 + $0x5ec] sm:$0xff]
      %v375 = vld [vmem:[%s169 + $0x5f4] sm:$0xff]
      %v376 = vld [vmem:[%s169 + $0x5fc] sm:$0xff]
      %v377 = vld [vmem:[%s169 + $0x604] sm:$0xff]
      %v378 = vld [vmem:[%s169 + $0x60c] sm:$0xff]
      %v379 = vld [vmem:[%s169 + $0x614] sm:$0xff]
      %v380 = vld [vmem:[%s169 + $0x61c] sm:$0xff]
      %v381 = vld [vmem:[%s169 + $0x624] sm:$0xff]
      %v382 = vld [vmem:[%s169 + $0x62c] sm:$0xff]
      %v383 = vld [vmem:[%s169 + $0x634] sm:$0xff]
      %v384 = vld [vmem:[%s169 + $0x63c] sm:$0xf]
      %v385 = vld [vmem:[%s169 + $0x640] sm:$0xff]
      %v386 = vld [vmem:[%s169 + $0x648] sm:$0xff]
      %v387 = vld [vmem:[%s169 + $0x650] sm:$0xff]
      %v388 = vld [vmem:[%s169 + $0x658] sm:$0xff]
      %v389 = vld [vmem:[%s169 + $0x660] sm:$0xff]
      %v390 = vld [vmem:[%s169 + $0x668] sm:$0xff]
      %v391 = vld [vmem:[%s169 + $0x670] sm:$0xff]
      %v392 = vld [vmem:[%s169 + $0x678] sm:$0xff]
      %v393 = vld [vmem:[%s169 + $0x680] sm:$0xff]
      %v394 = vld [vmem:[%s169 + $0x688] sm:$0xff]
      %v395 = vld [vmem:[%s169 + $0x690] sm:$0xff]
      %v396 = vld [vmem:[%s169 + $0x698] sm:$0xff]
      %v397 = vld [vmem:[%s169 + $0x6a0] sm:$0xf]
      %v398 = vld [vmem:[%s169 + $0x6a4] sm:$0xff]
      %v399 = vld [vmem:[%s169 + $0x6ac] sm:$0xff]
      %v400 = vld [vmem:[%s169 + $0x6b4] sm:$0xff]
      %v401 = vld [vmem:[%s169 + $0x6bc] sm:$0xff]
      %v402 = vld [vmem:[%s169 + $0x6c4] sm:$0xff]
      %v403 = vld [vmem:[%s169 + $0x6cc] sm:$0xff]
      %v404 = vld [vmem:[%s169 + $0x6d4] sm:$0xff]
      %v405 = vld [vmem:[%s169 + $0x6dc] sm:$0xff]
      %v406 = vld [vmem:[%s169 + $0x6e4] sm:$0xff]
      %v407 = vld [vmem:[%s169 + $0x6ec] sm:$0xff]
      %v408 = vld [vmem:[%s169 + $0x6f4] sm:$0xff]
      %v409 = vld [vmem:[%s169 + $0x6fc] sm:$0xff]
      %v410 = vld [vmem:[%s169 + $0x704] sm:$0xf]
      %v411 = vld [vmem:[%s169 + $0x708] sm:$0xff]
      %v412 = vld [vmem:[%s169 + $0x710] sm:$0xff]
      %v413 = vld [vmem:[%s169 + $0x718] sm:$0xff]
      %v414 = vld [vmem:[%s169 + $0x720] sm:$0xff]
      %v415 = vld [vmem:[%s169 + $0x728] sm:$0xff]
      %v416 = vld [vmem:[%s169 + $0x730] sm:$0xff]
      %v417 = vld [vmem:[%s169 + $0x738] sm:$0xff]
      %v418 = vld [vmem:[%s169 + $0x740] sm:$0xff]
      %v419 = vld [vmem:[%s169 + $0x748] sm:$0xff]
      %v420 = vld [vmem:[%s169 + $0x750] sm:$0xff]
      %v421 = vld [vmem:[%s169 + $0x758] sm:$0xff]
      %v422 = vld [vmem:[%s169 + $0x760] sm:$0xff]
      %v423 = vld [vmem:[%s169 + $0x768] sm:$0xf]
      %v424 = vld [vmem:[%s169 + $0x76c] sm:$0xff]
      %v425 = vld [vmem:[%s169 + $0x774] sm:$0xff]
      %v426 = vld [vmem:[%s169 + $0x77c] sm:$0xff]
      %v427 = vld [vmem:[%s169 + $0x784] sm:$0xff]
      %v428 = vld [vmem:[%s169 + $0x78c] sm:$0xff]
      %v429 = vld [vmem:[%s169 + $0x794] sm:$0xff]
      %v430 = vld [vmem:[%s169 + $0x79c] sm:$0xff]
      %v431 = vld [vmem:[%s169 + $0x7a4] sm:$0xff]
      %v432 = vld [vmem:[%s169 + $0x7ac] sm:$0xff]
      %v433 = vld [vmem:[%s169 + $0x7b4] sm:$0xff]
      %v434 = vld [vmem:[%s169 + $0x7bc] sm:$0xff]
      %v435 = vld [vmem:[%s169 + $0x7c4] sm:$0xff]
      %v436 = vld [vmem:[%s169 + $0x7cc] sm:$0xf]
      %v437 = vld [vmem:[%s169 + $0x7d0] sm:$0xff]
      %v438 = vld [vmem:[%s169 + $0x7d8] sm:$0xff]
      %v439 = vld [vmem:[%s169 + $0x7e0] sm:$0xff]
      %v440 = vld [vmem:[%s169 + $0x7e8] sm:$0xff]
      %v441 = vld [vmem:[%s169 + $0x7f0] sm:$0xff]
      %v442 = vld [vmem:[%s169 + $0x7f8] sm:$0xff]
      %v443 = vld [vmem:[%s169 + $0x800] sm:$0xff]
      %v444 = vld [vmem:[%s169 + $0x808] sm:$0xff]
      %v445 = vld [vmem:[%s169 + $0x810] sm:$0xff]
      %v446 = vld [vmem:[%s169 + $0x818] sm:$0xff]
      %v447 = vld [vmem:[%s169 + $0x820] sm:$0xff]
      %v448 = vld [vmem:[%s169 + $0x828] sm:$0xff]
      %v449 = vld [vmem:[%s169 + $0x830] sm:$0xf]
      %v450 = vld [vmem:[%s169 + $0x834] sm:$0xff]
      %v451 = vld [vmem:[%s169 + $0x83c] sm:$0xff]
      %v452 = vld [vmem:[%s169 + $0x844] sm:$0xff]
      %v453 = vld [vmem:[%s169 + $0x84c] sm:$0xff]
      %v454 = vld [vmem:[%s169 + $0x854] sm:$0xff]
      %v455 = vld [vmem:[%s169 + $0x85c] sm:$0xff]
      %v456 = vld [vmem:[%s169 + $0x864] sm:$0xff]
      %v457 = vld [vmem:[%s169 + $0x86c] sm:$0xff]
      %v458 = vld [vmem:[%s169 + $0x874] sm:$0xff]
      %v459 = vld [vmem:[%s169 + $0x87c] sm:$0xff]
      %v460 = vld [vmem:[%s169 + $0x884] sm:$0xff]
      %v461 = vld [vmem:[%s169 + $0x88c] sm:$0xff]
      %v462 = vld [vmem:[%s169 + $0x894] sm:$0xf]
      %v463 = vld [vmem:[%s169 + $0x898] sm:$0xff]
      %v464 = vld [vmem:[%s169 + $0x8a0] sm:$0xff]
      %v465 = vld [vmem:[%s169 + $0x8a8] sm:$0xff]
      %v466 = vld [vmem:[%s169 + $0x8b0] sm:$0xff]
      %v467 = vld [vmem:[%s169 + $0x8b8] sm:$0xff]
      %v468 = vld [vmem:[%s169 + $0x8c0] sm:$0xff]
      %v469 = vld [vmem:[%s169 + $0x8c8] sm:$0xff]
      %v470 = vld [vmem:[%s169 + $0x8d0] sm:$0xff]
      %v471 = vld [vmem:[%s169 + $0x8d8] sm:$0xff]
      %v472 = vld [vmem:[%s169 + $0x8e0] sm:$0xff]
      %v473 = vld [vmem:[%s169 + $0x8e8] sm:$0xff]
      %v474 = vld [vmem:[%s169 + $0x8f0] sm:$0xff]
      %v475 = vld [vmem:[%s169 + $0x8f8] sm:$0xf]
      %v476 = vld [vmem:[%s169 + $0x8fc] sm:$0xff]
      %v477 = vld [vmem:[%s169 + $0x904] sm:$0xff]
      %v478 = vld [vmem:[%s169 + $0x90c] sm:$0xff]
      %v479 = vld [vmem:[%s169 + $0x914] sm:$0xff]
      %v480 = vld [vmem:[%s169 + $0x91c] sm:$0xff]
      %v481 = vld [vmem:[%s169 + $0x924] sm:$0xff]
      %v482 = vld [vmem:[%s169 + $0x92c] sm:$0xff]
      %v483 = vld [vmem:[%s169 + $0x934] sm:$0xff]
      %v484 = vld [vmem:[%s169 + $0x93c] sm:$0xff]
      %v485 = vld [vmem:[%s169 + $0x944] sm:$0xff]
      %v486 = vld [vmem:[%s169 + $0x94c] sm:$0xff]
      %v487 = vld [vmem:[%s169 + $0x954] sm:$0xff]
      %v488 = vld [vmem:[%s169 + $0x95c] sm:$0xf]
      %v489 = vld [vmem:[%s169 + $0x960] sm:$0xff]
      %v490 = vld [vmem:[%s169 + $0x968] sm:$0xff]
      %v491 = vld [vmem:[%s169 + $0x970] sm:$0xff]
      %v492 = vld [vmem:[%s169 + $0x978] sm:$0xff]
      %v493 = vld [vmem:[%s169 + $0x980] sm:$0xff]
      %v494 = vld [vmem:[%s169 + $0x988] sm:$0xff]
      %v495 = vld [vmem:[%s169 + $0x990] sm:$0xff]
      %v496 = vld [vmem:[%s169 + $0x998] sm:$0xff]
      %v497 = vld [vmem:[%s169 + $0x9a0] sm:$0xff]
      %v498 = vld [vmem:[%s169 + $0x9a8] sm:$0xff]
      %v499 = vld [vmem:[%s169 + $0x9b0] sm:$0xff]
      %v500 = vld [vmem:[%s169 + $0x9b8] sm:$0xff]
      %v501 = vld [vmem:[%s169 + $0x9c0] sm:$0xf]
      %v502 = vld [vmem:[%s1] sm:$0xf]
      %v503 = vld [vmem:[%s1 + $0x4] sm:$0xf]
      %v504 = vld [vmem:[%s1 + $0x8] sm:$0xf]
      %v505 = vld [vmem:[%s1 + $0xc] sm:$0xf]
      %v506 = vld [vmem:[%s1 + $0x10] sm:$0xf]
      %v507 = vld [vmem:[%s1 + $0x14] sm:$0xf]
      %v508 = vld [vmem:[%s1 + $0x18] sm:$0xf]
      %v509 = vld [vmem:[%s1 + $0x1c] sm:$0xf]
      %v510 = vld [vmem:[%s1 + $0x20] sm:$0xf]
      %v511 = vld [vmem:[%s1 + $0x24] sm:$0xf]
      %v512 = vld [vmem:[%s1 + $0x28] sm:$0xf]
      %v513 = vld [vmem:[%s1 + $0x2c] sm:$0xf]
      %v514 = vld [vmem:[%s1 + $0x30] sm:$0xf]
      %v515 = vld [vmem:[%s1 + $0x34] sm:$0xf]
      %v516 = vld [vmem:[%s1 + $0x38] sm:$0xf]
      %v517 = vld [vmem:[%s1 + $0x3c] sm:$0xf]
      %v518 = vld [vmem:[%s1 + $0x40] sm:$0xf]
      %v519 = vld [vmem:[%s1 + $0x44] sm:$0xf]
      %v520 = vld [vmem:[%s1 + $0x48] sm:$0xf]
      %v521 = vld [vmem:[%s1 + $0x4c] sm:$0xf]
      %v522 = vld [vmem:[%s1 + $0x50] sm:$0xf]
      %v523 = vld [vmem:[%s1 + $0x54] sm:$0xf]
      %v524 = vld [vmem:[%s1 + $0x58] sm:$0xf]
      %v525 = vld [vmem:[%s1 + $0x5c] sm:$0xf]
      %v526 = vld [vmem:[%s1 + $0x60] sm:$0xf]
      %v527 = vld [vmem:[%s1 + $0x64] sm:$0xf]
      %v528 = vld [vmem:[%s1 + $0x68] sm:$0xf]
      %v529 = vld [vmem:[%s1 + $0x6c] sm:$0xf]
      %v530 = vld [vmem:[%s1 + $0x70] sm:$0xf]
      %v531 = vld [vmem:[%s1 + $0x74] sm:$0xf]
      %v532 = vld [vmem:[%s1 + $0x78] sm:$0xf]
      %v533 = vld [vmem:[%s1 + $0x7c] sm:$0xf]
      %v534 = vld [vmem:[%s1 + $0x80] sm:$0xf]
      %v535 = vld [vmem:[%s1 + $0x84] sm:$0xf]
      %v536 = vld [vmem:[%s1 + $0x88] sm:$0xf]
      %v537 = vld [vmem:[%s1 + $0x8c] sm:$0xf]
      %v538 = vld [vmem:[%s1 + $0x90] sm:$0xf]
      %v539 = vld [vmem:[%s1 + $0x94] sm:$0xf]
      %v540 = vld [vmem:[%s1 + $0x98] sm:$0xf]
      %v541 = vld [vmem:[%s1 + $0x9c] sm:$0xf]
      %v542 = vld [vmem:[%s1 + $0xa0] sm:$0xf]
      %v543 = vld [vmem:[%s1 + $0xa4] sm:$0xf]
      %v544 = vld [vmem:[%s1 + $0xa8] sm:$0xf]
      %v545 = vld [vmem:[%s1 + $0xac] sm:$0xf]
      %v546 = vld [vmem:[%s1 + $0xb0] sm:$0xf]
      %v547 = vld [vmem:[%s1 + $0xb4] sm:$0xf]
      %v548 = vld [vmem:[%s1 + $0xb8] sm:$0xf]
      %v549 = vld [vmem:[%s1 + $0xbc] sm:$0xf]
      %v550 = vld [vmem:[%s1 + $0xc0] sm:$0xf]
      %v551 = vld [vmem:[%s1 + $0xc4] sm:$0xf]
      %v552 = vld [vmem:[%s1 + $0xc8] sm:$0xf]
      %v553 = vld [vmem:[%s1 + $0xcc] sm:$0xf]
      %v554 = vld [vmem:[%s1 + $0xd0] sm:$0xf]
      %v555 = vld [vmem:[%s1 + $0xd4] sm:$0xf]
      %v556 = vld [vmem:[%s1 + $0xd8] sm:$0xf]
      %v557 = vld [vmem:[%s1 + $0xdc] sm:$0xf]
      %v558 = vld [vmem:[%s1 + $0xe0] sm:$0xf]
      %v559 = vld [vmem:[%s1 + $0xe4] sm:$0xf]
      %v560 = vld [vmem:[%s1 + $0xe8] sm:$0xf]
      %v561 = vld [vmem:[%s1 + $0xec] sm:$0xf]
      %v562 = vld [vmem:[%s1 + $0xf0] sm:$0xf]
      %v563 = vld [vmem:[%s1 + $0xf4] sm:$0xf]
      %v564 = vld [vmem:[%s1 + $0xf8] sm:$0xf]
      %v565 = vld [vmem:[%s1 + $0xfc] sm:$0xf]
      %v566 = vld [vmem:[%s1 + $0x100] sm:$0xf]
      %v567 = vld [vmem:[%s1 + $0x104] sm:$0xf]
      %v568 = vld [vmem:[%s1 + $0x108] sm:$0xf]
      %v569 = vld [vmem:[%s1 + $0x10c] sm:$0xf]
      %v570 = vld [vmem:[%s1 + $0x110] sm:$0xf]
      %v571 = vld [vmem:[%s1 + $0x114] sm:$0xf]
      %v572 = vld [vmem:[%s1 + $0x118] sm:$0xf]
      %v573 = vld [vmem:[%s1 + $0x11c] sm:$0xf]
      %v574 = vld [vmem:[%s1 + $0x120] sm:$0xf]
      %v575 = vld [vmem:[%s1 + $0x124] sm:$0xf]
      %v576 = vld [vmem:[%s1 + $0x128] sm:$0xf]
      %v577 = vld [vmem:[%s1 + $0x12c] sm:$0xf]
      %v578 = vld [vmem:[%s1 + $0x130] sm:$0xf]
      %v579 = vld [vmem:[%s1 + $0x134] sm:$0xf]
      %v580 = vld [vmem:[%s1 + $0x138] sm:$0xf]
      %v581 = vld [vmem:[%s1 + $0x13c] sm:$0xf]
      %v582 = vld [vmem:[%s1 + $0x140] sm:$0xf]
      %v583 = vld [vmem:[%s1 + $0x144] sm:$0xf]
      %v584 = vld [vmem:[%s1 + $0x148] sm:$0xf]
      %v585 = vld [vmem:[%s1 + $0x14c] sm:$0xf]
      %v586 = vld [vmem:[%s1 + $0x150] sm:$0xf]
      %v587 = vld [vmem:[%s1 + $0x154] sm:$0xf]
      %v588 = vld [vmem:[%s1 + $0x158] sm:$0xf]
      %v589 = vld [vmem:[%s1 + $0x15c] sm:$0xf]
      %v590 = vld [vmem:[%s1 + $0x160] sm:$0xf]
      %v591 = vld [vmem:[%s1 + $0x164] sm:$0xf]
      %v592 = vld [vmem:[%s1 + $0x168] sm:$0xf]
      %v593 = vld [vmem:[%s1 + $0x16c] sm:$0xf]
      %v594 = vld [vmem:[%s1 + $0x170] sm:$0xf]
      %v595 = vld [vmem:[%s1 + $0x174] sm:$0xf]
      %v596 = vld [vmem:[%s1 + $0x178] sm:$0xf]
      %v597 = vld [vmem:[%s1 + $0x17c] sm:$0xf]
      %v598 = vld [vmem:[%s1 + $0x180] sm:$0xf]
      %v599 = vld [vmem:[%s1 + $0x184] sm:$0xf]
      %v600 = vld [vmem:[%s1 + $0x188] sm:$0xf]
      %v601 = vld [vmem:[%s1 + $0x18c] sm:$0xf]
      %v602 = vld [vmem:[%s1 + $0x190] sm:$0xf]
      %v603 = vld [vmem:[%s1 + $0x194] sm:$0xf]
      %v604 = vld [vmem:[%s1 + $0x198] sm:$0xf]
      %v605 = vld [vmem:[%s1 + $0x19c] sm:$0xf]
      %v606 = vld [vmem:[%s1 + $0x1a0] sm:$0xf]
      %v607 = vld [vmem:[%s1 + $0x1a4] sm:$0xf]
      %v608 = vld [vmem:[%s1 + $0x1a8] sm:$0xf]
      %v609 = vld [vmem:[%s1 + $0x1ac] sm:$0xf]
      %v610 = vld [vmem:[%s1 + $0x1b0] sm:$0xf]
      %v611 = vld [vmem:[%s1 + $0x1b4] sm:$0xf]
      %v612 = vld [vmem:[%s1 + $0x1b8] sm:$0xf]
      %v613 = vld [vmem:[%s1 + $0x1bc] sm:$0xf]
      %v614 = vld [vmem:[%s1 + $0x1c0] sm:$0xf]
      %v615 = vld [vmem:[%s1 + $0x1c4] sm:$0xf]
      %v616 = vld [vmem:[%s1 + $0x1c8] sm:$0xf]
      %v617 = vld [vmem:[%s1 + $0x1cc] sm:$0xf]
      %v618 = vld [vmem:[%s1 + $0x1d0] sm:$0xf]
      %v619 = vld [vmem:[%s1 + $0x1d4] sm:$0xf]
      %v620 = vld [vmem:[%s1 + $0x1d8] sm:$0xf]
      %v621 = vld [vmem:[%s1 + $0x1dc] sm:$0xf]
      %v622 = vld [vmem:[%s1 + $0x1e0] sm:$0xf]
      %v623 = vld [vmem:[%s1 + $0x1e4] sm:$0xf]
      %v624 = vld [vmem:[%s1 + $0x1e8] sm:$0xf]
      %v625 = vld [vmem:[%s1 + $0x1ec] sm:$0xf]
      %v626 = vld [vmem:[%s1 + $0x1f0] sm:$0xf]
      %v627 = vld [vmem:[%s1 + $0x1f4] sm:$0xf]
      %v628 = vld [vmem:[%s1 + $0x1f8] sm:$0xf]
      %v629 = vld [vmem:[%s1 + $0x1fc] sm:$0xf]
      %v630 = vld [vmem:[%s1 + $0x200] sm:$0xf]
      %v631 = vld [vmem:[%s1 + $0x204] sm:$0xf]
      %v632 = vld [vmem:[%s1 + $0x208] sm:$0xf]
      %v633 = vld [vmem:[%s1 + $0x20c] sm:$0xf]
      %v634 = vld [vmem:[%s1 + $0x210] sm:$0xf]
      %v635 = vld [vmem:[%s1 + $0x214] sm:$0xf]
      %v636 = vld [vmem:[%s1 + $0x218] sm:$0xf]
      %v637 = vld [vmem:[%s1 + $0x21c] sm:$0xf]
      %v638 = vld [vmem:[%s1 + $0x220] sm:$0xf]
      %v639 = vld [vmem:[%s1 + $0x224] sm:$0xf]
      %v640 = vld [vmem:[%s1 + $0x228] sm:$0xf]
      %v641 = vld [vmem:[%s1 + $0x22c] sm:$0xf]
      %v642 = vld [vmem:[%s1 + $0x230] sm:$0xf]
      %v643 = vld [vmem:[%s1 + $0x234] sm:$0xf]
      %v644 = vld [vmem:[%s1 + $0x238] sm:$0xf]
      %v645 = vld [vmem:[%s1 + $0x23c] sm:$0xf]
      %v646 = vld [vmem:[%s1 + $0x240] sm:$0xf]
      %v647 = vld [vmem:[%s1 + $0x244] sm:$0xf]
      %v648 = vld [vmem:[%s1 + $0x248] sm:$0xf]
      %v649 = vld [vmem:[%s1 + $0x24c] sm:$0xf]
      %v650 = vld [vmem:[%s1 + $0x250] sm:$0xf]
      %v651 = vld [vmem:[%s1 + $0x254] sm:$0xf]
      %v652 = vld [vmem:[%s1 + $0x258] sm:$0xf]
      %v653 = vld [vmem:[%s1 + $0x25c] sm:$0xf]
      %v654 = vld [vmem:[%s1 + $0x260] sm:$0xf]
      %v655 = vld [vmem:[%s1 + $0x264] sm:$0xf]
      %v656 = vld [vmem:[%s1 + $0x268] sm:$0xf]
      %v657 = vld [vmem:[%s1 + $0x26c] sm:$0xf]
      %v658 = vld [vmem:[%s1 + $0x270] sm:$0xf]
      %v659 = vld [vmem:[%s1 + $0x274] sm:$0xf]
      %v660 = vld [vmem:[%s1 + $0x278] sm:$0xf]
      %v661 = vld [vmem:[%s1 + $0x27c] sm:$0xf]
      %v662 = vld [vmem:[%s1 + $0x280] sm:$0xf]
      %v663 = vld [vmem:[%s1 + $0x284] sm:$0xf]
      %v664 = vld [vmem:[%s1 + $0x288] sm:$0xf]
      %v665 = vld [vmem:[%s1 + $0x28c] sm:$0xf]
      %v666 = vld [vmem:[%s1 + $0x290] sm:$0xf]
      %v667 = vld [vmem:[%s1 + $0x294] sm:$0xf]
      %v668 = vld [vmem:[%s1 + $0x298] sm:$0xf]
      %v669 = vld [vmem:[%s1 + $0x29c] sm:$0xf]
      %v670 = vld [vmem:[%s1 + $0x2a0] sm:$0xf]
      %v671 = vld [vmem:[%s1 + $0x2a4] sm:$0xf]
      %v672 = vld [vmem:[%s1 + $0x2a8] sm:$0xf]
      %v673 = vld [vmem:[%s1 + $0x2ac] sm:$0xf]
      %v674 = vld [vmem:[%s1 + $0x2b0] sm:$0xf]
      %v675 = vld [vmem:[%s1 + $0x2b4] sm:$0xf]
      %v676 = vld [vmem:[%s1 + $0x2b8] sm:$0xf]
      %v677 = vld [vmem:[%s1 + $0x2bc] sm:$0xf]
      %v678 = vld [vmem:[%s1 + $0x2c0] sm:$0xf]
      %v679 = vld [vmem:[%s1 + $0x2c4] sm:$0xf]
      %v680 = vld [vmem:[%s1 + $0x2c8] sm:$0xf]
      %v681 = vld [vmem:[%s1 + $0x2cc] sm:$0xf]
      %v682 = vld [vmem:[%s1 + $0x2d0] sm:$0xf]
      %v683 = vld [vmem:[%s1 + $0x2d4] sm:$0xf]
      %v684 = vld [vmem:[%s1 + $0x2d8] sm:$0xf]
      %v685 = vld [vmem:[%s1 + $0x2dc] sm:$0xf]
      %v686 = vld [vmem:[%s1 + $0x2e0] sm:$0xf]
      %v687 = vld [vmem:[%s1 + $0x2e4] sm:$0xf]
      %v688 = vld [vmem:[%s1 + $0x2e8] sm:$0xf]
      %v689 = vld [vmem:[%s1 + $0x2ec] sm:$0xf]
      %v690 = vld [vmem:[%s1 + $0x2f0] sm:$0xf]
      %v691 = vld [vmem:[%s1 + $0x2f4] sm:$0xf]
      %v692 = vld [vmem:[%s1 + $0x2f8] sm:$0xf]
      %v693 = vld [vmem:[%s1 + $0x2fc] sm:$0xf]
      %v694 = vld [vmem:[%s1 + $0x300] sm:$0xf]
      %v695 = vld [vmem:[%s1 + $0x304] sm:$0xf]
      %v696 = vld [vmem:[%s1 + $0x308] sm:$0xf]
      %v697 = vld [vmem:[%s1 + $0x30c] sm:$0xf]
      %v698 = vld [vmem:[%s1 + $0x310] sm:$0xf]
      %v699 = vld [vmem:[%s1 + $0x314] sm:$0xf]
      %v700 = vld [vmem:[%s1 + $0x318] sm:$0xf]
      %v701 = vld [vmem:[%s1 + $0x31c] sm:$0xf]
      %v702 = vld [vmem:[%s1 + $0x320] sm:$0xf]
      %v703 = vld [vmem:[%s1 + $0x324] sm:$0xf]
      %v704 = vld [vmem:[%s1 + $0x328] sm:$0xf]
      %v705 = vld [vmem:[%s1 + $0x32c] sm:$0xf]
      %v706 = vld [vmem:[%s1 + $0x330] sm:$0xf]
      %v707 = vld [vmem:[%s1 + $0x334] sm:$0xf]
      %v708 = vld [vmem:[%s1 + $0x338] sm:$0xf]
      %v709 = vld [vmem:[%s1 + $0x33c] sm:$0xf]
      %v710 = vld [vmem:[%s1 + $0x340] sm:$0xf]
      %v711 = vld [vmem:[%s1 + $0x344] sm:$0xf]
      %v712 = vld [vmem:[%s1 + $0x348] sm:$0xf]
      %v713 = vld [vmem:[%s1 + $0x34c] sm:$0xf]
      %v714 = vld [vmem:[%s1 + $0x350] sm:$0xf]
      %v715 = vld [vmem:[%s1 + $0x354] sm:$0xf]
      %v716 = vld [vmem:[%s1 + $0x358] sm:$0xf]
      %v717 = vld [vmem:[%s1 + $0x35c] sm:$0xf]
      %v718 = vld [vmem:[%s1 + $0x360] sm:$0xf]
      %v719 = vld [vmem:[%s1 + $0x364] sm:$0xf]
      %v720 = vld [vmem:[%s1 + $0x368] sm:$0xf]
      %v721 = vld [vmem:[%s1 + $0x36c] sm:$0xf]
      %v722 = vld [vmem:[%s1 + $0x370] sm:$0xf]
      %v723 = vld [vmem:[%s1 + $0x374] sm:$0xf]
      %v724 = vld [vmem:[%s1 + $0x378] sm:$0xf]
      %v725 = vld [vmem:[%s1 + $0x37c] sm:$0xf]
      %v726 = vld [vmem:[%s1 + $0x380] sm:$0xf]
      %v727 = vld [vmem:[%s1 + $0x384] sm:$0xf]
      %v728 = vld [vmem:[%s1 + $0x388] sm:$0xf]
      %v729 = vld [vmem:[%s1 + $0x38c] sm:$0xf]
      %v730 = vld [vmem:[%s1 + $0x390] sm:$0xf]
      %v731 = vld [vmem:[%s1 + $0x394] sm:$0xf]
      %v732 = vld [vmem:[%s1 + $0x398] sm:$0xf]
      %v733 = vld [vmem:[%s1 + $0x39c] sm:$0xf]
      %v734 = vld [vmem:[%s1 + $0x3a0] sm:$0xf]
      %v735 = vld [vmem:[%s1 + $0x3a4] sm:$0xf]
      %v736 = vld [vmem:[%s1 + $0x3a8] sm:$0xf]
      %v737 = vld [vmem:[%s1 + $0x3ac] sm:$0xf]
      %v738 = vld [vmem:[%s1 + $0x3b0] sm:$0xf]
      %v739 = vld [vmem:[%s1 + $0x3b4] sm:$0xf]
      %v740 = vld [vmem:[%s1 + $0x3b8] sm:$0xf]
      %v741 = vld [vmem:[%s1 + $0x3bc] sm:$0xf]
      %v742 = vld [vmem:[%s1 + $0x3c0] sm:$0xf]
      %v743 = vld [vmem:[%s1 + $0x3c4] sm:$0xf]
      %v744 = vld [vmem:[%s1 + $0x3c8] sm:$0xf]
      %v745 = vld [vmem:[%s1 + $0x3cc] sm:$0xf]
      %v746 = vld [vmem:[%s1 + $0x3d0] sm:$0xf]
      %v747 = vld [vmem:[%s1 + $0x3d4] sm:$0xf]
      %v748 = vld [vmem:[%s1 + $0x3d8] sm:$0xf]
      %v749 = vld [vmem:[%s1 + $0x3dc] sm:$0xf]
      %v750 = vld [vmem:[%s1 + $0x3e0] sm:$0xf]
      %v751 = vld [vmem:[%s1 + $0x3e4] sm:$0xf]
      %v752 = vld [vmem:[%s1 + $0x3e8] sm:$0xf]
      %v753 = vld [vmem:[%s1 + $0x3ec] sm:$0xf]
      %v754 = vld [vmem:[%s1 + $0x3f0] sm:$0xf]
      %v755 = vld [vmem:[%s1 + $0x3f4] sm:$0xf]
      %v756 = vld [vmem:[%s1 + $0x3f8] sm:$0xf]
      %v757 = vld [vmem:[%s1 + $0x3fc] sm:$0xf]
      %v758 = vld [vmem:[%s1 + $0x400] sm:$0xf]
      %v759 = vld [vmem:[%s1 + $0x404] sm:$0xf]
      %v760 = vld [vmem:[%s1 + $0x408] sm:$0xf]
      %v761 = vld [vmem:[%s1 + $0x40c] sm:$0xf]
      %v762 = vld [vmem:[%s1 + $0x410] sm:$0xf]
      %v763 = vld [vmem:[%s1 + $0x414] sm:$0xf]
      %v764 = vld [vmem:[%s1 + $0x418] sm:$0xf]
      %v765 = vld [vmem:[%s1 + $0x41c] sm:$0xf]
      %v766 = vld [vmem:[%s1 + $0x420] sm:$0xf]
      %v767 = vld [vmem:[%s1 + $0x424] sm:$0xf]
      %v768 = vld [vmem:[%s1 + $0x428] sm:$0xf]
      %v769 = vld [vmem:[%s1 + $0x42c] sm:$0xf]
      %v770 = vld [vmem:[%s1 + $0x430] sm:$0xf]
      %v771 = vld [vmem:[%s1 + $0x434] sm:$0xf]
      %v772 = vld [vmem:[%s1 + $0x438] sm:$0xf]
      %v773 = vld [vmem:[%s1 + $0x43c] sm:$0xf]
      %v774 = vld [vmem:[%s1 + $0x440] sm:$0xf]
      %v775 = vld [vmem:[%s1 + $0x444] sm:$0xf]
      %v776 = vld [vmem:[%s1 + $0x448] sm:$0xf]
      %v777 = vld [vmem:[%s1 + $0x44c] sm:$0xf]
      %v778 = vld [vmem:[%s1 + $0x450] sm:$0xf]
      %v779 = vld [vmem:[%s1 + $0x454] sm:$0xf]
      %v780 = vld [vmem:[%s1 + $0x458] sm:$0xf]
      %v781 = vld [vmem:[%s1 + $0x45c] sm:$0xf]
      %v782 = vld [vmem:[%s1 + $0x460] sm:$0xf]
      %v783 = vld [vmem:[%s1 + $0x464] sm:$0xf]
      %v784 = vld [vmem:[%s1 + $0x468] sm:$0xf]
      %v785 = vld [vmem:[%s1 + $0x46c] sm:$0xf]
      %v786 = vld [vmem:[%s1 + $0x470] sm:$0xf]
      %v787 = vld [vmem:[%s1 + $0x474] sm:$0xf]
      %v788 = vld [vmem:[%s1 + $0x478] sm:$0xf]
      %v789 = vld [vmem:[%s1 + $0x47c] sm:$0xf]
      %v790 = vld [vmem:[%s1 + $0x480] sm:$0xf]
      %v791 = vld [vmem:[%s1 + $0x484] sm:$0xf]
      %v792 = vld [vmem:[%s1 + $0x488] sm:$0xf]
      %v793 = vld [vmem:[%s1 + $0x48c] sm:$0xf]
      %v794 = vld [vmem:[%s1 + $0x490] sm:$0xf]
      %v795 = vld [vmem:[%s1 + $0x494] sm:$0xf]
      %v796 = vld [vmem:[%s1 + $0x498] sm:$0xf]
      %v797 = vld [vmem:[%s1 + $0x49c] sm:$0xf]
      %v798 = vld [vmem:[%s1 + $0x4a0] sm:$0xf]
      %v799 = vld [vmem:[%s1 + $0x4a4] sm:$0xf]
      %v800 = vld [vmem:[%s1 + $0x4a8] sm:$0xf]
      %v801 = vld [vmem:[%s1 + $0x4ac] sm:$0xf]
      %v802 = vld [vmem:[%s1 + $0x4b0] sm:$0xf]
      %v803 = vld [vmem:[%s1 + $0x4b4] sm:$0xf]
      %v804 = vld [vmem:[%s1 + $0x4b8] sm:$0xf]
      %v805 = vld [vmem:[%s1 + $0x4bc] sm:$0xf]
      %v806 = vld [vmem:[%s1 + $0x4c0] sm:$0xf]
      %v807 = vld [vmem:[%s1 + $0x4c4] sm:$0xf]
      %v808 = vld [vmem:[%s1 + $0x4c8] sm:$0xf]
      %v809 = vld [vmem:[%s1 + $0x4cc] sm:$0xf]
      %v810 = vld [vmem:[%s1 + $0x4d0] sm:$0xf]
      %v811 = vld [vmem:[%s1 + $0x4d4] sm:$0xf]
      %v812 = vld [vmem:[%s1 + $0x4d8] sm:$0xf]
      %v813 = vld [vmem:[%s1 + $0x4dc] sm:$0xf]
      %v814 = vld [vmem:[%s1 + $0x4e0] sm:$0xf]
      %v815 = vld [vmem:[%s1 + $0x4e4] sm:$0xf]
      %v816 = vld [vmem:[%s1 + $0x4e8] sm:$0xf]
      %v817 = vld [vmem:[%s1 + $0x4ec] sm:$0xf]
      %v818 = vld [vmem:[%s1 + $0x4f0] sm:$0xf]
      %v819 = vld [vmem:[%s1 + $0x4f4] sm:$0xf]
      %v820 = vld [vmem:[%s1 + $0x4f8] sm:$0xf]
      %v821 = vld [vmem:[%s1 + $0x4fc] sm:$0xf]
      %v822 = vld [vmem:[%s1 + $0x500] sm:$0xf]
      %v823 = vld [vmem:[%s1 + $0x504] sm:$0xf]
      %v824 = vld [vmem:[%s1 + $0x508] sm:$0xf]
      %v825 = vld [vmem:[%s1 + $0x50c] sm:$0xf]
      %v826 = vld [vmem:[%s1 + $0x510] sm:$0xf]
      %v827 = vld [vmem:[%s1 + $0x514] sm:$0xf]
      %v828 = vld [vmem:[%s1 + $0x518] sm:$0xf]
      %v829 = vld [vmem:[%s1 + $0x51c] sm:$0xf]
      %v830 = vld [vmem:[%s1 + $0x520] sm:$0xf]
      %v831 = vld [vmem:[%s1 + $0x524] sm:$0xf]
      %v832 = vld [vmem:[%s1 + $0x528] sm:$0xf]
      %v833 = vld [vmem:[%s1 + $0x52c] sm:$0xf]
      %v834 = vld [vmem:[%s1 + $0x530] sm:$0xf]
      %v835 = vld [vmem:[%s1 + $0x534] sm:$0xf]
      %v836 = vld [vmem:[%s1 + $0x538] sm:$0xf]
      %v837 = vld [vmem:[%s1 + $0x53c] sm:$0xf]
      %v838 = vld [vmem:[%s1 + $0x540] sm:$0xf]
      %v839 = vld [vmem:[%s1 + $0x544] sm:$0xf]
      %v840 = vld [vmem:[%s1 + $0x548] sm:$0xf]
      %v841 = vld [vmem:[%s1 + $0x54c] sm:$0xf]
      %v842 = vld [vmem:[%s1 + $0x550] sm:$0xf]
      %v843 = vld [vmem:[%s1 + $0x554] sm:$0xf]
      %v844 = vld [vmem:[%s1 + $0x558] sm:$0xf]
      %v845 = vld [vmem:[%s1 + $0x55c] sm:$0xf]
      %v846 = vld [vmem:[%s1 + $0x560] sm:$0xf]
      %v847 = vld [vmem:[%s1 + $0x564] sm:$0xf]
      %v848 = vld [vmem:[%s1 + $0x568] sm:$0xf]
      %v849 = vld [vmem:[%s1 + $0x56c] sm:$0xf]
      %v850 = vld [vmem:[%s1 + $0x570] sm:$0xf]
      %v851 = vld [vmem:[%s1 + $0x574] sm:$0xf]
      %v852 = vld [vmem:[%s1 + $0x578] sm:$0xf]
      %v853 = vld [vmem:[%s1 + $0x57c] sm:$0xf]
      %v854 = vld [vmem:[%s1 + $0x580] sm:$0xf]
      %v855 = vld [vmem:[%s1 + $0x584] sm:$0xf]
      %v856 = vld [vmem:[%s1 + $0x588] sm:$0xf]
      %v857 = vld [vmem:[%s1 + $0x58c] sm:$0xf]
      %v858 = vld [vmem:[%s1 + $0x590] sm:$0xf]
      %v859 = vld [vmem:[%s1 + $0x594] sm:$0xf]
      %v860 = vld [vmem:[%s1 + $0x598] sm:$0xf]
      %v861 = vld [vmem:[%s1 + $0x59c] sm:$0xf]
      %v862 = vld [vmem:[%s1 + $0x5a0] sm:$0xf]
      %v863 = vld [vmem:[%s1 + $0x5a4] sm:$0xf]
      %v864 = vld [vmem:[%s1 + $0x5a8] sm:$0xf]
      %v865 = vld [vmem:[%s1 + $0x5ac] sm:$0xf]
      %v866 = vld [vmem:[%s1 + $0x5b0] sm:$0xf]
      %v867 = vld [vmem:[%s1 + $0x5b4] sm:$0xf]
      %v868 = vld [vmem:[%s1 + $0x5b8] sm:$0xf]
      %v869 = vld [vmem:[%s1 + $0x5bc] sm:$0xf]
      %v870 = vld [vmem:[%s1 + $0x5c0] sm:$0xf]
      %v871 = vld [vmem:[%s1 + $0x5c4] sm:$0xf]
      %v872 = vld [vmem:[%s1 + $0x5c8] sm:$0xf]
      %v873 = vld [vmem:[%s1 + $0x5cc] sm:$0xf]
      %v874 = vld [vmem:[%s1 + $0x5d0] sm:$0xf]
      %v875 = vld [vmem:[%s1 + $0x5d4] sm:$0xf]
      %v876 = vld [vmem:[%s1 + $0x5d8] sm:$0xf]
      %v877 = vld [vmem:[%s1 + $0x5dc] sm:$0xf]
      %v878 = vld [vmem:[%s1 + $0x5e0] sm:$0xf]
      %v879 = vld [vmem:[%s1 + $0x5e4] sm:$0xf]
      %v880 = vld [vmem:[%s1 + $0x5e8] sm:$0xf]
      %v881 = vld [vmem:[%s1 + $0x5ec] sm:$0xf]
      %v882 = vld [vmem:[%s1 + $0x5f0] sm:$0xf]
      %v883 = vld [vmem:[%s1 + $0x5f4] sm:$0xf]
      %v884 = vld [vmem:[%s1 + $0x5f8] sm:$0xf]
      %v885 = vld [vmem:[%s1 + $0x5fc] sm:$0xf]
      %v886 = vld [vmem:[%s1 + $0x600] sm:$0xf]
      %v887 = vld [vmem:[%s1 + $0x604] sm:$0xf]
      %v888 = vld [vmem:[%s1 + $0x608] sm:$0xf]
      %v889 = vld [vmem:[%s1 + $0x60c] sm:$0xf]
      %v890 = vld [vmem:[%s1 + $0x610] sm:$0xf]
      %v891 = vld [vmem:[%s1 + $0x614] sm:$0xf]
      %v892 = vld [vmem:[%s1 + $0x618] sm:$0xf]
      %v893 = vld [vmem:[%s1 + $0x61c] sm:$0xf]
      %v894 = vld [vmem:[%s1 + $0x620] sm:$0xf]
      %v895 = vld [vmem:[%s1 + $0x624] sm:$0xf]
      %v896 = vld [vmem:[%s1 + $0x628] sm:$0xf]
      %v897 = vld [vmem:[%s1 + $0x62c] sm:$0xf]
      %v898 = vld [vmem:[%s1 + $0x630] sm:$0xf]
      %v899 = vld [vmem:[%s1 + $0x634] sm:$0xf]
      %v900 = vld [vmem:[%s1 + $0x638] sm:$0xf]
      %v901 = vld [vmem:[%s1 + $0x63c] sm:$0xf]
      %v902 = vld [vmem:[%s2] sm:$0x1]
      %v904 = vperm.slane %v902, 0
      %v1231 = vunpack.c.l.b16 %v177
      %v1232 = vunpack.c.h.b16 %v177
      %v1233 = vunpack.c.l.b16 %v178
      %v1234 = vunpack.c.h.b16 %v178
      %v1235 = vunpack.c.l.b16 %v179
      %v1236 = vunpack.c.h.b16 %v179
      %v1237 = vunpack.c.l.b16 %v180
      %v1238 = vunpack.c.h.b16 %v180
      %v1239 = vunpack.c.l.b16 %v181
      %v1240 = vunpack.c.h.b16 %v181
      %v1241 = vunpack.c.l.b16 %v182
      %v1242 = vunpack.c.h.b16 %v182
      %v1243 = vunpack.c.l.b16 %v183
      %v1244 = vunpack.c.h.b16 %v183
      %v1245 = vunpack.c.l.b16 %v184
      %v1246 = vunpack.c.h.b16 %v184
      %v1247 = vunpack.c.l.b16 %v185
      %v1248 = vunpack.c.h.b16 %v185
      %v1249 = vunpack.c.l.b16 %v186
      %v1250 = vunpack.c.h.b16 %v186
      %v1251 = vunpack.c.l.b16 %v187
      %v1252 = vunpack.c.h.b16 %v187
      %v1253 = vunpack.c.l.b16 %v188
      %v1254 = vunpack.c.h.b16 %v188
      %v1255 = vunpack.c.l.b16 %v189
      %v1256 = vunpack.c.l.b16 %v190
      %v1257 = vunpack.c.h.b16 %v190
      %v1258 = vunpack.c.l.b16 %v191
      %v1259 = vunpack.c.h.b16 %v191
      %v1260 = vunpack.c.l.b16 %v192
      %v1261 = vunpack.c.h.b16 %v192
      %v1262 = vunpack.c.l.b16 %v193
      %v1263 = vunpack.c.h.b16 %v193
      %v1264 = vunpack.c.l.b16 %v194
      %v1265 = vunpack.c.h.b16 %v194
      %v1266 = vunpack.c.l.b16 %v195
      %v1267 = vunpack.c.h.b16 %v195
      %v1268 = vunpack.c.l.b16 %v196
      %v1269 = vunpack.c.h.b16 %v196
      %v1270 = vunpack.c.l.b16 %v197
      %v1271 = vunpack.c.h.b16 %v197
      %v1272 = vunpack.c.l.b16 %v198
      %v1273 = vunpack.c.h.b16 %v198
      %v1274 = vunpack.c.l.b16 %v199
      %v1275 = vunpack.c.h.b16 %v199
      %v1276 = vunpack.c.l.b16 %v200
      %v1277 = vunpack.c.h.b16 %v200
      %v1278 = vunpack.c.l.b16 %v201
      %v1279 = vunpack.c.h.b16 %v201
      %v1280 = vunpack.c.l.b16 %v202
      %v1281 = vunpack.c.l.b16 %v203
      %v1282 = vunpack.c.h.b16 %v203
      %v1283 = vunpack.c.l.b16 %v204
      %v1284 = vunpack.c.h.b16 %v204
      %v1285 = vunpack.c.l.b16 %v205
      %v1286 = vunpack.c.h.b16 %v205
      %v1287 = vunpack.c.l.b16 %v206
      %v1288 = vunpack.c.h.b16 %v206
      %v1289 = vunpack.c.l.b16 %v207
      %v1290 = vunpack.c.h.b16 %v207
      %v1291 = vunpack.c.l.b16 %v208
      %v1292 = vunpack.c.h.b16 %v208
      %v1293 = vunpack.c.l.b16 %v209
      %v1294 = vunpack.c.h.b16 %v209
      %v1295 = vunpack.c.l.b16 %v210
      %v1296 = vunpack.c.h.b16 %v210
      %v1297 = vunpack.c.l.b16 %v211
      %v1298 = vunpack.c.h.b16 %v211
      %v1299 = vunpack.c.l.b16 %v212
      %v1300 = vunpack.c.h.b16 %v212
      %v1301 = vunpack.c.l.b16 %v213
      %v1302 = vunpack.c.h.b16 %v213
      %v1303 = vunpack.c.l.b16 %v214
      %v1304 = vunpack.c.h.b16 %v214
      %v1305 = vunpack.c.l.b16 %v215
      %v1306 = vunpack.c.l.b16 %v216
      %v1307 = vunpack.c.h.b16 %v216
      %v1308 = vunpack.c.l.b16 %v217
      %v1309 = vunpack.c.h.b16 %v217
      %v1310 = vunpack.c.l.b16 %v218
      %v1311 = vunpack.c.h.b16 %v218
      %v1312 = vunpack.c.l.b16 %v219
      %v1313 = vunpack.c.h.b16 %v219
      %v1314 = vunpack.c.l.b16 %v220
      %v1315 = vunpack.c.h.b16 %v220
      %v1316 = vunpack.c.l.b16 %v221
      %v1317 = vunpack.c.h.b16 %v221
      %v1318 = vunpack.c.l.b16 %v222
      %v1319 = vunpack.c.h.b16 %v222
      %v1320 = vunpack.c.l.b16 %v223
      %v1321 = vunpack.c.h.b16 %v223
      %v1322 = vunpack.c.l.b16 %v224
      %v1323 = vunpack.c.h.b16 %v224
      %v1324 = vunpack.c.l.b16 %v225
      %v1325 = vunpack.c.h.b16 %v225
      %v1326 = vunpack.c.l.b16 %v226
      %v1327 = vunpack.c.h.b16 %v226
      %v1328 = vunpack.c.l.b16 %v227
      %v1329 = vunpack.c.h.b16 %v227
      %v1330 = vunpack.c.l.b16 %v228
      %v1331 = vunpack.c.l.b16 %v229
      %v1332 = vunpack.c.h.b16 %v229
      %v1333 = vunpack.c.l.b16 %v230
      %v1334 = vunpack.c.h.b16 %v230
      %v1335 = vunpack.c.l.b16 %v231
      %v1336 = vunpack.c.h.b16 %v231
      %v1337 = vunpack.c.l.b16 %v232
      %v1338 = vunpack.c.h.b16 %v232
      %v1339 = vunpack.c.l.b16 %v233
      %v1340 = vunpack.c.h.b16 %v233
      %v1341 = vunpack.c.l.b16 %v234
      %v1342 = vunpack.c.h.b16 %v234
      %v1343 = vunpack.c.l.b16 %v235
      %v1344 = vunpack.c.h.b16 %v235
      %v1345 = vunpack.c.l.b16 %v236
      %v1346 = vunpack.c.h.b16 %v236
      %v1347 = vunpack.c.l.b16 %v237
      %v1348 = vunpack.c.h.b16 %v237
      %v1349 = vunpack.c.l.b16 %v238
      %v1350 = vunpack.c.h.b16 %v238
      %v1351 = vunpack.c.l.b16 %v239
      %v1352 = vunpack.c.h.b16 %v239
      %v1353 = vunpack.c.l.b16 %v240
      %v1354 = vunpack.c.h.b16 %v240
      %v1355 = vunpack.c.l.b16 %v241
      %v1356 = vunpack.c.l.b16 %v242
      %v1357 = vunpack.c.h.b16 %v242
      %v1358 = vunpack.c.l.b16 %v243
      %v1359 = vunpack.c.h.b16 %v243
      %v1360 = vunpack.c.l.b16 %v244
      %v1361 = vunpack.c.h.b16 %v244
      %v1362 = vunpack.c.l.b16 %v245
      %v1363 = vunpack.c.h.b16 %v245
      %v1364 = vunpack.c.l.b16 %v246
      %v1365 = vunpack.c.h.b16 %v246
      %v1366 = vunpack.c.l.b16 %v247
      %v1367 = vunpack.c.h.b16 %v247
      %v1368 = vunpack.c.l.b16 %v248
      %v1369 = vunpack.c.h.b16 %v248
      %v1370 = vunpack.c.l.b16 %v249
      %v1371 = vunpack.c.h.b16 %v249
      %v1372 = vunpack.c.l.b16 %v250
      %v1373 = vunpack.c.h.b16 %v250
      %v1374 = vunpack.c.l.b16 %v251
      %v1375 = vunpack.c.h.b16 %v251
      %v1376 = vunpack.c.l.b16 %v252
      %v1377 = vunpack.c.h.b16 %v252
      %v1378 = vunpack.c.l.b16 %v253
      %v1379 = vunpack.c.h.b16 %v253
      %v1380 = vunpack.c.l.b16 %v254
      %v1381 = vunpack.c.l.b16 %v255
      %v1382 = vunpack.c.h.b16 %v255
      %v1383 = vunpack.c.l.b16 %v256
      %v1384 = vunpack.c.h.b16 %v256
      %v1385 = vunpack.c.l.b16 %v257
      %v1386 = vunpack.c.h.b16 %v257
      %v1387 = vunpack.c.l.b16 %v258
      %v1388 = vunpack.c.h.b16 %v258
      %v1389 = vunpack.c.l.b16 %v259
      %v1390 = vunpack.c.h.b16 %v259
      %v1391 = vunpack.c.l.b16 %v260
      %v1392 = vunpack.c.h.b16 %v260
      %v1393 = vunpack.c.l.b16 %v261
      %v1394 = vunpack.c.h.b16 %v261
      %v1395 = vunpack.c.l.b16 %v262
      %v1396 = vunpack.c.h.b16 %v262
      %v1397 = vunpack.c.l.b16 %v263
      %v1398 = vunpack.c.h.b16 %v263
      %v1399 = vunpack.c.l.b16 %v264
      %v1400 = vunpack.c.h.b16 %v264
      %v1401 = vunpack.c.l.b16 %v265
      %v1402 = vunpack.c.h.b16 %v265
      %v1403 = vunpack.c.l.b16 %v266
      %v1404 = vunpack.c.h.b16 %v266
      %v1405 = vunpack.c.l.b16 %v267
      %v1406 = vunpack.c.l.b16 %v268
      %v1407 = vunpack.c.h.b16 %v268
      %v1408 = vunpack.c.l.b16 %v269
      %v1409 = vunpack.c.h.b16 %v269
      %v1410 = vunpack.c.l.b16 %v270
      %v1411 = vunpack.c.h.b16 %v270
      %v1412 = vunpack.c.l.b16 %v271
      %v1413 = vunpack.c.h.b16 %v271
      %v1414 = vunpack.c.l.b16 %v272
      %v1415 = vunpack.c.h.b16 %v272
      %v1416 = vunpack.c.l.b16 %v273
      %v1417 = vunpack.c.h.b16 %v273
      %v1418 = vunpack.c.l.b16 %v274
      %v1419 = vunpack.c.h.b16 %v274
      %v1420 = vunpack.c.l.b16 %v275
      %v1421 = vunpack.c.h.b16 %v275
      %v1422 = vunpack.c.l.b16 %v276
      %v1423 = vunpack.c.h.b16 %v276
      %v1424 = vunpack.c.l.b16 %v277
      %v1425 = vunpack.c.h.b16 %v277
      %v1426 = vunpack.c.l.b16 %v278
      %v1427 = vunpack.c.h.b16 %v278
      %v1428 = vunpack.c.l.b16 %v279
      %v1429 = vunpack.c.h.b16 %v279
      %v1430 = vunpack.c.l.b16 %v280
      %v1431 = vunpack.c.l.b16 %v281
      %v1432 = vunpack.c.h.b16 %v281
      %v1433 = vunpack.c.l.b16 %v282
      %v1434 = vunpack.c.h.b16 %v282
      %v1435 = vunpack.c.l.b16 %v283
      %v1436 = vunpack.c.h.b16 %v283
      %v1437 = vunpack.c.l.b16 %v284
      %v1438 = vunpack.c.h.b16 %v284
      %v1439 = vunpack.c.l.b16 %v285
      %v1440 = vunpack.c.h.b16 %v285
      %v1441 = vunpack.c.l.b16 %v286
      %v1442 = vunpack.c.h.b16 %v286
      %v1443 = vunpack.c.l.b16 %v287
      %v1444 = vunpack.c.h.b16 %v287
      %v1445 = vunpack.c.l.b16 %v288
      %v1446 = vunpack.c.h.b16 %v288
      %v1447 = vunpack.c.l.b16 %v289
      %v1448 = vunpack.c.h.b16 %v289
      %v1449 = vunpack.c.l.b16 %v290
      %v1450 = vunpack.c.h.b16 %v290
      %v1451 = vunpack.c.l.b16 %v291
      %v1452 = vunpack.c.h.b16 %v291
      %v1453 = vunpack.c.l.b16 %v292
      %v1454 = vunpack.c.h.b16 %v292
      %v1455 = vunpack.c.l.b16 %v293
      %v1456 = vunpack.c.l.b16 %v294
      %v1457 = vunpack.c.h.b16 %v294
      %v1458 = vunpack.c.l.b16 %v295
      %v1459 = vunpack.c.h.b16 %v295
      %v1460 = vunpack.c.l.b16 %v296
      %v1461 = vunpack.c.h.b16 %v296
      %v1462 = vunpack.c.l.b16 %v297
      %v1463 = vunpack.c.h.b16 %v297
      %v1464 = vunpack.c.l.b16 %v298
      %v1465 = vunpack.c.h.b16 %v298
      %v1466 = vunpack.c.l.b16 %v299
      %v1467 = vunpack.c.h.b16 %v299
      %v1468 = vunpack.c.l.b16 %v300
      %v1469 = vunpack.c.h.b16 %v300
      %v1470 = vunpack.c.l.b16 %v301
      %v1471 = vunpack.c.h.b16 %v301
      %v1472 = vunpack.c.l.b16 %v302
      %v1473 = vunpack.c.h.b16 %v302
      %v1474 = vunpack.c.l.b16 %v303
      %v1475 = vunpack.c.h.b16 %v303
      %v1476 = vunpack.c.l.b16 %v304
      %v1477 = vunpack.c.h.b16 %v304
      %v1478 = vunpack.c.l.b16 %v305
      %v1479 = vunpack.c.h.b16 %v305
      %v1480 = vunpack.c.l.b16 %v306
      %v1481 = vunpack.c.l.b16 %v307
      %v1482 = vunpack.c.h.b16 %v307
      %v1483 = vunpack.c.l.b16 %v308
      %v1484 = vunpack.c.h.b16 %v308
      %v1485 = vunpack.c.l.b16 %v309
      %v1486 = vunpack.c.h.b16 %v309
      %v1487 = vunpack.c.l.b16 %v310
      %v1488 = vunpack.c.h.b16 %v310
      %v1489 = vunpack.c.l.b16 %v311
      %v1490 = vunpack.c.h.b16 %v311
      %v1491 = vunpack.c.l.b16 %v312
      %v1492 = vunpack.c.h.b16 %v312
      %v1493 = vunpack.c.l.b16 %v313
      %v1494 = vunpack.c.h.b16 %v313
      %v1495 = vunpack.c.l.b16 %v314
      %v1496 = vunpack.c.h.b16 %v314
      %v1497 = vunpack.c.l.b16 %v315
      %v1498 = vunpack.c.h.b16 %v315
      %v1499 = vunpack.c.l.b16 %v316
      %v1500 = vunpack.c.h.b16 %v316
      %v1501 = vunpack.c.l.b16 %v317
      %v1502 = vunpack.c.h.b16 %v317
      %v1503 = vunpack.c.l.b16 %v318
      %v1504 = vunpack.c.h.b16 %v318
      %v1505 = vunpack.c.l.b16 %v319
      %v1506 = vunpack.c.l.b16 %v320
      %v1507 = vunpack.c.h.b16 %v320
      %v1508 = vunpack.c.l.b16 %v321
      %v1509 = vunpack.c.h.b16 %v321
      %v1510 = vunpack.c.l.b16 %v322
      %v1511 = vunpack.c.h.b16 %v322
      %v1512 = vunpack.c.l.b16 %v323
      %v1513 = vunpack.c.h.b16 %v323
      %v1514 = vunpack.c.l.b16 %v324
      %v1515 = vunpack.c.h.b16 %v324
      %v1516 = vunpack.c.l.b16 %v325
      %v1517 = vunpack.c.h.b16 %v325
      %v1518 = vunpack.c.l.b16 %v326
      %v1519 = vunpack.c.h.b16 %v326
      %v1520 = vunpack.c.l.b16 %v327
      %v1521 = vunpack.c.h.b16 %v327
      %v1522 = vunpack.c.l.b16 %v328
      %v1523 = vunpack.c.h.b16 %v328
      %v1524 = vunpack.c.l.b16 %v329
      %v1525 = vunpack.c.h.b16 %v329
      %v1526 = vunpack.c.l.b16 %v330
      %v1527 = vunpack.c.h.b16 %v330
      %v1528 = vunpack.c.l.b16 %v331
      %v1529 = vunpack.c.h.b16 %v331
      %v1530 = vunpack.c.l.b16 %v332
      %v1531 = vunpack.c.l.b16 %v333
      %v1532 = vunpack.c.h.b16 %v333
      %v1533 = vunpack.c.l.b16 %v334
      %v1534 = vunpack.c.h.b16 %v334
      %v1535 = vunpack.c.l.b16 %v335
      %v1536 = vunpack.c.h.b16 %v335
      %v1537 = vunpack.c.l.b16 %v336
      %v1538 = vunpack.c.h.b16 %v336
      %v1539 = vunpack.c.l.b16 %v337
      %v1540 = vunpack.c.h.b16 %v337
      %v1541 = vunpack.c.l.b16 %v338
      %v1542 = vunpack.c.h.b16 %v338
      %v1543 = vunpack.c.l.b16 %v339
      %v1544 = vunpack.c.h.b16 %v339
      %v1545 = vunpack.c.l.b16 %v340
      %v1546 = vunpack.c.h.b16 %v340
      %v1547 = vunpack.c.l.b16 %v341
      %v1548 = vunpack.c.h.b16 %v341
      %v1549 = vunpack.c.l.b16 %v342
      %v1550 = vunpack.c.h.b16 %v342
      %v1551 = vunpack.c.l.b16 %v343
      %v1552 = vunpack.c.h.b16 %v343
      %v1553 = vunpack.c.l.b16 %v344
      %v1554 = vunpack.c.h.b16 %v344
      %v1555 = vunpack.c.l.b16 %v345
      %v1556 = vunpack.c.l.b16 %v346
      %v1557 = vunpack.c.h.b16 %v346
      %v1558 = vunpack.c.l.b16 %v347
      %v1559 = vunpack.c.h.b16 %v347
      %v1560 = vunpack.c.l.b16 %v348
      %v1561 = vunpack.c.h.b16 %v348
      %v1562 = vunpack.c.l.b16 %v349
      %v1563 = vunpack.c.h.b16 %v349
      %v1564 = vunpack.c.l.b16 %v350
      %v1565 = vunpack.c.h.b16 %v350
      %v1566 = vunpack.c.l.b16 %v351
      %v1567 = vunpack.c.h.b16 %v351
      %v1568 = vunpack.c.l.b16 %v352
      %v1569 = vunpack.c.h.b16 %v352
      %v1570 = vunpack.c.l.b16 %v353
      %v1571 = vunpack.c.h.b16 %v353
      %v1572 = vunpack.c.l.b16 %v354
      %v1573 = vunpack.c.h.b16 %v354
      %v1574 = vunpack.c.l.b16 %v355
      %v1575 = vunpack.c.h.b16 %v355
      %v1576 = vunpack.c.l.b16 %v356
      %v1577 = vunpack.c.h.b16 %v356
      %v1578 = vunpack.c.l.b16 %v357
      %v1579 = vunpack.c.h.b16 %v357
      %v1580 = vunpack.c.l.b16 %v358
      %v1581 = vunpack.c.l.b16 %v359
      %v1582 = vunpack.c.h.b16 %v359
      %v1583 = vunpack.c.l.b16 %v360
      %v1584 = vunpack.c.h.b16 %v360
      %v1585 = vunpack.c.l.b16 %v361
      %v1586 = vunpack.c.h.b16 %v361
      %v1587 = vunpack.c.l.b16 %v362
      %v1588 = vunpack.c.h.b16 %v362
      %v1589 = vunpack.c.l.b16 %v363
      %v1590 = vunpack.c.h.b16 %v363
      %v1591 = vunpack.c.l.b16 %v364
      %v1592 = vunpack.c.h.b16 %v364
      %v1593 = vunpack.c.l.b16 %v365
      %v1594 = vunpack.c.h.b16 %v365
      %v1595 = vunpack.c.l.b16 %v366
      %v1596 = vunpack.c.h.b16 %v366
      %v1597 = vunpack.c.l.b16 %v367
      %v1598 = vunpack.c.h.b16 %v367
      %v1599 = vunpack.c.l.b16 %v368
      %v1600 = vunpack.c.h.b16 %v368
      %v1601 = vunpack.c.l.b16 %v369
      %v1602 = vunpack.c.h.b16 %v369
      %v1603 = vunpack.c.l.b16 %v370
      %v1604 = vunpack.c.h.b16 %v370
      %v1605 = vunpack.c.l.b16 %v371
      %v1606 = vunpack.c.l.b16 %v372
      %v1607 = vunpack.c.h.b16 %v372
      %v1608 = vunpack.c.l.b16 %v373
      %v1609 = vunpack.c.h.b16 %v373
      %v1610 = vunpack.c.l.b16 %v374
      %v1611 = vunpack.c.h.b16 %v374
      %v1612 = vunpack.c.l.b16 %v375
      %v1613 = vunpack.c.h.b16 %v375
      %v1614 = vunpack.c.l.b16 %v376
      %v1615 = vunpack.c.h.b16 %v376
      %v1616 = vunpack.c.l.b16 %v377
      %v1617 = vunpack.c.h.b16 %v377
      %v1618 = vunpack.c.l.b16 %v378
      %v1619 = vunpack.c.h.b16 %v378
      %v1620 = vunpack.c.l.b16 %v379
      %v1621 = vunpack.c.h.b16 %v379
      %v1622 = vunpack.c.l.b16 %v380
      %v1623 = vunpack.c.h.b16 %v380
      %v1624 = vunpack.c.l.b16 %v381
      %v1625 = vunpack.c.h.b16 %v381
      %v1626 = vunpack.c.l.b16 %v382
      %v1627 = vunpack.c.h.b16 %v382
      %v1628 = vunpack.c.l.b16 %v383
      %v1629 = vunpack.c.h.b16 %v383
      %v1630 = vunpack.c.l.b16 %v384
      %v1631 = vunpack.c.l.b16 %v385
      %v1632 = vunpack.c.h.b16 %v385
      %v1633 = vunpack.c.l.b16 %v386
      %v1634 = vunpack.c.h.b16 %v386
      %v1635 = vunpack.c.l.b16 %v387
      %v1636 = vunpack.c.h.b16 %v387
      %v1637 = vunpack.c.l.b16 %v388
      %v1638 = vunpack.c.h.b16 %v388
      %v1639 = vunpack.c.l.b16 %v389
      %v1640 = vunpack.c.h.b16 %v389
      %v1641 = vunpack.c.l.b16 %v390
      %v1642 = vunpack.c.h.b16 %v390
      %v1643 = vunpack.c.l.b16 %v391
      %v1644 = vunpack.c.h.b16 %v391
      %v1645 = vunpack.c.l.b16 %v392
      %v1646 = vunpack.c.h.b16 %v392
      %v1647 = vunpack.c.l.b16 %v393
      %v1648 = vunpack.c.h.b16 %v393
      %v1649 = vunpack.c.l.b16 %v394
      %v1650 = vunpack.c.h.b16 %v394
      %v1651 = vunpack.c.l.b16 %v395
      %v1652 = vunpack.c.h.b16 %v395
      %v1653 = vunpack.c.l.b16 %v396
      %v1654 = vunpack.c.h.b16 %v396
      %v1655 = vunpack.c.l.b16 %v397
      %v1656 = vunpack.c.l.b16 %v398
      %v1657 = vunpack.c.h.b16 %v398
      %v1658 = vunpack.c.l.b16 %v399
      %v1659 = vunpack.c.h.b16 %v399
      %v1660 = vunpack.c.l.b16 %v400
      %v1661 = vunpack.c.h.b16 %v400
      %v1662 = vunpack.c.l.b16 %v401
      %v1663 = vunpack.c.h.b16 %v401
      %v1664 = vunpack.c.l.b16 %v402
      %v1665 = vunpack.c.h.b16 %v402
      %v1666 = vunpack.c.l.b16 %v403
      %v1667 = vunpack.c.h.b16 %v403
      %v1668 = vunpack.c.l.b16 %v404
      %v1669 = vunpack.c.h.b16 %v404
      %v1670 = vunpack.c.l.b16 %v405
      %v1671 = vunpack.c.h.b16 %v405
      %v1672 = vunpack.c.l.b16 %v406
      %v1673 = vunpack.c.h.b16 %v406
      %v1674 = vunpack.c.l.b16 %v407
      %v1675 = vunpack.c.h.b16 %v407
      %v1676 = vunpack.c.l.b16 %v408
      %v1677 = vunpack.c.h.b16 %v408
      %v1678 = vunpack.c.l.b16 %v409
      %v1679 = vunpack.c.h.b16 %v409
      %v1680 = vunpack.c.l.b16 %v410
      %v1681 = vunpack.c.l.b16 %v411
      %v1682 = vunpack.c.h.b16 %v411
      %v1683 = vunpack.c.l.b16 %v412
      %v1684 = vunpack.c.h.b16 %v412
      %v1685 = vunpack.c.l.b16 %v413
      %v1686 = vunpack.c.h.b16 %v413
      %v1687 = vunpack.c.l.b16 %v414
      %v1688 = vunpack.c.h.b16 %v414
      %v1689 = vunpack.c.l.b16 %v415
      %v1690 = vunpack.c.h.b16 %v415
      %v1691 = vunpack.c.l.b16 %v416
      %v1692 = vunpack.c.h.b16 %v416
      %v1693 = vunpack.c.l.b16 %v417
      %v1694 = vunpack.c.h.b16 %v417
      %v1695 = vunpack.c.l.b16 %v418
      %v1696 = vunpack.c.h.b16 %v418
      %v1697 = vunpack.c.l.b16 %v419
      %v1698 = vunpack.c.h.b16 %v419
      %v1699 = vunpack.c.l.b16 %v420
      %v1700 = vunpack.c.h.b16 %v420
      %v1701 = vunpack.c.l.b16 %v421
      %v1702 = vunpack.c.h.b16 %v421
      %v1703 = vunpack.c.l.b16 %v422
      %v1704 = vunpack.c.h.b16 %v422
      %v1705 = vunpack.c.l.b16 %v423
      %v1706 = vunpack.c.l.b16 %v424
      %v1707 = vunpack.c.h.b16 %v424
      %v1708 = vunpack.c.l.b16 %v425
      %v1709 = vunpack.c.h.b16 %v425
      %v1710 = vunpack.c.l.b16 %v426
      %v1711 = vunpack.c.h.b16 %v426
      %v1712 = vunpack.c.l.b16 %v427
      %v1713 = vunpack.c.h.b16 %v427
      %v1714 = vunpack.c.l.b16 %v428
      %v1715 = vunpack.c.h.b16 %v428
      %v1716 = vunpack.c.l.b16 %v429
      %v1717 = vunpack.c.h.b16 %v429
      %v1718 = vunpack.c.l.b16 %v430
      %v1719 = vunpack.c.h.b16 %v430
      %v1720 = vunpack.c.l.b16 %v431
      %v1721 = vunpack.c.h.b16 %v431
      %v1722 = vunpack.c.l.b16 %v432
      %v1723 = vunpack.c.h.b16 %v432
      %v1724 = vunpack.c.l.b16 %v433
      %v1725 = vunpack.c.h.b16 %v433
      %v1726 = vunpack.c.l.b16 %v434
      %v1727 = vunpack.c.h.b16 %v434
      %v1728 = vunpack.c.l.b16 %v435
      %v1729 = vunpack.c.h.b16 %v435
      %v1730 = vunpack.c.l.b16 %v436
      %v1731 = vunpack.c.l.b16 %v437
      %v1732 = vunpack.c.h.b16 %v437
      %v1733 = vunpack.c.l.b16 %v438
      %v1734 = vunpack.c.h.b16 %v438
      %v1735 = vunpack.c.l.b16 %v439
      %v1736 = vunpack.c.h.b16 %v439
      %v1737 = vunpack.c.l.b16 %v440
      %v1738 = vunpack.c.h.b16 %v440
      %v1739 = vunpack.c.l.b16 %v441
      %v1740 = vunpack.c.h.b16 %v441
      %v1741 = vunpack.c.l.b16 %v442
      %v1742 = vunpack.c.h.b16 %v442
      %v1743 = vunpack.c.l.b16 %v443
      %v1744 = vunpack.c.h.b16 %v443
      %v1745 = vunpack.c.l.b16 %v444
      %v1746 = vunpack.c.h.b16 %v444
      %v1747 = vunpack.c.l.b16 %v445
      %v1748 = vunpack.c.h.b16 %v445
      %v1749 = vunpack.c.l.b16 %v446
      %v1750 = vunpack.c.h.b16 %v446
      %v1751 = vunpack.c.l.b16 %v447
      %v1752 = vunpack.c.h.b16 %v447
      %v1753 = vunpack.c.l.b16 %v448
      %v1754 = vunpack.c.h.b16 %v448
      %v1755 = vunpack.c.l.b16 %v449
      %v1756 = vunpack.c.l.b16 %v450
      %v1757 = vunpack.c.h.b16 %v450
      %v1758 = vunpack.c.l.b16 %v451
      %v1759 = vunpack.c.h.b16 %v451
      %v1760 = vunpack.c.l.b16 %v452
      %v1761 = vunpack.c.h.b16 %v452
      %v1762 = vunpack.c.l.b16 %v453
      %v1763 = vunpack.c.h.b16 %v453
      %v1764 = vunpack.c.l.b16 %v454
      %v1765 = vunpack.c.h.b16 %v454
      %v1766 = vunpack.c.l.b16 %v455
      %v1767 = vunpack.c.h.b16 %v455
      %v1768 = vunpack.c.l.b16 %v456
      %v1769 = vunpack.c.h.b16 %v456
      %v1770 = vunpack.c.l.b16 %v457
      %v1771 = vunpack.c.h.b16 %v457
      %v1772 = vunpack.c.l.b16 %v458
      %v1773 = vunpack.c.h.b16 %v458
      %v1774 = vunpack.c.l.b16 %v459
      %v1775 = vunpack.c.h.b16 %v459
      %v1776 = vunpack.c.l.b16 %v460
      %v1777 = vunpack.c.h.b16 %v460
      %v1778 = vunpack.c.l.b16 %v461
      %v1779 = vunpack.c.h.b16 %v461
      %v1780 = vunpack.c.l.b16 %v462
      %v1781 = vunpack.c.l.b16 %v463
      %v1782 = vunpack.c.h.b16 %v463
      %v1783 = vunpack.c.l.b16 %v464
      %v1784 = vunpack.c.h.b16 %v464
      %v1785 = vunpack.c.l.b16 %v465
      %v1786 = vunpack.c.h.b16 %v465
      %v1787 = vunpack.c.l.b16 %v466
      %v1788 = vunpack.c.h.b16 %v466
      %v1789 = vunpack.c.l.b16 %v467
      %v1790 = vunpack.c.h.b16 %v467
      %v1791 = vunpack.c.l.b16 %v468
      %v1792 = vunpack.c.h.b16 %v468
      %v1793 = vunpack.c.l.b16 %v469
      %v1794 = vunpack.c.h.b16 %v469
      %v1795 = vunpack.c.l.b16 %v470
      %v1796 = vunpack.c.h.b16 %v470
      %v1797 = vunpack.c.l.b16 %v471
      %v1798 = vunpack.c.h.b16 %v471
      %v1799 = vunpack.c.l.b16 %v472
      %v1800 = vunpack.c.h.b16 %v472
      %v1801 = vunpack.c.l.b16 %v473
      %v1802 = vunpack.c.h.b16 %v473
      %v1803 = vunpack.c.l.b16 %v474
      %v1804 = vunpack.c.h.b16 %v474
      %v1805 = vunpack.c.l.b16 %v475
      %v1806 = vunpack.c.l.b16 %v476
      %v1807 = vunpack.c.h.b16 %v476
      %v1808 = vunpack.c.l.b16 %v477
      %v1809 = vunpack.c.h.b16 %v477
      %v1810 = vunpack.c.l.b16 %v478
      %v1811 = vunpack.c.h.b16 %v478
      %v1812 = vunpack.c.l.b16 %v479
      %v1813 = vunpack.c.h.b16 %v479
      %v1814 = vunpack.c.l.b16 %v480
      %v1815 = vunpack.c.h.b16 %v480
      %v1816 = vunpack.c.l.b16 %v481
      %v1817 = vunpack.c.h.b16 %v481
      %v1818 = vunpack.c.l.b16 %v482
      %v1819 = vunpack.c.h.b16 %v482
      %v1820 = vunpack.c.l.b16 %v483
      %v1821 = vunpack.c.h.b16 %v483
      %v1822 = vunpack.c.l.b16 %v484
      %v1823 = vunpack.c.h.b16 %v484
      %v1824 = vunpack.c.l.b16 %v485
      %v1825 = vunpack.c.h.b16 %v485
      %v1826 = vunpack.c.l.b16 %v486
      %v1827 = vunpack.c.h.b16 %v486
      %v1828 = vunpack.c.l.b16 %v487
      %v1829 = vunpack.c.h.b16 %v487
      %v1830 = vunpack.c.l.b16 %v488
      %v1831 = vunpack.c.l.b16 %v489
      %v1832 = vunpack.c.h.b16 %v489
      %v1833 = vunpack.c.l.b16 %v490
      %v1834 = vunpack.c.h.b16 %v490
      %v1835 = vunpack.c.l.b16 %v491
      %v1836 = vunpack.c.h.b16 %v491
      %v1837 = vunpack.c.l.b16 %v492
      %v1838 = vunpack.c.h.b16 %v492
      %v1839 = vunpack.c.l.b16 %v493
      %v1840 = vunpack.c.h.b16 %v493
      %v1841 = vunpack.c.l.b16 %v494
      %v1842 = vunpack.c.h.b16 %v494
      %v1843 = vunpack.c.l.b16 %v495
      %v1844 = vunpack.c.h.b16 %v495
      %v1845 = vunpack.c.l.b16 %v496
      %v1846 = vunpack.c.h.b16 %v496
      %v1847 = vunpack.c.l.b16 %v497
      %v1848 = vunpack.c.h.b16 %v497
      %v1849 = vunpack.c.l.b16 %v498
      %v1850 = vunpack.c.h.b16 %v498
      %v1851 = vunpack.c.l.b16 %v499
      %v1852 = vunpack.c.h.b16 %v499
      %v1853 = vunpack.c.l.b16 %v500
      %v1854 = vunpack.c.h.b16 %v500
      %v1855 = vunpack.c.l.b16 %v501
      %v1856 = vpack.c.b16 %v1256, %v1231
      %v1857 = vpack.c.b16 %v1257, %v1232
      %v1858 = vpack.c.b16 %v1258, %v1233
      %v1859 = vpack.c.b16 %v1259, %v1234
      %v1860 = vpack.c.b16 %v1260, %v1235
      %v1861 = vpack.c.b16 %v1261, %v1236
      %v1862 = vpack.c.b16 %v1262, %v1237
      %v1863 = vpack.c.b16 %v1263, %v1238
      %v1864 = vpack.c.b16 %v1264, %v1239
      %v1865 = vpack.c.b16 %v1265, %v1240
      %v1866 = vpack.c.b16 %v1266, %v1241
      %v1867 = vpack.c.b16 %v1267, %v1242
      %v1868 = vpack.c.b16 %v1268, %v1243
      %v1869 = vpack.c.b16 %v1269, %v1244
      %v1870 = vpack.c.b16 %v1270, %v1245
      %v1871 = vpack.c.b16 %v1271, %v1246
      %v1872 = vpack.c.b16 %v1272, %v1247
      %v1873 = vpack.c.b16 %v1273, %v1248
      %v1874 = vpack.c.b16 %v1274, %v1249
      %v1875 = vpack.c.b16 %v1275, %v1250
      %v1876 = vpack.c.b16 %v1276, %v1251
      %v1877 = vpack.c.b16 %v1277, %v1252
      %v1878 = vpack.c.b16 %v1278, %v1253
      %v1879 = vpack.c.b16 %v1279, %v1254
      %v1880 = vpack.c.b16 %v1280, %v1255
      %v1881 = vpack.c.b16 %v1306, %v1281
      %v1882 = vpack.c.b16 %v1307, %v1282
      %v1883 = vpack.c.b16 %v1308, %v1283
      %v1884 = vpack.c.b16 %v1309, %v1284
      %v1885 = vpack.c.b16 %v1310, %v1285
      %v1886 = vpack.c.b16 %v1311, %v1286
      %v1887 = vpack.c.b16 %v1312, %v1287
      %v1888 = vpack.c.b16 %v1313, %v1288
      %v1889 = vpack.c.b16 %v1314, %v1289
      %v1890 = vpack.c.b16 %v1315, %v1290
      %v1891 = vpack.c.b16 %v1316, %v1291
      %v1892 = vpack.c.b16 %v1317, %v1292
      %v1893 = vpack.c.b16 %v1318, %v1293
      %v1894 = vpack.c.b16 %v1319, %v1294
      %v1895 = vpack.c.b16 %v1320, %v1295
      %v1896 = vpack.c.b16 %v1321, %v1296
      %v1897 = vpack.c.b16 %v1322, %v1297
      %v1898 = vpack.c.b16 %v1323, %v1298
      %v1899 = vpack.c.b16 %v1324, %v1299
      %v1900 = vpack.c.b16 %v1325, %v1300
      %v1901 = vpack.c.b16 %v1326, %v1301
      %v1902 = vpack.c.b16 %v1327, %v1302
      %v1903 = vpack.c.b16 %v1328, %v1303
      %v1904 = vpack.c.b16 %v1329, %v1304
      %v1905 = vpack.c.b16 %v1330, %v1305
      %v1906 = vpack.c.b16 %v1356, %v1331
      %v1907 = vpack.c.b16 %v1357, %v1332
      %v1908 = vpack.c.b16 %v1358, %v1333
      %v1909 = vpack.c.b16 %v1359, %v1334
      %v1910 = vpack.c.b16 %v1360, %v1335
      %v1911 = vpack.c.b16 %v1361, %v1336
      %v1912 = vpack.c.b16 %v1362, %v1337
      %v1913 = vpack.c.b16 %v1363, %v1338
      %v1914 = vpack.c.b16 %v1364, %v1339
      %v1915 = vpack.c.b16 %v1365, %v1340
      %v1916 = vpack.c.b16 %v1366, %v1341
      %v1917 = vpack.c.b16 %v1367, %v1342
      %v1918 = vpack.c.b16 %v1368, %v1343
      %v1919 = vpack.c.b16 %v1369, %v1344
      %v1920 = vpack.c.b16 %v1370, %v1345
      %v1921 = vpack.c.b16 %v1371, %v1346
      %v1922 = vpack.c.b16 %v1372, %v1347
      %v1923 = vpack.c.b16 %v1373, %v1348
      %v1924 = vpack.c.b16 %v1374, %v1349
      %v1925 = vpack.c.b16 %v1375, %v1350
      %v1926 = vpack.c.b16 %v1376, %v1351
      %v1927 = vpack.c.b16 %v1377, %v1352
      %v1928 = vpack.c.b16 %v1378, %v1353
      %v1929 = vpack.c.b16 %v1379, %v1354
      %v1930 = vpack.c.b16 %v1380, %v1355
      %v1931 = vpack.c.b16 %v1406, %v1381
      %v1932 = vpack.c.b16 %v1407, %v1382
      %v1933 = vpack.c.b16 %v1408, %v1383
      %v1934 = vpack.c.b16 %v1409, %v1384
      %v1935 = vpack.c.b16 %v1410, %v1385
      %v1936 = vpack.c.b16 %v1411, %v1386
      %v1937 = vpack.c.b16 %v1412, %v1387
      %v1938 = vpack.c.b16 %v1413, %v1388
      %v1939 = vpack.c.b16 %v1414, %v1389
      %v1940 = vpack.c.b16 %v1415, %v1390
      %v1941 = vpack.c.b16 %v1416, %v1391
      %v1942 = vpack.c.b16 %v1417, %v1392
      %v1943 = vpack.c.b16 %v1418, %v1393
      %v1944 = vpack.c.b16 %v1419, %v1394
      %v1945 = vpack.c.b16 %v1420, %v1395
      %v1946 = vpack.c.b16 %v1421, %v1396
      %v1947 = vpack.c.b16 %v1422, %v1397
      %v1948 = vpack.c.b16 %v1423, %v1398
      %v1949 = vpack.c.b16 %v1424, %v1399
      %v1950 = vpack.c.b16 %v1425, %v1400
      %v1951 = vpack.c.b16 %v1426, %v1401
      %v1952 = vpack.c.b16 %v1427, %v1402
      %v1953 = vpack.c.b16 %v1428, %v1403
      %v1954 = vpack.c.b16 %v1429, %v1404
      %v1955 = vpack.c.b16 %v1430, %v1405
      %v1956 = vpack.c.b16 %v1456, %v1431
      %v1957 = vpack.c.b16 %v1457, %v1432
      %v1958 = vpack.c.b16 %v1458, %v1433
      %v1959 = vpack.c.b16 %v1459, %v1434
      %v1960 = vpack.c.b16 %v1460, %v1435
      %v1961 = vpack.c.b16 %v1461, %v1436
      %v1962 = vpack.c.b16 %v1462, %v1437
      %v1963 = vpack.c.b16 %v1463, %v1438
      %v1964 = vpack.c.b16 %v1464, %v1439
      %v1965 = vpack.c.b16 %v1465, %v1440
      %v1966 = vpack.c.b16 %v1466, %v1441
      %v1967 = vpack.c.b16 %v1467, %v1442
      %v1968 = vpack.c.b16 %v1468, %v1443
      %v1969 = vpack.c.b16 %v1469, %v1444
      %v1970 = vpack.c.b16 %v1470, %v1445
      %v1971 = vpack.c.b16 %v1471, %v1446
      %v1972 = vpack.c.b16 %v1472, %v1447
      %v1973 = vpack.c.b16 %v1473, %v1448
      %v1974 = vpack.c.b16 %v1474, %v1449
      %v1975 = vpack.c.b16 %v1475, %v1450
      %v1976 = vpack.c.b16 %v1476, %v1451
      %v1977 = vpack.c.b16 %v1477, %v1452
      %v1978 = vpack.c.b16 %v1478, %v1453
      %v1979 = vpack.c.b16 %v1479, %v1454
      %v1980 = vpack.c.b16 %v1480, %v1455
      %v1981 = vpack.c.b16 %v1506, %v1481
      %v1982 = vpack.c.b16 %v1507, %v1482
      %v1983 = vpack.c.b16 %v1508, %v1483
      %v1984 = vpack.c.b16 %v1509, %v1484
      %v1985 = vpack.c.b16 %v1510, %v1485
      %v1986 = vpack.c.b16 %v1511, %v1486
      %v1987 = vpack.c.b16 %v1512, %v1487
      %v1988 = vpack.c.b16 %v1513, %v1488
      %v1989 = vpack.c.b16 %v1514, %v1489
      %v1990 = vpack.c.b16 %v1515, %v1490
      %v1991 = vpack.c.b16 %v1516, %v1491
      %v1992 = vpack.c.b16 %v1517, %v1492
      %v1993 = vpack.c.b16 %v1518, %v1493
      %v1994 = vpack.c.b16 %v1519, %v1494
      %v1995 = vpack.c.b16 %v1520, %v1495
      %v1996 = vpack.c.b16 %v1521, %v1496
      %v1997 = vpack.c.b16 %v1522, %v1497
      %v1998 = vpack.c.b16 %v1523, %v1498
      %v1999 = vpack.c.b16 %v1524, %v1499
      %v2000 = vpack.c.b16 %v1525, %v1500
      %v2001 = vpack.c.b16 %v1526, %v1501
      %v2002 = vpack.c.b16 %v1527, %v1502
      %v2003 = vpack.c.b16 %v1528, %v1503
      %v2004 = vpack.c.b16 %v1529, %v1504
      %v2005 = vpack.c.b16 %v1530, %v1505
      %v2006 = vpack.c.b16 %v1556, %v1531
      %v2007 = vpack.c.b16 %v1557, %v1532
      %v2008 = vpack.c.b16 %v1558, %v1533
      %v2009 = vpack.c.b16 %v1559, %v1534
      %v2010 = vpack.c.b16 %v1560, %v1535
      %v2011 = vpack.c.b16 %v1561, %v1536
      %v2012 = vpack.c.b16 %v1562, %v1537
      %v2013 = vpack.c.b16 %v1563, %v1538
      %v2014 = vpack.c.b16 %v1564, %v1539
      %v2015 = vpack.c.b16 %v1565, %v1540
      %v2016 = vpack.c.b16 %v1566, %v1541
      %v2017 = vpack.c.b16 %v1567, %v1542
      %v2018 = vpack.c.b16 %v1568, %v1543
      %v2019 = vpack.c.b16 %v1569, %v1544
      %v2020 = vpack.c.b16 %v1570, %v1545
      %v2021 = vpack.c.b16 %v1571, %v1546
      %v2022 = vpack.c.b16 %v1572, %v1547
      %v2023 = vpack.c.b16 %v1573, %v1548
      %v2024 = vpack.c.b16 %v1574, %v1549
      %v2025 = vpack.c.b16 %v1575, %v1550
      %v2026 = vpack.c.b16 %v1576, %v1551
      %v2027 = vpack.c.b16 %v1577, %v1552
      %v2028 = vpack.c.b16 %v1578, %v1553
      %v2029 = vpack.c.b16 %v1579, %v1554
      %v2030 = vpack.c.b16 %v1580, %v1555
      %v2031 = vpack.c.b16 %v1606, %v1581
      %v2032 = vpack.c.b16 %v1607, %v1582
      %v2033 = vpack.c.b16 %v1608, %v1583
      %v2034 = vpack.c.b16 %v1609, %v1584
      %v2035 = vpack.c.b16 %v1610, %v1585
      %v2036 = vpack.c.b16 %v1611, %v1586
      %v2037 = vpack.c.b16 %v1612, %v1587
      %v2038 = vpack.c.b16 %v1613, %v1588
      %v2039 = vpack.c.b16 %v1614, %v1589
      %v2040 = vpack.c.b16 %v1615, %v1590
      %v2041 = vpack.c.b16 %v1616, %v1591
      %v2042 = vpack.c.b16 %v1617, %v1592
      %v2043 = vpack.c.b16 %v1618, %v1593
      %v2044 = vpack.c.b16 %v1619, %v1594
      %v2045 = vpack.c.b16 %v1620, %v1595
      %v2046 = vpack.c.b16 %v1621, %v1596
      %v2047 = vpack.c.b16 %v1622, %v1597
      %v2048 = vpack.c.b16 %v1623, %v1598
      %v2049 = vpack.c.b16 %v1624, %v1599
      %v2050 = vpack.c.b16 %v1625, %v1600
      %v2051 = vpack.c.b16 %v1626, %v1601
      %v2052 = vpack.c.b16 %v1627, %v1602
      %v2053 = vpack.c.b16 %v1628, %v1603
      %v2054 = vpack.c.b16 %v1629, %v1604
      %v2055 = vpack.c.b16 %v1630, %v1605
      %v2056 = vpack.c.b16 %v1656, %v1631
      %v2057 = vpack.c.b16 %v1657, %v1632
      %v2058 = vpack.c.b16 %v1658, %v1633
      %v2059 = vpack.c.b16 %v1659, %v1634
      %v2060 = vpack.c.b16 %v1660, %v1635
      %v2061 = vpack.c.b16 %v1661, %v1636
      %v2062 = vpack.c.b16 %v1662, %v1637
      %v2063 = vpack.c.b16 %v1663, %v1638
      %v2064 = vpack.c.b16 %v1664, %v1639
      %v2065 = vpack.c.b16 %v1665, %v1640
      %v2066 = vpack.c.b16 %v1666, %v1641
      %v2067 = vpack.c.b16 %v1667, %v1642
      %v2068 = vpack.c.b16 %v1668, %v1643
      %v2069 = vpack.c.b16 %v1669, %v1644
      %v2070 = vpack.c.b16 %v1670, %v1645
      %v2071 = vpack.c.b16 %v1671, %v1646
      %v2072 = vpack.c.b16 %v1672, %v1647
      %v2073 = vpack.c.b16 %v1673, %v1648
      %v2074 = vpack.c.b16 %v1674, %v1649
      %v2075 = vpack.c.b16 %v1675, %v1650
      %v2076 = vpack.c.b16 %v1676, %v1651
      %v2077 = vpack.c.b16 %v1677, %v1652
      %v2078 = vpack.c.b16 %v1678, %v1653
      %v2079 = vpack.c.b16 %v1679, %v1654
      %v2080 = vpack.c.b16 %v1680, %v1655
      %v2081 = vpack.c.b16 %v1706, %v1681
      %v2082 = vpack.c.b16 %v1707, %v1682
      %v2083 = vpack.c.b16 %v1708, %v1683
      %v2084 = vpack.c.b16 %v1709, %v1684
      %v2085 = vpack.c.b16 %v1710, %v1685
      %v2086 = vpack.c.b16 %v1711, %v1686
      %v2087 = vpack.c.b16 %v1712, %v1687
      %v2088 = vpack.c.b16 %v1713, %v1688
      %v2089 = vpack.c.b16 %v1714, %v1689
      %v2090 = vpack.c.b16 %v1715, %v1690
      %v2091 = vpack.c.b16 %v1716, %v1691
      %v2092 = vpack.c.b16 %v1717, %v1692
      %v2093 = vpack.c.b16 %v1718, %v1693
      %v2094 = vpack.c.b16 %v1719, %v1694
      %v2095 = vpack.c.b16 %v1720, %v1695
      %v2096 = vpack.c.b16 %v1721, %v1696
      %v2097 = vpack.c.b16 %v1722, %v1697
      %v2098 = vpack.c.b16 %v1723, %v1698
      %v2099 = vpack.c.b16 %v1724, %v1699
      %v2100 = vpack.c.b16 %v1725, %v1700
      %v2101 = vpack.c.b16 %v1726, %v1701
      %v2102 = vpack.c.b16 %v1727, %v1702
      %v2103 = vpack.c.b16 %v1728, %v1703
      %v2104 = vpack.c.b16 %v1729, %v1704
      %v2105 = vpack.c.b16 %v1730, %v1705
      %v2106 = vpack.c.b16 %v1756, %v1731
      %v2107 = vpack.c.b16 %v1757, %v1732
      %v2108 = vpack.c.b16 %v1758, %v1733
      %v2109 = vpack.c.b16 %v1759, %v1734
      %v2110 = vpack.c.b16 %v1760, %v1735
      %v2111 = vpack.c.b16 %v1761, %v1736
      %v2112 = vpack.c.b16 %v1762, %v1737
      %v2113 = vpack.c.b16 %v1763, %v1738
      %v2114 = vpack.c.b16 %v1764, %v1739
      %v2115 = vpack.c.b16 %v1765, %v1740
      %v2116 = vpack.c.b16 %v1766, %v1741
      %v2117 = vpack.c.b16 %v1767, %v1742
      %v2118 = vpack.c.b16 %v1768, %v1743
      %v2119 = vpack.c.b16 %v1769, %v1744
      %v2120 = vpack.c.b16 %v1770, %v1745
      %v2121 = vpack.c.b16 %v1771, %v1746
      %v2122 = vpack.c.b16 %v1772, %v1747
      %v2123 = vpack.c.b16 %v1773, %v1748
      %v2124 = vpack.c.b16 %v1774, %v1749
      %v2125 = vpack.c.b16 %v1775, %v1750
      %v2126 = vpack.c.b16 %v1776, %v1751
      %v2127 = vpack.c.b16 %v1777, %v1752
      %v2128 = vpack.c.b16 %v1778, %v1753
      %v2129 = vpack.c.b16 %v1779, %v1754
      %v2130 = vpack.c.b16 %v1780, %v1755
      %v2131 = vpack.c.b16 %v1806, %v1781
      %v2132 = vpack.c.b16 %v1807, %v1782
      %v2133 = vpack.c.b16 %v1808, %v1783
      %v2134 = vpack.c.b16 %v1809, %v1784
      %v2135 = vpack.c.b16 %v1810, %v1785
      %v2136 = vpack.c.b16 %v1811, %v1786
      %v2137 = vpack.c.b16 %v1812, %v1787
      %v2138 = vpack.c.b16 %v1813, %v1788
      %v2139 = vpack.c.b16 %v1814, %v1789
      %v2140 = vpack.c.b16 %v1815, %v1790
      %v2141 = vpack.c.b16 %v1816, %v1791
      %v2142 = vpack.c.b16 %v1817, %v1792
      %v2143 = vpack.c.b16 %v1818, %v1793
      %v2144 = vpack.c.b16 %v1819, %v1794
      %v2145 = vpack.c.b16 %v1820, %v1795
      %v2146 = vpack.c.b16 %v1821, %v1796
      %v2147 = vpack.c.b16 %v1822, %v1797
      %v2148 = vpack.c.b16 %v1823, %v1798
      %v2149 = vpack.c.b16 %v1824, %v1799
      %v2150 = vpack.c.b16 %v1825, %v1800
      %v2151 = vpack.c.b16 %v1826, %v1801
      %v2152 = vpack.c.b16 %v1827, %v1802
      %v2153 = vpack.c.b16 %v1828, %v1803
      %v2154 = vpack.c.b16 %v1829, %v1804
      %v2155 = vpack.c.b16 %v1830, %v1805
      %v2156 = vpack.c.b16 %v1831, %v1831
      %v2157 = vpack.c.b16 %v1832, %v1832
      %v2158 = vpack.c.b16 %v1833, %v1833
      %v2159 = vpack.c.b16 %v1834, %v1834
      %v2160 = vpack.c.b16 %v1835, %v1835
      %v2161 = vpack.c.b16 %v1836, %v1836
      %v2162 = vpack.c.b16 %v1837, %v1837
      %v2163 = vpack.c.b16 %v1838, %v1838
      %v2164 = vpack.c.b16 %v1839, %v1839
      %v2165 = vpack.c.b16 %v1840, %v1840
      %v2166 = vpack.c.b16 %v1841, %v1841
      %v2167 = vpack.c.b16 %v1842, %v1842
      %v2168 = vpack.c.b16 %v1843, %v1843
      %v2169 = vpack.c.b16 %v1844, %v1844
      %v2170 = vpack.c.b16 %v1845, %v1845
      %v2171 = vpack.c.b16 %v1846, %v1846
      %v2172 = vpack.c.b16 %v1847, %v1847
      %v2173 = vpack.c.b16 %v1848, %v1848
      %v2174 = vpack.c.b16 %v1849, %v1849
      %v2175 = vpack.c.b16 %v1850, %v1850
      %v2176 = vpack.c.b16 %v1851, %v1851
      %v2177 = vpack.c.b16 %v1852, %v1852
      %v2178 = vpack.c.b16 %v1853, %v1853
      %v2179 = vpack.c.b16 %v1854, %v1854
      %v2180 = vpack.c.b16 %v1855, %v1855
      %v2906 = vunpack.c.l.b16 %v502
      %v2907 = vunpack.c.l.b16 %v503
      %v2908 = vunpack.c.l.b16 %v504
      %v2909 = vunpack.c.l.b16 %v505
      %v2910 = vunpack.c.l.b16 %v506
      %v2911 = vunpack.c.l.b16 %v507
      %v2912 = vunpack.c.l.b16 %v508
      %v2913 = vunpack.c.l.b16 %v509
      %v2914 = vunpack.c.l.b16 %v510
      %v2915 = vunpack.c.l.b16 %v511
      %v2916 = vunpack.c.l.b16 %v512
      %v2917 = vunpack.c.l.b16 %v513
      %v2918 = vunpack.c.l.b16 %v514
      %v2919 = vunpack.c.l.b16 %v515
      %v2920 = vunpack.c.l.b16 %v516
      %v2921 = vunpack.c.l.b16 %v517
      %v2922 = vunpack.c.l.b16 %v518
      %v2923 = vunpack.c.l.b16 %v519
      %v2924 = vunpack.c.l.b16 %v520
      %v2925 = vunpack.c.l.b16 %v521
      %v2926 = vunpack.c.l.b16 %v522
      %v2927 = vunpack.c.l.b16 %v523
      %v2928 = vunpack.c.l.b16 %v524
      %v2929 = vunpack.c.l.b16 %v525
      %v2930 = vunpack.c.l.b16 %v526
      %v2931 = vunpack.c.l.b16 %v527
      %v2932 = vunpack.c.l.b16 %v528
      %v2933 = vunpack.c.l.b16 %v529
      %v2934 = vunpack.c.l.b16 %v530
      %v2935 = vunpack.c.l.b16 %v531
      %v2936 = vunpack.c.l.b16 %v532
      %v2937 = vunpack.c.l.b16 %v533
      %v2938 = vunpack.c.l.b16 %v534
      %v2939 = vunpack.c.l.b16 %v535
      %v2940 = vunpack.c.l.b16 %v536
      %v2941 = vunpack.c.l.b16 %v537
      %v2942 = vunpack.c.l.b16 %v538
      %v2943 = vunpack.c.l.b16 %v539
      %v2944 = vunpack.c.l.b16 %v540
      %v2945 = vunpack.c.l.b16 %v541
      %v2946 = vunpack.c.l.b16 %v542
      %v2947 = vunpack.c.l.b16 %v543
      %v2948 = vunpack.c.l.b16 %v544
      %v2949 = vunpack.c.l.b16 %v545
      %v2950 = vunpack.c.l.b16 %v546
      %v2951 = vunpack.c.l.b16 %v547
      %v2952 = vunpack.c.l.b16 %v548
      %v2953 = vunpack.c.l.b16 %v549
      %v2954 = vunpack.c.l.b16 %v550
      %v2955 = vunpack.c.l.b16 %v551
      %v2956 = vunpack.c.l.b16 %v552
      %v2957 = vunpack.c.l.b16 %v553
      %v2958 = vunpack.c.l.b16 %v554
      %v2959 = vunpack.c.l.b16 %v555
      %v2960 = vunpack.c.l.b16 %v556
      %v2961 = vunpack.c.l.b16 %v557
      %v2962 = vunpack.c.l.b16 %v558
      %v2963 = vunpack.c.l.b16 %v559
      %v2964 = vunpack.c.l.b16 %v560
      %v2965 = vunpack.c.l.b16 %v561
      %v2966 = vunpack.c.l.b16 %v562
      %v2967 = vunpack.c.l.b16 %v563
      %v2968 = vunpack.c.l.b16 %v564
      %v2969 = vunpack.c.l.b16 %v565
      %v2970 = vunpack.c.l.b16 %v566
      %v2971 = vunpack.c.l.b16 %v567
      %v2972 = vunpack.c.l.b16 %v568
      %v2973 = vunpack.c.l.b16 %v569
      %v2974 = vunpack.c.l.b16 %v570
      %v2975 = vunpack.c.l.b16 %v571
      %v2976 = vunpack.c.l.b16 %v572
      %v2977 = vunpack.c.l.b16 %v573
      %v2978 = vunpack.c.l.b16 %v574
      %v2979 = vunpack.c.l.b16 %v575
      %v2980 = vunpack.c.l.b16 %v576
      %v2981 = vunpack.c.l.b16 %v577
      %v2982 = vunpack.c.l.b16 %v578
      %v2983 = vunpack.c.l.b16 %v579
      %v2984 = vunpack.c.l.b16 %v580
      %v2985 = vunpack.c.l.b16 %v581
      %v2986 = vunpack.c.l.b16 %v582
      %v2987 = vunpack.c.l.b16 %v583
      %v2988 = vunpack.c.l.b16 %v584
      %v2989 = vunpack.c.l.b16 %v585
      %v2990 = vunpack.c.l.b16 %v586
      %v2991 = vunpack.c.l.b16 %v587
      %v2992 = vunpack.c.l.b16 %v588
      %v2993 = vunpack.c.l.b16 %v589
      %v2994 = vunpack.c.l.b16 %v590
      %v2995 = vunpack.c.l.b16 %v591
      %v2996 = vunpack.c.l.b16 %v592
      %v2997 = vunpack.c.l.b16 %v593
      %v2998 = vunpack.c.l.b16 %v594
      %v2999 = vunpack.c.l.b16 %v595
      %v3000 = vunpack.c.l.b16 %v596
      %v3001 = vunpack.c.l.b16 %v597
      %v3002 = vunpack.c.l.b16 %v598
      %v3003 = vunpack.c.l.b16 %v599
      %v3004 = vunpack.c.l.b16 %v600
      %v3005 = vunpack.c.l.b16 %v601
      %v3006 = vunpack.c.l.b16 %v602
      %v3007 = vunpack.c.l.b16 %v603
      %v3008 = vunpack.c.l.b16 %v604
      %v3009 = vunpack.c.l.b16 %v605
      %v3010 = vunpack.c.l.b16 %v606
      %v3011 = vunpack.c.l.b16 %v607
      %v3012 = vunpack.c.l.b16 %v608
      %v3013 = vunpack.c.l.b16 %v609
      %v3014 = vunpack.c.l.b16 %v610
      %v3015 = vunpack.c.l.b16 %v611
      %v3016 = vunpack.c.l.b16 %v612
      %v3017 = vunpack.c.l.b16 %v613
      %v3018 = vunpack.c.l.b16 %v614
      %v3019 = vunpack.c.l.b16 %v615
      %v3020 = vunpack.c.l.b16 %v616
      %v3021 = vunpack.c.l.b16 %v617
      %v3022 = vunpack.c.l.b16 %v618
      %v3023 = vunpack.c.l.b16 %v619
      %v3024 = vunpack.c.l.b16 %v620
      %v3025 = vunpack.c.l.b16 %v621
      %v3026 = vunpack.c.l.b16 %v622
      %v3027 = vunpack.c.l.b16 %v623
      %v3028 = vunpack.c.l.b16 %v624
      %v3029 = vunpack.c.l.b16 %v625
      %v3030 = vunpack.c.l.b16 %v626
      %v3031 = vunpack.c.l.b16 %v627
      %v3032 = vunpack.c.l.b16 %v628
      %v3033 = vunpack.c.l.b16 %v629
      %v3034 = vunpack.c.l.b16 %v630
      %v3035 = vunpack.c.l.b16 %v631
      %v3036 = vunpack.c.l.b16 %v632
      %v3037 = vunpack.c.l.b16 %v633
      %v3038 = vunpack.c.l.b16 %v634
      %v3039 = vunpack.c.l.b16 %v635
      %v3040 = vunpack.c.l.b16 %v636
      %v3041 = vunpack.c.l.b16 %v637
      %v3042 = vunpack.c.l.b16 %v638
      %v3043 = vunpack.c.l.b16 %v639
      %v3044 = vunpack.c.l.b16 %v640
      %v3045 = vunpack.c.l.b16 %v641
      %v3046 = vunpack.c.l.b16 %v642
      %v3047 = vunpack.c.l.b16 %v643
      %v3048 = vunpack.c.l.b16 %v644
      %v3049 = vunpack.c.l.b16 %v645
      %v3050 = vunpack.c.l.b16 %v646
      %v3051 = vunpack.c.l.b16 %v647
      %v3052 = vunpack.c.l.b16 %v648
      %v3053 = vunpack.c.l.b16 %v649
      %v3054 = vunpack.c.l.b16 %v650
      %v3055 = vunpack.c.l.b16 %v651
      %v3056 = vunpack.c.l.b16 %v652
      %v3057 = vunpack.c.l.b16 %v653
      %v3058 = vunpack.c.l.b16 %v654
      %v3059 = vunpack.c.l.b16 %v655
      %v3060 = vunpack.c.l.b16 %v656
      %v3061 = vunpack.c.l.b16 %v657
      %v3062 = vunpack.c.l.b16 %v658
      %v3063 = vunpack.c.l.b16 %v659
      %v3064 = vunpack.c.l.b16 %v660
      %v3065 = vunpack.c.l.b16 %v661
      %v3066 = vunpack.c.l.b16 %v662
      %v3067 = vunpack.c.l.b16 %v663
      %v3068 = vunpack.c.l.b16 %v664
      %v3069 = vunpack.c.l.b16 %v665
      %v3070 = vunpack.c.l.b16 %v666
      %v3071 = vunpack.c.l.b16 %v667
      %v3072 = vunpack.c.l.b16 %v668
      %v3073 = vunpack.c.l.b16 %v669
      %v3074 = vunpack.c.l.b16 %v670
      %v3075 = vunpack.c.l.b16 %v671
      %v3076 = vunpack.c.l.b16 %v672
      %v3077 = vunpack.c.l.b16 %v673
      %v3078 = vunpack.c.l.b16 %v674
      %v3079 = vunpack.c.l.b16 %v675
      %v3080 = vunpack.c.l.b16 %v676
      %v3081 = vunpack.c.l.b16 %v677
      %v3082 = vunpack.c.l.b16 %v678
      %v3083 = vunpack.c.l.b16 %v679
      %v3084 = vunpack.c.l.b16 %v680
      %v3085 = vunpack.c.l.b16 %v681
      %v3086 = vunpack.c.l.b16 %v682
      %v3087 = vunpack.c.l.b16 %v683
      %v3088 = vunpack.c.l.b16 %v684
      %v3089 = vunpack.c.l.b16 %v685
      %v3090 = vunpack.c.l.b16 %v686
      %v3091 = vunpack.c.l.b16 %v687
      %v3092 = vunpack.c.l.b16 %v688
      %v3093 = vunpack.c.l.b16 %v689
      %v3094 = vunpack.c.l.b16 %v690
      %v3095 = vunpack.c.l.b16 %v691
      %v3096 = vunpack.c.l.b16 %v692
      %v3097 = vunpack.c.l.b16 %v693
      %v3098 = vunpack.c.l.b16 %v694
      %v3099 = vunpack.c.l.b16 %v695
      %v3100 = vunpack.c.l.b16 %v696
      %v3101 = vunpack.c.l.b16 %v697
      %v3102 = vunpack.c.l.b16 %v698
      %v3103 = vunpack.c.l.b16 %v699
      %v3104 = vunpack.c.l.b16 %v700
      %v3105 = vunpack.c.l.b16 %v701
      %v3106 = vunpack.c.l.b16 %v702
      %v3107 = vunpack.c.l.b16 %v703
      %v3108 = vunpack.c.l.b16 %v704
      %v3109 = vunpack.c.l.b16 %v705
      %v3110 = vunpack.c.l.b16 %v706
      %v3111 = vunpack.c.l.b16 %v707
      %v3112 = vunpack.c.l.b16 %v708
      %v3113 = vunpack.c.l.b16 %v709
      %v3114 = vunpack.c.l.b16 %v710
      %v3115 = vunpack.c.l.b16 %v711
      %v3116 = vunpack.c.l.b16 %v712
      %v3117 = vunpack.c.l.b16 %v713
      %v3118 = vunpack.c.l.b16 %v714
      %v3119 = vunpack.c.l.b16 %v715
      %v3120 = vunpack.c.l.b16 %v716
      %v3121 = vunpack.c.l.b16 %v717
      %v3122 = vunpack.c.l.b16 %v718
      %v3123 = vunpack.c.l.b16 %v719
      %v3124 = vunpack.c.l.b16 %v720
      %v3125 = vunpack.c.l.b16 %v721
      %v3126 = vunpack.c.l.b16 %v722
      %v3127 = vunpack.c.l.b16 %v723
      %v3128 = vunpack.c.l.b16 %v724
      %v3129 = vunpack.c.l.b16 %v725
      %v3130 = vunpack.c.l.b16 %v726
      %v3131 = vunpack.c.l.b16 %v727
      %v3132 = vunpack.c.l.b16 %v728
      %v3133 = vunpack.c.l.b16 %v729
      %v3134 = vunpack.c.l.b16 %v730
      %v3135 = vunpack.c.l.b16 %v731
      %v3136 = vunpack.c.l.b16 %v732
      %v3137 = vunpack.c.l.b16 %v733
      %v3138 = vunpack.c.l.b16 %v734
      %v3139 = vunpack.c.l.b16 %v735
      %v3140 = vunpack.c.l.b16 %v736
      %v3141 = vunpack.c.l.b16 %v737
      %v3142 = vunpack.c.l.b16 %v738
      %v3143 = vunpack.c.l.b16 %v739
      %v3144 = vunpack.c.l.b16 %v740
      %v3145 = vunpack.c.l.b16 %v741
      %v3146 = vunpack.c.l.b16 %v742
      %v3147 = vunpack.c.l.b16 %v743
      %v3148 = vunpack.c.l.b16 %v744
      %v3149 = vunpack.c.l.b16 %v745
      %v3150 = vunpack.c.l.b16 %v746
      %v3151 = vunpack.c.l.b16 %v747
      %v3152 = vunpack.c.l.b16 %v748
      %v3153 = vunpack.c.l.b16 %v749
      %v3154 = vunpack.c.l.b16 %v750
      %v3155 = vunpack.c.l.b16 %v751
      %v3156 = vunpack.c.l.b16 %v752
      %v3157 = vunpack.c.l.b16 %v753
      %v3158 = vunpack.c.l.b16 %v754
      %v3159 = vunpack.c.l.b16 %v755
      %v3160 = vunpack.c.l.b16 %v756
      %v3161 = vunpack.c.l.b16 %v757
      %v3162 = vunpack.c.l.b16 %v758
      %v3163 = vunpack.c.l.b16 %v759
      %v3164 = vunpack.c.l.b16 %v760
      %v3165 = vunpack.c.l.b16 %v761
      %v3166 = vunpack.c.l.b16 %v762
      %v3167 = vunpack.c.l.b16 %v763
      %v3168 = vunpack.c.l.b16 %v764
      %v3169 = vunpack.c.l.b16 %v765
      %v3170 = vunpack.c.l.b16 %v766
      %v3171 = vunpack.c.l.b16 %v767
      %v3172 = vunpack.c.l.b16 %v768
      %v3173 = vunpack.c.l.b16 %v769
      %v3174 = vunpack.c.l.b16 %v770
      %v3175 = vunpack.c.l.b16 %v771
      %v3176 = vunpack.c.l.b16 %v772
      %v3177 = vunpack.c.l.b16 %v773
      %v3178 = vunpack.c.l.b16 %v774
      %v3179 = vunpack.c.l.b16 %v775
      %v3180 = vunpack.c.l.b16 %v776
      %v3181 = vunpack.c.l.b16 %v777
      %v3182 = vunpack.c.l.b16 %v778
      %v3183 = vunpack.c.l.b16 %v779
      %v3184 = vunpack.c.l.b16 %v780
      %v3185 = vunpack.c.l.b16 %v781
      %v3186 = vunpack.c.l.b16 %v782
      %v3187 = vunpack.c.l.b16 %v783
      %v3188 = vunpack.c.l.b16 %v784
      %v3189 = vunpack.c.l.b16 %v785
      %v3190 = vunpack.c.l.b16 %v786
      %v3191 = vunpack.c.l.b16 %v787
      %v3192 = vunpack.c.l.b16 %v788
      %v3193 = vunpack.c.l.b16 %v789
      %v3194 = vunpack.c.l.b16 %v790
      %v3195 = vunpack.c.l.b16 %v791
      %v3196 = vunpack.c.l.b16 %v792
      %v3197 = vunpack.c.l.b16 %v793
      %v3198 = vunpack.c.l.b16 %v794
      %v3199 = vunpack.c.l.b16 %v795
      %v3200 = vunpack.c.l.b16 %v796
      %v3201 = vunpack.c.l.b16 %v797
      %v3202 = vunpack.c.l.b16 %v798
      %v3203 = vunpack.c.l.b16 %v799
      %v3204 = vunpack.c.l.b16 %v800
      %v3205 = vunpack.c.l.b16 %v801
      %v3206 = vunpack.c.l.b16 %v802
      %v3207 = vunpack.c.l.b16 %v803
      %v3208 = vunpack.c.l.b16 %v804
      %v3209 = vunpack.c.l.b16 %v805
      %v3210 = vunpack.c.l.b16 %v806
      %v3211 = vunpack.c.l.b16 %v807
      %v3212 = vunpack.c.l.b16 %v808
      %v3213 = vunpack.c.l.b16 %v809
      %v3214 = vunpack.c.l.b16 %v810
      %v3215 = vunpack.c.l.b16 %v811
      %v3216 = vunpack.c.l.b16 %v812
      %v3217 = vunpack.c.l.b16 %v813
      %v3218 = vunpack.c.l.b16 %v814
      %v3219 = vunpack.c.l.b16 %v815
      %v3220 = vunpack.c.l.b16 %v816
      %v3221 = vunpack.c.l.b16 %v817
      %v3222 = vunpack.c.l.b16 %v818
      %v3223 = vunpack.c.l.b16 %v819
      %v3224 = vunpack.c.l.b16 %v820
      %v3225 = vunpack.c.l.b16 %v821
      %v3226 = vunpack.c.l.b16 %v822
      %v3227 = vunpack.c.l.b16 %v823
      %v3228 = vunpack.c.l.b16 %v824
      %v3229 = vunpack.c.l.b16 %v825
      %v3230 = vunpack.c.l.b16 %v826
      %v3231 = vunpack.c.l.b16 %v827
      %v3232 = vunpack.c.l.b16 %v828
      %v3233 = vunpack.c.l.b16 %v829
      %v3234 = vunpack.c.l.b16 %v830
      %v3235 = vunpack.c.l.b16 %v831
      %v3236 = vunpack.c.l.b16 %v832
      %v3237 = vunpack.c.l.b16 %v833
      %v3238 = vunpack.c.l.b16 %v834
      %v3239 = vunpack.c.l.b16 %v835
      %v3240 = vunpack.c.l.b16 %v836
      %v3241 = vunpack.c.l.b16 %v837
      %v3242 = vunpack.c.l.b16 %v838
      %v3243 = vunpack.c.l.b16 %v839
      %v3244 = vunpack.c.l.b16 %v840
      %v3245 = vunpack.c.l.b16 %v841
      %v3246 = vunpack.c.l.b16 %v842
      %v3247 = vunpack.c.l.b16 %v843
      %v3248 = vunpack.c.l.b16 %v844
      %v3249 = vunpack.c.l.b16 %v845
      %v3250 = vunpack.c.l.b16 %v846
      %v3251 = vunpack.c.l.b16 %v847
      %v3252 = vunpack.c.l.b16 %v848
      %v3253 = vunpack.c.l.b16 %v849
      %v3254 = vunpack.c.l.b16 %v850
      %v3255 = vunpack.c.l.b16 %v851
      %v3256 = vunpack.c.l.b16 %v852
      %v3257 = vunpack.c.l.b16 %v853
      %v3258 = vunpack.c.l.b16 %v854
      %v3259 = vunpack.c.l.b16 %v855
      %v3260 = vunpack.c.l.b16 %v856
      %v3261 = vunpack.c.l.b16 %v857
      %v3262 = vunpack.c.l.b16 %v858
      %v3263 = vunpack.c.l.b16 %v859
      %v3264 = vunpack.c.l.b16 %v860
      %v3265 = vunpack.c.l.b16 %v861
      %v3266 = vunpack.c.l.b16 %v862
      %v3267 = vunpack.c.l.b16 %v863
      %v3268 = vunpack.c.l.b16 %v864
      %v3269 = vunpack.c.l.b16 %v865
      %v3270 = vunpack.c.l.b16 %v866
      %v3271 = vunpack.c.l.b16 %v867
      %v3272 = vunpack.c.l.b16 %v868
      %v3273 = vunpack.c.l.b16 %v869
      %v3274 = vunpack.c.l.b16 %v870
      %v3275 = vunpack.c.l.b16 %v871
      %v3276 = vunpack.c.l.b16 %v872
      %v3277 = vunpack.c.l.b16 %v873
      %v3278 = vunpack.c.l.b16 %v874
      %v3279 = vunpack.c.l.b16 %v875
      %v3280 = vunpack.c.l.b16 %v876
      %v3281 = vunpack.c.l.b16 %v877
      %v3282 = vunpack.c.l.b16 %v878
      %v3283 = vunpack.c.l.b16 %v879
      %v3284 = vunpack.c.l.b16 %v880
      %v3285 = vunpack.c.l.b16 %v881
      %v3286 = vunpack.c.l.b16 %v882
      %v3287 = vunpack.c.l.b16 %v883
      %v3288 = vunpack.c.l.b16 %v884
      %v3289 = vunpack.c.l.b16 %v885
      %v3290 = vunpack.c.l.b16 %v886
      %v3291 = vunpack.c.l.b16 %v887
      %v3292 = vunpack.c.l.b16 %v888
      %v3293 = vunpack.c.l.b16 %v889
      %v3294 = vunpack.c.l.b16 %v890
      %v3295 = vunpack.c.l.b16 %v891
      %v3296 = vunpack.c.l.b16 %v892
      %v3297 = vunpack.c.l.b16 %v893
      %v3298 = vunpack.c.l.b16 %v894
      %v3299 = vunpack.c.l.b16 %v895
      %v3300 = vunpack.c.l.b16 %v896
      %v3301 = vunpack.c.l.b16 %v897
      %v3302 = vunpack.c.l.b16 %v898
      %v3303 = vunpack.c.l.b16 %v899
      %v3304 = vunpack.c.l.b16 %v900
      %v3305 = vunpack.c.l.b16 %v901
      %v3306 = vpack.c.b16 %v2907, %v2906
      %v3307 = vpack.c.b16 %v2909, %v2908
      %v3308 = vpack.c.b16 %v2911, %v2910
      %v3309 = vpack.c.b16 %v2913, %v2912
      %v3310 = vpack.c.b16 %v2915, %v2914
      %v3311 = vpack.c.b16 %v2917, %v2916
      %v3312 = vpack.c.b16 %v2919, %v2918
      %v3313 = vpack.c.b16 %v2921, %v2920
      %v3314 = vpack.c.b16 %v2923, %v2922
      %v3315 = vpack.c.b16 %v2925, %v2924
      %v3316 = vpack.c.b16 %v2927, %v2926
      %v3317 = vpack.c.b16 %v2929, %v2928
      %v3318 = vpack.c.b16 %v2931, %v2930
      %v3319 = vpack.c.b16 %v2933, %v2932
      %v3320 = vpack.c.b16 %v2935, %v2934
      %v3321 = vpack.c.b16 %v2937, %v2936
      %v3322 = vpack.c.b16 %v2939, %v2938
      %v3323 = vpack.c.b16 %v2941, %v2940
      %v3324 = vpack.c.b16 %v2943, %v2942
      %v3325 = vpack.c.b16 %v2945, %v2944
      %v3326 = vpack.c.b16 %v2947, %v2946
      %v3327 = vpack.c.b16 %v2949, %v2948
      %v3328 = vpack.c.b16 %v2951, %v2950
      %v3329 = vpack.c.b16 %v2953, %v2952
      %v3330 = vpack.c.b16 %v2955, %v2954
      %v3331 = vpack.c.b16 %v2957, %v2956
      %v3332 = vpack.c.b16 %v2959, %v2958
      %v3333 = vpack.c.b16 %v2961, %v2960
      %v3334 = vpack.c.b16 %v2963, %v2962
      %v3335 = vpack.c.b16 %v2965, %v2964
      %v3336 = vpack.c.b16 %v2967, %v2966
      %v3337 = vpack.c.b16 %v2969, %v2968
      %v3338 = vpack.c.b16 %v2971, %v2970
      %v3339 = vpack.c.b16 %v2973, %v2972
      %v3340 = vpack.c.b16 %v2975, %v2974
      %v3341 = vpack.c.b16 %v2977, %v2976
      %v3342 = vpack.c.b16 %v2979, %v2978
      %v3343 = vpack.c.b16 %v2981, %v2980
      %v3344 = vpack.c.b16 %v2983, %v2982
      %v3345 = vpack.c.b16 %v2985, %v2984
      %v3346 = vpack.c.b16 %v2987, %v2986
      %v3347 = vpack.c.b16 %v2989, %v2988
      %v3348 = vpack.c.b16 %v2991, %v2990
      %v3349 = vpack.c.b16 %v2993, %v2992
      %v3350 = vpack.c.b16 %v2995, %v2994
      %v3351 = vpack.c.b16 %v2997, %v2996
      %v3352 = vpack.c.b16 %v2999, %v2998
      %v3353 = vpack.c.b16 %v3001, %v3000
      %v3354 = vpack.c.b16 %v3003, %v3002
      %v3355 = vpack.c.b16 %v3005, %v3004
      %v3356 = vpack.c.b16 %v3007, %v3006
      %v3357 = vpack.c.b16 %v3009, %v3008
      %v3358 = vpack.c.b16 %v3011, %v3010
      %v3359 = vpack.c.b16 %v3013, %v3012
      %v3360 = vpack.c.b16 %v3015, %v3014
      %v3361 = vpack.c.b16 %v3017, %v3016
      %v3362 = vpack.c.b16 %v3019, %v3018
      %v3363 = vpack.c.b16 %v3021, %v3020
      %v3364 = vpack.c.b16 %v3023, %v3022
      %v3365 = vpack.c.b16 %v3025, %v3024
      %v3366 = vpack.c.b16 %v3027, %v3026
      %v3367 = vpack.c.b16 %v3029, %v3028
      %v3368 = vpack.c.b16 %v3031, %v3030
      %v3369 = vpack.c.b16 %v3033, %v3032
      %v3370 = vpack.c.b16 %v3035, %v3034
      %v3371 = vpack.c.b16 %v3037, %v3036
      %v3372 = vpack.c.b16 %v3039, %v3038
      %v3373 = vpack.c.b16 %v3041, %v3040
      %v3374 = vpack.c.b16 %v3043, %v3042
      %v3375 = vpack.c.b16 %v3045, %v3044
      %v3376 = vpack.c.b16 %v3047, %v3046
      %v3377 = vpack.c.b16 %v3049, %v3048
      %v3378 = vpack.c.b16 %v3051, %v3050
      %v3379 = vpack.c.b16 %v3053, %v3052
      %v3380 = vpack.c.b16 %v3055, %v3054
      %v3381 = vpack.c.b16 %v3057, %v3056
      %v3382 = vpack.c.b16 %v3059, %v3058
      %v3383 = vpack.c.b16 %v3061, %v3060
      %v3384 = vpack.c.b16 %v3063, %v3062
      %v3385 = vpack.c.b16 %v3065, %v3064
      %v3386 = vpack.c.b16 %v3067, %v3066
      %v3387 = vpack.c.b16 %v3069, %v3068
      %v3388 = vpack.c.b16 %v3071, %v3070
      %v3389 = vpack.c.b16 %v3073, %v3072
      %v3390 = vpack.c.b16 %v3075, %v3074
      %v3391 = vpack.c.b16 %v3077, %v3076
      %v3392 = vpack.c.b16 %v3079, %v3078
      %v3393 = vpack.c.b16 %v3081, %v3080
      %v3394 = vpack.c.b16 %v3083, %v3082
      %v3395 = vpack.c.b16 %v3085, %v3084
      %v3396 = vpack.c.b16 %v3087, %v3086
      %v3397 = vpack.c.b16 %v3089, %v3088
      %v3398 = vpack.c.b16 %v3091, %v3090
      %v3399 = vpack.c.b16 %v3093, %v3092
      %v3400 = vpack.c.b16 %v3095, %v3094
      %v3401 = vpack.c.b16 %v3097, %v3096
      %v3402 = vpack.c.b16 %v3099, %v3098
      %v3403 = vpack.c.b16 %v3101, %v3100
      %v3404 = vpack.c.b16 %v3103, %v3102
      %v3405 = vpack.c.b16 %v3105, %v3104
      %v3406 = vpack.c.b16 %v3107, %v3106
      %v3407 = vpack.c.b16 %v3109, %v3108
      %v3408 = vpack.c.b16 %v3111, %v3110
      %v3409 = vpack.c.b16 %v3113, %v3112
      %v3410 = vpack.c.b16 %v3115, %v3114
      %v3411 = vpack.c.b16 %v3117, %v3116
      %v3412 = vpack.c.b16 %v3119, %v3118
      %v3413 = vpack.c.b16 %v3121, %v3120
      %v3414 = vpack.c.b16 %v3123, %v3122
      %v3415 = vpack.c.b16 %v3125, %v3124
      %v3416 = vpack.c.b16 %v3127, %v3126
      %v3417 = vpack.c.b16 %v3129, %v3128
      %v3418 = vpack.c.b16 %v3131, %v3130
      %v3419 = vpack.c.b16 %v3133, %v3132
      %v3420 = vpack.c.b16 %v3135, %v3134
      %v3421 = vpack.c.b16 %v3137, %v3136
      %v3422 = vpack.c.b16 %v3139, %v3138
      %v3423 = vpack.c.b16 %v3141, %v3140
      %v3424 = vpack.c.b16 %v3143, %v3142
      %v3425 = vpack.c.b16 %v3145, %v3144
      %v3426 = vpack.c.b16 %v3147, %v3146
      %v3427 = vpack.c.b16 %v3149, %v3148
      %v3428 = vpack.c.b16 %v3151, %v3150
      %v3429 = vpack.c.b16 %v3153, %v3152
      %v3430 = vpack.c.b16 %v3155, %v3154
      %v3431 = vpack.c.b16 %v3157, %v3156
      %v3432 = vpack.c.b16 %v3159, %v3158
      %v3433 = vpack.c.b16 %v3161, %v3160
      %v3434 = vpack.c.b16 %v3163, %v3162
      %v3435 = vpack.c.b16 %v3165, %v3164
      %v3436 = vpack.c.b16 %v3167, %v3166
      %v3437 = vpack.c.b16 %v3169, %v3168
      %v3438 = vpack.c.b16 %v3171, %v3170
      %v3439 = vpack.c.b16 %v3173, %v3172
      %v3440 = vpack.c.b16 %v3175, %v3174
      %v3441 = vpack.c.b16 %v3177, %v3176
      %v3442 = vpack.c.b16 %v3179, %v3178
      %v3443 = vpack.c.b16 %v3181, %v3180
      %v3444 = vpack.c.b16 %v3183, %v3182
      %v3445 = vpack.c.b16 %v3185, %v3184
      %v3446 = vpack.c.b16 %v3187, %v3186
      %v3447 = vpack.c.b16 %v3189, %v3188
      %v3448 = vpack.c.b16 %v3191, %v3190
      %v3449 = vpack.c.b16 %v3193, %v3192
      %v3450 = vpack.c.b16 %v3195, %v3194
      %v3451 = vpack.c.b16 %v3197, %v3196
      %v3452 = vpack.c.b16 %v3199, %v3198
      %v3453 = vpack.c.b16 %v3201, %v3200
      %v3454 = vpack.c.b16 %v3203, %v3202
      %v3455 = vpack.c.b16 %v3205, %v3204
      %v3456 = vpack.c.b16 %v3207, %v3206
      %v3457 = vpack.c.b16 %v3209, %v3208
      %v3458 = vpack.c.b16 %v3211, %v3210
      %v3459 = vpack.c.b16 %v3213, %v3212
      %v3460 = vpack.c.b16 %v3215, %v3214
      %v3461 = vpack.c.b16 %v3217, %v3216
      %v3462 = vpack.c.b16 %v3219, %v3218
      %v3463 = vpack.c.b16 %v3221, %v3220
      %v3464 = vpack.c.b16 %v3223, %v3222
      %v3465 = vpack.c.b16 %v3225, %v3224
      %v3466 = vpack.c.b16 %v3227, %v3226
      %v3467 = vpack.c.b16 %v3229, %v3228
      %v3468 = vpack.c.b16 %v3231, %v3230
      %v3469 = vpack.c.b16 %v3233, %v3232
      %v3470 = vpack.c.b16 %v3235, %v3234
      %v3471 = vpack.c.b16 %v3237, %v3236
      %v3472 = vpack.c.b16 %v3239, %v3238
      %v3473 = vpack.c.b16 %v3241, %v3240
      %v3474 = vpack.c.b16 %v3243, %v3242
      %v3475 = vpack.c.b16 %v3245, %v3244
      %v3476 = vpack.c.b16 %v3247, %v3246
      %v3477 = vpack.c.b16 %v3249, %v3248
      %v3478 = vpack.c.b16 %v3251, %v3250
      %v3479 = vpack.c.b16 %v3253, %v3252
      %v3480 = vpack.c.b16 %v3255, %v3254
      %v3481 = vpack.c.b16 %v3257, %v3256
      %v3482 = vpack.c.b16 %v3259, %v3258
      %v3483 = vpack.c.b16 %v3261, %v3260
      %v3484 = vpack.c.b16 %v3263, %v3262
      %v3485 = vpack.c.b16 %v3265, %v3264
      %v3486 = vpack.c.b16 %v3267, %v3266
      %v3487 = vpack.c.b16 %v3269, %v3268
      %v3488 = vpack.c.b16 %v3271, %v3270
      %v3489 = vpack.c.b16 %v3273, %v3272
      %v3490 = vpack.c.b16 %v3275, %v3274
      %v3491 = vpack.c.b16 %v3277, %v3276
      %v3492 = vpack.c.b16 %v3279, %v3278
      %v3493 = vpack.c.b16 %v3281, %v3280
      %v3494 = vpack.c.b16 %v3283, %v3282
      %v3495 = vpack.c.b16 %v3285, %v3284
      %v3496 = vpack.c.b16 %v3287, %v3286
      %v3497 = vpack.c.b16 %v3289, %v3288
      %v3498 = vpack.c.b16 %v3291, %v3290
      %v3499 = vpack.c.b16 %v3293, %v3292
      %v3500 = vpack.c.b16 %v3295, %v3294
      %v3501 = vpack.c.b16 %v3297, %v3296
      %v3502 = vpack.c.b16 %v3299, %v3298
      %v3503 = vpack.c.b16 %v3301, %v3300
      %v3504 = vpack.c.b16 %v3303, %v3302
      %v3505 = vpack.c.b16 %v3305, %v3304
      %3706 = vmatpush.bf16.msra.mxu0 %v3313
      %3707 = vmatpush.bf16.msra.mxu0 %v3312
      %3708 = vmatpush.bf16.msra.mxu0 %v3311
      %3709 = vmatpush.bf16.msra.mxu0 %v3310
      %3710 = vmatpush.bf16.msra.mxu0 %v3309
      %3711 = vmatpush.bf16.msra.mxu0 %v3308
      %3712 = vmatpush.bf16.msra.mxu0 %v3307
      %3713 = vmatpush.bf16.msra.mxu0 %v3306
      %3714 = vmatmul.bf16.gmra.mxu0 %v1856
      %v3715 = vpop.f32.mrf.mxu0
      %v3716 = vadd.f32 %v904, %v3715
      %v3717 = vpop.f32.mrf.mxu0
      %v3718 = vadd.f32 %v904, %v3717
      %3719 = vmatmul.bf16.gmra.mxu0 %v1881
      %v3720 = vpop.f32.mrf.mxu0
      %v3721 = vadd.f32 %v904, %v3720
      %v3722 = vpop.f32.mrf.mxu0
      %v3723 = vadd.f32 %v904, %v3722
      %3724 = vmatmul.bf16.gmra.mxu0 %v1906
      %v3725 = vpop.f32.mrf.mxu0
      %v3726 = vadd.f32 %v904, %v3725
      %v3727 = vpop.f32.mrf.mxu0
      %v3728 = vadd.f32 %v904, %v3727
      %3729 = vmatmul.bf16.gmra.mxu0 %v1931
      %v3730 = vpop.f32.mrf.mxu0
      %v3731 = vadd.f32 %v904, %v3730
      %v3732 = vpop.f32.mrf.mxu0
      %v3733 = vadd.f32 %v904, %v3732
      %3734 = vmatmul.bf16.gmra.mxu0 %v1956
      %v3735 = vpop.f32.mrf.mxu0
      %v3736 = vadd.f32 %v904, %v3735
      %v3737 = vpop.f32.mrf.mxu0
      %v3738 = vadd.f32 %v904, %v3737
      %3739 = vmatmul.bf16.gmra.mxu0 %v1981
      %v3740 = vpop.f32.mrf.mxu0
      %v3741 = vadd.f32 %v904, %v3740
      %v3742 = vpop.f32.mrf.mxu0
      %v3743 = vadd.f32 %v904, %v3742
      %3744 = vmatmul.bf16.gmra.mxu0 %v2006
      %v3745 = vpop.f32.mrf.mxu0
      %v3746 = vadd.f32 %v904, %v3745
      %v3747 = vpop.f32.mrf.mxu0
      %v3748 = vadd.f32 %v904, %v3747
      %3749 = vmatmul.bf16.gmra.mxu0 %v2031
      %v3750 = vpop.f32.mrf.mxu0
      %v3751 = vadd.f32 %v904, %v3750
      %v3752 = vpop.f32.mrf.mxu0
      %v3753 = vadd.f32 %v904, %v3752
      %3754 = vmatmul.bf16.gmra.mxu0 %v2056
      %v3755 = vpop.f32.mrf.mxu0
      %v3756 = vadd.f32 %v904, %v3755
      %v3757 = vpop.f32.mrf.mxu0
      %v3758 = vadd.f32 %v904, %v3757
      %3759 = vmatmul.bf16.gmra.mxu0 %v2081
      %v3760 = vpop.f32.mrf.mxu0
      %v3761 = vadd.f32 %v904, %v3760
      %v3762 = vpop.f32.mrf.mxu0
      %v3763 = vadd.f32 %v904, %v3762
      %3764 = vmatmul.bf16.gmra.mxu0 %v2106
      %v3765 = vpop.f32.mrf.mxu0
      %v3766 = vadd.f32 %v904, %v3765
      %v3767 = vpop.f32.mrf.mxu0
      %v3768 = vadd.f32 %v904, %v3767
      %3769 = vmatmul.bf16.gmra.mxu0 %v2131
      %v3770 = vpop.f32.mrf.mxu0
      %v3771 = vadd.f32 %v904, %v3770
      %v3772 = vpop.f32.mrf.mxu0
      %v3773 = vadd.f32 %v904, %v3772
      %3774 = vmatmul.bf16.gmra.mxu0 %v2156
      %v3775 = vpop.f32.mrf.mxu0
      %v3776 = vadd.f32 %v904, %v3775
      %v3777 = vpop.f32.mrf.mxu0
      %3778 = vdwg.mxu0
      %3779 = vmatpush.bf16.msra.mxu0 %v3321
      %3780 = vmatpush.bf16.msra.mxu0 %v3320
      %3781 = vmatpush.bf16.msra.mxu0 %v3319
      %3782 = vmatpush.bf16.msra.mxu0 %v3318
      %3783 = vmatpush.bf16.msra.mxu0 %v3317
      %3784 = vmatpush.bf16.msra.mxu0 %v3316
      %3785 = vmatpush.bf16.msra.mxu0 %v3315
      %3786 = vmatpush.bf16.msra.mxu0 %v3314
      %3787 = vmatmul.bf16.gmra.mxu0 %v1857
      %v3788 = vpop.f32.mrf.mxu0
      %v3789 = vadd.f32 %v3716, %v3788
      %v3790 = vpop.f32.mrf.mxu0
      %v3791 = vadd.f32 %v3718, %v3790
      %3792 = vmatmul.bf16.gmra.mxu0 %v1882
      %v3793 = vpop.f32.mrf.mxu0
      %v3794 = vadd.f32 %v3721, %v3793
      %v3795 = vpop.f32.mrf.mxu0
      %v3796 = vadd.f32 %v3723, %v3795
      %3797 = vmatmul.bf16.gmra.mxu0 %v1907
      %v3798 = vpop.f32.mrf.mxu0
      %v3799 = vadd.f32 %v3726, %v3798
      %v3800 = vpop.f32.mrf.mxu0
      %v3801 = vadd.f32 %v3728, %v3800
      %3802 = vmatmul.bf16.gmra.mxu0 %v1932
      %v3803 = vpop.f32.mrf.mxu0
      %v3804 = vadd.f32 %v3731, %v3803
      %v3805 = vpop.f32.mrf.mxu0
      %v3806 = vadd.f32 %v3733, %v3805
      %3807 = vmatmul.bf16.gmra.mxu0 %v1957
      %v3808 = vpop.f32.mrf.mxu0
      %v3809 = vadd.f32 %v3736, %v3808
      %v3810 = vpop.f32.mrf.mxu0
      %v3811 = vadd.f32 %v3738, %v3810
      %3812 = vmatmul.bf16.gmra.mxu0 %v1982
      %v3813 = vpop.f32.mrf.mxu0
      %v3814 = vadd.f32 %v3741, %v3813
      %v3815 = vpop.f32.mrf.mxu0
      %v3816 = vadd.f32 %v3743, %v3815
      %3817 = vmatmul.bf16.gmra.mxu0 %v2007
      %v3818 = vpop.f32.mrf.mxu0
      %v3819 = vadd.f32 %v3746, %v3818
      %v3820 = vpop.f32.mrf.mxu0
      %v3821 = vadd.f32 %v3748, %v3820
      %3822 = vmatmul.bf16.gmra.mxu0 %v2032
      %v3823 = vpop.f32.mrf.mxu0
      %v3824 = vadd.f32 %v3751, %v3823
      %v3825 = vpop.f32.mrf.mxu0
      %v3826 = vadd.f32 %v3753, %v3825
      %3827 = vmatmul.bf16.gmra.mxu0 %v2057
      %v3828 = vpop.f32.mrf.mxu0
      %v3829 = vadd.f32 %v3756, %v3828
      %v3830 = vpop.f32.mrf.mxu0
      %v3831 = vadd.f32 %v3758, %v3830
      %3832 = vmatmul.bf16.gmra.mxu0 %v2082
      %v3833 = vpop.f32.mrf.mxu0
      %v3834 = vadd.f32 %v3761, %v3833
      %v3835 = vpop.f32.mrf.mxu0
      %v3836 = vadd.f32 %v3763, %v3835
      %3837 = vmatmul.bf16.gmra.mxu0 %v2107
      %v3838 = vpop.f32.mrf.mxu0
      %v3839 = vadd.f32 %v3766, %v3838
      %v3840 = vpop.f32.mrf.mxu0
      %v3841 = vadd.f32 %v3768, %v3840
      %3842 = vmatmul.bf16.gmra.mxu0 %v2132
      %v3843 = vpop.f32.mrf.mxu0
      %v3844 = vadd.f32 %v3771, %v3843
      %v3845 = vpop.f32.mrf.mxu0
      %v3846 = vadd.f32 %v3773, %v3845
      %3847 = vmatmul.bf16.gmra.mxu0 %v2157
      %v3848 = vpop.f32.mrf.mxu0
      %v3849 = vadd.f32 %v3776, %v3848
      %v3850 = vpop.f32.mrf.mxu0
      %3851 = vdwg.mxu0
      %3852 = vmatpush.bf16.msra.mxu0 %v3329
      %3853 = vmatpush.bf16.msra.mxu0 %v3328
      %3854 = vmatpush.bf16.msra.mxu0 %v3327
      %3855 = vmatpush.bf16.msra.mxu0 %v3326
      %3856 = vmatpush.bf16.msra.mxu0 %v3325
      %3857 = vmatpush.bf16.msra.mxu0 %v3324
      %3858 = vmatpush.bf16.msra.mxu0 %v3323
      %3859 = vmatpush.bf16.msra.mxu0 %v3322
      %3860 = vmatmul.bf16.gmra.mxu0 %v1858
      %v3861 = vpop.f32.mrf.mxu0
      %v3862 = vadd.f32 %v3789, %v3861
      %v3863 = vpop.f32.mrf.mxu0
      %v3864 = vadd.f32 %v3791, %v3863
      %3865 = vmatmul.bf16.gmra.mxu0 %v1883
      %v3866 = vpop.f32.mrf.mxu0
      %v3867 = vadd.f32 %v3794, %v3866
      %v3868 = vpop.f32.mrf.mxu0
      %v3869 = vadd.f32 %v3796, %v3868
      %3870 = vmatmul.bf16.gmra.mxu0 %v1908
      %v3871 = vpop.f32.mrf.mxu0
      %v3872 = vadd.f32 %v3799, %v3871
      %v3873 = vpop.f32.mrf.mxu0
      %v3874 = vadd.f32 %v3801, %v3873
      %3875 = vmatmul.bf16.gmra.mxu0 %v1933
      %v3876 = vpop.f32.mrf.mxu0
      %v3877 = vadd.f32 %v3804, %v3876
      %v3878 = vpop.f32.mrf.mxu0
      %v3879 = vadd.f32 %v3806, %v3878
      %3880 = vmatmul.bf16.gmra.mxu0 %v1958
      %v3881 = vpop.f32.mrf.mxu0
      %v3882 = vadd.f32 %v3809, %v3881
      %v3883 = vpop.f32.mrf.mxu0
      %v3884 = vadd.f32 %v3811, %v3883
      %3885 = vmatmul.bf16.gmra.mxu0 %v1983
      %v3886 = vpop.f32.mrf.mxu0
      %v3887 = vadd.f32 %v3814, %v3886
      %v3888 = vpop.f32.mrf.mxu0
      %v3889 = vadd.f32 %v3816, %v3888
      %3890 = vmatmul.bf16.gmra.mxu0 %v2008
      %v3891 = vpop.f32.mrf.mxu0
      %v3892 = vadd.f32 %v3819, %v3891
      %v3893 = vpop.f32.mrf.mxu0
      %v3894 = vadd.f32 %v3821, %v3893
      %3895 = vmatmul.bf16.gmra.mxu0 %v2033
      %v3896 = vpop.f32.mrf.mxu0
      %v3897 = vadd.f32 %v3824, %v3896
      %v3898 = vpop.f32.mrf.mxu0
      %v3899 = vadd.f32 %v3826, %v3898
      %3900 = vmatmul.bf16.gmra.mxu0 %v2058
      %v3901 = vpop.f32.mrf.mxu0
      %v3902 = vadd.f32 %v3829, %v3901
      %v3903 = vpop.f32.mrf.mxu0
      %v3904 = vadd.f32 %v3831, %v3903
      %3905 = vmatmul.bf16.gmra.mxu0 %v2083
      %v3906 = vpop.f32.mrf.mxu0
      %v3907 = vadd.f32 %v3834, %v3906
      %v3908 = vpop.f32.mrf.mxu0
      %v3909 = vadd.f32 %v3836, %v3908
      %3910 = vmatmul.bf16.gmra.mxu0 %v2108
      %v3911 = vpop.f32.mrf.mxu0
      %v3912 = vadd.f32 %v3839, %v3911
      %v3913 = vpop.f32.mrf.mxu0
      %v3914 = vadd.f32 %v3841, %v3913
      %3915 = vmatmul.bf16.gmra.mxu0 %v2133
      %v3916 = vpop.f32.mrf.mxu0
      %v3917 = vadd.f32 %v3844, %v3916
      %v3918 = vpop.f32.mrf.mxu0
      %v3919 = vadd.f32 %v3846, %v3918
      %3920 = vmatmul.bf16.gmra.mxu0 %v2158
      %v3921 = vpop.f32.mrf.mxu0
      %v3922 = vadd.f32 %v3849, %v3921
      %v3923 = vpop.f32.mrf.mxu0
      %3924 = vdwg.mxu0
      %3925 = vmatpush.bf16.msra.mxu0 %v3337
      %3926 = vmatpush.bf16.msra.mxu0 %v3336
      %3927 = vmatpush.bf16.msra.mxu0 %v3335
      %3928 = vmatpush.bf16.msra.mxu0 %v3334
      %3929 = vmatpush.bf16.msra.mxu0 %v3333
      %3930 = vmatpush.bf16.msra.mxu0 %v3332
      %3931 = vmatpush.bf16.msra.mxu0 %v3331
      %3932 = vmatpush.bf16.msra.mxu0 %v3330
      %3933 = vmatmul.bf16.gmra.mxu0 %v1859
      %v3934 = vpop.f32.mrf.mxu0
      %v3935 = vadd.f32 %v3862, %v3934
      %v3936 = vpop.f32.mrf.mxu0
      %v3937 = vadd.f32 %v3864, %v3936
      %3938 = vmatmul.bf16.gmra.mxu0 %v1884
      %v3939 = vpop.f32.mrf.mxu0
      %v3940 = vadd.f32 %v3867, %v3939
      %v3941 = vpop.f32.mrf.mxu0
      %v3942 = vadd.f32 %v3869, %v3941
      %3943 = vmatmul.bf16.gmra.mxu0 %v1909
      %v3944 = vpop.f32.mrf.mxu0
      %v3945 = vadd.f32 %v3872, %v3944
      %v3946 = vpop.f32.mrf.mxu0
      %v3947 = vadd.f32 %v3874, %v3946
      %3948 = vmatmul.bf16.gmra.mxu0 %v1934
      %v3949 = vpop.f32.mrf.mxu0
      %v3950 = vadd.f32 %v3877, %v3949
      %v3951 = vpop.f32.mrf.mxu0
      %v3952 = vadd.f32 %v3879, %v3951
      %3953 = vmatmul.bf16.gmra.mxu0 %v1959
      %v3954 = vpop.f32.mrf.mxu0
      %v3955 = vadd.f32 %v3882, %v3954
      %v3956 = vpop.f32.mrf.mxu0
      %v3957 = vadd.f32 %v3884, %v3956
      %3958 = vmatmul.bf16.gmra.mxu0 %v1984
      %v3959 = vpop.f32.mrf.mxu0
      %v3960 = vadd.f32 %v3887, %v3959
      %v3961 = vpop.f32.mrf.mxu0
      %v3962 = vadd.f32 %v3889, %v3961
      %3963 = vmatmul.bf16.gmra.mxu0 %v2009
      %v3964 = vpop.f32.mrf.mxu0
      %v3965 = vadd.f32 %v3892, %v3964
      %v3966 = vpop.f32.mrf.mxu0
      %v3967 = vadd.f32 %v3894, %v3966
      %3968 = vmatmul.bf16.gmra.mxu0 %v2034
      %v3969 = vpop.f32.mrf.mxu0
      %v3970 = vadd.f32 %v3897, %v3969
      %v3971 = vpop.f32.mrf.mxu0
      %v3972 = vadd.f32 %v3899, %v3971
      %3973 = vmatmul.bf16.gmra.mxu0 %v2059
      %v3974 = vpop.f32.mrf.mxu0
      %v3975 = vadd.f32 %v3902, %v3974
      %v3976 = vpop.f32.mrf.mxu0
      %v3977 = vadd.f32 %v3904, %v3976
      %3978 = vmatmul.bf16.gmra.mxu0 %v2084
      %v3979 = vpop.f32.mrf.mxu0
      %v3980 = vadd.f32 %v3907, %v3979
      %v3981 = vpop.f32.mrf.mxu0
      %v3982 = vadd.f32 %v3909, %v3981
      %3983 = vmatmul.bf16.gmra.mxu0 %v2109
      %v3984 = vpop.f32.mrf.mxu0
      %v3985 = vadd.f32 %v3912, %v3984
      %v3986 = vpop.f32.mrf.mxu0
      %v3987 = vadd.f32 %v3914, %v3986
      %3988 = vmatmul.bf16.gmra.mxu0 %v2134
      %v3989 = vpop.f32.mrf.mxu0
      %v3990 = vadd.f32 %v3917, %v3989
      %v3991 = vpop.f32.mrf.mxu0
      %v3992 = vadd.f32 %v3919, %v3991
      %3993 = vmatmul.bf16.gmra.mxu0 %v2159
      %v3994 = vpop.f32.mrf.mxu0
      %v3995 = vadd.f32 %v3922, %v3994
      %v3996 = vpop.f32.mrf.mxu0
      %3997 = vdwg.mxu0
      %3998 = vmatpush.bf16.msra.mxu0 %v3345
      %3999 = vmatpush.bf16.msra.mxu0 %v3344
      %4000 = vmatpush.bf16.msra.mxu0 %v3343
      %4001 = vmatpush.bf16.msra.mxu0 %v3342
      %4002 = vmatpush.bf16.msra.mxu0 %v3341
      %4003 = vmatpush.bf16.msra.mxu0 %v3340
      %4004 = vmatpush.bf16.msra.mxu0 %v3339
      %4005 = vmatpush.bf16.msra.mxu0 %v3338
      %4006 = vmatmul.bf16.gmra.mxu0 %v1860
      %v4007 = vpop.f32.mrf.mxu0
      %v4008 = vadd.f32 %v3935, %v4007
      %v4009 = vpop.f32.mrf.mxu0
      %v4010 = vadd.f32 %v3937, %v4009
      %4011 = vmatmul.bf16.gmra.mxu0 %v1885
      %v4012 = vpop.f32.mrf.mxu0
      %v4013 = vadd.f32 %v3940, %v4012
      %v4014 = vpop.f32.mrf.mxu0
      %v4015 = vadd.f32 %v3942, %v4014
      %4016 = vmatmul.bf16.gmra.mxu0 %v1910
      %v4017 = vpop.f32.mrf.mxu0
      %v4018 = vadd.f32 %v3945, %v4017
      %v4019 = vpop.f32.mrf.mxu0
      %v4020 = vadd.f32 %v3947, %v4019
      %4021 = vmatmul.bf16.gmra.mxu0 %v1935
      %v4022 = vpop.f32.mrf.mxu0
      %v4023 = vadd.f32 %v3950, %v4022
      %v4024 = vpop.f32.mrf.mxu0
      %v4025 = vadd.f32 %v3952, %v4024
      %4026 = vmatmul.bf16.gmra.mxu0 %v1960
      %v4027 = vpop.f32.mrf.mxu0
      %v4028 = vadd.f32 %v3955, %v4027
      %v4029 = vpop.f32.mrf.mxu0
      %v4030 = vadd.f32 %v3957, %v4029
      %4031 = vmatmul.bf16.gmra.mxu0 %v1985
      %v4032 = vpop.f32.mrf.mxu0
      %v4033 = vadd.f32 %v3960, %v4032
      %v4034 = vpop.f32.mrf.mxu0
      %v4035 = vadd.f32 %v3962, %v4034
      %4036 = vmatmul.bf16.gmra.mxu0 %v2010
      %v4037 = vpop.f32.mrf.mxu0
      %v4038 = vadd.f32 %v3965, %v4037
      %v4039 = vpop.f32.mrf.mxu0
      %v4040 = vadd.f32 %v3967, %v4039
      %4041 = vmatmul.bf16.gmra.mxu0 %v2035
      %v4042 = vpop.f32.mrf.mxu0
      %v4043 = vadd.f32 %v3970, %v4042
      %v4044 = vpop.f32.mrf.mxu0
      %v4045 = vadd.f32 %v3972, %v4044
      %4046 = vmatmul.bf16.gmra.mxu0 %v2060
      %v4047 = vpop.f32.mrf.mxu0
      %v4048 = vadd.f32 %v3975, %v4047
      %v4049 = vpop.f32.mrf.mxu0
      %v4050 = vadd.f32 %v3977, %v4049
      %4051 = vmatmul.bf16.gmra.mxu0 %v2085
      %v4052 = vpop.f32.mrf.mxu0
      %v4053 = vadd.f32 %v3980, %v4052
      %v4054 = vpop.f32.mrf.mxu0
      %v4055 = vadd.f32 %v3982, %v4054
      %4056 = vmatmul.bf16.gmra.mxu0 %v2110
      %v4057 = vpop.f32.mrf.mxu0
      %v4058 = vadd.f32 %v3985, %v4057
      %v4059 = vpop.f32.mrf.mxu0
      %v4060 = vadd.f32 %v3987, %v4059
      %4061 = vmatmul.bf16.gmra.mxu0 %v2135
      %v4062 = vpop.f32.mrf.mxu0
      %v4063 = vadd.f32 %v3990, %v4062
      %v4064 = vpop.f32.mrf.mxu0
      %v4065 = vadd.f32 %v3992, %v4064
      %4066 = vmatmul.bf16.gmra.mxu0 %v2160
      %v4067 = vpop.f32.mrf.mxu0
      %v4068 = vadd.f32 %v3995, %v4067
      %v4069 = vpop.f32.mrf.mxu0
      %4070 = vdwg.mxu0
      %4071 = vmatpush.bf16.msra.mxu0 %v3353
      %4072 = vmatpush.bf16.msra.mxu0 %v3352
      %4073 = vmatpush.bf16.msra.mxu0 %v3351
      %4074 = vmatpush.bf16.msra.mxu0 %v3350
      %4075 = vmatpush.bf16.msra.mxu0 %v3349
      %4076 = vmatpush.bf16.msra.mxu0 %v3348
      %4077 = vmatpush.bf16.msra.mxu0 %v3347
      %4078 = vmatpush.bf16.msra.mxu0 %v3346
      %4079 = vmatmul.bf16.gmra.mxu0 %v1861
      %v4080 = vpop.f32.mrf.mxu0
      %v4081 = vadd.f32 %v4008, %v4080
      %v4082 = vpop.f32.mrf.mxu0
      %v4083 = vadd.f32 %v4010, %v4082
      %4084 = vmatmul.bf16.gmra.mxu0 %v1886
      %v4085 = vpop.f32.mrf.mxu0
      %v4086 = vadd.f32 %v4013, %v4085
      %v4087 = vpop.f32.mrf.mxu0
      %v4088 = vadd.f32 %v4015, %v4087
      %4089 = vmatmul.bf16.gmra.mxu0 %v1911
      %v4090 = vpop.f32.mrf.mxu0
      %v4091 = vadd.f32 %v4018, %v4090
      %v4092 = vpop.f32.mrf.mxu0
      %v4093 = vadd.f32 %v4020, %v4092
      %4094 = vmatmul.bf16.gmra.mxu0 %v1936
      %v4095 = vpop.f32.mrf.mxu0
      %v4096 = vadd.f32 %v4023, %v4095
      %v4097 = vpop.f32.mrf.mxu0
      %v4098 = vadd.f32 %v4025, %v4097
      %4099 = vmatmul.bf16.gmra.mxu0 %v1961
      %v4100 = vpop.f32.mrf.mxu0
      %v4101 = vadd.f32 %v4028, %v4100
      %v4102 = vpop.f32.mrf.mxu0
      %v4103 = vadd.f32 %v4030, %v4102
      %4104 = vmatmul.bf16.gmra.mxu0 %v1986
      %v4105 = vpop.f32.mrf.mxu0
      %v4106 = vadd.f32 %v4033, %v4105
      %v4107 = vpop.f32.mrf.mxu0
      %v4108 = vadd.f32 %v4035, %v4107
      %4109 = vmatmul.bf16.gmra.mxu0 %v2011
      %v4110 = vpop.f32.mrf.mxu0
      %v4111 = vadd.f32 %v4038, %v4110
      %v4112 = vpop.f32.mrf.mxu0
      %v4113 = vadd.f32 %v4040, %v4112
      %4114 = vmatmul.bf16.gmra.mxu0 %v2036
      %v4115 = vpop.f32.mrf.mxu0
      %v4116 = vadd.f32 %v4043, %v4115
      %v4117 = vpop.f32.mrf.mxu0
      %v4118 = vadd.f32 %v4045, %v4117
      %4119 = vmatmul.bf16.gmra.mxu0 %v2061
      %v4120 = vpop.f32.mrf.mxu0
      %v4121 = vadd.f32 %v4048, %v4120
      %v4122 = vpop.f32.mrf.mxu0
      %v4123 = vadd.f32 %v4050, %v4122
      %4124 = vmatmul.bf16.gmra.mxu0 %v2086
      %v4125 = vpop.f32.mrf.mxu0
      %v4126 = vadd.f32 %v4053, %v4125
      %v4127 = vpop.f32.mrf.mxu0
      %v4128 = vadd.f32 %v4055, %v4127
      %4129 = vmatmul.bf16.gmra.mxu0 %v2111
      %v4130 = vpop.f32.mrf.mxu0
      %v4131 = vadd.f32 %v4058, %v4130
      %v4132 = vpop.f32.mrf.mxu0
      %v4133 = vadd.f32 %v4060, %v4132
      %4134 = vmatmul.bf16.gmra.mxu0 %v2136
      %v4135 = vpop.f32.mrf.mxu0
      %v4136 = vadd.f32 %v4063, %v4135
      %v4137 = vpop.f32.mrf.mxu0
      %v4138 = vadd.f32 %v4065, %v4137
      %4139 = vmatmul.bf16.gmra.mxu0 %v2161
      %v4140 = vpop.f32.mrf.mxu0
      %v4141 = vadd.f32 %v4068, %v4140
      %v4142 = vpop.f32.mrf.mxu0
      %4143 = vdwg.mxu0
      %4144 = vmatpush.bf16.msra.mxu0 %v3361
      %4145 = vmatpush.bf16.msra.mxu0 %v3360
      %4146 = vmatpush.bf16.msra.mxu0 %v3359
      %4147 = vmatpush.bf16.msra.mxu0 %v3358
      %4148 = vmatpush.bf16.msra.mxu0 %v3357
      %4149 = vmatpush.bf16.msra.mxu0 %v3356
      %4150 = vmatpush.bf16.msra.mxu0 %v3355
      %4151 = vmatpush.bf16.msra.mxu0 %v3354
      %4152 = vmatmul.bf16.gmra.mxu0 %v1862
      %v4153 = vpop.f32.mrf.mxu0
      %v4154 = vadd.f32 %v4081, %v4153
      %v4155 = vpop.f32.mrf.mxu0
      %v4156 = vadd.f32 %v4083, %v4155
      %4157 = vmatmul.bf16.gmra.mxu0 %v1887
      %v4158 = vpop.f32.mrf.mxu0
      %v4159 = vadd.f32 %v4086, %v4158
      %v4160 = vpop.f32.mrf.mxu0
      %v4161 = vadd.f32 %v4088, %v4160
      %4162 = vmatmul.bf16.gmra.mxu0 %v1912
      %v4163 = vpop.f32.mrf.mxu0
      %v4164 = vadd.f32 %v4091, %v4163
      %v4165 = vpop.f32.mrf.mxu0
      %v4166 = vadd.f32 %v4093, %v4165
      %4167 = vmatmul.bf16.gmra.mxu0 %v1937
      %v4168 = vpop.f32.mrf.mxu0
      %v4169 = vadd.f32 %v4096, %v4168
      %v4170 = vpop.f32.mrf.mxu0
      %v4171 = vadd.f32 %v4098, %v4170
      %4172 = vmatmul.bf16.gmra.mxu0 %v1962
      %v4173 = vpop.f32.mrf.mxu0
      %v4174 = vadd.f32 %v4101, %v4173
      %v4175 = vpop.f32.mrf.mxu0
      %v4176 = vadd.f32 %v4103, %v4175
      %4177 = vmatmul.bf16.gmra.mxu0 %v1987
      %v4178 = vpop.f32.mrf.mxu0
      %v4179 = vadd.f32 %v4106, %v4178
      %v4180 = vpop.f32.mrf.mxu0
      %v4181 = vadd.f32 %v4108, %v4180
      %4182 = vmatmul.bf16.gmra.mxu0 %v2012
      %v4183 = vpop.f32.mrf.mxu0
      %v4184 = vadd.f32 %v4111, %v4183
      %v4185 = vpop.f32.mrf.mxu0
      %v4186 = vadd.f32 %v4113, %v4185
      %4187 = vmatmul.bf16.gmra.mxu0 %v2037
      %v4188 = vpop.f32.mrf.mxu0
      %v4189 = vadd.f32 %v4116, %v4188
      %v4190 = vpop.f32.mrf.mxu0
      %v4191 = vadd.f32 %v4118, %v4190
      %4192 = vmatmul.bf16.gmra.mxu0 %v2062
      %v4193 = vpop.f32.mrf.mxu0
      %v4194 = vadd.f32 %v4121, %v4193
      %v4195 = vpop.f32.mrf.mxu0
      %v4196 = vadd.f32 %v4123, %v4195
      %4197 = vmatmul.bf16.gmra.mxu0 %v2087
      %v4198 = vpop.f32.mrf.mxu0
      %v4199 = vadd.f32 %v4126, %v4198
      %v4200 = vpop.f32.mrf.mxu0
      %v4201 = vadd.f32 %v4128, %v4200
      %4202 = vmatmul.bf16.gmra.mxu0 %v2112
      %v4203 = vpop.f32.mrf.mxu0
      %v4204 = vadd.f32 %v4131, %v4203
      %v4205 = vpop.f32.mrf.mxu0
      %v4206 = vadd.f32 %v4133, %v4205
      %4207 = vmatmul.bf16.gmra.mxu0 %v2137
      %v4208 = vpop.f32.mrf.mxu0
      %v4209 = vadd.f32 %v4136, %v4208
      %v4210 = vpop.f32.mrf.mxu0
      %v4211 = vadd.f32 %v4138, %v4210
      %4212 = vmatmul.bf16.gmra.mxu0 %v2162
      %v4213 = vpop.f32.mrf.mxu0
      %v4214 = vadd.f32 %v4141, %v4213
      %v4215 = vpop.f32.mrf.mxu0
      %4216 = vdwg.mxu0
      %4217 = vmatpush.bf16.msra.mxu0 %v3369
      %4218 = vmatpush.bf16.msra.mxu0 %v3368
      %4219 = vmatpush.bf16.msra.mxu0 %v3367
      %4220 = vmatpush.bf16.msra.mxu0 %v3366
      %4221 = vmatpush.bf16.msra.mxu0 %v3365
      %4222 = vmatpush.bf16.msra.mxu0 %v3364
      %4223 = vmatpush.bf16.msra.mxu0 %v3363
      %4224 = vmatpush.bf16.msra.mxu0 %v3362
      %4225 = vmatmul.bf16.gmra.mxu0 %v1863
      %v4226 = vpop.f32.mrf.mxu0
      %v4227 = vadd.f32 %v4154, %v4226
      %v4228 = vpop.f32.mrf.mxu0
      %v4229 = vadd.f32 %v4156, %v4228
      %4230 = vmatmul.bf16.gmra.mxu0 %v1888
      %v4231 = vpop.f32.mrf.mxu0
      %v4232 = vadd.f32 %v4159, %v4231
      %v4233 = vpop.f32.mrf.mxu0
      %v4234 = vadd.f32 %v4161, %v4233
      %4235 = vmatmul.bf16.gmra.mxu0 %v1913
      %v4236 = vpop.f32.mrf.mxu0
      %v4237 = vadd.f32 %v4164, %v4236
      %v4238 = vpop.f32.mrf.mxu0
      %v4239 = vadd.f32 %v4166, %v4238
      %4240 = vmatmul.bf16.gmra.mxu0 %v1938
      %v4241 = vpop.f32.mrf.mxu0
      %v4242 = vadd.f32 %v4169, %v4241
      %v4243 = vpop.f32.mrf.mxu0
      %v4244 = vadd.f32 %v4171, %v4243
      %4245 = vmatmul.bf16.gmra.mxu0 %v1963
      %v4246 = vpop.f32.mrf.mxu0
      %v4247 = vadd.f32 %v4174, %v4246
      %v4248 = vpop.f32.mrf.mxu0
      %v4249 = vadd.f32 %v4176, %v4248
      %4250 = vmatmul.bf16.gmra.mxu0 %v1988
      %v4251 = vpop.f32.mrf.mxu0
      %v4252 = vadd.f32 %v4179, %v4251
      %v4253 = vpop.f32.mrf.mxu0
      %v4254 = vadd.f32 %v4181, %v4253
      %4255 = vmatmul.bf16.gmra.mxu0 %v2013
      %v4256 = vpop.f32.mrf.mxu0
      %v4257 = vadd.f32 %v4184, %v4256
      %v4258 = vpop.f32.mrf.mxu0
      %v4259 = vadd.f32 %v4186, %v4258
      %4260 = vmatmul.bf16.gmra.mxu0 %v2038
      %v4261 = vpop.f32.mrf.mxu0
      %v4262 = vadd.f32 %v4189, %v4261
      %v4263 = vpop.f32.mrf.mxu0
      %v4264 = vadd.f32 %v4191, %v4263
      %4265 = vmatmul.bf16.gmra.mxu0 %v2063
      %v4266 = vpop.f32.mrf.mxu0
      %v4267 = vadd.f32 %v4194, %v4266
      %v4268 = vpop.f32.mrf.mxu0
      %v4269 = vadd.f32 %v4196, %v4268
      %4270 = vmatmul.bf16.gmra.mxu0 %v2088
      %v4271 = vpop.f32.mrf.mxu0
      %v4272 = vadd.f32 %v4199, %v4271
      %v4273 = vpop.f32.mrf.mxu0
      %v4274 = vadd.f32 %v4201, %v4273
      %4275 = vmatmul.bf16.gmra.mxu0 %v2113
      %v4276 = vpop.f32.mrf.mxu0
      %v4277 = vadd.f32 %v4204, %v4276
      %v4278 = vpop.f32.mrf.mxu0
      %v4279 = vadd.f32 %v4206, %v4278
      %4280 = vmatmul.bf16.gmra.mxu0 %v2138
      %v4281 = vpop.f32.mrf.mxu0
      %v4282 = vadd.f32 %v4209, %v4281
      %v4283 = vpop.f32.mrf.mxu0
      %v4284 = vadd.f32 %v4211, %v4283
      %4285 = vmatmul.bf16.gmra.mxu0 %v2163
      %v4286 = vpop.f32.mrf.mxu0
      %v4287 = vadd.f32 %v4214, %v4286
      %v4288 = vpop.f32.mrf.mxu0
      %4289 = vdwg.mxu0
      %4290 = vmatpush.bf16.msra.mxu0 %v3377
      %4291 = vmatpush.bf16.msra.mxu0 %v3376
      %4292 = vmatpush.bf16.msra.mxu0 %v3375
      %4293 = vmatpush.bf16.msra.mxu0 %v3374
      %4294 = vmatpush.bf16.msra.mxu0 %v3373
      %4295 = vmatpush.bf16.msra.mxu0 %v3372
      %4296 = vmatpush.bf16.msra.mxu0 %v3371
      %4297 = vmatpush.bf16.msra.mxu0 %v3370
      %4298 = vmatmul.bf16.gmra.mxu0 %v1864
      %v4299 = vpop.f32.mrf.mxu0
      %v4300 = vadd.f32 %v4227, %v4299
      %v4301 = vpop.f32.mrf.mxu0
      %v4302 = vadd.f32 %v4229, %v4301
      %4303 = vmatmul.bf16.gmra.mxu0 %v1889
      %v4304 = vpop.f32.mrf.mxu0
      %v4305 = vadd.f32 %v4232, %v4304
      %v4306 = vpop.f32.mrf.mxu0
      %v4307 = vadd.f32 %v4234, %v4306
      %4308 = vmatmul.bf16.gmra.mxu0 %v1914
      %v4309 = vpop.f32.mrf.mxu0
      %v4310 = vadd.f32 %v4237, %v4309
      %v4311 = vpop.f32.mrf.mxu0
      %v4312 = vadd.f32 %v4239, %v4311
      %4313 = vmatmul.bf16.gmra.mxu0 %v1939
      %v4314 = vpop.f32.mrf.mxu0
      %v4315 = vadd.f32 %v4242, %v4314
      %v4316 = vpop.f32.mrf.mxu0
      %v4317 = vadd.f32 %v4244, %v4316
      %4318 = vmatmul.bf16.gmra.mxu0 %v1964
      %v4319 = vpop.f32.mrf.mxu0
      %v4320 = vadd.f32 %v4247, %v4319
      %v4321 = vpop.f32.mrf.mxu0
      %v4322 = vadd.f32 %v4249, %v4321
      %4323 = vmatmul.bf16.gmra.mxu0 %v1989
      %v4324 = vpop.f32.mrf.mxu0
      %v4325 = vadd.f32 %v4252, %v4324
      %v4326 = vpop.f32.mrf.mxu0
      %v4327 = vadd.f32 %v4254, %v4326
      %4328 = vmatmul.bf16.gmra.mxu0 %v2014
      %v4329 = vpop.f32.mrf.mxu0
      %v4330 = vadd.f32 %v4257, %v4329
      %v4331 = vpop.f32.mrf.mxu0
      %v4332 = vadd.f32 %v4259, %v4331
      %4333 = vmatmul.bf16.gmra.mxu0 %v2039
      %v4334 = vpop.f32.mrf.mxu0
      %v4335 = vadd.f32 %v4262, %v4334
      %v4336 = vpop.f32.mrf.mxu0
      %v4337 = vadd.f32 %v4264, %v4336
      %4338 = vmatmul.bf16.gmra.mxu0 %v2064
      %v4339 = vpop.f32.mrf.mxu0
      %v4340 = vadd.f32 %v4267, %v4339
      %v4341 = vpop.f32.mrf.mxu0
      %v4342 = vadd.f32 %v4269, %v4341
      %4343 = vmatmul.bf16.gmra.mxu0 %v2089
      %v4344 = vpop.f32.mrf.mxu0
      %v4345 = vadd.f32 %v4272, %v4344
      %v4346 = vpop.f32.mrf.mxu0
      %v4347 = vadd.f32 %v4274, %v4346
      %4348 = vmatmul.bf16.gmra.mxu0 %v2114
      %v4349 = vpop.f32.mrf.mxu0
      %v4350 = vadd.f32 %v4277, %v4349
      %v4351 = vpop.f32.mrf.mxu0
      %v4352 = vadd.f32 %v4279, %v4351
      %4353 = vmatmul.bf16.gmra.mxu0 %v2139
      %v4354 = vpop.f32.mrf.mxu0
      %v4355 = vadd.f32 %v4282, %v4354
      %v4356 = vpop.f32.mrf.mxu0
      %v4357 = vadd.f32 %v4284, %v4356
      %4358 = vmatmul.bf16.gmra.mxu0 %v2164
      %v4359 = vpop.f32.mrf.mxu0
      %v4360 = vadd.f32 %v4287, %v4359
      %v4361 = vpop.f32.mrf.mxu0
      %4362 = vdwg.mxu0
      %4363 = vmatpush.bf16.msra.mxu0 %v3385
      %4364 = vmatpush.bf16.msra.mxu0 %v3384
      %4365 = vmatpush.bf16.msra.mxu0 %v3383
      %4366 = vmatpush.bf16.msra.mxu0 %v3382
      %4367 = vmatpush.bf16.msra.mxu0 %v3381
      %4368 = vmatpush.bf16.msra.mxu0 %v3380
      %4369 = vmatpush.bf16.msra.mxu0 %v3379
      %4370 = vmatpush.bf16.msra.mxu0 %v3378
      %4371 = vmatmul.bf16.gmra.mxu0 %v1865
      %v4372 = vpop.f32.mrf.mxu0
      %v4373 = vadd.f32 %v4300, %v4372
      %v4374 = vpop.f32.mrf.mxu0
      %v4375 = vadd.f32 %v4302, %v4374
      %4376 = vmatmul.bf16.gmra.mxu0 %v1890
      %v4377 = vpop.f32.mrf.mxu0
      %v4378 = vadd.f32 %v4305, %v4377
      %v4379 = vpop.f32.mrf.mxu0
      %v4380 = vadd.f32 %v4307, %v4379
      %4381 = vmatmul.bf16.gmra.mxu0 %v1915
      %v4382 = vpop.f32.mrf.mxu0
      %v4383 = vadd.f32 %v4310, %v4382
      %v4384 = vpop.f32.mrf.mxu0
      %v4385 = vadd.f32 %v4312, %v4384
      %4386 = vmatmul.bf16.gmra.mxu0 %v1940
      %v4387 = vpop.f32.mrf.mxu0
      %v4388 = vadd.f32 %v4315, %v4387
      %v4389 = vpop.f32.mrf.mxu0
      %v4390 = vadd.f32 %v4317, %v4389
      %4391 = vmatmul.bf16.gmra.mxu0 %v1965
      %v4392 = vpop.f32.mrf.mxu0
      %v4393 = vadd.f32 %v4320, %v4392
      %v4394 = vpop.f32.mrf.mxu0
      %v4395 = vadd.f32 %v4322, %v4394
      %4396 = vmatmul.bf16.gmra.mxu0 %v1990
      %v4397 = vpop.f32.mrf.mxu0
      %v4398 = vadd.f32 %v4325, %v4397
      %v4399 = vpop.f32.mrf.mxu0
      %v4400 = vadd.f32 %v4327, %v4399
      %4401 = vmatmul.bf16.gmra.mxu0 %v2015
      %v4402 = vpop.f32.mrf.mxu0
      %v4403 = vadd.f32 %v4330, %v4402
      %v4404 = vpop.f32.mrf.mxu0
      %v4405 = vadd.f32 %v4332, %v4404
      %4406 = vmatmul.bf16.gmra.mxu0 %v2040
      %v4407 = vpop.f32.mrf.mxu0
      %v4408 = vadd.f32 %v4335, %v4407
      %v4409 = vpop.f32.mrf.mxu0
      %v4410 = vadd.f32 %v4337, %v4409
      %4411 = vmatmul.bf16.gmra.mxu0 %v2065
      %v4412 = vpop.f32.mrf.mxu0
      %v4413 = vadd.f32 %v4340, %v4412
      %v4414 = vpop.f32.mrf.mxu0
      %v4415 = vadd.f32 %v4342, %v4414
      %4416 = vmatmul.bf16.gmra.mxu0 %v2090
      %v4417 = vpop.f32.mrf.mxu0
      %v4418 = vadd.f32 %v4345, %v4417
      %v4419 = vpop.f32.mrf.mxu0
      %v4420 = vadd.f32 %v4347, %v4419
      %4421 = vmatmul.bf16.gmra.mxu0 %v2115
      %v4422 = vpop.f32.mrf.mxu0
      %v4423 = vadd.f32 %v4350, %v4422
      %v4424 = vpop.f32.mrf.mxu0
      %v4425 = vadd.f32 %v4352, %v4424
      %4426 = vmatmul.bf16.gmra.mxu0 %v2140
      %v4427 = vpop.f32.mrf.mxu0
      %v4428 = vadd.f32 %v4355, %v4427
      %v4429 = vpop.f32.mrf.mxu0
      %v4430 = vadd.f32 %v4357, %v4429
      %4431 = vmatmul.bf16.gmra.mxu0 %v2165
      %v4432 = vpop.f32.mrf.mxu0
      %v4433 = vadd.f32 %v4360, %v4432
      %v4434 = vpop.f32.mrf.mxu0
      %4435 = vdwg.mxu0
      %4436 = vmatpush.bf16.msra.mxu0 %v3393
      %4437 = vmatpush.bf16.msra.mxu0 %v3392
      %4438 = vmatpush.bf16.msra.mxu0 %v3391
      %4439 = vmatpush.bf16.msra.mxu0 %v3390
      %4440 = vmatpush.bf16.msra.mxu0 %v3389
      %4441 = vmatpush.bf16.msra.mxu0 %v3388
      %4442 = vmatpush.bf16.msra.mxu0 %v3387
      %4443 = vmatpush.bf16.msra.mxu0 %v3386
      %4444 = vmatmul.bf16.gmra.mxu0 %v1866
      %v4445 = vpop.f32.mrf.mxu0
      %v4446 = vadd.f32 %v4373, %v4445
      %v4447 = vpop.f32.mrf.mxu0
      %v4448 = vadd.f32 %v4375, %v4447
      %4449 = vmatmul.bf16.gmra.mxu0 %v1891
      %v4450 = vpop.f32.mrf.mxu0
      %v4451 = vadd.f32 %v4378, %v4450
      %v4452 = vpop.f32.mrf.mxu0
      %v4453 = vadd.f32 %v4380, %v4452
      %4454 = vmatmul.bf16.gmra.mxu0 %v1916
      %v4455 = vpop.f32.mrf.mxu0
      %v4456 = vadd.f32 %v4383, %v4455
      %v4457 = vpop.f32.mrf.mxu0
      %v4458 = vadd.f32 %v4385, %v4457
      %4459 = vmatmul.bf16.gmra.mxu0 %v1941
      %v4460 = vpop.f32.mrf.mxu0
      %v4461 = vadd.f32 %v4388, %v4460
      %v4462 = vpop.f32.mrf.mxu0
      %v4463 = vadd.f32 %v4390, %v4462
      %4464 = vmatmul.bf16.gmra.mxu0 %v1966
      %v4465 = vpop.f32.mrf.mxu0
      %v4466 = vadd.f32 %v4393, %v4465
      %v4467 = vpop.f32.mrf.mxu0
      %v4468 = vadd.f32 %v4395, %v4467
      %4469 = vmatmul.bf16.gmra.mxu0 %v1991
      %v4470 = vpop.f32.mrf.mxu0
      %v4471 = vadd.f32 %v4398, %v4470
      %v4472 = vpop.f32.mrf.mxu0
      %v4473 = vadd.f32 %v4400, %v4472
      %4474 = vmatmul.bf16.gmra.mxu0 %v2016
      %v4475 = vpop.f32.mrf.mxu0
      %v4476 = vadd.f32 %v4403, %v4475
      %v4477 = vpop.f32.mrf.mxu0
      %v4478 = vadd.f32 %v4405, %v4477
      %4479 = vmatmul.bf16.gmra.mxu0 %v2041
      %v4480 = vpop.f32.mrf.mxu0
      %v4481 = vadd.f32 %v4408, %v4480
      %v4482 = vpop.f32.mrf.mxu0
      %v4483 = vadd.f32 %v4410, %v4482
      %4484 = vmatmul.bf16.gmra.mxu0 %v2066
      %v4485 = vpop.f32.mrf.mxu0
      %v4486 = vadd.f32 %v4413, %v4485
      %v4487 = vpop.f32.mrf.mxu0
      %v4488 = vadd.f32 %v4415, %v4487
      %4489 = vmatmul.bf16.gmra.mxu0 %v2091
      %v4490 = vpop.f32.mrf.mxu0
      %v4491 = vadd.f32 %v4418, %v4490
      %v4492 = vpop.f32.mrf.mxu0
      %v4493 = vadd.f32 %v4420, %v4492
      %4494 = vmatmul.bf16.gmra.mxu0 %v2116
      %v4495 = vpop.f32.mrf.mxu0
      %v4496 = vadd.f32 %v4423, %v4495
      %v4497 = vpop.f32.mrf.mxu0
      %v4498 = vadd.f32 %v4425, %v4497
      %4499 = vmatmul.bf16.gmra.mxu0 %v2141
      %v4500 = vpop.f32.mrf.mxu0
      %v4501 = vadd.f32 %v4428, %v4500
      %v4502 = vpop.f32.mrf.mxu0
      %v4503 = vadd.f32 %v4430, %v4502
      %4504 = vmatmul.bf16.gmra.mxu0 %v2166
      %v4505 = vpop.f32.mrf.mxu0
      %v4506 = vadd.f32 %v4433, %v4505
      %v4507 = vpop.f32.mrf.mxu0
      %4508 = vdwg.mxu0
      %4509 = vmatpush.bf16.msra.mxu0 %v3401
      %4510 = vmatpush.bf16.msra.mxu0 %v3400
      %4511 = vmatpush.bf16.msra.mxu0 %v3399
      %4512 = vmatpush.bf16.msra.mxu0 %v3398
      %4513 = vmatpush.bf16.msra.mxu0 %v3397
      %4514 = vmatpush.bf16.msra.mxu0 %v3396
      %4515 = vmatpush.bf16.msra.mxu0 %v3395
      %4516 = vmatpush.bf16.msra.mxu0 %v3394
      %4517 = vmatmul.bf16.gmra.mxu0 %v1867
      %v4518 = vpop.f32.mrf.mxu0
      %v4519 = vadd.f32 %v4446, %v4518
      %v4520 = vpop.f32.mrf.mxu0
      %v4521 = vadd.f32 %v4448, %v4520
      %4522 = vmatmul.bf16.gmra.mxu0 %v1892
      %v4523 = vpop.f32.mrf.mxu0
      %v4524 = vadd.f32 %v4451, %v4523
      %v4525 = vpop.f32.mrf.mxu0
      %v4526 = vadd.f32 %v4453, %v4525
      %4527 = vmatmul.bf16.gmra.mxu0 %v1917
      %v4528 = vpop.f32.mrf.mxu0
      %v4529 = vadd.f32 %v4456, %v4528
      %v4530 = vpop.f32.mrf.mxu0
      %v4531 = vadd.f32 %v4458, %v4530
      %4532 = vmatmul.bf16.gmra.mxu0 %v1942
      %v4533 = vpop.f32.mrf.mxu0
      %v4534 = vadd.f32 %v4461, %v4533
      %v4535 = vpop.f32.mrf.mxu0
      %v4536 = vadd.f32 %v4463, %v4535
      %4537 = vmatmul.bf16.gmra.mxu0 %v1967
      %v4538 = vpop.f32.mrf.mxu0
      %v4539 = vadd.f32 %v4466, %v4538
      %v4540 = vpop.f32.mrf.mxu0
      %v4541 = vadd.f32 %v4468, %v4540
      %4542 = vmatmul.bf16.gmra.mxu0 %v1992
      %v4543 = vpop.f32.mrf.mxu0
      %v4544 = vadd.f32 %v4471, %v4543
      %v4545 = vpop.f32.mrf.mxu0
      %v4546 = vadd.f32 %v4473, %v4545
      %4547 = vmatmul.bf16.gmra.mxu0 %v2017
      %v4548 = vpop.f32.mrf.mxu0
      %v4549 = vadd.f32 %v4476, %v4548
      %v4550 = vpop.f32.mrf.mxu0
      %v4551 = vadd.f32 %v4478, %v4550
      %4552 = vmatmul.bf16.gmra.mxu0 %v2042
      %v4553 = vpop.f32.mrf.mxu0
      %v4554 = vadd.f32 %v4481, %v4553
      %v4555 = vpop.f32.mrf.mxu0
      %v4556 = vadd.f32 %v4483, %v4555
      %4557 = vmatmul.bf16.gmra.mxu0 %v2067
      %v4558 = vpop.f32.mrf.mxu0
      %v4559 = vadd.f32 %v4486, %v4558
      %v4560 = vpop.f32.mrf.mxu0
      %v4561 = vadd.f32 %v4488, %v4560
      %4562 = vmatmul.bf16.gmra.mxu0 %v2092
      %v4563 = vpop.f32.mrf.mxu0
      %v4564 = vadd.f32 %v4491, %v4563
      %v4565 = vpop.f32.mrf.mxu0
      %v4566 = vadd.f32 %v4493, %v4565
      %4567 = vmatmul.bf16.gmra.mxu0 %v2117
      %v4568 = vpop.f32.mrf.mxu0
      %v4569 = vadd.f32 %v4496, %v4568
      %v4570 = vpop.f32.mrf.mxu0
      %v4571 = vadd.f32 %v4498, %v4570
      %4572 = vmatmul.bf16.gmra.mxu0 %v2142
      %v4573 = vpop.f32.mrf.mxu0
      %v4574 = vadd.f32 %v4501, %v4573
      %v4575 = vpop.f32.mrf.mxu0
      %v4576 = vadd.f32 %v4503, %v4575
      %4577 = vmatmul.bf16.gmra.mxu0 %v2167
      %v4578 = vpop.f32.mrf.mxu0
      %v4579 = vadd.f32 %v4506, %v4578
      %v4580 = vpop.f32.mrf.mxu0
      %4581 = vdwg.mxu0
      %4582 = vmatpush.bf16.msra.mxu0 %v3409
      %4583 = vmatpush.bf16.msra.mxu0 %v3408
      %4584 = vmatpush.bf16.msra.mxu0 %v3407
      %4585 = vmatpush.bf16.msra.mxu0 %v3406
      %4586 = vmatpush.bf16.msra.mxu0 %v3405
      %4587 = vmatpush.bf16.msra.mxu0 %v3404
      %4588 = vmatpush.bf16.msra.mxu0 %v3403
      %4589 = vmatpush.bf16.msra.mxu0 %v3402
      %4590 = vmatmul.bf16.gmra.mxu0 %v1868
      %v4591 = vpop.f32.mrf.mxu0
      %v4592 = vadd.f32 %v4519, %v4591
      %v4593 = vpop.f32.mrf.mxu0
      %v4594 = vadd.f32 %v4521, %v4593
      %4595 = vmatmul.bf16.gmra.mxu0 %v1893
      %v4596 = vpop.f32.mrf.mxu0
      %v4597 = vadd.f32 %v4524, %v4596
      %v4598 = vpop.f32.mrf.mxu0
      %v4599 = vadd.f32 %v4526, %v4598
      %4600 = vmatmul.bf16.gmra.mxu0 %v1918
      %v4601 = vpop.f32.mrf.mxu0
      %v4602 = vadd.f32 %v4529, %v4601
      %v4603 = vpop.f32.mrf.mxu0
      %v4604 = vadd.f32 %v4531, %v4603
      %4605 = vmatmul.bf16.gmra.mxu0 %v1943
      %v4606 = vpop.f32.mrf.mxu0
      %v4607 = vadd.f32 %v4534, %v4606
      %v4608 = vpop.f32.mrf.mxu0
      %v4609 = vadd.f32 %v4536, %v4608
      %4610 = vmatmul.bf16.gmra.mxu0 %v1968
      %v4611 = vpop.f32.mrf.mxu0
      %v4612 = vadd.f32 %v4539, %v4611
      %v4613 = vpop.f32.mrf.mxu0
      %v4614 = vadd.f32 %v4541, %v4613
      %4615 = vmatmul.bf16.gmra.mxu0 %v1993
      %v4616 = vpop.f32.mrf.mxu0
      %v4617 = vadd.f32 %v4544, %v4616
      %v4618 = vpop.f32.mrf.mxu0
      %v4619 = vadd.f32 %v4546, %v4618
      %4620 = vmatmul.bf16.gmra.mxu0 %v2018
      %v4621 = vpop.f32.mrf.mxu0
      %v4622 = vadd.f32 %v4549, %v4621
      %v4623 = vpop.f32.mrf.mxu0
      %v4624 = vadd.f32 %v4551, %v4623
      %4625 = vmatmul.bf16.gmra.mxu0 %v2043
      %v4626 = vpop.f32.mrf.mxu0
      %v4627 = vadd.f32 %v4554, %v4626
      %v4628 = vpop.f32.mrf.mxu0
      %v4629 = vadd.f32 %v4556, %v4628
      %4630 = vmatmul.bf16.gmra.mxu0 %v2068
      %v4631 = vpop.f32.mrf.mxu0
      %v4632 = vadd.f32 %v4559, %v4631
      %v4633 = vpop.f32.mrf.mxu0
      %v4634 = vadd.f32 %v4561, %v4633
      %4635 = vmatmul.bf16.gmra.mxu0 %v2093
      %v4636 = vpop.f32.mrf.mxu0
      %v4637 = vadd.f32 %v4564, %v4636
      %v4638 = vpop.f32.mrf.mxu0
      %v4639 = vadd.f32 %v4566, %v4638
      %4640 = vmatmul.bf16.gmra.mxu0 %v2118
      %v4641 = vpop.f32.mrf.mxu0
      %v4642 = vadd.f32 %v4569, %v4641
      %v4643 = vpop.f32.mrf.mxu0
      %v4644 = vadd.f32 %v4571, %v4643
      %4645 = vmatmul.bf16.gmra.mxu0 %v2143
      %v4646 = vpop.f32.mrf.mxu0
      %v4647 = vadd.f32 %v4574, %v4646
      %v4648 = vpop.f32.mrf.mxu0
      %v4649 = vadd.f32 %v4576, %v4648
      %4650 = vmatmul.bf16.gmra.mxu0 %v2168
      %v4651 = vpop.f32.mrf.mxu0
      %v4652 = vadd.f32 %v4579, %v4651
      %v4653 = vpop.f32.mrf.mxu0
      %4654 = vdwg.mxu0
      %4655 = vmatpush.bf16.msra.mxu0 %v3417
      %4656 = vmatpush.bf16.msra.mxu0 %v3416
      %4657 = vmatpush.bf16.msra.mxu0 %v3415
      %4658 = vmatpush.bf16.msra.mxu0 %v3414
      %4659 = vmatpush.bf16.msra.mxu0 %v3413
      %4660 = vmatpush.bf16.msra.mxu0 %v3412
      %4661 = vmatpush.bf16.msra.mxu0 %v3411
      %4662 = vmatpush.bf16.msra.mxu0 %v3410
      %4663 = vmatmul.bf16.gmra.mxu0 %v1869
      %v4664 = vpop.f32.mrf.mxu0
      %v4665 = vadd.f32 %v4592, %v4664
      %v4666 = vpop.f32.mrf.mxu0
      %v4667 = vadd.f32 %v4594, %v4666
      %4668 = vmatmul.bf16.gmra.mxu0 %v1894
      %v4669 = vpop.f32.mrf.mxu0
      %v4670 = vadd.f32 %v4597, %v4669
      %v4671 = vpop.f32.mrf.mxu0
      %v4672 = vadd.f32 %v4599, %v4671
      %4673 = vmatmul.bf16.gmra.mxu0 %v1919
      %v4674 = vpop.f32.mrf.mxu0
      %v4675 = vadd.f32 %v4602, %v4674
      %v4676 = vpop.f32.mrf.mxu0
      %v4677 = vadd.f32 %v4604, %v4676
      %4678 = vmatmul.bf16.gmra.mxu0 %v1944
      %v4679 = vpop.f32.mrf.mxu0
      %v4680 = vadd.f32 %v4607, %v4679
      %v4681 = vpop.f32.mrf.mxu0
      %v4682 = vadd.f32 %v4609, %v4681
      %4683 = vmatmul.bf16.gmra.mxu0 %v1969
      %v4684 = vpop.f32.mrf.mxu0
      %v4685 = vadd.f32 %v4612, %v4684
      %v4686 = vpop.f32.mrf.mxu0
      %v4687 = vadd.f32 %v4614, %v4686
      %4688 = vmatmul.bf16.gmra.mxu0 %v1994
      %v4689 = vpop.f32.mrf.mxu0
      %v4690 = vadd.f32 %v4617, %v4689
      %v4691 = vpop.f32.mrf.mxu0
      %v4692 = vadd.f32 %v4619, %v4691
      %4693 = vmatmul.bf16.gmra.mxu0 %v2019
      %v4694 = vpop.f32.mrf.mxu0
      %v4695 = vadd.f32 %v4622, %v4694
      %v4696 = vpop.f32.mrf.mxu0
      %v4697 = vadd.f32 %v4624, %v4696
      %4698 = vmatmul.bf16.gmra.mxu0 %v2044
      %v4699 = vpop.f32.mrf.mxu0
      %v4700 = vadd.f32 %v4627, %v4699
      %v4701 = vpop.f32.mrf.mxu0
      %v4702 = vadd.f32 %v4629, %v4701
      %4703 = vmatmul.bf16.gmra.mxu0 %v2069
      %v4704 = vpop.f32.mrf.mxu0
      %v4705 = vadd.f32 %v4632, %v4704
      %v4706 = vpop.f32.mrf.mxu0
      %v4707 = vadd.f32 %v4634, %v4706
      %4708 = vmatmul.bf16.gmra.mxu0 %v2094
      %v4709 = vpop.f32.mrf.mxu0
      %v4710 = vadd.f32 %v4637, %v4709
      %v4711 = vpop.f32.mrf.mxu0
      %v4712 = vadd.f32 %v4639, %v4711
      %4713 = vmatmul.bf16.gmra.mxu0 %v2119
      %v4714 = vpop.f32.mrf.mxu0
      %v4715 = vadd.f32 %v4642, %v4714
      %v4716 = vpop.f32.mrf.mxu0
      %v4717 = vadd.f32 %v4644, %v4716
      %4718 = vmatmul.bf16.gmra.mxu0 %v2144
      %v4719 = vpop.f32.mrf.mxu0
      %v4720 = vadd.f32 %v4647, %v4719
      %v4721 = vpop.f32.mrf.mxu0
      %v4722 = vadd.f32 %v4649, %v4721
      %4723 = vmatmul.bf16.gmra.mxu0 %v2169
      %v4724 = vpop.f32.mrf.mxu0
      %v4725 = vadd.f32 %v4652, %v4724
      %v4726 = vpop.f32.mrf.mxu0
      %4727 = vdwg.mxu0
      %4728 = vmatpush.bf16.msra.mxu0 %v3425
      %4729 = vmatpush.bf16.msra.mxu0 %v3424
      %4730 = vmatpush.bf16.msra.mxu0 %v3423
      %4731 = vmatpush.bf16.msra.mxu0 %v3422
      %4732 = vmatpush.bf16.msra.mxu0 %v3421
      %4733 = vmatpush.bf16.msra.mxu0 %v3420
      %4734 = vmatpush.bf16.msra.mxu0 %v3419
      %4735 = vmatpush.bf16.msra.mxu0 %v3418
      %4736 = vmatmul.bf16.gmra.mxu0 %v1870
      %v4737 = vpop.f32.mrf.mxu0
      %v4738 = vadd.f32 %v4665, %v4737
      %v4739 = vpop.f32.mrf.mxu0
      %v4740 = vadd.f32 %v4667, %v4739
      %4741 = vmatmul.bf16.gmra.mxu0 %v1895
      %v4742 = vpop.f32.mrf.mxu0
      %v4743 = vadd.f32 %v4670, %v4742
      %v4744 = vpop.f32.mrf.mxu0
      %v4745 = vadd.f32 %v4672, %v4744
      %4746 = vmatmul.bf16.gmra.mxu0 %v1920
      %v4747 = vpop.f32.mrf.mxu0
      %v4748 = vadd.f32 %v4675, %v4747
      %v4749 = vpop.f32.mrf.mxu0
      %v4750 = vadd.f32 %v4677, %v4749
      %4751 = vmatmul.bf16.gmra.mxu0 %v1945
      %v4752 = vpop.f32.mrf.mxu0
      %v4753 = vadd.f32 %v4680, %v4752
      %v4754 = vpop.f32.mrf.mxu0
      %v4755 = vadd.f32 %v4682, %v4754
      %4756 = vmatmul.bf16.gmra.mxu0 %v1970
      %v4757 = vpop.f32.mrf.mxu0
      %v4758 = vadd.f32 %v4685, %v4757
      %v4759 = vpop.f32.mrf.mxu0
      %v4760 = vadd.f32 %v4687, %v4759
      %4761 = vmatmul.bf16.gmra.mxu0 %v1995
      %v4762 = vpop.f32.mrf.mxu0
      %v4763 = vadd.f32 %v4690, %v4762
      %v4764 = vpop.f32.mrf.mxu0
      %v4765 = vadd.f32 %v4692, %v4764
      %4766 = vmatmul.bf16.gmra.mxu0 %v2020
      %v4767 = vpop.f32.mrf.mxu0
      %v4768 = vadd.f32 %v4695, %v4767
      %v4769 = vpop.f32.mrf.mxu0
      %v4770 = vadd.f32 %v4697, %v4769
      %4771 = vmatmul.bf16.gmra.mxu0 %v2045
      %v4772 = vpop.f32.mrf.mxu0
      %v4773 = vadd.f32 %v4700, %v4772
      %v4774 = vpop.f32.mrf.mxu0
      %v4775 = vadd.f32 %v4702, %v4774
      %4776 = vmatmul.bf16.gmra.mxu0 %v2070
      %v4777 = vpop.f32.mrf.mxu0
      %v4778 = vadd.f32 %v4705, %v4777
      %v4779 = vpop.f32.mrf.mxu0
      %v4780 = vadd.f32 %v4707, %v4779
      %4781 = vmatmul.bf16.gmra.mxu0 %v2095
      %v4782 = vpop.f32.mrf.mxu0
      %v4783 = vadd.f32 %v4710, %v4782
      %v4784 = vpop.f32.mrf.mxu0
      %v4785 = vadd.f32 %v4712, %v4784
      %4786 = vmatmul.bf16.gmra.mxu0 %v2120
      %v4787 = vpop.f32.mrf.mxu0
      %v4788 = vadd.f32 %v4715, %v4787
      %v4789 = vpop.f32.mrf.mxu0
      %v4790 = vadd.f32 %v4717, %v4789
      %4791 = vmatmul.bf16.gmra.mxu0 %v2145
      %v4792 = vpop.f32.mrf.mxu0
      %v4793 = vadd.f32 %v4720, %v4792
      %v4794 = vpop.f32.mrf.mxu0
      %v4795 = vadd.f32 %v4722, %v4794
      %4796 = vmatmul.bf16.gmra.mxu0 %v2170
      %v4797 = vpop.f32.mrf.mxu0
      %v4798 = vadd.f32 %v4725, %v4797
      %v4799 = vpop.f32.mrf.mxu0
      %4800 = vdwg.mxu0
      %4801 = vmatpush.bf16.msra.mxu0 %v3433
      %4802 = vmatpush.bf16.msra.mxu0 %v3432
      %4803 = vmatpush.bf16.msra.mxu0 %v3431
      %4804 = vmatpush.bf16.msra.mxu0 %v3430
      %4805 = vmatpush.bf16.msra.mxu0 %v3429
      %4806 = vmatpush.bf16.msra.mxu0 %v3428
      %4807 = vmatpush.bf16.msra.mxu0 %v3427
      %4808 = vmatpush.bf16.msra.mxu0 %v3426
      %4809 = vmatmul.bf16.gmra.mxu0 %v1871
      %v4810 = vpop.f32.mrf.mxu0
      %v4811 = vadd.f32 %v4738, %v4810
      %v4812 = vpop.f32.mrf.mxu0
      %v4813 = vadd.f32 %v4740, %v4812
      %4814 = vmatmul.bf16.gmra.mxu0 %v1896
      %v4815 = vpop.f32.mrf.mxu0
      %v4816 = vadd.f32 %v4743, %v4815
      %v4817 = vpop.f32.mrf.mxu0
      %v4818 = vadd.f32 %v4745, %v4817
      %4819 = vmatmul.bf16.gmra.mxu0 %v1921
      %v4820 = vpop.f32.mrf.mxu0
      %v4821 = vadd.f32 %v4748, %v4820
      %v4822 = vpop.f32.mrf.mxu0
      %v4823 = vadd.f32 %v4750, %v4822
      %4824 = vmatmul.bf16.gmra.mxu0 %v1946
      %v4825 = vpop.f32.mrf.mxu0
      %v4826 = vadd.f32 %v4753, %v4825
      %v4827 = vpop.f32.mrf.mxu0
      %v4828 = vadd.f32 %v4755, %v4827
      %4829 = vmatmul.bf16.gmra.mxu0 %v1971
      %v4830 = vpop.f32.mrf.mxu0
      %v4831 = vadd.f32 %v4758, %v4830
      %v4832 = vpop.f32.mrf.mxu0
      %v4833 = vadd.f32 %v4760, %v4832
      %4834 = vmatmul.bf16.gmra.mxu0 %v1996
      %v4835 = vpop.f32.mrf.mxu0
      %v4836 = vadd.f32 %v4763, %v4835
      %v4837 = vpop.f32.mrf.mxu0
      %v4838 = vadd.f32 %v4765, %v4837
      %4839 = vmatmul.bf16.gmra.mxu0 %v2021
      %v4840 = vpop.f32.mrf.mxu0
      %v4841 = vadd.f32 %v4768, %v4840
      %v4842 = vpop.f32.mrf.mxu0
      %v4843 = vadd.f32 %v4770, %v4842
      %4844 = vmatmul.bf16.gmra.mxu0 %v2046
      %v4845 = vpop.f32.mrf.mxu0
      %v4846 = vadd.f32 %v4773, %v4845
      %v4847 = vpop.f32.mrf.mxu0
      %v4848 = vadd.f32 %v4775, %v4847
      %4849 = vmatmul.bf16.gmra.mxu0 %v2071
      %v4850 = vpop.f32.mrf.mxu0
      %v4851 = vadd.f32 %v4778, %v4850
      %v4852 = vpop.f32.mrf.mxu0
      %v4853 = vadd.f32 %v4780, %v4852
      %4854 = vmatmul.bf16.gmra.mxu0 %v2096
      %v4855 = vpop.f32.mrf.mxu0
      %v4856 = vadd.f32 %v4783, %v4855
      %v4857 = vpop.f32.mrf.mxu0
      %v4858 = vadd.f32 %v4785, %v4857
      %4859 = vmatmul.bf16.gmra.mxu0 %v2121
      %v4860 = vpop.f32.mrf.mxu0
      %v4861 = vadd.f32 %v4788, %v4860
      %v4862 = vpop.f32.mrf.mxu0
      %v4863 = vadd.f32 %v4790, %v4862
      %4864 = vmatmul.bf16.gmra.mxu0 %v2146
      %v4865 = vpop.f32.mrf.mxu0
      %v4866 = vadd.f32 %v4793, %v4865
      %v4867 = vpop.f32.mrf.mxu0
      %v4868 = vadd.f32 %v4795, %v4867
      %4869 = vmatmul.bf16.gmra.mxu0 %v2171
      %v4870 = vpop.f32.mrf.mxu0
      %v4871 = vadd.f32 %v4798, %v4870
      %v4872 = vpop.f32.mrf.mxu0
      %4873 = vdwg.mxu0
      %4874 = vmatpush.bf16.msra.mxu0 %v3441
      %4875 = vmatpush.bf16.msra.mxu0 %v3440
      %4876 = vmatpush.bf16.msra.mxu0 %v3439
      %4877 = vmatpush.bf16.msra.mxu0 %v3438
      %4878 = vmatpush.bf16.msra.mxu0 %v3437
      %4879 = vmatpush.bf16.msra.mxu0 %v3436
      %4880 = vmatpush.bf16.msra.mxu0 %v3435
      %4881 = vmatpush.bf16.msra.mxu0 %v3434
      %4882 = vmatmul.bf16.gmra.mxu0 %v1872
      %v4883 = vpop.f32.mrf.mxu0
      %v4884 = vadd.f32 %v4811, %v4883
      %v4885 = vpop.f32.mrf.mxu0
      %v4886 = vadd.f32 %v4813, %v4885
      %4887 = vmatmul.bf16.gmra.mxu0 %v1897
      %v4888 = vpop.f32.mrf.mxu0
      %v4889 = vadd.f32 %v4816, %v4888
      %v4890 = vpop.f32.mrf.mxu0
      %v4891 = vadd.f32 %v4818, %v4890
      %4892 = vmatmul.bf16.gmra.mxu0 %v1922
      %v4893 = vpop.f32.mrf.mxu0
      %v4894 = vadd.f32 %v4821, %v4893
      %v4895 = vpop.f32.mrf.mxu0
      %v4896 = vadd.f32 %v4823, %v4895
      %4897 = vmatmul.bf16.gmra.mxu0 %v1947
      %v4898 = vpop.f32.mrf.mxu0
      %v4899 = vadd.f32 %v4826, %v4898
      %v4900 = vpop.f32.mrf.mxu0
      %v4901 = vadd.f32 %v4828, %v4900
      %4902 = vmatmul.bf16.gmra.mxu0 %v1972
      %v4903 = vpop.f32.mrf.mxu0
      %v4904 = vadd.f32 %v4831, %v4903
      %v4905 = vpop.f32.mrf.mxu0
      %v4906 = vadd.f32 %v4833, %v4905
      %4907 = vmatmul.bf16.gmra.mxu0 %v1997
      %v4908 = vpop.f32.mrf.mxu0
      %v4909 = vadd.f32 %v4836, %v4908
      %v4910 = vpop.f32.mrf.mxu0
      %v4911 = vadd.f32 %v4838, %v4910
      %4912 = vmatmul.bf16.gmra.mxu0 %v2022
      %v4913 = vpop.f32.mrf.mxu0
      %v4914 = vadd.f32 %v4841, %v4913
      %v4915 = vpop.f32.mrf.mxu0
      %v4916 = vadd.f32 %v4843, %v4915
      %4917 = vmatmul.bf16.gmra.mxu0 %v2047
      %v4918 = vpop.f32.mrf.mxu0
      %v4919 = vadd.f32 %v4846, %v4918
      %v4920 = vpop.f32.mrf.mxu0
      %v4921 = vadd.f32 %v4848, %v4920
      %4922 = vmatmul.bf16.gmra.mxu0 %v2072
      %v4923 = vpop.f32.mrf.mxu0
      %v4924 = vadd.f32 %v4851, %v4923
      %v4925 = vpop.f32.mrf.mxu0
      %v4926 = vadd.f32 %v4853, %v4925
      %4927 = vmatmul.bf16.gmra.mxu0 %v2097
      %v4928 = vpop.f32.mrf.mxu0
      %v4929 = vadd.f32 %v4856, %v4928
      %v4930 = vpop.f32.mrf.mxu0
      %v4931 = vadd.f32 %v4858, %v4930
      %4932 = vmatmul.bf16.gmra.mxu0 %v2122
      %v4933 = vpop.f32.mrf.mxu0
      %v4934 = vadd.f32 %v4861, %v4933
      %v4935 = vpop.f32.mrf.mxu0
      %v4936 = vadd.f32 %v4863, %v4935
      %4937 = vmatmul.bf16.gmra.mxu0 %v2147
      %v4938 = vpop.f32.mrf.mxu0
      %v4939 = vadd.f32 %v4866, %v4938
      %v4940 = vpop.f32.mrf.mxu0
      %v4941 = vadd.f32 %v4868, %v4940
      %4942 = vmatmul.bf16.gmra.mxu0 %v2172
      %v4943 = vpop.f32.mrf.mxu0
      %v4944 = vadd.f32 %v4871, %v4943
      %v4945 = vpop.f32.mrf.mxu0
      %4946 = vdwg.mxu0
      %4947 = vmatpush.bf16.msra.mxu0 %v3449
      %4948 = vmatpush.bf16.msra.mxu0 %v3448
      %4949 = vmatpush.bf16.msra.mxu0 %v3447
      %4950 = vmatpush.bf16.msra.mxu0 %v3446
      %4951 = vmatpush.bf16.msra.mxu0 %v3445
      %4952 = vmatpush.bf16.msra.mxu0 %v3444
      %4953 = vmatpush.bf16.msra.mxu0 %v3443
      %4954 = vmatpush.bf16.msra.mxu0 %v3442
      %4955 = vmatmul.bf16.gmra.mxu0 %v1873
      %v4956 = vpop.f32.mrf.mxu0
      %v4957 = vadd.f32 %v4884, %v4956
      %v4958 = vpop.f32.mrf.mxu0
      %v4959 = vadd.f32 %v4886, %v4958
      %4960 = vmatmul.bf16.gmra.mxu0 %v1898
      %v4961 = vpop.f32.mrf.mxu0
      %v4962 = vadd.f32 %v4889, %v4961
      %v4963 = vpop.f32.mrf.mxu0
      %v4964 = vadd.f32 %v4891, %v4963
      %4965 = vmatmul.bf16.gmra.mxu0 %v1923
      %v4966 = vpop.f32.mrf.mxu0
      %v4967 = vadd.f32 %v4894, %v4966
      %v4968 = vpop.f32.mrf.mxu0
      %v4969 = vadd.f32 %v4896, %v4968
      %4970 = vmatmul.bf16.gmra.mxu0 %v1948
      %v4971 = vpop.f32.mrf.mxu0
      %v4972 = vadd.f32 %v4899, %v4971
      %v4973 = vpop.f32.mrf.mxu0
      %v4974 = vadd.f32 %v4901, %v4973
      %4975 = vmatmul.bf16.gmra.mxu0 %v1973
      %v4976 = vpop.f32.mrf.mxu0
      %v4977 = vadd.f32 %v4904, %v4976
      %v4978 = vpop.f32.mrf.mxu0
      %v4979 = vadd.f32 %v4906, %v4978
      %4980 = vmatmul.bf16.gmra.mxu0 %v1998
      %v4981 = vpop.f32.mrf.mxu0
      %v4982 = vadd.f32 %v4909, %v4981
      %v4983 = vpop.f32.mrf.mxu0
      %v4984 = vadd.f32 %v4911, %v4983
      %4985 = vmatmul.bf16.gmra.mxu0 %v2023
      %v4986 = vpop.f32.mrf.mxu0
      %v4987 = vadd.f32 %v4914, %v4986
      %v4988 = vpop.f32.mrf.mxu0
      %v4989 = vadd.f32 %v4916, %v4988
      %4990 = vmatmul.bf16.gmra.mxu0 %v2048
      %v4991 = vpop.f32.mrf.mxu0
      %v4992 = vadd.f32 %v4919, %v4991
      %v4993 = vpop.f32.mrf.mxu0
      %v4994 = vadd.f32 %v4921, %v4993
      %4995 = vmatmul.bf16.gmra.mxu0 %v2073
      %v4996 = vpop.f32.mrf.mxu0
      %v4997 = vadd.f32 %v4924, %v4996
      %v4998 = vpop.f32.mrf.mxu0
      %v4999 = vadd.f32 %v4926, %v4998
      %5000 = vmatmul.bf16.gmra.mxu0 %v2098
      %v5001 = vpop.f32.mrf.mxu0
      %v5002 = vadd.f32 %v4929, %v5001
      %v5003 = vpop.f32.mrf.mxu0
      %v5004 = vadd.f32 %v4931, %v5003
      %5005 = vmatmul.bf16.gmra.mxu0 %v2123
      %v5006 = vpop.f32.mrf.mxu0
      %v5007 = vadd.f32 %v4934, %v5006
      %v5008 = vpop.f32.mrf.mxu0
      %v5009 = vadd.f32 %v4936, %v5008
      %5010 = vmatmul.bf16.gmra.mxu0 %v2148
      %v5011 = vpop.f32.mrf.mxu0
      %v5012 = vadd.f32 %v4939, %v5011
      %v5013 = vpop.f32.mrf.mxu0
      %v5014 = vadd.f32 %v4941, %v5013
      %5015 = vmatmul.bf16.gmra.mxu0 %v2173
      %v5016 = vpop.f32.mrf.mxu0
      %v5017 = vadd.f32 %v4944, %v5016
      %v5018 = vpop.f32.mrf.mxu0
      %5019 = vdwg.mxu0
      %5020 = vmatpush.bf16.msra.mxu0 %v3457
      %5021 = vmatpush.bf16.msra.mxu0 %v3456
      %5022 = vmatpush.bf16.msra.mxu0 %v3455
      %5023 = vmatpush.bf16.msra.mxu0 %v3454
      %5024 = vmatpush.bf16.msra.mxu0 %v3453
      %5025 = vmatpush.bf16.msra.mxu0 %v3452
      %5026 = vmatpush.bf16.msra.mxu0 %v3451
      %5027 = vmatpush.bf16.msra.mxu0 %v3450
      %5028 = vmatmul.bf16.gmra.mxu0 %v1874
      %v5029 = vpop.f32.mrf.mxu0
      %v5030 = vadd.f32 %v4957, %v5029
      %v5031 = vpop.f32.mrf.mxu0
      %v5032 = vadd.f32 %v4959, %v5031
      %5033 = vmatmul.bf16.gmra.mxu0 %v1899
      %v5034 = vpop.f32.mrf.mxu0
      %v5035 = vadd.f32 %v4962, %v5034
      %v5036 = vpop.f32.mrf.mxu0
      %v5037 = vadd.f32 %v4964, %v5036
      %5038 = vmatmul.bf16.gmra.mxu0 %v1924
      %v5039 = vpop.f32.mrf.mxu0
      %v5040 = vadd.f32 %v4967, %v5039
      %v5041 = vpop.f32.mrf.mxu0
      %v5042 = vadd.f32 %v4969, %v5041
      %5043 = vmatmul.bf16.gmra.mxu0 %v1949
      %v5044 = vpop.f32.mrf.mxu0
      %v5045 = vadd.f32 %v4972, %v5044
      %v5046 = vpop.f32.mrf.mxu0
      %v5047 = vadd.f32 %v4974, %v5046
      %5048 = vmatmul.bf16.gmra.mxu0 %v1974
      %v5049 = vpop.f32.mrf.mxu0
      %v5050 = vadd.f32 %v4977, %v5049
      %v5051 = vpop.f32.mrf.mxu0
      %v5052 = vadd.f32 %v4979, %v5051
      %5053 = vmatmul.bf16.gmra.mxu0 %v1999
      %v5054 = vpop.f32.mrf.mxu0
      %v5055 = vadd.f32 %v4982, %v5054
      %v5056 = vpop.f32.mrf.mxu0
      %v5057 = vadd.f32 %v4984, %v5056
      %5058 = vmatmul.bf16.gmra.mxu0 %v2024
      %v5059 = vpop.f32.mrf.mxu0
      %v5060 = vadd.f32 %v4987, %v5059
      %v5061 = vpop.f32.mrf.mxu0
      %v5062 = vadd.f32 %v4989, %v5061
      %5063 = vmatmul.bf16.gmra.mxu0 %v2049
      %v5064 = vpop.f32.mrf.mxu0
      %v5065 = vadd.f32 %v4992, %v5064
      %v5066 = vpop.f32.mrf.mxu0
      %v5067 = vadd.f32 %v4994, %v5066
      %5068 = vmatmul.bf16.gmra.mxu0 %v2074
      %v5069 = vpop.f32.mrf.mxu0
      %v5070 = vadd.f32 %v4997, %v5069
      %v5071 = vpop.f32.mrf.mxu0
      %v5072 = vadd.f32 %v4999, %v5071
      %5073 = vmatmul.bf16.gmra.mxu0 %v2099
      %v5074 = vpop.f32.mrf.mxu0
      %v5075 = vadd.f32 %v5002, %v5074
      %v5076 = vpop.f32.mrf.mxu0
      %v5077 = vadd.f32 %v5004, %v5076
      %5078 = vmatmul.bf16.gmra.mxu0 %v2124
      %v5079 = vpop.f32.mrf.mxu0
      %v5080 = vadd.f32 %v5007, %v5079
      %v5081 = vpop.f32.mrf.mxu0
      %v5082 = vadd.f32 %v5009, %v5081
      %5083 = vmatmul.bf16.gmra.mxu0 %v2149
      %v5084 = vpop.f32.mrf.mxu0
      %v5085 = vadd.f32 %v5012, %v5084
      %v5086 = vpop.f32.mrf.mxu0
      %v5087 = vadd.f32 %v5014, %v5086
      %5088 = vmatmul.bf16.gmra.mxu0 %v2174
      %v5089 = vpop.f32.mrf.mxu0
      %v5090 = vadd.f32 %v5017, %v5089
      %v5091 = vpop.f32.mrf.mxu0
      %5092 = vdwg.mxu0
      %5093 = vmatpush.bf16.msra.mxu0 %v3465
      %5094 = vmatpush.bf16.msra.mxu0 %v3464
      %5095 = vmatpush.bf16.msra.mxu0 %v3463
      %5096 = vmatpush.bf16.msra.mxu0 %v3462
      %5097 = vmatpush.bf16.msra.mxu0 %v3461
      %5098 = vmatpush.bf16.msra.mxu0 %v3460
      %5099 = vmatpush.bf16.msra.mxu0 %v3459
      %5100 = vmatpush.bf16.msra.mxu0 %v3458
      %5101 = vmatmul.bf16.gmra.mxu0 %v1875
      %v5102 = vpop.f32.mrf.mxu0
      %v5103 = vadd.f32 %v5030, %v5102
      %v5104 = vpop.f32.mrf.mxu0
      %v5105 = vadd.f32 %v5032, %v5104
      %5106 = vmatmul.bf16.gmra.mxu0 %v1900
      %v5107 = vpop.f32.mrf.mxu0
      %v5108 = vadd.f32 %v5035, %v5107
      %v5109 = vpop.f32.mrf.mxu0
      %v5110 = vadd.f32 %v5037, %v5109
      %5111 = vmatmul.bf16.gmra.mxu0 %v1925
      %v5112 = vpop.f32.mrf.mxu0
      %v5113 = vadd.f32 %v5040, %v5112
      %v5114 = vpop.f32.mrf.mxu0
      %v5115 = vadd.f32 %v5042, %v5114
      %5116 = vmatmul.bf16.gmra.mxu0 %v1950
      %v5117 = vpop.f32.mrf.mxu0
      %v5118 = vadd.f32 %v5045, %v5117
      %v5119 = vpop.f32.mrf.mxu0
      %v5120 = vadd.f32 %v5047, %v5119
      %5121 = vmatmul.bf16.gmra.mxu0 %v1975
      %v5122 = vpop.f32.mrf.mxu0
      %v5123 = vadd.f32 %v5050, %v5122
      %v5124 = vpop.f32.mrf.mxu0
      %v5125 = vadd.f32 %v5052, %v5124
      %5126 = vmatmul.bf16.gmra.mxu0 %v2000
      %v5127 = vpop.f32.mrf.mxu0
      %v5128 = vadd.f32 %v5055, %v5127
      %v5129 = vpop.f32.mrf.mxu0
      %v5130 = vadd.f32 %v5057, %v5129
      %5131 = vmatmul.bf16.gmra.mxu0 %v2025
      %v5132 = vpop.f32.mrf.mxu0
      %v5133 = vadd.f32 %v5060, %v5132
      %v5134 = vpop.f32.mrf.mxu0
      %v5135 = vadd.f32 %v5062, %v5134
      %5136 = vmatmul.bf16.gmra.mxu0 %v2050
      %v5137 = vpop.f32.mrf.mxu0
      %v5138 = vadd.f32 %v5065, %v5137
      %v5139 = vpop.f32.mrf.mxu0
      %v5140 = vadd.f32 %v5067, %v5139
      %5141 = vmatmul.bf16.gmra.mxu0 %v2075
      %v5142 = vpop.f32.mrf.mxu0
      %v5143 = vadd.f32 %v5070, %v5142
      %v5144 = vpop.f32.mrf.mxu0
      %v5145 = vadd.f32 %v5072, %v5144
      %5146 = vmatmul.bf16.gmra.mxu0 %v2100
      %v5147 = vpop.f32.mrf.mxu0
      %v5148 = vadd.f32 %v5075, %v5147
      %v5149 = vpop.f32.mrf.mxu0
      %v5150 = vadd.f32 %v5077, %v5149
      %5151 = vmatmul.bf16.gmra.mxu0 %v2125
      %v5152 = vpop.f32.mrf.mxu0
      %v5153 = vadd.f32 %v5080, %v5152
      %v5154 = vpop.f32.mrf.mxu0
      %v5155 = vadd.f32 %v5082, %v5154
      %5156 = vmatmul.bf16.gmra.mxu0 %v2150
      %v5157 = vpop.f32.mrf.mxu0
      %v5158 = vadd.f32 %v5085, %v5157
      %v5159 = vpop.f32.mrf.mxu0
      %v5160 = vadd.f32 %v5087, %v5159
      %5161 = vmatmul.bf16.gmra.mxu0 %v2175
      %v5162 = vpop.f32.mrf.mxu0
      %v5163 = vadd.f32 %v5090, %v5162
      %v5164 = vpop.f32.mrf.mxu0
      %5165 = vdwg.mxu0
      %5166 = vmatpush.bf16.msra.mxu0 %v3473
      %5167 = vmatpush.bf16.msra.mxu0 %v3472
      %5168 = vmatpush.bf16.msra.mxu0 %v3471
      %5169 = vmatpush.bf16.msra.mxu0 %v3470
      %5170 = vmatpush.bf16.msra.mxu0 %v3469
      %5171 = vmatpush.bf16.msra.mxu0 %v3468
      %5172 = vmatpush.bf16.msra.mxu0 %v3467
      %5173 = vmatpush.bf16.msra.mxu0 %v3466
      %5174 = vmatmul.bf16.gmra.mxu0 %v1876
      %v5175 = vpop.f32.mrf.mxu0
      %v5176 = vadd.f32 %v5103, %v5175
      %v5177 = vpop.f32.mrf.mxu0
      %v5178 = vadd.f32 %v5105, %v5177
      %5179 = vmatmul.bf16.gmra.mxu0 %v1901
      %v5180 = vpop.f32.mrf.mxu0
      %v5181 = vadd.f32 %v5108, %v5180
      %v5182 = vpop.f32.mrf.mxu0
      %v5183 = vadd.f32 %v5110, %v5182
      %5184 = vmatmul.bf16.gmra.mxu0 %v1926
      %v5185 = vpop.f32.mrf.mxu0
      %v5186 = vadd.f32 %v5113, %v5185
      %v5187 = vpop.f32.mrf.mxu0
      %v5188 = vadd.f32 %v5115, %v5187
      %5189 = vmatmul.bf16.gmra.mxu0 %v1951
      %v5190 = vpop.f32.mrf.mxu0
      %v5191 = vadd.f32 %v5118, %v5190
      %v5192 = vpop.f32.mrf.mxu0
      %v5193 = vadd.f32 %v5120, %v5192
      %5194 = vmatmul.bf16.gmra.mxu0 %v1976
      %v5195 = vpop.f32.mrf.mxu0
      %v5196 = vadd.f32 %v5123, %v5195
      %v5197 = vpop.f32.mrf.mxu0
      %v5198 = vadd.f32 %v5125, %v5197
      %5199 = vmatmul.bf16.gmra.mxu0 %v2001
      %v5200 = vpop.f32.mrf.mxu0
      %v5201 = vadd.f32 %v5128, %v5200
      %v5202 = vpop.f32.mrf.mxu0
      %v5203 = vadd.f32 %v5130, %v5202
      %5204 = vmatmul.bf16.gmra.mxu0 %v2026
      %v5205 = vpop.f32.mrf.mxu0
      %v5206 = vadd.f32 %v5133, %v5205
      %v5207 = vpop.f32.mrf.mxu0
      %v5208 = vadd.f32 %v5135, %v5207
      %5209 = vmatmul.bf16.gmra.mxu0 %v2051
      %v5210 = vpop.f32.mrf.mxu0
      %v5211 = vadd.f32 %v5138, %v5210
      %v5212 = vpop.f32.mrf.mxu0
      %v5213 = vadd.f32 %v5140, %v5212
      %5214 = vmatmul.bf16.gmra.mxu0 %v2076
      %v5215 = vpop.f32.mrf.mxu0
      %v5216 = vadd.f32 %v5143, %v5215
      %v5217 = vpop.f32.mrf.mxu0
      %v5218 = vadd.f32 %v5145, %v5217
      %5219 = vmatmul.bf16.gmra.mxu0 %v2101
      %v5220 = vpop.f32.mrf.mxu0
      %v5221 = vadd.f32 %v5148, %v5220
      %v5222 = vpop.f32.mrf.mxu0
      %v5223 = vadd.f32 %v5150, %v5222
      %5224 = vmatmul.bf16.gmra.mxu0 %v2126
      %v5225 = vpop.f32.mrf.mxu0
      %v5226 = vadd.f32 %v5153, %v5225
      %v5227 = vpop.f32.mrf.mxu0
      %v5228 = vadd.f32 %v5155, %v5227
      %5229 = vmatmul.bf16.gmra.mxu0 %v2151
      %v5230 = vpop.f32.mrf.mxu0
      %v5231 = vadd.f32 %v5158, %v5230
      %v5232 = vpop.f32.mrf.mxu0
      %v5233 = vadd.f32 %v5160, %v5232
      %5234 = vmatmul.bf16.gmra.mxu0 %v2176
      %v5235 = vpop.f32.mrf.mxu0
      %v5236 = vadd.f32 %v5163, %v5235
      %v5237 = vpop.f32.mrf.mxu0
      %5238 = vdwg.mxu0
      %5239 = vmatpush.bf16.msra.mxu0 %v3481
      %5240 = vmatpush.bf16.msra.mxu0 %v3480
      %5241 = vmatpush.bf16.msra.mxu0 %v3479
      %5242 = vmatpush.bf16.msra.mxu0 %v3478
      %5243 = vmatpush.bf16.msra.mxu0 %v3477
      %5244 = vmatpush.bf16.msra.mxu0 %v3476
      %5245 = vmatpush.bf16.msra.mxu0 %v3475
      %5246 = vmatpush.bf16.msra.mxu0 %v3474
      %5247 = vmatmul.bf16.gmra.mxu0 %v1877
      %v5248 = vpop.f32.mrf.mxu0
      %v5249 = vadd.f32 %v5176, %v5248
      %v5250 = vpop.f32.mrf.mxu0
      %v5251 = vadd.f32 %v5178, %v5250
      %5252 = vmatmul.bf16.gmra.mxu0 %v1902
      %v5253 = vpop.f32.mrf.mxu0
      %v5254 = vadd.f32 %v5181, %v5253
      %v5255 = vpop.f32.mrf.mxu0
      %v5256 = vadd.f32 %v5183, %v5255
      %5257 = vmatmul.bf16.gmra.mxu0 %v1927
      %v5258 = vpop.f32.mrf.mxu0
      %v5259 = vadd.f32 %v5186, %v5258
      %v5260 = vpop.f32.mrf.mxu0
      %v5261 = vadd.f32 %v5188, %v5260
      %5262 = vmatmul.bf16.gmra.mxu0 %v1952
      %v5263 = vpop.f32.mrf.mxu0
      %v5264 = vadd.f32 %v5191, %v5263
      %v5265 = vpop.f32.mrf.mxu0
      %v5266 = vadd.f32 %v5193, %v5265
      %5267 = vmatmul.bf16.gmra.mxu0 %v1977
      %v5268 = vpop.f32.mrf.mxu0
      %v5269 = vadd.f32 %v5196, %v5268
      %v5270 = vpop.f32.mrf.mxu0
      %v5271 = vadd.f32 %v5198, %v5270
      %5272 = vmatmul.bf16.gmra.mxu0 %v2002
      %v5273 = vpop.f32.mrf.mxu0
      %v5274 = vadd.f32 %v5201, %v5273
      %v5275 = vpop.f32.mrf.mxu0
      %v5276 = vadd.f32 %v5203, %v5275
      %5277 = vmatmul.bf16.gmra.mxu0 %v2027
      %v5278 = vpop.f32.mrf.mxu0
      %v5279 = vadd.f32 %v5206, %v5278
      %v5280 = vpop.f32.mrf.mxu0
      %v5281 = vadd.f32 %v5208, %v5280
      %5282 = vmatmul.bf16.gmra.mxu0 %v2052
      %v5283 = vpop.f32.mrf.mxu0
      %v5284 = vadd.f32 %v5211, %v5283
      %v5285 = vpop.f32.mrf.mxu0
      %v5286 = vadd.f32 %v5213, %v5285
      %5287 = vmatmul.bf16.gmra.mxu0 %v2077
      %v5288 = vpop.f32.mrf.mxu0
      %v5289 = vadd.f32 %v5216, %v5288
      %v5290 = vpop.f32.mrf.mxu0
      %v5291 = vadd.f32 %v5218, %v5290
      %5292 = vmatmul.bf16.gmra.mxu0 %v2102
      %v5293 = vpop.f32.mrf.mxu0
      %v5294 = vadd.f32 %v5221, %v5293
      %v5295 = vpop.f32.mrf.mxu0
      %v5296 = vadd.f32 %v5223, %v5295
      %5297 = vmatmul.bf16.gmra.mxu0 %v2127
      %v5298 = vpop.f32.mrf.mxu0
      %v5299 = vadd.f32 %v5226, %v5298
      %v5300 = vpop.f32.mrf.mxu0
      %v5301 = vadd.f32 %v5228, %v5300
      %5302 = vmatmul.bf16.gmra.mxu0 %v2152
      %v5303 = vpop.f32.mrf.mxu0
      %v5304 = vadd.f32 %v5231, %v5303
      %v5305 = vpop.f32.mrf.mxu0
      %v5306 = vadd.f32 %v5233, %v5305
      %5307 = vmatmul.bf16.gmra.mxu0 %v2177
      %v5308 = vpop.f32.mrf.mxu0
      %v5309 = vadd.f32 %v5236, %v5308
      %v5310 = vpop.f32.mrf.mxu0
      %5311 = vdwg.mxu0
      %5312 = vmatpush.bf16.msra.mxu0 %v3489
      %5313 = vmatpush.bf16.msra.mxu0 %v3488
      %5314 = vmatpush.bf16.msra.mxu0 %v3487
      %5315 = vmatpush.bf16.msra.mxu0 %v3486
      %5316 = vmatpush.bf16.msra.mxu0 %v3485
      %5317 = vmatpush.bf16.msra.mxu0 %v3484
      %5318 = vmatpush.bf16.msra.mxu0 %v3483
      %5319 = vmatpush.bf16.msra.mxu0 %v3482
      %5320 = vmatmul.bf16.gmra.mxu0 %v1878
      %v5321 = vpop.f32.mrf.mxu0
      %v5322 = vadd.f32 %v5249, %v5321
      %v5323 = vpop.f32.mrf.mxu0
      %v5324 = vadd.f32 %v5251, %v5323
      %5325 = vmatmul.bf16.gmra.mxu0 %v1903
      %v5326 = vpop.f32.mrf.mxu0
      %v5327 = vadd.f32 %v5254, %v5326
      %v5328 = vpop.f32.mrf.mxu0
      %v5329 = vadd.f32 %v5256, %v5328
      %5330 = vmatmul.bf16.gmra.mxu0 %v1928
      %v5331 = vpop.f32.mrf.mxu0
      %v5332 = vadd.f32 %v5259, %v5331
      %v5333 = vpop.f32.mrf.mxu0
      %v5334 = vadd.f32 %v5261, %v5333
      %5335 = vmatmul.bf16.gmra.mxu0 %v1953
      %v5336 = vpop.f32.mrf.mxu0
      %v5337 = vadd.f32 %v5264, %v5336
      %v5338 = vpop.f32.mrf.mxu0
      %v5339 = vadd.f32 %v5266, %v5338
      %5340 = vmatmul.bf16.gmra.mxu0 %v1978
      %v5341 = vpop.f32.mrf.mxu0
      %v5342 = vadd.f32 %v5269, %v5341
      %v5343 = vpop.f32.mrf.mxu0
      %v5344 = vadd.f32 %v5271, %v5343
      %5345 = vmatmul.bf16.gmra.mxu0 %v2003
      %v5346 = vpop.f32.mrf.mxu0
      %v5347 = vadd.f32 %v5274, %v5346
      %v5348 = vpop.f32.mrf.mxu0
      %v5349 = vadd.f32 %v5276, %v5348
      %5350 = vmatmul.bf16.gmra.mxu0 %v2028
      %v5351 = vpop.f32.mrf.mxu0
      %v5352 = vadd.f32 %v5279, %v5351
      %v5353 = vpop.f32.mrf.mxu0
      %v5354 = vadd.f32 %v5281, %v5353
      %5355 = vmatmul.bf16.gmra.mxu0 %v2053
      %v5356 = vpop.f32.mrf.mxu0
      %v5357 = vadd.f32 %v5284, %v5356
      %v5358 = vpop.f32.mrf.mxu0
      %v5359 = vadd.f32 %v5286, %v5358
      %5360 = vmatmul.bf16.gmra.mxu0 %v2078
      %v5361 = vpop.f32.mrf.mxu0
      %v5362 = vadd.f32 %v5289, %v5361
      %v5363 = vpop.f32.mrf.mxu0
      %v5364 = vadd.f32 %v5291, %v5363
      %5365 = vmatmul.bf16.gmra.mxu0 %v2103
      %v5366 = vpop.f32.mrf.mxu0
      %v5367 = vadd.f32 %v5294, %v5366
      %v5368 = vpop.f32.mrf.mxu0
      %v5369 = vadd.f32 %v5296, %v5368
      %5370 = vmatmul.bf16.gmra.mxu0 %v2128
      %v5371 = vpop.f32.mrf.mxu0
      %v5372 = vadd.f32 %v5299, %v5371
      %v5373 = vpop.f32.mrf.mxu0
      %v5374 = vadd.f32 %v5301, %v5373
      %5375 = vmatmul.bf16.gmra.mxu0 %v2153
      %v5376 = vpop.f32.mrf.mxu0
      %v5377 = vadd.f32 %v5304, %v5376
      %v5378 = vpop.f32.mrf.mxu0
      %v5379 = vadd.f32 %v5306, %v5378
      %5380 = vmatmul.bf16.gmra.mxu0 %v2178
      %v5381 = vpop.f32.mrf.mxu0
      %v5382 = vadd.f32 %v5309, %v5381
      %v5383 = vpop.f32.mrf.mxu0
      %5384 = vdwg.mxu0
      %5385 = vmatpush.bf16.msra.mxu0 %v3497
      %5386 = vmatpush.bf16.msra.mxu0 %v3496
      %5387 = vmatpush.bf16.msra.mxu0 %v3495
      %5388 = vmatpush.bf16.msra.mxu0 %v3494
      %5389 = vmatpush.bf16.msra.mxu0 %v3493
      %5390 = vmatpush.bf16.msra.mxu0 %v3492
      %5391 = vmatpush.bf16.msra.mxu0 %v3491
      %5392 = vmatpush.bf16.msra.mxu0 %v3490
      %5393 = vmatmul.bf16.gmra.mxu0 %v1879
      %v5394 = vpop.f32.mrf.mxu0
      %v5395 = vadd.f32 %v5322, %v5394
      %v5396 = vpop.f32.mrf.mxu0
      %v5397 = vadd.f32 %v5324, %v5396
      %5398 = vmatmul.bf16.gmra.mxu0 %v1904
      %v5399 = vpop.f32.mrf.mxu0
      %v5400 = vadd.f32 %v5327, %v5399
      %v5401 = vpop.f32.mrf.mxu0
      %v5402 = vadd.f32 %v5329, %v5401
      %5403 = vmatmul.bf16.gmra.mxu0 %v1929
      %v5404 = vpop.f32.mrf.mxu0
      %v5405 = vadd.f32 %v5332, %v5404
      %v5406 = vpop.f32.mrf.mxu0
      %v5407 = vadd.f32 %v5334, %v5406
      %5408 = vmatmul.bf16.gmra.mxu0 %v1954
      %v5409 = vpop.f32.mrf.mxu0
      %v5410 = vadd.f32 %v5337, %v5409
      %v5411 = vpop.f32.mrf.mxu0
      %v5412 = vadd.f32 %v5339, %v5411
      %5413 = vmatmul.bf16.gmra.mxu0 %v1979
      %v5414 = vpop.f32.mrf.mxu0
      %v5415 = vadd.f32 %v5342, %v5414
      %v5416 = vpop.f32.mrf.mxu0
      %v5417 = vadd.f32 %v5344, %v5416
      %5418 = vmatmul.bf16.gmra.mxu0 %v2004
      %v5419 = vpop.f32.mrf.mxu0
      %v5420 = vadd.f32 %v5347, %v5419
      %v5421 = vpop.f32.mrf.mxu0
      %v5422 = vadd.f32 %v5349, %v5421
      %5423 = vmatmul.bf16.gmra.mxu0 %v2029
      %v5424 = vpop.f32.mrf.mxu0
      %v5425 = vadd.f32 %v5352, %v5424
      %v5426 = vpop.f32.mrf.mxu0
      %v5427 = vadd.f32 %v5354, %v5426
      %5428 = vmatmul.bf16.gmra.mxu0 %v2054
      %v5429 = vpop.f32.mrf.mxu0
      %v5430 = vadd.f32 %v5357, %v5429
      %v5431 = vpop.f32.mrf.mxu0
      %v5432 = vadd.f32 %v5359, %v5431
      %5433 = vmatmul.bf16.gmra.mxu0 %v2079
      %v5434 = vpop.f32.mrf.mxu0
      %v5435 = vadd.f32 %v5362, %v5434
      %v5436 = vpop.f32.mrf.mxu0
      %v5437 = vadd.f32 %v5364, %v5436
      %5438 = vmatmul.bf16.gmra.mxu0 %v2104
      %v5439 = vpop.f32.mrf.mxu0
      %v5440 = vadd.f32 %v5367, %v5439
      %v5441 = vpop.f32.mrf.mxu0
      %v5442 = vadd.f32 %v5369, %v5441
      %5443 = vmatmul.bf16.gmra.mxu0 %v2129
      %v5444 = vpop.f32.mrf.mxu0
      %v5445 = vadd.f32 %v5372, %v5444
      %v5446 = vpop.f32.mrf.mxu0
      %v5447 = vadd.f32 %v5374, %v5446
      %5448 = vmatmul.bf16.gmra.mxu0 %v2154
      %v5449 = vpop.f32.mrf.mxu0
      %v5450 = vadd.f32 %v5377, %v5449
      %v5451 = vpop.f32.mrf.mxu0
      %v5452 = vadd.f32 %v5379, %v5451
      %5453 = vmatmul.bf16.gmra.mxu0 %v2179
      %v5454 = vpop.f32.mrf.mxu0
      %v5455 = vadd.f32 %v5382, %v5454
      %v5456 = vpop.f32.mrf.mxu0
      %5457 = vdwg.mxu0
      %5458 = vmatpush.bf16.msra.mxu0 %v3505
      %5459 = vmatpush.bf16.msra.mxu0 %v3504
      %5460 = vmatpush.bf16.msra.mxu0 %v3503
      %5461 = vmatpush.bf16.msra.mxu0 %v3502
      %5462 = vmatpush.bf16.msra.mxu0 %v3501
      %5463 = vmatpush.bf16.msra.mxu0 %v3500
      %5464 = vmatpush.bf16.msra.mxu0 %v3499
      %5465 = vmatpush.bf16.msra.mxu0 %v3498
      %5466 = vmatmul.bf16.gmra.mxu0 %v1880
      %v5467 = vpop.f32.mrf.mxu0
      %v5468 = vadd.f32 %v5395, %v5467
      %v5469 = vpop.f32.mrf.mxu0
      %v5470 = vadd.f32 %v5397, %v5469
      %5471 = vmatmul.bf16.gmra.mxu0 %v1905
      %v5472 = vpop.f32.mrf.mxu0
      %v5473 = vadd.f32 %v5400, %v5472
      %v5474 = vpop.f32.mrf.mxu0
      %v5475 = vadd.f32 %v5402, %v5474
      %5476 = vmatmul.bf16.gmra.mxu0 %v1930
      %v5477 = vpop.f32.mrf.mxu0
      %v5478 = vadd.f32 %v5405, %v5477
      %v5479 = vpop.f32.mrf.mxu0
      %v5480 = vadd.f32 %v5407, %v5479
      %5481 = vmatmul.bf16.gmra.mxu0 %v1955
      %v5482 = vpop.f32.mrf.mxu0
      %v5483 = vadd.f32 %v5410, %v5482
      %v5484 = vpop.f32.mrf.mxu0
      %v5485 = vadd.f32 %v5412, %v5484
      %5486 = vmatmul.bf16.gmra.mxu0 %v1980
      %v5487 = vpop.f32.mrf.mxu0
      %v5488 = vadd.f32 %v5415, %v5487
      %v5489 = vpop.f32.mrf.mxu0
      %v5490 = vadd.f32 %v5417, %v5489
      %5491 = vmatmul.bf16.gmra.mxu0 %v2005
      %v5492 = vpop.f32.mrf.mxu0
      %v5493 = vadd.f32 %v5420, %v5492
      %v5494 = vpop.f32.mrf.mxu0
      %v5495 = vadd.f32 %v5422, %v5494
      %5496 = vmatmul.bf16.gmra.mxu0 %v2030
      %v5497 = vpop.f32.mrf.mxu0
      %v5498 = vadd.f32 %v5425, %v5497
      %v5499 = vpop.f32.mrf.mxu0
      %v5500 = vadd.f32 %v5427, %v5499
      %5501 = vmatmul.bf16.gmra.mxu0 %v2055
      %v5502 = vpop.f32.mrf.mxu0
      %v5503 = vadd.f32 %v5430, %v5502
      %v5504 = vpop.f32.mrf.mxu0
      %v5505 = vadd.f32 %v5432, %v5504
      %5506 = vmatmul.bf16.gmra.mxu0 %v2080
      %v5507 = vpop.f32.mrf.mxu0
      %v5508 = vadd.f32 %v5435, %v5507
      %v5509 = vpop.f32.mrf.mxu0
      %v5510 = vadd.f32 %v5437, %v5509
      %5511 = vmatmul.bf16.gmra.mxu0 %v2105
      %v5512 = vpop.f32.mrf.mxu0
      %v5513 = vadd.f32 %v5440, %v5512
      %v5514 = vpop.f32.mrf.mxu0
      %v5515 = vadd.f32 %v5442, %v5514
      %5516 = vmatmul.bf16.gmra.mxu0 %v2130
      %v5517 = vpop.f32.mrf.mxu0
      %v5518 = vadd.f32 %v5445, %v5517
      %v5519 = vpop.f32.mrf.mxu0
      %v5520 = vadd.f32 %v5447, %v5519
      %5521 = vmatmul.bf16.gmra.mxu0 %v2155
      %v5522 = vpop.f32.mrf.mxu0
      %v5523 = vadd.f32 %v5450, %v5522
      %v5524 = vpop.f32.mrf.mxu0
      %v5525 = vadd.f32 %v5452, %v5524
      %5526 = vmatmul.bf16.gmra.mxu0 %v2180
      %v5527 = vpop.f32.mrf.mxu0
      %v5528 = vadd.f32 %v5455, %v5527
      %v5529 = vpop.f32.mrf.mxu0
      %5530 = vdwg.mxu0
      %5531 = vmax.xlane.f32.xlu0 %v5468
      %v5532 = vpop.xlane.xlu0 %5531
      %5533 = vmax.xlane.f32.xlu0 %v5470
      %v5534 = vpop.xlane.xlu0 %5533
      %5535 = vmax.xlane.f32.xlu0 %v5473
      %v5536 = vpop.xlane.xlu0 %5535
      %5537 = vmax.xlane.f32.xlu0 %v5475
      %v5538 = vpop.xlane.xlu0 %5537
      %5539 = vmax.xlane.f32.xlu0 %v5478
      %v5540 = vpop.xlane.xlu0 %5539
      %5541 = vmax.xlane.f32.xlu0 %v5480
      %v5542 = vpop.xlane.xlu0 %5541
      %5543 = vmax.xlane.f32.xlu0 %v5483
      %v5544 = vpop.xlane.xlu0 %5543
      %5545 = vmax.xlane.f32.xlu0 %v5485
      %v5546 = vpop.xlane.xlu0 %5545
      %5547 = vmax.xlane.f32.xlu0 %v5488
      %v5548 = vpop.xlane.xlu0 %5547
      %5549 = vmax.xlane.f32.xlu0 %v5490
      %v5550 = vpop.xlane.xlu0 %5549
      %5551 = vmax.xlane.f32.xlu0 %v5493
      %v5552 = vpop.xlane.xlu0 %5551
      %5553 = vmax.xlane.f32.xlu0 %v5495
      %v5554 = vpop.xlane.xlu0 %5553
      %5555 = vmax.xlane.f32.xlu0 %v5498
      %v5556 = vpop.xlane.xlu0 %5555
      %5557 = vmax.xlane.f32.xlu0 %v5500
      %v5558 = vpop.xlane.xlu0 %5557
      %5559 = vmax.xlane.f32.xlu0 %v5503
      %v5560 = vpop.xlane.xlu0 %5559
      %5561 = vmax.xlane.f32.xlu0 %v5505
      %v5562 = vpop.xlane.xlu0 %5561
      %5563 = vmax.xlane.f32.xlu0 %v5508
      %v5564 = vpop.xlane.xlu0 %5563
      %5565 = vmax.xlane.f32.xlu0 %v5510
      %v5566 = vpop.xlane.xlu0 %5565
      %5567 = vmax.xlane.f32.xlu0 %v5513
      %v5568 = vpop.xlane.xlu0 %5567
      %5569 = vmax.xlane.f32.xlu0 %v5515
      %v5570 = vpop.xlane.xlu0 %5569
      %5571 = vmax.xlane.f32.xlu0 %v5518
      %v5572 = vpop.xlane.xlu0 %5571
      %5573 = vmax.xlane.f32.xlu0 %v5520
      %v5574 = vpop.xlane.xlu0 %5573
      %5575 = vmax.xlane.f32.xlu0 %v5523
      %v5576 = vpop.xlane.xlu0 %5575
      %5577 = vmax.xlane.f32.xlu0 %v5525
      %v5578 = vpop.xlane.xlu0 %5577
      %5579 = vmax.xlane.f32.xlu0 %v5528
      %v5580 = vpop.xlane.xlu0 %5579
      %v5581 = vsub.f32 %v5468, %v5532
      %v5582 = vsub.f32 %v5470, %v5534
      %v5583 = vsub.f32 %v5473, %v5536
      %v5584 = vsub.f32 %v5475, %v5538
      %v5585 = vsub.f32 %v5478, %v5540
      %v5586 = vsub.f32 %v5480, %v5542
      %v5587 = vsub.f32 %v5483, %v5544
      %v5588 = vsub.f32 %v5485, %v5546
      %v5589 = vsub.f32 %v5488, %v5548
      %v5590 = vsub.f32 %v5490, %v5550
      %v5591 = vsub.f32 %v5493, %v5552
      %v5592 = vsub.f32 %v5495, %v5554
      %v5593 = vsub.f32 %v5498, %v5556
      %v5594 = vsub.f32 %v5500, %v5558
      %v5595 = vsub.f32 %v5503, %v5560
      %v5596 = vsub.f32 %v5505, %v5562
      %v5597 = vsub.f32 %v5508, %v5564
      %v5598 = vsub.f32 %v5510, %v5566
      %v5599 = vsub.f32 %v5513, %v5568
      %v5600 = vsub.f32 %v5515, %v5570
      %v5601 = vsub.f32 %v5518, %v5572
      %v5602 = vsub.f32 %v5520, %v5574
      %v5603 = vsub.f32 %v5523, %v5576
      %v5604 = vsub.f32 %v5525, %v5578
      %v5605 = vsub.f32 %v5528, %v5580
      %v5606 = vmul.f32 %v5581, 1.442695
      %v5607 = vpow.pop %v5606
      %v5608 = vmul.f32 %v5582, 1.442695
      %v5609 = vpow.pop %v5608
      %v5610 = vmul.f32 %v5583, 1.442695
      %v5611 = vpow.pop %v5610
      %v5612 = vmul.f32 %v5584, 1.442695
      %v5613 = vpow.pop %v5612
      %v5614 = vmul.f32 %v5585, 1.442695
      %v5615 = vpow.pop %v5614
      %v5616 = vmul.f32 %v5586, 1.442695
      %v5617 = vpow.pop %v5616
      %v5618 = vmul.f32 %v5587, 1.442695
      %v5619 = vpow.pop %v5618
      %v5620 = vmul.f32 %v5588, 1.442695
      %v5621 = vpow.pop %v5620
      %v5622 = vmul.f32 %v5589, 1.442695
      %v5623 = vpow.pop %v5622
      %v5624 = vmul.f32 %v5590, 1.442695
      %v5625 = vpow.pop %v5624
      %v5626 = vmul.f32 %v5591, 1.442695
      %v5627 = vpow.pop %v5626
      %v5628 = vmul.f32 %v5592, 1.442695
      %v5629 = vpow.pop %v5628
      %v5630 = vmul.f32 %v5593, 1.442695
      %v5631 = vpow.pop %v5630
      %v5632 = vmul.f32 %v5594, 1.442695
      %v5633 = vpow.pop %v5632
      %v5634 = vmul.f32 %v5595, 1.442695
      %v5635 = vpow.pop %v5634
      %v5636 = vmul.f32 %v5596, 1.442695
      %v5637 = vpow.pop %v5636
      %v5638 = vmul.f32 %v5597, 1.442695
      %v5639 = vpow.pop %v5638
      %v5640 = vmul.f32 %v5598, 1.442695
      %v5641 = vpow.pop %v5640
      %v5642 = vmul.f32 %v5599, 1.442695
      %v5643 = vpow.pop %v5642
      %v5644 = vmul.f32 %v5600, 1.442695
      %v5645 = vpow.pop %v5644
      %v5646 = vmul.f32 %v5601, 1.442695
      %v5647 = vpow.pop %v5646
      %v5648 = vmul.f32 %v5602, 1.442695
      %v5649 = vpow.pop %v5648
      %v5650 = vmul.f32 %v5603, 1.442695
      %v5651 = vpow.pop %v5650
      %v5652 = vmul.f32 %v5604, 1.442695
      %v5653 = vpow.pop %v5652
      %v5654 = vmul.f32 %v5605, 1.442695
      %v5655 = vpow.pop %v5654
      %5656 = vadd.xlane.f32.xlu0 %v5607
      %v5657 = vpop.xlane.xlu0 %5656
      %5658 = vadd.xlane.f32.xlu0 %v5609
      %v5659 = vpop.xlane.xlu0 %5658
      %5660 = vadd.xlane.f32.xlu0 %v5611
      %v5661 = vpop.xlane.xlu0 %5660
      %5662 = vadd.xlane.f32.xlu0 %v5613
      %v5663 = vpop.xlane.xlu0 %5662
      %5664 = vadd.xlane.f32.xlu0 %v5615
      %v5665 = vpop.xlane.xlu0 %5664
      %5666 = vadd.xlane.f32.xlu0 %v5617
      %v5667 = vpop.xlane.xlu0 %5666
      %5668 = vadd.xlane.f32.xlu0 %v5619
      %v5669 = vpop.xlane.xlu0 %5668
      %5670 = vadd.xlane.f32.xlu0 %v5621
      %v5671 = vpop.xlane.xlu0 %5670
      %5672 = vadd.xlane.f32.xlu0 %v5623
      %v5673 = vpop.xlane.xlu0 %5672
      %5674 = vadd.xlane.f32.xlu0 %v5625
      %v5675 = vpop.xlane.xlu0 %5674
      %5676 = vadd.xlane.f32.xlu0 %v5627
      %v5677 = vpop.xlane.xlu0 %5676
      %5678 = vadd.xlane.f32.xlu0 %v5629
      %v5679 = vpop.xlane.xlu0 %5678
      %5680 = vadd.xlane.f32.xlu0 %v5631
      %v5681 = vpop.xlane.xlu0 %5680
      %5682 = vadd.xlane.f32.xlu0 %v5633
      %v5683 = vpop.xlane.xlu0 %5682
      %5684 = vadd.xlane.f32.xlu0 %v5635
      %v5685 = vpop.xlane.xlu0 %5684
      %5686 = vadd.xlane.f32.xlu0 %v5637
      %v5687 = vpop.xlane.xlu0 %5686
      %5688 = vadd.xlane.f32.xlu0 %v5639
      %v5689 = vpop.xlane.xlu0 %5688
      %5690 = vadd.xlane.f32.xlu0 %v5641
      %v5691 = vpop.xlane.xlu0 %5690
      %5692 = vadd.xlane.f32.xlu0 %v5643
      %v5693 = vpop.xlane.xlu0 %5692
      %5694 = vadd.xlane.f32.xlu0 %v5645
      %v5695 = vpop.xlane.xlu0 %5694
      %5696 = vadd.xlane.f32.xlu0 %v5647
      %v5697 = vpop.xlane.xlu0 %5696
      %5698 = vadd.xlane.f32.xlu0 %v5649
      %v5699 = vpop.xlane.xlu0 %5698
      %5700 = vadd.xlane.f32.xlu0 %v5651
      %v5701 = vpop.xlane.xlu0 %5700
      %5702 = vadd.xlane.f32.xlu0 %v5653
      %v5703 = vpop.xlane.xlu0 %5702
      %5704 = vadd.xlane.f32.xlu0 %v5655
      %v5705 = vpop.xlane.xlu0 %5704
      %v5706 = vrcp.pop %v5657
      %v5707 = vrcp.pop %v5659
      %v5708 = vrcp.pop %v5661
      %v5709 = vrcp.pop %v5663
      %v5710 = vrcp.pop %v5665
      %v5711 = vrcp.pop %v5667
      %v5712 = vrcp.pop %v5669
      %v5713 = vrcp.pop %v5671
      %v5714 = vrcp.pop %v5673
      %v5715 = vrcp.pop %v5675
      %v5716 = vrcp.pop %v5677
      %v5717 = vrcp.pop %v5679
      %v5718 = vrcp.pop %v5681
      %v5719 = vrcp.pop %v5683
      %v5720 = vrcp.pop %v5685
      %v5721 = vrcp.pop %v5687
      %v5722 = vrcp.pop %v5689
      %v5723 = vrcp.pop %v5691
      %v5724 = vrcp.pop %v5693
      %v5725 = vrcp.pop %v5695
      %v5726 = vrcp.pop %v5697
      %v5727 = vrcp.pop %v5699
      %v5728 = vrcp.pop %v5701
      %v5729 = vrcp.pop %v5703
      %v5730 = vrcp.pop %v5705
      %v5731 = vmul.f32 %v5607, %v5706
      %v5732 = vmul.f32 %v5609, %v5707
      %v5733 = vmul.f32 %v5611, %v5708
      %v5734 = vmul.f32 %v5613, %v5709
      %v5735 = vmul.f32 %v5615, %v5710
      %v5736 = vmul.f32 %v5617, %v5711
      %v5737 = vmul.f32 %v5619, %v5712
      %v5738 = vmul.f32 %v5621, %v5713
      %v5739 = vmul.f32 %v5623, %v5714
      %v5740 = vmul.f32 %v5625, %v5715
      %v5741 = vmul.f32 %v5627, %v5716
      %v5742 = vmul.f32 %v5629, %v5717
      %v5743 = vmul.f32 %v5631, %v5718
      %v5744 = vmul.f32 %v5633, %v5719
      %v5745 = vmul.f32 %v5635, %v5720
      %v5746 = vmul.f32 %v5637, %v5721
      %v5747 = vmul.f32 %v5639, %v5722
      %v5748 = vmul.f32 %v5641, %v5723
      %v5749 = vmul.f32 %v5643, %v5724
      %v5750 = vmul.f32 %v5645, %v5725
      %v5751 = vmul.f32 %v5647, %v5726
      %v5752 = vmul.f32 %v5649, %v5727
      %v5753 = vmul.f32 %v5651, %v5728
      %v5754 = vmul.f32 %v5653, %v5729
      %v5755 = vmul.f32 %v5655, %v5730
      %v5756 = vpack.c.bf16 %v5731, %v5731
      %v5757 = vpack.c.bf16 %v5732, %v5732
      %v5758 = vpack.c.bf16 %v5733, %v5733
      %v5759 = vpack.c.bf16 %v5734, %v5734
      %v5760 = vpack.c.bf16 %v5735, %v5735
      %v5761 = vpack.c.bf16 %v5736, %v5736
      %v5762 = vpack.c.bf16 %v5737, %v5737
      %v5763 = vpack.c.bf16 %v5738, %v5738
      %v5764 = vpack.c.bf16 %v5739, %v5739
      %v5765 = vpack.c.bf16 %v5740, %v5740
      %v5766 = vpack.c.bf16 %v5741, %v5741
      %v5767 = vpack.c.bf16 %v5742, %v5742
      %v5768 = vpack.c.bf16 %v5743, %v5743
      %v5769 = vpack.c.bf16 %v5744, %v5744
      %v5770 = vpack.c.bf16 %v5745, %v5745
      %v5771 = vpack.c.bf16 %v5746, %v5746
      %v5772 = vpack.c.bf16 %v5747, %v5747
      %v5773 = vpack.c.bf16 %v5748, %v5748
      %v5774 = vpack.c.bf16 %v5749, %v5749
      %v5775 = vpack.c.bf16 %v5750, %v5750
      %v5776 = vpack.c.bf16 %v5751, %v5751
      %v5777 = vpack.c.bf16 %v5752, %v5752
      %v5778 = vpack.c.bf16 %v5753, %v5753
      %v5779 = vpack.c.bf16 %v5754, %v5754
      %v5780 = vpack.c.bf16 %v5755, %v5755
      %5781 = vst [vmem:[%s175] sm:$0xf] %v5756
      %5782 = vst [vmem:[%s175 + $0x4] sm:$0xf] %v5757
      %5783 = vst [vmem:[%s175 + $0x8] sm:$0xf] %v5758
      %5784 = vst [vmem:[%s175 + $0xc] sm:$0xf] %v5759
      %5785 = vst [vmem:[%s175 + $0x10] sm:$0xf] %v5760
      %5786 = vst [vmem:[%s175 + $0x14] sm:$0xf] %v5761
      %5787 = vst [vmem:[%s175 + $0x18] sm:$0xf] %v5762
      %5788 = vst [vmem:[%s175 + $0x1c] sm:$0xf] %v5763
      %5789 = vst [vmem:[%s175 + $0x20] sm:$0xf] %v5764
      %5790 = vst [vmem:[%s175 + $0x24] sm:$0xf] %v5765
      %5791 = vst [vmem:[%s175 + $0x28] sm:$0xf] %v5766
      %5792 = vst [vmem:[%s175 + $0x2c] sm:$0xf] %v5767
      %5793 = vst [vmem:[%s175 + $0x30] sm:$0xf] %v5768
      %5794 = vst [vmem:[%s175 + $0x34] sm:$0xf] %v5769
      %5795 = vst [vmem:[%s175 + $0x38] sm:$0xf] %v5770
      %5796 = vst [vmem:[%s175 + $0x3c] sm:$0xf] %v5771
      %5797 = vst [vmem:[%s175 + $0x40] sm:$0xf] %v5772
      %5798 = vst [vmem:[%s175 + $0x44] sm:$0xf] %v5773
      %5799 = vst [vmem:[%s175 + $0x48] sm:$0xf] %v5774
      %5800 = vst [vmem:[%s175 + $0x4c] sm:$0xf] %v5775
      %5801 = vst [vmem:[%s175 + $0x50] sm:$0xf] %v5776
      %5802 = vst [vmem:[%s175 + $0x54] sm:$0xf] %v5777
      %5803 = vst [vmem:[%s175 + $0x58] sm:$0xf] %v5778
      %5804 = vst [vmem:[%s175 + $0x5c] sm:$0xf] %v5779
      %5805 = vst [vmem:[%s175 + $0x60] sm:$0xf] %v5780
      %s5806 = smul.u32 25, %s14
      %p5807 = scmp.lt.s32.totalorder %s5806, 49
      %s5808 = scalar_select %p5807, %s5806, 49
      %s5809 = smul.addr %s5808, 4
      %s5810 = scalar_lea.vmem %s3, %s5809
      // Predicated region
      $region33: #{m2cnn_forward.10} parent=31 // pred_check
        %p5811 = pneg %p100
      $region34: #{m2cnn_forward.10} parent=31 // pred_check_branch
        %5813 = sbr.rel (%p5811) target = $region36
      $region35: #{m2cnn_forward.10} parent=31 // pred_region
        %s5814 = smul.u32 25, %s14
      $region36: #{m2cnn_forward.10} parent=31 // pred_fallthru
        _
    $region32: #{m2cnn_forward.10} parent=5 // pred_fallthru
      _
    %p5815 = scmp.le.s32.totalorder 2, %s9
    // Predicated region
    $region37: #{m2cnn_forward.10} parent=5 // pred_check
      %p5816 = pneg %p5815
    $region38: #{m2cnn_forward.10} parent=5 // pred_check_branch
      %5818 = sbr.rel (%p5816) target = $region40
    $region39: #{m2cnn_forward.10} parent=5 // pred_region
      %s5819 = ssub.s32 %s9, 2
      // Predicated region
      $region41: #{m2cnn_forward.10} parent=39 // pred_check
        %p5820 = pneg %p106
      $region42: #{m2cnn_forward.10} parent=39 // pred_check_branch
        %5822 = sbr.rel (%p5820) target = $region44
      $region43: #{m2cnn_forward.10} parent=39 // pred_region
        %s5823 = smul.u32 25, %s15
        %p5824 = scmp.lt.s32.totalorder %s5823, 49
        %s5825 = scalar_select %p5824, %s5823, 49
        %s5826 = smul.addr %s5825, 4
        %s5827 = scalar_lea.vmem %s3, %s5826
      $region44: #{m2cnn_forward.10} parent=39 // pred_fallthru
        _
    $region40: #{m2cnn_forward.10} parent=5 // pred_fallthru
      _
  $region6: #{m2cnn_forward.10} parent=0 // loop_footer
    %s13 = sadd.s32 1, %s9
  $region7: #{m2cnn_forward.10} parent=0 // loop_footer_branch
    %8 = sbr.rel target = $region3
  $region8: #{m2cnn_forward.10} parent=0 // loop_exit
    _

// kernel: m2cnn_forward.13
$region0: #{m2cnn_forward.13}
  #allocation0 [shape = 'u32[]', space=smem, size = 0x4, offset = 0x4, fixed_abs, tag = 'smem constant byte address 0x4 - core index']
  #allocation1 [shape = 'u32[72,128]{1,0:T(1,128)}', space=vmem, size = 0x9000, scoped, tag = 'internal scratch']
  #allocation2 [shape = 'f32[8,1024]{1,0:T(8,128)}', space=vmem, size = 0x8000, scoped, tag = 'scratch operand']
  %s0 = inlined_call_operand.vmem [shape: bf16[8,3200], index: 0, kind: input, shape index: {}]
  %s1 = inlined_call_operand.vmem [shape: bf16[3200,1024], index: 1, kind: input, shape index: {}]
  %s2 = inlined_call_operand.vmem [shape: f32[1,1024], index: 2, kind: input, shape index: {}]
  %s3 = inlined_call_operand.vmem [shape: bf16[1024,128], index: 3, kind: input, shape index: {}]
  %s4 = inlined_call_operand.vmem [shape: f32[1,128], index: 4, kind: input, shape index: {}]
  %s5 = inlined_call_operand.vmem [shape: f32[8,128], index: 5, kind: output, shape index: {}]
  %s6 = sld [smem:[#allocation0]]
  $region61: #{m2cnn_forward.13} parent=0
    _
  %s8 = ssub.s32 1, %s6
  %s9 = scalar_select 0, %s8, %s6
  loop: start=0, step=1, limit=7
  $region2: #{m2cnn_forward.13} parent=0 // loop_pre_header
    _
  $region3: #{m2cnn_forward.13} parent=0 // loop_header
    %s11 = sphi 0, %s15
    %p12 = scmp.ge.s32.totalorder %s11, 7
    %s18 = sphi 0, %s30
    %s19 = sphi 0, %s26
    %s20 = sphi 0, %s18
    %s21 = sphi 0, %s19
    %s22 = sphi 0, %s20
    %s23 = sphi 0, %s21
    %s35 = sphi 0, %s37
    %s38 = sphi 0, %s35
    %s39 = sphi 0, %s38
    %s55 = sphi 0, %s39
    %s61 = sphi 0, %s63
    %s64 = sphi 0, %s61
    %s65 = sphi 0, %s64
    %s81 = sphi 0, %s65
    %s85 = sphi 0, %s85
    %s87 = sphi 0, %s85
    %s88 = sphi 0, %s87
    %s102 = sphi 0, %s88
    %s106 = sphi 0, %s106
    %s108 = sphi 0, %s106
    %s109 = sphi 0, %s108
    %s123 = sphi 0, %s109
    %s127 = sphi 0, %s127
    %s129 = sphi 0, %s127
    %s130 = sphi 0, %s129
    %s144 = sphi 0, %s130
    %s150 = sphi 0, %s152
    %s153 = sphi 0, %s150
    %s154 = sphi 0, %s153
    %s170 = sphi 0, %s154
  $region4: #{m2cnn_forward.13} parent=0 // loop_header_branch
    %14 = sbr.rel (%p12) target = $region8
  $region5: #{m2cnn_forward.13} parent=0 // loop_body
    %s16 = ssub.s32 %s11, 1
    %s17 = ssub.s32 %s11, 2
    %s24 = sadd.s32 1, %s19
    %p25 = scmp.ge.s32.totalorder %s24, 5
    %s26 = scalar_select %p25, 0, %s24
    %s27 = sadd.s32 1, %s18
    %s28 = scalar_select %p25, %s27, %s18
    %p29 = scmp.ge.s32.totalorder %s28, 1
    %s30 = scalar_select %p29, 0, %s28
    %s31 = ssub.s32 %s18, %s30
    %s32 = ssub.s32 %s19, %s26
    %s33 = sor.u32 %s31, %s32
    %p34 = scmp.eq.s32.totalorder %s33, 0
    %s36 = sadd.s32 %s35, 1
    %s37 = scalar_select %p34, %s35, %s36
    %p40 = pneg %p34
    %p41 = scmp.eq.s32.totalorder %s11, 4
    %p42 = por %p40, %p41
    %p43 = scmp.ne.s32.totalorder %s35, %s38
    %p44 = scmp.eq.s32.totalorder %s11, 0
    %p45 = por %p43, %p44
    %p46 = scmp.ne.s32.totalorder %s35, %s38
    %p47 = scmp.eq.s32.totalorder %s16, 4
    %p48 = por %p46, %p47
    %p49 = scmp.ne.s32.totalorder %s38, %s39
    %p50 = scmp.eq.s32.totalorder %s16, 0
    %p51 = por %p49, %p50
    %p52 = scmp.ne.s32.totalorder %s38, %s39
    %p53 = scmp.eq.s32.totalorder %s17, 4
    %p54 = por %p52, %p53
    %p56 = scmp.ne.s32.totalorder %s39, %s55
    %p57 = scmp.eq.s32.totalorder %s17, 0
    %p58 = por %p56, %p57
    %s59 = ssub.s32 %s19, %s26
    %p60 = scmp.eq.s32.totalorder %s59, 0
    %s62 = sadd.s32 %s61, 1
    %s63 = scalar_select %p60, %s61, %s62
    %p66 = pneg %p60
    %p67 = scmp.eq.s32.totalorder %s11, 4
    %p68 = por %p66, %p67
    %p69 = scmp.ne.s32.totalorder %s61, %s64
    %p70 = scmp.eq.s32.totalorder %s11, 0
    %p71 = por %p69, %p70
    %p72 = scmp.ne.s32.totalorder %s61, %s64
    %p73 = scmp.eq.s32.totalorder %s16, 4
    %p74 = por %p72, %p73
    %p75 = scmp.ne.s32.totalorder %s64, %s65
    %p76 = scmp.eq.s32.totalorder %s16, 0
    %p77 = por %p75, %p76
    %p78 = scmp.ne.s32.totalorder %s64, %s65
    %p79 = scmp.eq.s32.totalorder %s17, 4
    %p80 = por %p78, %p79
    %p82 = scmp.ne.s32.totalorder %s65, %s81
    %p83 = scmp.eq.s32.totalorder %s17, 0
    %p84 = por %p82, %p83
    %s86 = sadd.s32 %s85, 1
    %p89 = scmp.eq.s32.totalorder %s11, 4
    %p90 = scmp.ne.s32.totalorder %s85, %s87
    %p91 = scmp.eq.s32.totalorder %s11, 0
    %p92 = por %p90, %p91
    %p93 = scmp.ne.s32.totalorder %s85, %s87
    %p94 = scmp.eq.s32.totalorder %s16, 4
    %p95 = por %p93, %p94
    %p96 = scmp.ne.s32.totalorder %s87, %s88
    %p97 = scmp.eq.s32.totalorder %s16, 0
    %p98 = por %p96, %p97
    %p99 = scmp.ne.s32.totalorder %s87, %s88
    %p100 = scmp.eq.s32.totalorder %s17, 4
    %p101 = por %p99, %p100
    %p103 = scmp.ne.s32.totalorder %s88, %s102
    %p104 = scmp.eq.s32.totalorder %s17, 0
    %p105 = por %p103, %p104
    %s107 = sadd.s32 %s106, 1
    %p110 = scmp.eq.s32.totalorder %s11, 4
    %p111 = scmp.ne.s32.totalorder %s106, %s108
    %p112 = scmp.eq.s32.totalorder %s11, 0
    %p113 = por %p111, %p112
    %p114 = scmp.ne.s32.totalorder %s106, %s108
    %p115 = scmp.eq.s32.totalorder %s16, 4
    %p116 = por %p114, %p115
    %p117 = scmp.ne.s32.totalorder %s108, %s109
    %p118 = scmp.eq.s32.totalorder %s16, 0
    %p119 = por %p117, %p118
    %p120 = scmp.ne.s32.totalorder %s108, %s109
    %p121 = scmp.eq.s32.totalorder %s17, 4
    %p122 = por %p120, %p121
    %p124 = scmp.ne.s32.totalorder %s109, %s123
    %p125 = scmp.eq.s32.totalorder %s17, 0
    %p126 = por %p124, %p125
    %s128 = sadd.s32 %s127, 1
    %p131 = scmp.eq.s32.totalorder %s11, 4
    %p132 = scmp.ne.s32.totalorder %s127, %s129
    %p133 = scmp.eq.s32.totalorder %s11, 0
    %p134 = por %p132, %p133
    %p135 = scmp.ne.s32.totalorder %s127, %s129
    %p136 = scmp.eq.s32.totalorder %s16, 4
    %p137 = por %p135, %p136
    %p138 = scmp.ne.s32.totalorder %s129, %s130
    %p139 = scmp.eq.s32.totalorder %s16, 0
    %p140 = por %p138, %p139
    %p141 = scmp.ne.s32.totalorder %s129, %s130
    %p142 = scmp.eq.s32.totalorder %s17, 4
    %p143 = por %p141, %p142
    %p145 = scmp.ne.s32.totalorder %s130, %s144
    %p146 = scmp.eq.s32.totalorder %s17, 0
    %p147 = por %p145, %p146
    %s148 = ssub.s32 %s18, %s30
    %p149 = scmp.eq.s32.totalorder %s148, 0
    %s151 = sadd.s32 %s150, 1
    %s152 = scalar_select %p149, %s150, %s151
    %p155 = pneg %p149
    %p156 = scmp.eq.s32.totalorder %s11, 4
    %p157 = por %p155, %p156
    %p158 = scmp.ne.s32.totalorder %s150, %s153
    %p159 = scmp.eq.s32.totalorder %s11, 0
    %p160 = por %p158, %p159
    %p161 = scmp.ne.s32.totalorder %s150, %s153
    %p162 = scmp.eq.s32.totalorder %s16, 4
    %p163 = por %p161, %p162
    %p164 = scmp.ne.s32.totalorder %s153, %s154
    %p165 = scmp.eq.s32.totalorder %s16, 0
    %p166 = por %p164, %p165
    %p167 = scmp.ne.s32.totalorder %s153, %s154
    %p168 = scmp.eq.s32.totalorder %s17, 4
    %p169 = por %p167, %p168
    %p171 = scmp.ne.s32.totalorder %s154, %s170
    %p172 = scmp.eq.s32.totalorder %s17, 0
    %p173 = por %p171, %p172
    %p174 = scmp.le.s32.totalorder 1, %s11
    %p175 = scmp.lt.s32.totalorder %s11, 6
    %p176 = pnand %p174, %p175
    %p177 = pneg %p176
    // Predicated region
    $region9: #{m2cnn_forward.13} parent=5 // pred_check
      _
    $region10: #{m2cnn_forward.13} parent=5 // pred_check_branch
      %179 = sbr.rel (%p176) target = $region12
    $region11: #{m2cnn_forward.13} parent=5 // pred_region
      %s180 = ssub.s32 %s11, 1
      // Predicated region
      $region13: #{m2cnn_forward.13} parent=11 // pred_check
        %p181 = pneg %p98
      $region14: #{m2cnn_forward.13} parent=11 // pred_check_branch
        %183 = sbr.rel (%p181) target = $region16
      $region15: #{m2cnn_forward.13} parent=11 // pred_region
        _
      $region16: #{m2cnn_forward.13} parent=11 // pred_fallthru
        _
      // Predicated region
      $region17: #{m2cnn_forward.13} parent=11 // pred_check
        %p184 = pneg %p119
      $region18: #{m2cnn_forward.13} parent=11 // pred_check_branch
        %186 = sbr.rel (%p184) target = $region20
      $region19: #{m2cnn_forward.13} parent=11 // pred_region
        _
      $region20: #{m2cnn_forward.13} parent=11 // pred_fallthru
        _
      // Predicated region
      $region21: #{m2cnn_forward.13} parent=11 // pred_check
        %p187 = pneg %p140
      $region22: #{m2cnn_forward.13} parent=11 // pred_check_branch
        %189 = sbr.rel (%p187) target = $region24
      $region23: #{m2cnn_forward.13} parent=11 // pred_region
        _
      $region24: #{m2cnn_forward.13} parent=11 // pred_fallthru
        _
    $region12: #{m2cnn_forward.13} parent=5 // pred_fallthru
      _
    %p190 = scmp.lt.s32.totalorder %s11, 5
    // Predicated region
    $region25: #{m2cnn_forward.13} parent=5 // pred_check
      %p191 = pneg %p190
    $region26: #{m2cnn_forward.13} parent=5 // pred_check_branch
      %193 = sbr.rel (%p191) target = $region28
    $region27: #{m2cnn_forward.13} parent=5 // pred_region
      // Predicated region
      $region29: #{m2cnn_forward.13} parent=27 // pred_check
        %p194 = pneg %p45
      $region30: #{m2cnn_forward.13} parent=27 // pred_check_branch
        %196 = sbr.rel (%p194) target = $region32
      $region31: #{m2cnn_forward.13} parent=27 // pred_region
        %s197 = smul.u32 5, %s19
        %p198 = scmp.lt.s32.totalorder %s18, 0
        %s199 = scalar_select %p198, %s18, 0
        %p200 = scmp.lt.s32.totalorder %s197, 24
        %s201 = scalar_select %p200, %s197, 24
        %s202 = smul.addr %s199, 25
        %s203 = sadd.s32 %s201, %s202
        %s204 = smul.addr %s203, 4
        %s205 = scalar_lea.vmem %s0, %s204
        %s206 = smul.u32 5, %s19
      $region32: #{m2cnn_forward.13} parent=27 // pred_fallthru
        _
      // Predicated region
      $region33: #{m2cnn_forward.13} parent=27 // pred_check
        %p207 = pneg %p71
      $region34: #{m2cnn_forward.13} parent=27 // pred_check_branch
        %209 = sbr.rel (%p207) target = $region36
      $region35: #{m2cnn_forward.13} parent=27 // pred_region
        %s210 = smul.u32 80, %s19
        %p211 = scmp.lt.s32.totalorder %s210, 399
        %s212 = scalar_select %p211, %s210, 399
        %s213 = smul.addr %s212, 8
        %s214 = smul.addr %s213, 4
        %s215 = scalar_lea.vmem %s1, %s214
        %s216 = smul.u32 80, %s19
      $region36: #{m2cnn_forward.13} parent=27 // pred_fallthru
        _
    $region28: #{m2cnn_forward.13} parent=5 // pred_fallthru
      _
    %p217 = scmp.le.s32.totalorder 1, %s11
    %p218 = scmp.lt.s32.totalorder %s11, 6
    %p219 = pnand %p217, %p218
    %p220 = pneg %p219
    // Predicated region
    $region37: #{m2cnn_forward.13} parent=5 // pred_check
      _
    $region38: #{m2cnn_forward.13} parent=5 // pred_check_branch
      %222 = sbr.rel (%p219) target = $region40
    $region39: #{m2cnn_forward.13} parent=5 // pred_region
      %s223 = ssub.s32 %s11, 1
      %s224 = smul.u32 5, %s21
      %p225 = scmp.lt.s32.totalorder %s20, 0
      %s226 = scalar_select %p225, %s20, 0
      %p227 = scmp.lt.s32.totalorder %s224, 24
      %s228 = scalar_select %p227, %s224, 24
      %s229 = smul.addr %s226, 25
      %s230 = sadd.s32 %s228, %s229
      %s231 = smul.addr %s230, 4
      %s232 = scalar_lea.vmem %s0, %s231
      %p233 = pneg %p51
      %p234 = pneg %p48
      %s235 = smul.u32 80, %s21
      %p236 = scmp.lt.s32.totalorder %s235, 399
      %s237 = scalar_select %p236, %s235, 399
      %s238 = smul.addr %s237, 8
      %s239 = smul.addr %s238, 4
      %s240 = scalar_lea.vmem %s1, %s239
      %p241 = pneg %p77
      %p242 = pneg %p74
      %p243 = pneg %p98
      %p244 = pneg %p95
      %p245 = pneg %p119
      %p246 = pneg %p116
      %p247 = pneg %p140
      %p248 = pneg %p137
      %p249 = pneg %p166
      %p250 = pneg %p163
      %p251 = scmp.lt.s32.totalorder %s20, 0
      %s252 = scalar_select %p251, %s20, 0
      %s253 = smul.addr %s252, 8
      %s254 = scalar_lea.vmem %s5, %s253
      %s255 = smul.u32 5, %s21
      %p256 = scmp.lt.s32.totalorder %s20, 0
      %s257 = scalar_select %p256, %s20, 0
      %p258 = scmp.lt.s32.totalorder %s255, 24
      %s259 = scalar_select %p258, %s255, 24
      %s260 = smul.addr %s257, 25
      %s261 = sadd.s32 %s259, %s260
      %s262 = smul.addr %s261, 4
      %s263 = scalar_lea.vmem %s0, %s262
      %s264 = smul.u32 5, %s21
      %s265 = smul.u32 80, %s21
      %p266 = scmp.lt.s32.totalorder %s265, 399
      %s267 = scalar_select %p266, %s265, 399
      %s268 = smul.addr %s267, 8
      %s269 = smul.addr %s268, 4
      %s270 = scalar_lea.vmem %s1, %s269
      %s271 = smul.u32 80, %s21
      %p272 = scmp.lt.s32.totalorder %s20, 0
      %s273 = scalar_select %p272, %s20, 0
      %s274 = smul.addr %s273, 8
      %s275 = scalar_lea.vmem %s5, %s274
      %p276 = scmp.eq.s32.totalorder %s21, 0
      // Predicated region
      $region41: #{m2cnn_forward.13} parent=39 // pred_check
        %p277 = pneg %p276
      $region42: #{m2cnn_forward.13} parent=39 // pred_check_branch
        %279 = sbr.rel (%p277) target = $region44
      $region43: #{m2cnn_forward.13} parent=39 // pred_region
        %280 = vst [vmem:[#allocation2] sm:$0xff] 0.0
        %281 = vst [vmem:[#allocation2 + $0x8] sm:$0xff] 0.0
        %282 = vst [vmem:[#allocation2 + $0x10] sm:$0xff] 0.0
        %283 = vst [vmem:[#allocation2 + $0x18] sm:$0xff] 0.0
        %284 = vst [vmem:[#allocation2 + $0x20] sm:$0xff] 0.0
        %285 = vst [vmem:[#allocation2 + $0x28] sm:$0xff] 0.0
        %286 = vst [vmem:[#allocation2 + $0x30] sm:$0xff] 0.0
        %287 = vst [vmem:[#allocation2 + $0x38] sm:$0xff] 0.0
      $region44: #{m2cnn_forward.13} parent=39 // pred_fallthru
        _
      %v288 = vld [vmem:[#allocation2] sm:$0xff]
      %v289 = vld [vmem:[#allocation2 + $0x8] sm:$0xff]
      %v290 = vld [vmem:[#allocation2 + $0x10] sm:$0xff]
      %v291 = vld [vmem:[#allocation2 + $0x18] sm:$0xff]
      %v292 = vld [vmem:[#allocation2 + $0x20] sm:$0xff]
      %v293 = vld [vmem:[#allocation2 + $0x28] sm:$0xff]
      %v294 = vld [vmem:[#allocation2 + $0x30] sm:$0xff]
      %v295 = vld [vmem:[#allocation2 + $0x38] sm:$0xff]
      %v296 = vld [vmem:[%s263] sm:$0xff]
      %v297 = vld [vmem:[%s263 + $0x8] sm:$0xff]
      %v298 = vld [vmem:[%s263 + $0x10] sm:$0xf]
      %v299 = vld [vmem:[%s270] sm:$0xff]
      %v300 = vld [vmem:[%s270 + $0x8] sm:$0xff]
      %v301 = vld [vmem:[%s270 + $0x10] sm:$0xff]
      %v302 = vld [vmem:[%s270 + $0x18] sm:$0xff]
      %v303 = vld [vmem:[%s270 + $0x20] sm:$0xff]
      %v304 = vld [vmem:[%s270 + $0x28] sm:$0xff]
      %v305 = vld [vmem:[%s270 + $0x30] sm:$0xff]
      %v306 = vld [vmem:[%s270 + $0x38] sm:$0xff]
      %v307 = vld [vmem:[%s270 + $0x40] sm:$0xff]
      %v308 = vld [vmem:[%s270 + $0x48] sm:$0xff]
      %v309 = vld [vmem:[%s270 + $0x50] sm:$0xff]
      %v310 = vld [vmem:[%s270 + $0x58] sm:$0xff]
      %v311 = vld [vmem:[%s270 + $0x60] sm:$0xff]
      %v312 = vld [vmem:[%s270 + $0x68] sm:$0xff]
      %v313 = vld [vmem:[%s270 + $0x70] sm:$0xff]
      %v314 = vld [vmem:[%s270 + $0x78] sm:$0xff]
      %v315 = vld [vmem:[%s270 + $0x80] sm:$0xff]
      %v316 = vld [vmem:[%s270 + $0x88] sm:$0xff]
      %v317 = vld [vmem:[%s270 + $0x90] sm:$0xff]
      %v318 = vld [vmem:[%s270 + $0x98] sm:$0xff]
      %v319 = vld [vmem:[%s270 + $0xa0] sm:$0xff]
      %v320 = vld [vmem:[%s270 + $0xa8] sm:$0xff]
      %v321 = vld [vmem:[%s270 + $0xb0] sm:$0xff]
      %v322 = vld [vmem:[%s270 + $0xb8] sm:$0xff]
      %v323 = vld [vmem:[%s270 + $0xc0] sm:$0xff]
      %v324 = vld [vmem:[%s270 + $0xc8] sm:$0xff]
      %v325 = vld [vmem:[%s270 + $0xd0] sm:$0xff]
      %v326 = vld [vmem:[%s270 + $0xd8] sm:$0xff]
      %v327 = vld [vmem:[%s270 + $0xe0] sm:$0xff]
      %v328 = vld [vmem:[%s270 + $0xe8] sm:$0xff]
      %v329 = vld [vmem:[%s270 + $0xf0] sm:$0xff]
      %v330 = vld [vmem:[%s270 + $0xf8] sm:$0xff]
      %v331 = vld [vmem:[%s270 + $0x100] sm:$0xff]
      %v332 = vld [vmem:[%s270 + $0x108] sm:$0xff]
      %v333 = vld [vmem:[%s270 + $0x110] sm:$0xff]
      %v334 = vld [vmem:[%s270 + $0x118] sm:$0xff]
      %v335 = vld [vmem:[%s270 + $0x120] sm:$0xff]
      %v336 = vld [vmem:[%s270 + $0x128] sm:$0xff]
      %v337 = vld [vmem:[%s270 + $0x130] sm:$0xff]
      %v338 = vld [vmem:[%s270 + $0x138] sm:$0xff]
      %v339 = vld [vmem:[%s270 + $0x140] sm:$0xff]
      %v340 = vld [vmem:[%s270 + $0x148] sm:$0xff]
      %v341 = vld [vmem:[%s270 + $0x150] sm:$0xff]
      %v342 = vld [vmem:[%s270 + $0x158] sm:$0xff]
      %v343 = vld [vmem:[%s270 + $0x160] sm:$0xff]
      %v344 = vld [vmem:[%s270 + $0x168] sm:$0xff]
      %v345 = vld [vmem:[%s270 + $0x170] sm:$0xff]
      %v346 = vld [vmem:[%s270 + $0x178] sm:$0xff]
      %v347 = vld [vmem:[%s270 + $0x180] sm:$0xff]
      %v348 = vld [vmem:[%s270 + $0x188] sm:$0xff]
      %v349 = vld [vmem:[%s270 + $0x190] sm:$0xff]
      %v350 = vld [vmem:[%s270 + $0x198] sm:$0xff]
      %v351 = vld [vmem:[%s270 + $0x1a0] sm:$0xff]
      %v352 = vld [vmem:[%s270 + $0x1a8] sm:$0xff]
      %v353 = vld [vmem:[%s270 + $0x1b0] sm:$0xff]
      %v354 = vld [vmem:[%s270 + $0x1b8] sm:$0xff]
      %v355 = vld [vmem:[%s270 + $0x1c0] sm:$0xff]
      %v356 = vld [vmem:[%s270 + $0x1c8] sm:$0xff]
      %v357 = vld [vmem:[%s270 + $0x1d0] sm:$0xff]
      %v358 = vld [vmem:[%s270 + $0x1d8] sm:$0xff]
      %v359 = vld [vmem:[%s270 + $0x1e0] sm:$0xff]
      %v360 = vld [vmem:[%s270 + $0x1e8] sm:$0xff]
      %v361 = vld [vmem:[%s270 + $0x1f0] sm:$0xff]
      %v362 = vld [vmem:[%s270 + $0x1f8] sm:$0xff]
      %v363 = vld [vmem:[%s270 + $0x200] sm:$0xff]
      %v364 = vld [vmem:[%s270 + $0x208] sm:$0xff]
      %v365 = vld [vmem:[%s270 + $0x210] sm:$0xff]
      %v366 = vld [vmem:[%s270 + $0x218] sm:$0xff]
      %v367 = vld [vmem:[%s270 + $0x220] sm:$0xff]
      %v368 = vld [vmem:[%s270 + $0x228] sm:$0xff]
      %v369 = vld [vmem:[%s270 + $0x230] sm:$0xff]
      %v370 = vld [vmem:[%s270 + $0x238] sm:$0xff]
      %v371 = vld [vmem:[%s270 + $0x240] sm:$0xff]
      %v372 = vld [vmem:[%s270 + $0x248] sm:$0xff]
      %v373 = vld [vmem:[%s270 + $0x250] sm:$0xff]
      %v374 = vld [vmem:[%s270 + $0x258] sm:$0xff]
      %v375 = vld [vmem:[%s270 + $0x260] sm:$0xff]
      %v376 = vld [vmem:[%s270 + $0x268] sm:$0xff]
      %v377 = vld [vmem:[%s270 + $0x270] sm:$0xff]
      %v378 = vld [vmem:[%s270 + $0x278] sm:$0xff]
      %v379 = vld [vmem:[%s270 + $0x280] sm:$0xff]
      %v380 = vld [vmem:[%s270 + $0x288] sm:$0xff]
      %v381 = vld [vmem:[%s270 + $0x290] sm:$0xff]
      %v382 = vld [vmem:[%s270 + $0x298] sm:$0xff]
      %v383 = vld [vmem:[%s270 + $0x2a0] sm:$0xff]
      %v384 = vld [vmem:[%s270 + $0x2a8] sm:$0xff]
      %v385 = vld [vmem:[%s270 + $0x2b0] sm:$0xff]
      %v386 = vld [vmem:[%s270 + $0x2b8] sm:$0xff]
      %v387 = vld [vmem:[%s270 + $0x2c0] sm:$0xff]
      %v388 = vld [vmem:[%s270 + $0x2c8] sm:$0xff]
      %v389 = vld [vmem:[%s270 + $0x2d0] sm:$0xff]
      %v390 = vld [vmem:[%s270 + $0x2d8] sm:$0xff]
      %v391 = vld [vmem:[%s270 + $0x2e0] sm:$0xff]
      %v392 = vld [vmem:[%s270 + $0x2e8] sm:$0xff]
      %v393 = vld [vmem:[%s270 + $0x2f0] sm:$0xff]
      %v394 = vld [vmem:[%s270 + $0x2f8] sm:$0xff]
      %v395 = vld [vmem:[%s270 + $0x300] sm:$0xff]
      %v396 = vld [vmem:[%s270 + $0x308] sm:$0xff]
      %v397 = vld [vmem:[%s270 + $0x310] sm:$0xff]
      %v398 = vld [vmem:[%s270 + $0x318] sm:$0xff]
      %v399 = vld [vmem:[%s270 + $0x320] sm:$0xff]
      %v400 = vld [vmem:[%s270 + $0x328] sm:$0xff]
      %v401 = vld [vmem:[%s270 + $0x330] sm:$0xff]
      %v402 = vld [vmem:[%s270 + $0x338] sm:$0xff]
      %v403 = vld [vmem:[%s270 + $0x340] sm:$0xff]
      %v404 = vld [vmem:[%s270 + $0x348] sm:$0xff]
      %v405 = vld [vmem:[%s270 + $0x350] sm:$0xff]
      %v406 = vld [vmem:[%s270 + $0x358] sm:$0xff]
      %v407 = vld [vmem:[%s270 + $0x360] sm:$0xff]
      %v408 = vld [vmem:[%s270 + $0x368] sm:$0xff]
      %v409 = vld [vmem:[%s270 + $0x370] sm:$0xff]
      %v410 = vld [vmem:[%s270 + $0x378] sm:$0xff]
      %v411 = vld [vmem:[%s270 + $0x380] sm:$0xff]
      %v412 = vld [vmem:[%s270 + $0x388] sm:$0xff]
      %v413 = vld [vmem:[%s270 + $0x390] sm:$0xff]
      %v414 = vld [vmem:[%s270 + $0x398] sm:$0xff]
      %v415 = vld [vmem:[%s270 + $0x3a0] sm:$0xff]
      %v416 = vld [vmem:[%s270 + $0x3a8] sm:$0xff]
      %v417 = vld [vmem:[%s270 + $0x3b0] sm:$0xff]
      %v418 = vld [vmem:[%s270 + $0x3b8] sm:$0xff]
      %v419 = vld [vmem:[%s270 + $0x3c0] sm:$0xff]
      %v420 = vld [vmem:[%s270 + $0x3c8] sm:$0xff]
      %v421 = vld [vmem:[%s270 + $0x3d0] sm:$0xff]
      %v422 = vld [vmem:[%s270 + $0x3d8] sm:$0xff]
      %v423 = vld [vmem:[%s270 + $0x3e0] sm:$0xff]
      %v424 = vld [vmem:[%s270 + $0x3e8] sm:$0xff]
      %v425 = vld [vmem:[%s270 + $0x3f0] sm:$0xff]
      %v426 = vld [vmem:[%s270 + $0x3f8] sm:$0xff]
      %v427 = vld [vmem:[%s270 + $0x400] sm:$0xff]
      %v428 = vld [vmem:[%s270 + $0x408] sm:$0xff]
      %v429 = vld [vmem:[%s270 + $0x410] sm:$0xff]
      %v430 = vld [vmem:[%s270 + $0x418] sm:$0xff]
      %v431 = vld [vmem:[%s270 + $0x420] sm:$0xff]
      %v432 = vld [vmem:[%s270 + $0x428] sm:$0xff]
      %v433 = vld [vmem:[%s270 + $0x430] sm:$0xff]
      %v434 = vld [vmem:[%s270 + $0x438] sm:$0xff]
      %v435 = vld [vmem:[%s270 + $0x440] sm:$0xff]
      %v436 = vld [vmem:[%s270 + $0x448] sm:$0xff]
      %v437 = vld [vmem:[%s270 + $0x450] sm:$0xff]
      %v438 = vld [vmem:[%s270 + $0x458] sm:$0xff]
      %v439 = vld [vmem:[%s270 + $0x460] sm:$0xff]
      %v440 = vld [vmem:[%s270 + $0x468] sm:$0xff]
      %v441 = vld [vmem:[%s270 + $0x470] sm:$0xff]
      %v442 = vld [vmem:[%s270 + $0x478] sm:$0xff]
      %v443 = vld [vmem:[%s270 + $0x480] sm:$0xff]
      %v444 = vld [vmem:[%s270 + $0x488] sm:$0xff]
      %v445 = vld [vmem:[%s270 + $0x490] sm:$0xff]
      %v446 = vld [vmem:[%s270 + $0x498] sm:$0xff]
      %v447 = vld [vmem:[%s270 + $0x4a0] sm:$0xff]
      %v448 = vld [vmem:[%s270 + $0x4a8] sm:$0xff]
      %v449 = vld [vmem:[%s270 + $0x4b0] sm:$0xff]
      %v450 = vld [vmem:[%s270 + $0x4b8] sm:$0xff]
      %v451 = vld [vmem:[%s270 + $0x4c0] sm:$0xff]
      %v452 = vld [vmem:[%s270 + $0x4c8] sm:$0xff]
      %v453 = vld [vmem:[%s270 + $0x4d0] sm:$0xff]
      %v454 = vld [vmem:[%s270 + $0x4d8] sm:$0xff]
      %v455 = vld [vmem:[%s270 + $0x4e0] sm:$0xff]
      %v456 = vld [vmem:[%s270 + $0x4e8] sm:$0xff]
      %v457 = vld [vmem:[%s270 + $0x4f0] sm:$0xff]
      %v458 = vld [vmem:[%s270 + $0x4f8] sm:$0xff]
      %v459 = vld [vmem:[%s270 + $0x500] sm:$0xff]
      %v460 = vld [vmem:[%s270 + $0x508] sm:$0xff]
      %v461 = vld [vmem:[%s270 + $0x510] sm:$0xff]
      %v462 = vld [vmem:[%s270 + $0x518] sm:$0xff]
      %v463 = vld [vmem:[%s270 + $0x520] sm:$0xff]
      %v464 = vld [vmem:[%s270 + $0x528] sm:$0xff]
      %v465 = vld [vmem:[%s270 + $0x530] sm:$0xff]
      %v466 = vld [vmem:[%s270 + $0x538] sm:$0xff]
      %v467 = vld [vmem:[%s270 + $0x540] sm:$0xff]
      %v468 = vld [vmem:[%s270 + $0x548] sm:$0xff]
      %v469 = vld [vmem:[%s270 + $0x550] sm:$0xff]
      %v470 = vld [vmem:[%s270 + $0x558] sm:$0xff]
      %v471 = vld [vmem:[%s270 + $0x560] sm:$0xff]
      %v472 = vld [vmem:[%s270 + $0x568] sm:$0xff]
      %v473 = vld [vmem:[%s270 + $0x570] sm:$0xff]
      %v474 = vld [vmem:[%s270 + $0x578] sm:$0xff]
      %v475 = vld [vmem:[%s270 + $0x580] sm:$0xff]
      %v476 = vld [vmem:[%s270 + $0x588] sm:$0xff]
      %v477 = vld [vmem:[%s270 + $0x590] sm:$0xff]
      %v478 = vld [vmem:[%s270 + $0x598] sm:$0xff]
      %v479 = vld [vmem:[%s270 + $0x5a0] sm:$0xff]
      %v480 = vld [vmem:[%s270 + $0x5a8] sm:$0xff]
      %v481 = vld [vmem:[%s270 + $0x5b0] sm:$0xff]
      %v482 = vld [vmem:[%s270 + $0x5b8] sm:$0xff]
      %v483 = vld [vmem:[%s270 + $0x5c0] sm:$0xff]
      %v484 = vld [vmem:[%s270 + $0x5c8] sm:$0xff]
      %v485 = vld [vmem:[%s270 + $0x5d0] sm:$0xff]
      %v486 = vld [vmem:[%s270 + $0x5d8] sm:$0xff]
      %v487 = vld [vmem:[%s270 + $0x5e0] sm:$0xff]
      %v488 = vld [vmem:[%s270 + $0x5e8] sm:$0xff]
      %v489 = vld [vmem:[%s270 + $0x5f0] sm:$0xff]
      %v490 = vld [vmem:[%s270 + $0x5f8] sm:$0xff]
      %v491 = vld [vmem:[%s270 + $0x600] sm:$0xff]
      %v492 = vld [vmem:[%s270 + $0x608] sm:$0xff]
      %v493 = vld [vmem:[%s270 + $0x610] sm:$0xff]
      %v494 = vld [vmem:[%s270 + $0x618] sm:$0xff]
      %v495 = vld [vmem:[%s270 + $0x620] sm:$0xff]
      %v496 = vld [vmem:[%s270 + $0x628] sm:$0xff]
      %v497 = vld [vmem:[%s270 + $0x630] sm:$0xff]
      %v498 = vld [vmem:[%s270 + $0x638] sm:$0xff]
      %v499 = vld [vmem:[%s270 + $0x640] sm:$0xff]
      %v500 = vld [vmem:[%s270 + $0x648] sm:$0xff]
      %v501 = vld [vmem:[%s270 + $0x650] sm:$0xff]
      %v502 = vld [vmem:[%s270 + $0x658] sm:$0xff]
      %v503 = vld [vmem:[%s270 + $0x660] sm:$0xff]
      %v504 = vld [vmem:[%s270 + $0x668] sm:$0xff]
      %v505 = vld [vmem:[%s270 + $0x670] sm:$0xff]
      %v506 = vld [vmem:[%s270 + $0x678] sm:$0xff]
      %v507 = vld [vmem:[%s270 + $0x680] sm:$0xff]
      %v508 = vld [vmem:[%s270 + $0x688] sm:$0xff]
      %v509 = vld [vmem:[%s270 + $0x690] sm:$0xff]
      %v510 = vld [vmem:[%s270 + $0x698] sm:$0xff]
      %v511 = vld [vmem:[%s270 + $0x6a0] sm:$0xff]
      %v512 = vld [vmem:[%s270 + $0x6a8] sm:$0xff]
      %v513 = vld [vmem:[%s270 + $0x6b0] sm:$0xff]
      %v514 = vld [vmem:[%s270 + $0x6b8] sm:$0xff]
      %v515 = vld [vmem:[%s270 + $0x6c0] sm:$0xff]
      %v516 = vld [vmem:[%s270 + $0x6c8] sm:$0xff]
      %v517 = vld [vmem:[%s270 + $0x6d0] sm:$0xff]
      %v518 = vld [vmem:[%s270 + $0x6d8] sm:$0xff]
      %v519 = vld [vmem:[%s270 + $0x6e0] sm:$0xff]
      %v520 = vld [vmem:[%s270 + $0x6e8] sm:$0xff]
      %v521 = vld [vmem:[%s270 + $0x6f0] sm:$0xff]
      %v522 = vld [vmem:[%s270 + $0x6f8] sm:$0xff]
      %v523 = vld [vmem:[%s270 + $0x700] sm:$0xff]
      %v524 = vld [vmem:[%s270 + $0x708] sm:$0xff]
      %v525 = vld [vmem:[%s270 + $0x710] sm:$0xff]
      %v526 = vld [vmem:[%s270 + $0x718] sm:$0xff]
      %v527 = vld [vmem:[%s270 + $0x720] sm:$0xff]
      %v528 = vld [vmem:[%s270 + $0x728] sm:$0xff]
      %v529 = vld [vmem:[%s270 + $0x730] sm:$0xff]
      %v530 = vld [vmem:[%s270 + $0x738] sm:$0xff]
      %v531 = vld [vmem:[%s270 + $0x740] sm:$0xff]
      %v532 = vld [vmem:[%s270 + $0x748] sm:$0xff]
      %v533 = vld [vmem:[%s270 + $0x750] sm:$0xff]
      %v534 = vld [vmem:[%s270 + $0x758] sm:$0xff]
      %v535 = vld [vmem:[%s270 + $0x760] sm:$0xff]
      %v536 = vld [vmem:[%s270 + $0x768] sm:$0xff]
      %v537 = vld [vmem:[%s270 + $0x770] sm:$0xff]
      %v538 = vld [vmem:[%s270 + $0x778] sm:$0xff]
      %v539 = vld [vmem:[%s270 + $0x780] sm:$0xff]
      %v540 = vld [vmem:[%s270 + $0x788] sm:$0xff]
      %v541 = vld [vmem:[%s270 + $0x790] sm:$0xff]
      %v542 = vld [vmem:[%s270 + $0x798] sm:$0xff]
      %v543 = vld [vmem:[%s270 + $0x7a0] sm:$0xff]
      %v544 = vld [vmem:[%s270 + $0x7a8] sm:$0xff]
      %v545 = vld [vmem:[%s270 + $0x7b0] sm:$0xff]
      %v546 = vld [vmem:[%s270 + $0x7b8] sm:$0xff]
      %v547 = vld [vmem:[%s270 + $0x7c0] sm:$0xff]
      %v548 = vld [vmem:[%s270 + $0x7c8] sm:$0xff]
      %v549 = vld [vmem:[%s270 + $0x7d0] sm:$0xff]
      %v550 = vld [vmem:[%s270 + $0x7d8] sm:$0xff]
      %v551 = vld [vmem:[%s270 + $0x7e0] sm:$0xff]
      %v552 = vld [vmem:[%s270 + $0x7e8] sm:$0xff]
      %v553 = vld [vmem:[%s270 + $0x7f0] sm:$0xff]
      %v554 = vld [vmem:[%s270 + $0x7f8] sm:$0xff]
      %v555 = vld [vmem:[%s270 + $0x800] sm:$0xff]
      %v556 = vld [vmem:[%s270 + $0x808] sm:$0xff]
      %v557 = vld [vmem:[%s270 + $0x810] sm:$0xff]
      %v558 = vld [vmem:[%s270 + $0x818] sm:$0xff]
      %v559 = vld [vmem:[%s270 + $0x820] sm:$0xff]
      %v560 = vld [vmem:[%s270 + $0x828] sm:$0xff]
      %v561 = vld [vmem:[%s270 + $0x830] sm:$0xff]
      %v562 = vld [vmem:[%s270 + $0x838] sm:$0xff]
      %v563 = vld [vmem:[%s270 + $0x840] sm:$0xff]
      %v564 = vld [vmem:[%s270 + $0x848] sm:$0xff]
      %v565 = vld [vmem:[%s270 + $0x850] sm:$0xff]
      %v566 = vld [vmem:[%s270 + $0x858] sm:$0xff]
      %v567 = vld [vmem:[%s270 + $0x860] sm:$0xff]
      %v568 = vld [vmem:[%s270 + $0x868] sm:$0xff]
      %v569 = vld [vmem:[%s270 + $0x870] sm:$0xff]
      %v570 = vld [vmem:[%s270 + $0x878] sm:$0xff]
      %v571 = vld [vmem:[%s270 + $0x880] sm:$0xff]
      %v572 = vld [vmem:[%s270 + $0x888] sm:$0xff]
      %v573 = vld [vmem:[%s270 + $0x890] sm:$0xff]
      %v574 = vld [vmem:[%s270 + $0x898] sm:$0xff]
      %v575 = vld [vmem:[%s270 + $0x8a0] sm:$0xff]
      %v576 = vld [vmem:[%s270 + $0x8a8] sm:$0xff]
      %v577 = vld [vmem:[%s270 + $0x8b0] sm:$0xff]
      %v578 = vld [vmem:[%s270 + $0x8b8] sm:$0xff]
      %v579 = vld [vmem:[%s270 + $0x8c0] sm:$0xff]
      %v580 = vld [vmem:[%s270 + $0x8c8] sm:$0xff]
      %v581 = vld [vmem:[%s270 + $0x8d0] sm:$0xff]
      %v582 = vld [vmem:[%s270 + $0x8d8] sm:$0xff]
      %v583 = vld [vmem:[%s270 + $0x8e0] sm:$0xff]
      %v584 = vld [vmem:[%s270 + $0x8e8] sm:$0xff]
      %v585 = vld [vmem:[%s270 + $0x8f0] sm:$0xff]
      %v586 = vld [vmem:[%s270 + $0x8f8] sm:$0xff]
      %v587 = vld [vmem:[%s270 + $0x900] sm:$0xff]
      %v588 = vld [vmem:[%s270 + $0x908] sm:$0xff]
      %v589 = vld [vmem:[%s270 + $0x910] sm:$0xff]
      %v590 = vld [vmem:[%s270 + $0x918] sm:$0xff]
      %v591 = vld [vmem:[%s270 + $0x920] sm:$0xff]
      %v592 = vld [vmem:[%s270 + $0x928] sm:$0xff]
      %v593 = vld [vmem:[%s270 + $0x930] sm:$0xff]
      %v594 = vld [vmem:[%s270 + $0x938] sm:$0xff]
      %v595 = vld [vmem:[%s270 + $0x940] sm:$0xff]
      %v596 = vld [vmem:[%s270 + $0x948] sm:$0xff]
      %v597 = vld [vmem:[%s270 + $0x950] sm:$0xff]
      %v598 = vld [vmem:[%s270 + $0x958] sm:$0xff]
      %v599 = vld [vmem:[%s270 + $0x960] sm:$0xff]
      %v600 = vld [vmem:[%s270 + $0x968] sm:$0xff]
      %v601 = vld [vmem:[%s270 + $0x970] sm:$0xff]
      %v602 = vld [vmem:[%s270 + $0x978] sm:$0xff]
      %v603 = vld [vmem:[%s270 + $0x980] sm:$0xff]
      %v604 = vld [vmem:[%s270 + $0x988] sm:$0xff]
      %v605 = vld [vmem:[%s270 + $0x990] sm:$0xff]
      %v606 = vld [vmem:[%s270 + $0x998] sm:$0xff]
      %v607 = vld [vmem:[%s270 + $0x9a0] sm:$0xff]
      %v608 = vld [vmem:[%s270 + $0x9a8] sm:$0xff]
      %v609 = vld [vmem:[%s270 + $0x9b0] sm:$0xff]
      %v610 = vld [vmem:[%s270 + $0x9b8] sm:$0xff]
      %v611 = vld [vmem:[%s270 + $0x9c0] sm:$0xff]
      %v612 = vld [vmem:[%s270 + $0x9c8] sm:$0xff]
      %v613 = vld [vmem:[%s270 + $0x9d0] sm:$0xff]
      %v614 = vld [vmem:[%s270 + $0x9d8] sm:$0xff]
      %v615 = vld [vmem:[%s270 + $0x9e0] sm:$0xff]
      %v616 = vld [vmem:[%s270 + $0x9e8] sm:$0xff]
      %v617 = vld [vmem:[%s270 + $0x9f0] sm:$0xff]
      %v618 = vld [vmem:[%s270 + $0x9f8] sm:$0xff]
      %v622 = vunpack.c.l.b16 %v296
      %v623 = vunpack.c.h.b16 %v296
      %v624 = vunpack.c.l.b16 %v297
      %v625 = vunpack.c.h.b16 %v297
      %v626 = vunpack.c.l.b16 %v298
      %v627 = vpack.c.b16 %v622, %v622
      %v628 = vpack.c.b16 %v623, %v623
      %v629 = vpack.c.b16 %v624, %v624
      %v630 = vpack.c.b16 %v625, %v625
      %v631 = vpack.c.b16 %v626, %v626
      %v957 = vunpack.c.l.b16 %v299
      %v958 = vunpack.c.h.b16 %v299
      %v959 = vunpack.c.l.b16 %v300
      %v960 = vunpack.c.h.b16 %v300
      %v961 = vunpack.c.l.b16 %v301
      %v962 = vunpack.c.h.b16 %v301
      %v963 = vunpack.c.l.b16 %v302
      %v964 = vunpack.c.h.b16 %v302
      %v965 = vunpack.c.l.b16 %v303
      %v966 = vunpack.c.h.b16 %v303
      %v967 = vunpack.c.l.b16 %v304
      %v968 = vunpack.c.h.b16 %v304
      %v969 = vunpack.c.l.b16 %v305
      %v970 = vunpack.c.h.b16 %v305
      %v971 = vunpack.c.l.b16 %v306
      %v972 = vunpack.c.h.b16 %v306
      %v973 = vunpack.c.l.b16 %v307
      %v974 = vunpack.c.h.b16 %v307
      %v975 = vunpack.c.l.b16 %v308
      %v976 = vunpack.c.h.b16 %v308
      %v977 = vunpack.c.l.b16 %v309
      %v978 = vunpack.c.h.b16 %v309
      %v979 = vunpack.c.l.b16 %v310
      %v980 = vunpack.c.h.b16 %v310
      %v981 = vunpack.c.l.b16 %v311
      %v982 = vunpack.c.h.b16 %v311
      %v983 = vunpack.c.l.b16 %v312
      %v984 = vunpack.c.h.b16 %v312
      %v985 = vunpack.c.l.b16 %v313
      %v986 = vunpack.c.h.b16 %v313
      %v987 = vunpack.c.l.b16 %v314
      %v988 = vunpack.c.h.b16 %v314
      %v989 = vunpack.c.l.b16 %v315
      %v990 = vunpack.c.h.b16 %v315
      %v991 = vunpack.c.l.b16 %v316
      %v992 = vunpack.c.h.b16 %v316
      %v993 = vunpack.c.l.b16 %v317
      %v994 = vunpack.c.h.b16 %v317
      %v995 = vunpack.c.l.b16 %v318
      %v996 = vunpack.c.h.b16 %v318
      %v997 = vunpack.c.l.b16 %v319
      %v998 = vunpack.c.h.b16 %v319
      %v999 = vunpack.c.l.b16 %v320
      %v1000 = vunpack.c.h.b16 %v320
      %v1001 = vunpack.c.l.b16 %v321
      %v1002 = vunpack.c.h.b16 %v321
      %v1003 = vunpack.c.l.b16 %v322
      %v1004 = vunpack.c.h.b16 %v322
      %v1005 = vunpack.c.l.b16 %v323
      %v1006 = vunpack.c.h.b16 %v323
      %v1007 = vunpack.c.l.b16 %v324
      %v1008 = vunpack.c.h.b16 %v324
      %v1009 = vunpack.c.l.b16 %v325
      %v1010 = vunpack.c.h.b16 %v325
      %v1011 = vunpack.c.l.b16 %v326
      %v1012 = vunpack.c.h.b16 %v326
      %v1013 = vunpack.c.l.b16 %v327
      %v1014 = vunpack.c.h.b16 %v327
      %v1015 = vunpack.c.l.b16 %v328
      %v1016 = vunpack.c.h.b16 %v328
      %v1017 = vunpack.c.l.b16 %v329
      %v1018 = vunpack.c.h.b16 %v329
      %v1019 = vunpack.c.l.b16 %v330
      %v1020 = vunpack.c.h.b16 %v330
      %v1021 = vunpack.c.l.b16 %v331
      %v1022 = vunpack.c.h.b16 %v331
      %v1023 = vunpack.c.l.b16 %v332
      %v1024 = vunpack.c.h.b16 %v332
      %v1025 = vunpack.c.l.b16 %v333
      %v1026 = vunpack.c.h.b16 %v333
      %v1027 = vunpack.c.l.b16 %v334
      %v1028 = vunpack.c.h.b16 %v334
      %v1029 = vunpack.c.l.b16 %v335
      %v1030 = vunpack.c.h.b16 %v335
      %v1031 = vunpack.c.l.b16 %v336
      %v1032 = vunpack.c.h.b16 %v336
      %v1033 = vunpack.c.l.b16 %v337
      %v1034 = vunpack.c.h.b16 %v337
      %v1035 = vunpack.c.l.b16 %v338
      %v1036 = vunpack.c.h.b16 %v338
      %v1037 = vunpack.c.l.b16 %v339
      %v1038 = vunpack.c.h.b16 %v339
      %v1039 = vunpack.c.l.b16 %v340
      %v1040 = vunpack.c.h.b16 %v340
      %v1041 = vunpack.c.l.b16 %v341
      %v1042 = vunpack.c.h.b16 %v341
      %v1043 = vunpack.c.l.b16 %v342
      %v1044 = vunpack.c.h.b16 %v342
      %v1045 = vunpack.c.l.b16 %v343
      %v1046 = vunpack.c.h.b16 %v343
      %v1047 = vunpack.c.l.b16 %v344
      %v1048 = vunpack.c.h.b16 %v344
      %v1049 = vunpack.c.l.b16 %v345
      %v1050 = vunpack.c.h.b16 %v345
      %v1051 = vunpack.c.l.b16 %v346
      %v1052 = vunpack.c.h.b16 %v346
      %v1053 = vunpack.c.l.b16 %v347
      %v1054 = vunpack.c.h.b16 %v347
      %v1055 = vunpack.c.l.b16 %v348
      %v1056 = vunpack.c.h.b16 %v348
      %v1057 = vunpack.c.l.b16 %v349
      %v1058 = vunpack.c.h.b16 %v349
      %v1059 = vunpack.c.l.b16 %v350
      %v1060 = vunpack.c.h.b16 %v350
      %v1061 = vunpack.c.l.b16 %v351
      %v1062 = vunpack.c.h.b16 %v351
      %v1063 = vunpack.c.l.b16 %v352
      %v1064 = vunpack.c.h.b16 %v352
      %v1065 = vunpack.c.l.b16 %v353
      %v1066 = vunpack.c.h.b16 %v353
      %v1067 = vunpack.c.l.b16 %v354
      %v1068 = vunpack.c.h.b16 %v354
      %v1069 = vunpack.c.l.b16 %v355
      %v1070 = vunpack.c.h.b16 %v355
      %v1071 = vunpack.c.l.b16 %v356
      %v1072 = vunpack.c.h.b16 %v356
      %v1073 = vunpack.c.l.b16 %v357
      %v1074 = vunpack.c.h.b16 %v357
      %v1075 = vunpack.c.l.b16 %v358
      %v1076 = vunpack.c.h.b16 %v358
      %v1077 = vunpack.c.l.b16 %v359
      %v1078 = vunpack.c.h.b16 %v359
      %v1079 = vunpack.c.l.b16 %v360
      %v1080 = vunpack.c.h.b16 %v360
      %v1081 = vunpack.c.l.b16 %v361
      %v1082 = vunpack.c.h.b16 %v361
      %v1083 = vunpack.c.l.b16 %v362
      %v1084 = vunpack.c.h.b16 %v362
      %v1085 = vunpack.c.l.b16 %v363
      %v1086 = vunpack.c.h.b16 %v363
      %v1087 = vunpack.c.l.b16 %v364
      %v1088 = vunpack.c.h.b16 %v364
      %v1089 = vunpack.c.l.b16 %v365
      %v1090 = vunpack.c.h.b16 %v365
      %v1091 = vunpack.c.l.b16 %v366
      %v1092 = vunpack.c.h.b16 %v366
      %v1093 = vunpack.c.l.b16 %v367
      %v1094 = vunpack.c.h.b16 %v367
      %v1095 = vunpack.c.l.b16 %v368
      %v1096 = vunpack.c.h.b16 %v368
      %v1097 = vunpack.c.l.b16 %v369
      %v1098 = vunpack.c.h.b16 %v369
      %v1099 = vunpack.c.l.b16 %v370
      %v1100 = vunpack.c.h.b16 %v370
      %v1101 = vunpack.c.l.b16 %v371
      %v1102 = vunpack.c.h.b16 %v371
      %v1103 = vunpack.c.l.b16 %v372
      %v1104 = vunpack.c.h.b16 %v372
      %v1105 = vunpack.c.l.b16 %v373
      %v1106 = vunpack.c.h.b16 %v373
      %v1107 = vunpack.c.l.b16 %v374
      %v1108 = vunpack.c.h.b16 %v374
      %v1109 = vunpack.c.l.b16 %v375
      %v1110 = vunpack.c.h.b16 %v375
      %v1111 = vunpack.c.l.b16 %v376
      %v1112 = vunpack.c.h.b16 %v376
      %v1113 = vunpack.c.l.b16 %v377
      %v1114 = vunpack.c.h.b16 %v377
      %v1115 = vunpack.c.l.b16 %v378
      %v1116 = vunpack.c.h.b16 %v378
      %v1117 = vunpack.c.l.b16 %v379
      %v1118 = vunpack.c.h.b16 %v379
      %v1119 = vunpack.c.l.b16 %v380
      %v1120 = vunpack.c.h.b16 %v380
      %v1121 = vunpack.c.l.b16 %v381
      %v1122 = vunpack.c.h.b16 %v381
      %v1123 = vunpack.c.l.b16 %v382
      %v1124 = vunpack.c.h.b16 %v382
      %v1125 = vunpack.c.l.b16 %v383
      %v1126 = vunpack.c.h.b16 %v383
      %v1127 = vunpack.c.l.b16 %v384
      %v1128 = vunpack.c.h.b16 %v384
      %v1129 = vunpack.c.l.b16 %v385
      %v1130 = vunpack.c.h.b16 %v385
      %v1131 = vunpack.c.l.b16 %v386
      %v1132 = vunpack.c.h.b16 %v386
      %v1133 = vunpack.c.l.b16 %v387
      %v1134 = vunpack.c.h.b16 %v387
      %v1135 = vunpack.c.l.b16 %v388
      %v1136 = vunpack.c.h.b16 %v388
      %v1137 = vunpack.c.l.b16 %v389
      %v1138 = vunpack.c.h.b16 %v389
      %v1139 = vunpack.c.l.b16 %v390
      %v1140 = vunpack.c.h.b16 %v390
      %v1141 = vunpack.c.l.b16 %v391
      %v1142 = vunpack.c.h.b16 %v391
      %v1143 = vunpack.c.l.b16 %v392
      %v1144 = vunpack.c.h.b16 %v392
      %v1145 = vunpack.c.l.b16 %v393
      %v1146 = vunpack.c.h.b16 %v393
      %v1147 = vunpack.c.l.b16 %v394
      %v1148 = vunpack.c.h.b16 %v394
      %v1149 = vunpack.c.l.b16 %v395
      %v1150 = vunpack.c.h.b16 %v395
      %v1151 = vunpack.c.l.b16 %v396
      %v1152 = vunpack.c.h.b16 %v396
      %v1153 = vunpack.c.l.b16 %v397
      %v1154 = vunpack.c.h.b16 %v397
      %v1155 = vunpack.c.l.b16 %v398
      %v1156 = vunpack.c.h.b16 %v398
      %v1157 = vunpack.c.l.b16 %v399
      %v1158 = vunpack.c.h.b16 %v399
      %v1159 = vunpack.c.l.b16 %v400
      %v1160 = vunpack.c.h.b16 %v400
      %v1161 = vunpack.c.l.b16 %v401
      %v1162 = vunpack.c.h.b16 %v401
      %v1163 = vunpack.c.l.b16 %v402
      %v1164 = vunpack.c.h.b16 %v402
      %v1165 = vunpack.c.l.b16 %v403
      %v1166 = vunpack.c.h.b16 %v403
      %v1167 = vunpack.c.l.b16 %v404
      %v1168 = vunpack.c.h.b16 %v404
      %v1169 = vunpack.c.l.b16 %v405
      %v1170 = vunpack.c.h.b16 %v405
      %v1171 = vunpack.c.l.b16 %v406
      %v1172 = vunpack.c.h.b16 %v406
      %v1173 = vunpack.c.l.b16 %v407
      %v1174 = vunpack.c.h.b16 %v407
      %v1175 = vunpack.c.l.b16 %v408
      %v1176 = vunpack.c.h.b16 %v408
      %v1177 = vunpack.c.l.b16 %v409
      %v1178 = vunpack.c.h.b16 %v409
      %v1179 = vunpack.c.l.b16 %v410
      %v1180 = vunpack.c.h.b16 %v410
      %v1181 = vunpack.c.l.b16 %v411
      %v1182 = vunpack.c.h.b16 %v411
      %v1183 = vunpack.c.l.b16 %v412
      %v1184 = vunpack.c.h.b16 %v412
      %v1185 = vunpack.c.l.b16 %v413
      %v1186 = vunpack.c.h.b16 %v413
      %v1187 = vunpack.c.l.b16 %v414
      %v1188 = vunpack.c.h.b16 %v414
      %v1189 = vunpack.c.l.b16 %v415
      %v1190 = vunpack.c.h.b16 %v415
      %v1191 = vunpack.c.l.b16 %v416
      %v1192 = vunpack.c.h.b16 %v416
      %v1193 = vunpack.c.l.b16 %v417
      %v1194 = vunpack.c.h.b16 %v417
      %v1195 = vunpack.c.l.b16 %v418
      %v1196 = vunpack.c.h.b16 %v418
      %v1197 = vunpack.c.l.b16 %v419
      %v1198 = vunpack.c.h.b16 %v419
      %v1199 = vunpack.c.l.b16 %v420
      %v1200 = vunpack.c.h.b16 %v420
      %v1201 = vunpack.c.l.b16 %v421
      %v1202 = vunpack.c.h.b16 %v421
      %v1203 = vunpack.c.l.b16 %v422
      %v1204 = vunpack.c.h.b16 %v422
      %v1205 = vunpack.c.l.b16 %v423
      %v1206 = vunpack.c.h.b16 %v423
      %v1207 = vunpack.c.l.b16 %v424
      %v1208 = vunpack.c.h.b16 %v424
      %v1209 = vunpack.c.l.b16 %v425
      %v1210 = vunpack.c.h.b16 %v425
      %v1211 = vunpack.c.l.b16 %v426
      %v1212 = vunpack.c.h.b16 %v426
      %v1213 = vunpack.c.l.b16 %v427
      %v1214 = vunpack.c.h.b16 %v427
      %v1215 = vunpack.c.l.b16 %v428
      %v1216 = vunpack.c.h.b16 %v428
      %v1217 = vunpack.c.l.b16 %v429
      %v1218 = vunpack.c.h.b16 %v429
      %v1219 = vunpack.c.l.b16 %v430
      %v1220 = vunpack.c.h.b16 %v430
      %v1221 = vunpack.c.l.b16 %v431
      %v1222 = vunpack.c.h.b16 %v431
      %v1223 = vunpack.c.l.b16 %v432
      %v1224 = vunpack.c.h.b16 %v432
      %v1225 = vunpack.c.l.b16 %v433
      %v1226 = vunpack.c.h.b16 %v433
      %v1227 = vunpack.c.l.b16 %v434
      %v1228 = vunpack.c.h.b16 %v434
      %v1229 = vunpack.c.l.b16 %v435
      %v1230 = vunpack.c.h.b16 %v435
      %v1231 = vunpack.c.l.b16 %v436
      %v1232 = vunpack.c.h.b16 %v436
      %v1233 = vunpack.c.l.b16 %v437
      %v1234 = vunpack.c.h.b16 %v437
      %v1235 = vunpack.c.l.b16 %v438
      %v1236 = vunpack.c.h.b16 %v438
      %v1237 = vunpack.c.l.b16 %v439
      %v1238 = vunpack.c.h.b16 %v439
      %v1239 = vunpack.c.l.b16 %v440
      %v1240 = vunpack.c.h.b16 %v440
      %v1241 = vunpack.c.l.b16 %v441
      %v1242 = vunpack.c.h.b16 %v441
      %v1243 = vunpack.c.l.b16 %v442
      %v1244 = vunpack.c.h.b16 %v442
      %v1245 = vunpack.c.l.b16 %v443
      %v1246 = vunpack.c.h.b16 %v443
      %v1247 = vunpack.c.l.b16 %v444
      %v1248 = vunpack.c.h.b16 %v444
      %v1249 = vunpack.c.l.b16 %v445
      %v1250 = vunpack.c.h.b16 %v445
      %v1251 = vunpack.c.l.b16 %v446
      %v1252 = vunpack.c.h.b16 %v446
      %v1253 = vunpack.c.l.b16 %v447
      %v1254 = vunpack.c.h.b16 %v447
      %v1255 = vunpack.c.l.b16 %v448
      %v1256 = vunpack.c.h.b16 %v448
      %v1257 = vunpack.c.l.b16 %v449
      %v1258 = vunpack.c.h.b16 %v449
      %v1259 = vunpack.c.l.b16 %v450
      %v1260 = vunpack.c.h.b16 %v450
      %v1261 = vunpack.c.l.b16 %v451
      %v1262 = vunpack.c.h.b16 %v451
      %v1263 = vunpack.c.l.b16 %v452
      %v1264 = vunpack.c.h.b16 %v452
      %v1265 = vunpack.c.l.b16 %v453
      %v1266 = vunpack.c.h.b16 %v453
      %v1267 = vunpack.c.l.b16 %v454
      %v1268 = vunpack.c.h.b16 %v454
      %v1269 = vunpack.c.l.b16 %v455
      %v1270 = vunpack.c.h.b16 %v455
      %v1271 = vunpack.c.l.b16 %v456
      %v1272 = vunpack.c.h.b16 %v456
      %v1273 = vunpack.c.l.b16 %v457
      %v1274 = vunpack.c.h.b16 %v457
      %v1275 = vunpack.c.l.b16 %v458
      %v1276 = vunpack.c.h.b16 %v458
      %v1277 = vunpack.c.l.b16 %v459
      %v1278 = vunpack.c.h.b16 %v459
      %v1279 = vunpack.c.l.b16 %v460
      %v1280 = vunpack.c.h.b16 %v460
      %v1281 = vunpack.c.l.b16 %v461
      %v1282 = vunpack.c.h.b16 %v461
      %v1283 = vunpack.c.l.b16 %v462
      %v1284 = vunpack.c.h.b16 %v462
      %v1285 = vunpack.c.l.b16 %v463
      %v1286 = vunpack.c.h.b16 %v463
      %v1287 = vunpack.c.l.b16 %v464
      %v1288 = vunpack.c.h.b16 %v464
      %v1289 = vunpack.c.l.b16 %v465
      %v1290 = vunpack.c.h.b16 %v465
      %v1291 = vunpack.c.l.b16 %v466
      %v1292 = vunpack.c.h.b16 %v466
      %v1293 = vunpack.c.l.b16 %v467
      %v1294 = vunpack.c.h.b16 %v467
      %v1295 = vunpack.c.l.b16 %v468
      %v1296 = vunpack.c.h.b16 %v468
      %v1297 = vunpack.c.l.b16 %v469
      %v1298 = vunpack.c.h.b16 %v469
      %v1299 = vunpack.c.l.b16 %v470
      %v1300 = vunpack.c.h.b16 %v470
      %v1301 = vunpack.c.l.b16 %v471
      %v1302 = vunpack.c.h.b16 %v471
      %v1303 = vunpack.c.l.b16 %v472
      %v1304 = vunpack.c.h.b16 %v472
      %v1305 = vunpack.c.l.b16 %v473
      %v1306 = vunpack.c.h.b16 %v473
      %v1307 = vunpack.c.l.b16 %v474
      %v1308 = vunpack.c.h.b16 %v474
      %v1309 = vunpack.c.l.b16 %v475
      %v1310 = vunpack.c.h.b16 %v475
      %v1311 = vunpack.c.l.b16 %v476
      %v1312 = vunpack.c.h.b16 %v476
      %v1313 = vunpack.c.l.b16 %v477
      %v1314 = vunpack.c.h.b16 %v477
      %v1315 = vunpack.c.l.b16 %v478
      %v1316 = vunpack.c.h.b16 %v478
      %v1317 = vunpack.c.l.b16 %v479
      %v1318 = vunpack.c.h.b16 %v479
      %v1319 = vunpack.c.l.b16 %v480
      %v1320 = vunpack.c.h.b16 %v480
      %v1321 = vunpack.c.l.b16 %v481
      %v1322 = vunpack.c.h.b16 %v481
      %v1323 = vunpack.c.l.b16 %v482
      %v1324 = vunpack.c.h.b16 %v482
      %v1325 = vunpack.c.l.b16 %v483
      %v1326 = vunpack.c.h.b16 %v483
      %v1327 = vunpack.c.l.b16 %v484
      %v1328 = vunpack.c.h.b16 %v484
      %v1329 = vunpack.c.l.b16 %v485
      %v1330 = vunpack.c.h.b16 %v485
      %v1331 = vunpack.c.l.b16 %v486
      %v1332 = vunpack.c.h.b16 %v486
      %v1333 = vunpack.c.l.b16 %v487
      %v1334 = vunpack.c.h.b16 %v487
      %v1335 = vunpack.c.l.b16 %v488
      %v1336 = vunpack.c.h.b16 %v488
      %v1337 = vunpack.c.l.b16 %v489
      %v1338 = vunpack.c.h.b16 %v489
      %v1339 = vunpack.c.l.b16 %v490
      %v1340 = vunpack.c.h.b16 %v490
      %v1341 = vunpack.c.l.b16 %v491
      %v1342 = vunpack.c.h.b16 %v491
      %v1343 = vunpack.c.l.b16 %v492
      %v1344 = vunpack.c.h.b16 %v492
      %v1345 = vunpack.c.l.b16 %v493
      %v1346 = vunpack.c.h.b16 %v493
      %v1347 = vunpack.c.l.b16 %v494
      %v1348 = vunpack.c.h.b16 %v494
      %v1349 = vunpack.c.l.b16 %v495
      %v1350 = vunpack.c.h.b16 %v495
      %v1351 = vunpack.c.l.b16 %v496
      %v1352 = vunpack.c.h.b16 %v496
      %v1353 = vunpack.c.l.b16 %v497
      %v1354 = vunpack.c.h.b16 %v497
      %v1355 = vunpack.c.l.b16 %v498
      %v1356 = vunpack.c.h.b16 %v498
      %v1357 = vunpack.c.l.b16 %v499
      %v1358 = vunpack.c.h.b16 %v499
      %v1359 = vunpack.c.l.b16 %v500
      %v1360 = vunpack.c.h.b16 %v500
      %v1361 = vunpack.c.l.b16 %v501
      %v1362 = vunpack.c.h.b16 %v501
      %v1363 = vunpack.c.l.b16 %v502
      %v1364 = vunpack.c.h.b16 %v502
      %v1365 = vunpack.c.l.b16 %v503
      %v1366 = vunpack.c.h.b16 %v503
      %v1367 = vunpack.c.l.b16 %v504
      %v1368 = vunpack.c.h.b16 %v504
      %v1369 = vunpack.c.l.b16 %v505
      %v1370 = vunpack.c.h.b16 %v505
      %v1371 = vunpack.c.l.b16 %v506
      %v1372 = vunpack.c.h.b16 %v506
      %v1373 = vunpack.c.l.b16 %v507
      %v1374 = vunpack.c.h.b16 %v507
      %v1375 = vunpack.c.l.b16 %v508
      %v1376 = vunpack.c.h.b16 %v508
      %v1377 = vunpack.c.l.b16 %v509
      %v1378 = vunpack.c.h.b16 %v509
      %v1379 = vunpack.c.l.b16 %v510
      %v1380 = vunpack.c.h.b16 %v510
      %v1381 = vunpack.c.l.b16 %v511
      %v1382 = vunpack.c.h.b16 %v511
      %v1383 = vunpack.c.l.b16 %v512
      %v1384 = vunpack.c.h.b16 %v512
      %v1385 = vunpack.c.l.b16 %v513
      %v1386 = vunpack.c.h.b16 %v513
      %v1387 = vunpack.c.l.b16 %v514
      %v1388 = vunpack.c.h.b16 %v514
      %v1389 = vunpack.c.l.b16 %v515
      %v1390 = vunpack.c.h.b16 %v515
      %v1391 = vunpack.c.l.b16 %v516
      %v1392 = vunpack.c.h.b16 %v516
      %v1393 = vunpack.c.l.b16 %v517
      %v1394 = vunpack.c.h.b16 %v517
      %v1395 = vunpack.c.l.b16 %v518
      %v1396 = vunpack.c.h.b16 %v518
      %v1397 = vunpack.c.l.b16 %v519
      %v1398 = vunpack.c.h.b16 %v519
      %v1399 = vunpack.c.l.b16 %v520
      %v1400 = vunpack.c.h.b16 %v520
      %v1401 = vunpack.c.l.b16 %v521
      %v1402 = vunpack.c.h.b16 %v521
      %v1403 = vunpack.c.l.b16 %v522
      %v1404 = vunpack.c.h.b16 %v522
      %v1405 = vunpack.c.l.b16 %v523
      %v1406 = vunpack.c.h.b16 %v523
      %v1407 = vunpack.c.l.b16 %v524
      %v1408 = vunpack.c.h.b16 %v524
      %v1409 = vunpack.c.l.b16 %v525
      %v1410 = vunpack.c.h.b16 %v525
      %v1411 = vunpack.c.l.b16 %v526
      %v1412 = vunpack.c.h.b16 %v526
      %v1413 = vunpack.c.l.b16 %v527
      %v1414 = vunpack.c.h.b16 %v527
      %v1415 = vunpack.c.l.b16 %v528
      %v1416 = vunpack.c.h.b16 %v528
      %v1417 = vunpack.c.l.b16 %v529
      %v1418 = vunpack.c.h.b16 %v529
      %v1419 = vunpack.c.l.b16 %v530
      %v1420 = vunpack.c.h.b16 %v530
      %v1421 = vunpack.c.l.b16 %v531
      %v1422 = vunpack.c.h.b16 %v531
      %v1423 = vunpack.c.l.b16 %v532
      %v1424 = vunpack.c.h.b16 %v532
      %v1425 = vunpack.c.l.b16 %v533
      %v1426 = vunpack.c.h.b16 %v533
      %v1427 = vunpack.c.l.b16 %v534
      %v1428 = vunpack.c.h.b16 %v534
      %v1429 = vunpack.c.l.b16 %v535
      %v1430 = vunpack.c.h.b16 %v535
      %v1431 = vunpack.c.l.b16 %v536
      %v1432 = vunpack.c.h.b16 %v536
      %v1433 = vunpack.c.l.b16 %v537
      %v1434 = vunpack.c.h.b16 %v537
      %v1435 = vunpack.c.l.b16 %v538
      %v1436 = vunpack.c.h.b16 %v538
      %v1437 = vunpack.c.l.b16 %v539
      %v1438 = vunpack.c.h.b16 %v539
      %v1439 = vunpack.c.l.b16 %v540
      %v1440 = vunpack.c.h.b16 %v540
      %v1441 = vunpack.c.l.b16 %v541
      %v1442 = vunpack.c.h.b16 %v541
      %v1443 = vunpack.c.l.b16 %v542
      %v1444 = vunpack.c.h.b16 %v542
      %v1445 = vunpack.c.l.b16 %v543
      %v1446 = vunpack.c.h.b16 %v543
      %v1447 = vunpack.c.l.b16 %v544
      %v1448 = vunpack.c.h.b16 %v544
      %v1449 = vunpack.c.l.b16 %v545
      %v1450 = vunpack.c.h.b16 %v545
      %v1451 = vunpack.c.l.b16 %v546
      %v1452 = vunpack.c.h.b16 %v546
      %v1453 = vunpack.c.l.b16 %v547
      %v1454 = vunpack.c.h.b16 %v547
      %v1455 = vunpack.c.l.b16 %v548
      %v1456 = vunpack.c.h.b16 %v548
      %v1457 = vunpack.c.l.b16 %v549
      %v1458 = vunpack.c.h.b16 %v549
      %v1459 = vunpack.c.l.b16 %v550
      %v1460 = vunpack.c.h.b16 %v550
      %v1461 = vunpack.c.l.b16 %v551
      %v1462 = vunpack.c.h.b16 %v551
      %v1463 = vunpack.c.l.b16 %v552
      %v1464 = vunpack.c.h.b16 %v552
      %v1465 = vunpack.c.l.b16 %v553
      %v1466 = vunpack.c.h.b16 %v553
      %v1467 = vunpack.c.l.b16 %v554
      %v1468 = vunpack.c.h.b16 %v554
      %v1469 = vunpack.c.l.b16 %v555
      %v1470 = vunpack.c.h.b16 %v555
      %v1471 = vunpack.c.l.b16 %v556
      %v1472 = vunpack.c.h.b16 %v556
      %v1473 = vunpack.c.l.b16 %v557
      %v1474 = vunpack.c.h.b16 %v557
      %v1475 = vunpack.c.l.b16 %v558
      %v1476 = vunpack.c.h.b16 %v558
      %v1477 = vunpack.c.l.b16 %v559
      %v1478 = vunpack.c.h.b16 %v559
      %v1479 = vunpack.c.l.b16 %v560
      %v1480 = vunpack.c.h.b16 %v560
      %v1481 = vunpack.c.l.b16 %v561
      %v1482 = vunpack.c.h.b16 %v561
      %v1483 = vunpack.c.l.b16 %v562
      %v1484 = vunpack.c.h.b16 %v562
      %v1485 = vunpack.c.l.b16 %v563
      %v1486 = vunpack.c.h.b16 %v563
      %v1487 = vunpack.c.l.b16 %v564
      %v1488 = vunpack.c.h.b16 %v564
      %v1489 = vunpack.c.l.b16 %v565
      %v1490 = vunpack.c.h.b16 %v565
      %v1491 = vunpack.c.l.b16 %v566
      %v1492 = vunpack.c.h.b16 %v566
      %v1493 = vunpack.c.l.b16 %v567
      %v1494 = vunpack.c.h.b16 %v567
      %v1495 = vunpack.c.l.b16 %v568
      %v1496 = vunpack.c.h.b16 %v568
      %v1497 = vunpack.c.l.b16 %v569
      %v1498 = vunpack.c.h.b16 %v569
      %v1499 = vunpack.c.l.b16 %v570
      %v1500 = vunpack.c.h.b16 %v570
      %v1501 = vunpack.c.l.b16 %v571
      %v1502 = vunpack.c.h.b16 %v571
      %v1503 = vunpack.c.l.b16 %v572
      %v1504 = vunpack.c.h.b16 %v572
      %v1505 = vunpack.c.l.b16 %v573
      %v1506 = vunpack.c.h.b16 %v573
      %v1507 = vunpack.c.l.b16 %v574
      %v1508 = vunpack.c.h.b16 %v574
      %v1509 = vunpack.c.l.b16 %v575
      %v1510 = vunpack.c.h.b16 %v575
      %v1511 = vunpack.c.l.b16 %v576
      %v1512 = vunpack.c.h.b16 %v576
      %v1513 = vunpack.c.l.b16 %v577
      %v1514 = vunpack.c.h.b16 %v577
      %v1515 = vunpack.c.l.b16 %v578
      %v1516 = vunpack.c.h.b16 %v578
      %v1517 = vunpack.c.l.b16 %v579
      %v1518 = vunpack.c.h.b16 %v579
      %v1519 = vunpack.c.l.b16 %v580
      %v1520 = vunpack.c.h.b16 %v580
      %v1521 = vunpack.c.l.b16 %v581
      %v1522 = vunpack.c.h.b16 %v581
      %v1523 = vunpack.c.l.b16 %v582
      %v1524 = vunpack.c.h.b16 %v582
      %v1525 = vunpack.c.l.b16 %v583
      %v1526 = vunpack.c.h.b16 %v583
      %v1527 = vunpack.c.l.b16 %v584
      %v1528 = vunpack.c.h.b16 %v584
      %v1529 = vunpack.c.l.b16 %v585
      %v1530 = vunpack.c.h.b16 %v585
      %v1531 = vunpack.c.l.b16 %v586
      %v1532 = vunpack.c.h.b16 %v586
      %v1533 = vunpack.c.l.b16 %v587
      %v1534 = vunpack.c.h.b16 %v587
      %v1535 = vunpack.c.l.b16 %v588
      %v1536 = vunpack.c.h.b16 %v588
      %v1537 = vunpack.c.l.b16 %v589
      %v1538 = vunpack.c.h.b16 %v589
      %v1539 = vunpack.c.l.b16 %v590
      %v1540 = vunpack.c.h.b16 %v590
      %v1541 = vunpack.c.l.b16 %v591
      %v1542 = vunpack.c.h.b16 %v591
      %v1543 = vunpack.c.l.b16 %v592
      %v1544 = vunpack.c.h.b16 %v592
      %v1545 = vunpack.c.l.b16 %v593
      %v1546 = vunpack.c.h.b16 %v593
      %v1547 = vunpack.c.l.b16 %v594
      %v1548 = vunpack.c.h.b16 %v594
      %v1549 = vunpack.c.l.b16 %v595
      %v1550 = vunpack.c.h.b16 %v595
      %v1551 = vunpack.c.l.b16 %v596
      %v1552 = vunpack.c.h.b16 %v596
      %v1553 = vunpack.c.l.b16 %v597
      %v1554 = vunpack.c.h.b16 %v597
      %v1555 = vunpack.c.l.b16 %v598
      %v1556 = vunpack.c.h.b16 %v598
      %v1557 = vunpack.c.l.b16 %v599
      %v1558 = vunpack.c.h.b16 %v599
      %v1559 = vunpack.c.l.b16 %v600
      %v1560 = vunpack.c.h.b16 %v600
      %v1561 = vunpack.c.l.b16 %v601
      %v1562 = vunpack.c.h.b16 %v601
      %v1563 = vunpack.c.l.b16 %v602
      %v1564 = vunpack.c.h.b16 %v602
      %v1565 = vunpack.c.l.b16 %v603
      %v1566 = vunpack.c.h.b16 %v603
      %v1567 = vunpack.c.l.b16 %v604
      %v1568 = vunpack.c.h.b16 %v604
      %v1569 = vunpack.c.l.b16 %v605
      %v1570 = vunpack.c.h.b16 %v605
      %v1571 = vunpack.c.l.b16 %v606
      %v1572 = vunpack.c.h.b16 %v606
      %v1573 = vunpack.c.l.b16 %v607
      %v1574 = vunpack.c.h.b16 %v607
      %v1575 = vunpack.c.l.b16 %v608
      %v1576 = vunpack.c.h.b16 %v608
      %v1577 = vunpack.c.l.b16 %v609
      %v1578 = vunpack.c.h.b16 %v609
      %v1579 = vunpack.c.l.b16 %v610
      %v1580 = vunpack.c.h.b16 %v610
      %v1581 = vunpack.c.l.b16 %v611
      %v1582 = vunpack.c.h.b16 %v611
      %v1583 = vunpack.c.l.b16 %v612
      %v1584 = vunpack.c.h.b16 %v612
      %v1585 = vunpack.c.l.b16 %v613
      %v1586 = vunpack.c.h.b16 %v613
      %v1587 = vunpack.c.l.b16 %v614
      %v1588 = vunpack.c.h.b16 %v614
      %v1589 = vunpack.c.l.b16 %v615
      %v1590 = vunpack.c.h.b16 %v615
      %v1591 = vunpack.c.l.b16 %v616
      %v1592 = vunpack.c.h.b16 %v616
      %v1593 = vunpack.c.l.b16 %v617
      %v1594 = vunpack.c.h.b16 %v617
      %v1595 = vunpack.c.l.b16 %v618
      %v1596 = vunpack.c.h.b16 %v618
      %v1597 = vpack.c.b16 %v965, %v957
      %v1598 = vpack.c.b16 %v966, %v958
      %v1599 = vpack.c.b16 %v967, %v959
      %v1600 = vpack.c.b16 %v968, %v960
      %v1601 = vpack.c.b16 %v969, %v961
      %v1602 = vpack.c.b16 %v970, %v962
      %v1603 = vpack.c.b16 %v971, %v963
      %v1604 = vpack.c.b16 %v972, %v964
      %v1605 = vpack.c.b16 %v981, %v973
      %v1606 = vpack.c.b16 %v982, %v974
      %v1607 = vpack.c.b16 %v983, %v975
      %v1608 = vpack.c.b16 %v984, %v976
      %v1609 = vpack.c.b16 %v985, %v977
      %v1610 = vpack.c.b16 %v986, %v978
      %v1611 = vpack.c.b16 %v987, %v979
      %v1612 = vpack.c.b16 %v988, %v980
      %v1613 = vpack.c.b16 %v997, %v989
      %v1614 = vpack.c.b16 %v998, %v990
      %v1615 = vpack.c.b16 %v999, %v991
      %v1616 = vpack.c.b16 %v1000, %v992
      %v1617 = vpack.c.b16 %v1001, %v993
      %v1618 = vpack.c.b16 %v1002, %v994
      %v1619 = vpack.c.b16 %v1003, %v995
      %v1620 = vpack.c.b16 %v1004, %v996
      %v1621 = vpack.c.b16 %v1013, %v1005
      %v1622 = vpack.c.b16 %v1014, %v1006
      %v1623 = vpack.c.b16 %v1015, %v1007
      %v1624 = vpack.c.b16 %v1016, %v1008
      %v1625 = vpack.c.b16 %v1017, %v1009
      %v1626 = vpack.c.b16 %v1018, %v1010
      %v1627 = vpack.c.b16 %v1019, %v1011
      %v1628 = vpack.c.b16 %v1020, %v1012
      %v1629 = vpack.c.b16 %v1029, %v1021
      %v1630 = vpack.c.b16 %v1030, %v1022
      %v1631 = vpack.c.b16 %v1031, %v1023
      %v1632 = vpack.c.b16 %v1032, %v1024
      %v1633 = vpack.c.b16 %v1033, %v1025
      %v1634 = vpack.c.b16 %v1034, %v1026
      %v1635 = vpack.c.b16 %v1035, %v1027
      %v1636 = vpack.c.b16 %v1036, %v1028
      %v1637 = vpack.c.b16 %v1045, %v1037
      %v1638 = vpack.c.b16 %v1046, %v1038
      %v1639 = vpack.c.b16 %v1047, %v1039
      %v1640 = vpack.c.b16 %v1048, %v1040
      %v1641 = vpack.c.b16 %v1049, %v1041
      %v1642 = vpack.c.b16 %v1050, %v1042
      %v1643 = vpack.c.b16 %v1051, %v1043
      %v1644 = vpack.c.b16 %v1052, %v1044
      %v1645 = vpack.c.b16 %v1061, %v1053
      %v1646 = vpack.c.b16 %v1062, %v1054
      %v1647 = vpack.c.b16 %v1063, %v1055
      %v1648 = vpack.c.b16 %v1064, %v1056
      %v1649 = vpack.c.b16 %v1065, %v1057
      %v1650 = vpack.c.b16 %v1066, %v1058
      %v1651 = vpack.c.b16 %v1067, %v1059
      %v1652 = vpack.c.b16 %v1068, %v1060
      %v1653 = vpack.c.b16 %v1077, %v1069
      %v1654 = vpack.c.b16 %v1078, %v1070
      %v1655 = vpack.c.b16 %v1079, %v1071
      %v1656 = vpack.c.b16 %v1080, %v1072
      %v1657 = vpack.c.b16 %v1081, %v1073
      %v1658 = vpack.c.b16 %v1082, %v1074
      %v1659 = vpack.c.b16 %v1083, %v1075
      %v1660 = vpack.c.b16 %v1084, %v1076
      %v1661 = vpack.c.b16 %v1093, %v1085
      %v1662 = vpack.c.b16 %v1094, %v1086
      %v1663 = vpack.c.b16 %v1095, %v1087
      %v1664 = vpack.c.b16 %v1096, %v1088
      %v1665 = vpack.c.b16 %v1097, %v1089
      %v1666 = vpack.c.b16 %v1098, %v1090
      %v1667 = vpack.c.b16 %v1099, %v1091
      %v1668 = vpack.c.b16 %v1100, %v1092
      %v1669 = vpack.c.b16 %v1109, %v1101
      %v1670 = vpack.c.b16 %v1110, %v1102
      %v1671 = vpack.c.b16 %v1111, %v1103
      %v1672 = vpack.c.b16 %v1112, %v1104
      %v1673 = vpack.c.b16 %v1113, %v1105
      %v1674 = vpack.c.b16 %v1114, %v1106
      %v1675 = vpack.c.b16 %v1115, %v1107
      %v1676 = vpack.c.b16 %v1116, %v1108
      %v1677 = vpack.c.b16 %v1125, %v1117
      %v1678 = vpack.c.b16 %v1126, %v1118
      %v1679 = vpack.c.b16 %v1127, %v1119
      %v1680 = vpack.c.b16 %v1128, %v1120
      %v1681 = vpack.c.b16 %v1129, %v1121
      %v1682 = vpack.c.b16 %v1130, %v1122
      %v1683 = vpack.c.b16 %v1131, %v1123
      %v1684 = vpack.c.b16 %v1132, %v1124
      %v1685 = vpack.c.b16 %v1141, %v1133
      %v1686 = vpack.c.b16 %v1142, %v1134
      %v1687 = vpack.c.b16 %v1143, %v1135
      %v1688 = vpack.c.b16 %v1144, %v1136
      %v1689 = vpack.c.b16 %v1145, %v1137
      %v1690 = vpack.c.b16 %v1146, %v1138
      %v1691 = vpack.c.b16 %v1147, %v1139
      %v1692 = vpack.c.b16 %v1148, %v1140
      %v1693 = vpack.c.b16 %v1157, %v1149
      %v1694 = vpack.c.b16 %v1158, %v1150
      %v1695 = vpack.c.b16 %v1159, %v1151
      %v1696 = vpack.c.b16 %v1160, %v1152
      %v1697 = vpack.c.b16 %v1161, %v1153
      %v1698 = vpack.c.b16 %v1162, %v1154
      %v1699 = vpack.c.b16 %v1163, %v1155
      %v1700 = vpack.c.b16 %v1164, %v1156
      %v1701 = vpack.c.b16 %v1173, %v1165
      %v1702 = vpack.c.b16 %v1174, %v1166
      %v1703 = vpack.c.b16 %v1175, %v1167
      %v1704 = vpack.c.b16 %v1176, %v1168
      %v1705 = vpack.c.b16 %v1177, %v1169
      %v1706 = vpack.c.b16 %v1178, %v1170
      %v1707 = vpack.c.b16 %v1179, %v1171
      %v1708 = vpack.c.b16 %v1180, %v1172
      %v1709 = vpack.c.b16 %v1189, %v1181
      %v1710 = vpack.c.b16 %v1190, %v1182
      %v1711 = vpack.c.b16 %v1191, %v1183
      %v1712 = vpack.c.b16 %v1192, %v1184
      %v1713 = vpack.c.b16 %v1193, %v1185
      %v1714 = vpack.c.b16 %v1194, %v1186
      %v1715 = vpack.c.b16 %v1195, %v1187
      %v1716 = vpack.c.b16 %v1196, %v1188
      %v1717 = vpack.c.b16 %v1205, %v1197
      %v1718 = vpack.c.b16 %v1206, %v1198
      %v1719 = vpack.c.b16 %v1207, %v1199
      %v1720 = vpack.c.b16 %v1208, %v1200
      %v1721 = vpack.c.b16 %v1209, %v1201
      %v1722 = vpack.c.b16 %v1210, %v1202
      %v1723 = vpack.c.b16 %v1211, %v1203
      %v1724 = vpack.c.b16 %v1212, %v1204
      %v1725 = vpack.c.b16 %v1221, %v1213
      %v1726 = vpack.c.b16 %v1222, %v1214
      %v1727 = vpack.c.b16 %v1223, %v1215
      %v1728 = vpack.c.b16 %v1224, %v1216
      %v1729 = vpack.c.b16 %v1225, %v1217
      %v1730 = vpack.c.b16 %v1226, %v1218
      %v1731 = vpack.c.b16 %v1227, %v1219
      %v1732 = vpack.c.b16 %v1228, %v1220
      %v1733 = vpack.c.b16 %v1237, %v1229
      %v1734 = vpack.c.b16 %v1238, %v1230
      %v1735 = vpack.c.b16 %v1239, %v1231
      %v1736 = vpack.c.b16 %v1240, %v1232
      %v1737 = vpack.c.b16 %v1241, %v1233
      %v1738 = vpack.c.b16 %v1242, %v1234
      %v1739 = vpack.c.b16 %v1243, %v1235
      %v1740 = vpack.c.b16 %v1244, %v1236
      %v1741 = vpack.c.b16 %v1253, %v1245
      %v1742 = vpack.c.b16 %v1254, %v1246
      %v1743 = vpack.c.b16 %v1255, %v1247
      %v1744 = vpack.c.b16 %v1256, %v1248
      %v1745 = vpack.c.b16 %v1257, %v1249
      %v1746 = vpack.c.b16 %v1258, %v1250
      %v1747 = vpack.c.b16 %v1259, %v1251
      %v1748 = vpack.c.b16 %v1260, %v1252
      %v1749 = vpack.c.b16 %v1269, %v1261
      %v1750 = vpack.c.b16 %v1270, %v1262
      %v1751 = vpack.c.b16 %v1271, %v1263
      %v1752 = vpack.c.b16 %v1272, %v1264
      %v1753 = vpack.c.b16 %v1273, %v1265
      %v1754 = vpack.c.b16 %v1274, %v1266
      %v1755 = vpack.c.b16 %v1275, %v1267
      %v1756 = vpack.c.b16 %v1276, %v1268
      %v1757 = vpack.c.b16 %v1285, %v1277
      %v1758 = vpack.c.b16 %v1286, %v1278
      %v1759 = vpack.c.b16 %v1287, %v1279
      %v1760 = vpack.c.b16 %v1288, %v1280
      %v1761 = vpack.c.b16 %v1289, %v1281
      %v1762 = vpack.c.b16 %v1290, %v1282
      %v1763 = vpack.c.b16 %v1291, %v1283
      %v1764 = vpack.c.b16 %v1292, %v1284
      %v1765 = vpack.c.b16 %v1301, %v1293
      %v1766 = vpack.c.b16 %v1302, %v1294
      %v1767 = vpack.c.b16 %v1303, %v1295
      %v1768 = vpack.c.b16 %v1304, %v1296
      %v1769 = vpack.c.b16 %v1305, %v1297
      %v1770 = vpack.c.b16 %v1306, %v1298
      %v1771 = vpack.c.b16 %v1307, %v1299
      %v1772 = vpack.c.b16 %v1308, %v1300
      %v1773 = vpack.c.b16 %v1317, %v1309
      %v1774 = vpack.c.b16 %v1318, %v1310
      %v1775 = vpack.c.b16 %v1319, %v1311
      %v1776 = vpack.c.b16 %v1320, %v1312
      %v1777 = vpack.c.b16 %v1321, %v1313
      %v1778 = vpack.c.b16 %v1322, %v1314
      %v1779 = vpack.c.b16 %v1323, %v1315
      %v1780 = vpack.c.b16 %v1324, %v1316
      %v1781 = vpack.c.b16 %v1333, %v1325
      %v1782 = vpack.c.b16 %v1334, %v1326
      %v1783 = vpack.c.b16 %v1335, %v1327
      %v1784 = vpack.c.b16 %v1336, %v1328
      %v1785 = vpack.c.b16 %v1337, %v1329
      %v1786 = vpack.c.b16 %v1338, %v1330
      %v1787 = vpack.c.b16 %v1339, %v1331
      %v1788 = vpack.c.b16 %v1340, %v1332
      %v1789 = vpack.c.b16 %v1349, %v1341
      %v1790 = vpack.c.b16 %v1350, %v1342
      %v1791 = vpack.c.b16 %v1351, %v1343
      %v1792 = vpack.c.b16 %v1352, %v1344
      %v1793 = vpack.c.b16 %v1353, %v1345
      %v1794 = vpack.c.b16 %v1354, %v1346
      %v1795 = vpack.c.b16 %v1355, %v1347
      %v1796 = vpack.c.b16 %v1356, %v1348
      %v1797 = vpack.c.b16 %v1365, %v1357
      %v1798 = vpack.c.b16 %v1366, %v1358
      %v1799 = vpack.c.b16 %v1367, %v1359
      %v1800 = vpack.c.b16 %v1368, %v1360
      %v1801 = vpack.c.b16 %v1369, %v1361
      %v1802 = vpack.c.b16 %v1370, %v1362
      %v1803 = vpack.c.b16 %v1371, %v1363
      %v1804 = vpack.c.b16 %v1372, %v1364
      %v1805 = vpack.c.b16 %v1381, %v1373
      %v1806 = vpack.c.b16 %v1382, %v1374
      %v1807 = vpack.c.b16 %v1383, %v1375
      %v1808 = vpack.c.b16 %v1384, %v1376
      %v1809 = vpack.c.b16 %v1385, %v1377
      %v1810 = vpack.c.b16 %v1386, %v1378
      %v1811 = vpack.c.b16 %v1387, %v1379
      %v1812 = vpack.c.b16 %v1388, %v1380
      %v1813 = vpack.c.b16 %v1397, %v1389
      %v1814 = vpack.c.b16 %v1398, %v1390
      %v1815 = vpack.c.b16 %v1399, %v1391
      %v1816 = vpack.c.b16 %v1400, %v1392
      %v1817 = vpack.c.b16 %v1401, %v1393
      %v1818 = vpack.c.b16 %v1402, %v1394
      %v1819 = vpack.c.b16 %v1403, %v1395
      %v1820 = vpack.c.b16 %v1404, %v1396
      %v1821 = vpack.c.b16 %v1413, %v1405
      %v1822 = vpack.c.b16 %v1414, %v1406
      %v1823 = vpack.c.b16 %v1415, %v1407
      %v1824 = vpack.c.b16 %v1416, %v1408
      %v1825 = vpack.c.b16 %v1417, %v1409
      %v1826 = vpack.c.b16 %v1418, %v1410
      %v1827 = vpack.c.b16 %v1419, %v1411
      %v1828 = vpack.c.b16 %v1420, %v1412
      %v1829 = vpack.c.b16 %v1429, %v1421
      %v1830 = vpack.c.b16 %v1430, %v1422
      %v1831 = vpack.c.b16 %v1431, %v1423
      %v1832 = vpack.c.b16 %v1432, %v1424
      %v1833 = vpack.c.b16 %v1433, %v1425
      %v1834 = vpack.c.b16 %v1434, %v1426
      %v1835 = vpack.c.b16 %v1435, %v1427
      %v1836 = vpack.c.b16 %v1436, %v1428
      %v1837 = vpack.c.b16 %v1445, %v1437
      %v1838 = vpack.c.b16 %v1446, %v1438
      %v1839 = vpack.c.b16 %v1447, %v1439
      %v1840 = vpack.c.b16 %v1448, %v1440
      %v1841 = vpack.c.b16 %v1449, %v1441
      %v1842 = vpack.c.b16 %v1450, %v1442
      %v1843 = vpack.c.b16 %v1451, %v1443
      %v1844 = vpack.c.b16 %v1452, %v1444
      %v1845 = vpack.c.b16 %v1461, %v1453
      %v1846 = vpack.c.b16 %v1462, %v1454
      %v1847 = vpack.c.b16 %v1463, %v1455
      %v1848 = vpack.c.b16 %v1464, %v1456
      %v1849 = vpack.c.b16 %v1465, %v1457
      %v1850 = vpack.c.b16 %v1466, %v1458
      %v1851 = vpack.c.b16 %v1467, %v1459
      %v1852 = vpack.c.b16 %v1468, %v1460
      %v1853 = vpack.c.b16 %v1477, %v1469
      %v1854 = vpack.c.b16 %v1478, %v1470
      %v1855 = vpack.c.b16 %v1479, %v1471
      %v1856 = vpack.c.b16 %v1480, %v1472
      %v1857 = vpack.c.b16 %v1481, %v1473
      %v1858 = vpack.c.b16 %v1482, %v1474
      %v1859 = vpack.c.b16 %v1483, %v1475
      %v1860 = vpack.c.b16 %v1484, %v1476
      %v1861 = vpack.c.b16 %v1493, %v1485
      %v1862 = vpack.c.b16 %v1494, %v1486
      %v1863 = vpack.c.b16 %v1495, %v1487
      %v1864 = vpack.c.b16 %v1496, %v1488
      %v1865 = vpack.c.b16 %v1497, %v1489
      %v1866 = vpack.c.b16 %v1498, %v1490
      %v1867 = vpack.c.b16 %v1499, %v1491
      %v1868 = vpack.c.b16 %v1500, %v1492
      %v1869 = vpack.c.b16 %v1509, %v1501
      %v1870 = vpack.c.b16 %v1510, %v1502
      %v1871 = vpack.c.b16 %v1511, %v1503
      %v1872 = vpack.c.b16 %v1512, %v1504
      %v1873 = vpack.c.b16 %v1513, %v1505
      %v1874 = vpack.c.b16 %v1514, %v1506
      %v1875 = vpack.c.b16 %v1515, %v1507
      %v1876 = vpack.c.b16 %v1516, %v1508
      %v1877 = vpack.c.b16 %v1525, %v1517
      %v1878 = vpack.c.b16 %v1526, %v1518
      %v1879 = vpack.c.b16 %v1527, %v1519
      %v1880 = vpack.c.b16 %v1528, %v1520
      %v1881 = vpack.c.b16 %v1529, %v1521
      %v1882 = vpack.c.b16 %v1530, %v1522
      %v1883 = vpack.c.b16 %v1531, %v1523
      %v1884 = vpack.c.b16 %v1532, %v1524
      %v1885 = vpack.c.b16 %v1541, %v1533
      %v1886 = vpack.c.b16 %v1542, %v1534
      %v1887 = vpack.c.b16 %v1543, %v1535
      %v1888 = vpack.c.b16 %v1544, %v1536
      %v1889 = vpack.c.b16 %v1545, %v1537
      %v1890 = vpack.c.b16 %v1546, %v1538
      %v1891 = vpack.c.b16 %v1547, %v1539
      %v1892 = vpack.c.b16 %v1548, %v1540
      %v1893 = vpack.c.b16 %v1557, %v1549
      %v1894 = vpack.c.b16 %v1558, %v1550
      %v1895 = vpack.c.b16 %v1559, %v1551
      %v1896 = vpack.c.b16 %v1560, %v1552
      %v1897 = vpack.c.b16 %v1561, %v1553
      %v1898 = vpack.c.b16 %v1562, %v1554
      %v1899 = vpack.c.b16 %v1563, %v1555
      %v1900 = vpack.c.b16 %v1564, %v1556
      %v1901 = vpack.c.b16 %v1573, %v1565
      %v1902 = vpack.c.b16 %v1574, %v1566
      %v1903 = vpack.c.b16 %v1575, %v1567
      %v1904 = vpack.c.b16 %v1576, %v1568
      %v1905 = vpack.c.b16 %v1577, %v1569
      %v1906 = vpack.c.b16 %v1578, %v1570
      %v1907 = vpack.c.b16 %v1579, %v1571
      %v1908 = vpack.c.b16 %v1580, %v1572
      %v1909 = vpack.c.b16 %v1589, %v1581
      %v1910 = vpack.c.b16 %v1590, %v1582
      %v1911 = vpack.c.b16 %v1591, %v1583
      %v1912 = vpack.c.b16 %v1592, %v1584
      %v1913 = vpack.c.b16 %v1593, %v1585
      %v1914 = vpack.c.b16 %v1594, %v1586
      %v1915 = vpack.c.b16 %v1595, %v1587
      %v1916 = vpack.c.b16 %v1596, %v1588
      %2237 = vmatpush.bf16.msra.mxu0 %v1653
      %2238 = vmatpush.bf16.msra.mxu0 %v1645
      %2239 = vmatpush.bf16.msra.mxu0 %v1637
      %2240 = vmatpush.bf16.msra.mxu0 %v1629
      %2241 = vmatpush.bf16.msra.mxu0 %v1621
      %2242 = vmatpush.bf16.msra.mxu0 %v1613
      %2243 = vmatpush.bf16.msra.mxu0 %v1605
      %2244 = vmatpush.bf16.msra.mxu0 %v1597
      %2245 = vmatmul.bf16.gmra.mxu0 %v627
      %v2246 = vpop.f32.mrf.mxu0
      %v2247 = vadd.f32 0.0, %v2246
      %v2248 = vpop.f32.mrf.mxu0
      %2249 = vdwg.mxu0
      %2250 = vmatpush.bf16.msra.mxu0 %v1717
      %2251 = vmatpush.bf16.msra.mxu0 %v1709
      %2252 = vmatpush.bf16.msra.mxu0 %v1701
      %2253 = vmatpush.bf16.msra.mxu0 %v1693
      %2254 = vmatpush.bf16.msra.mxu0 %v1685
      %2255 = vmatpush.bf16.msra.mxu0 %v1677
      %2256 = vmatpush.bf16.msra.mxu0 %v1669
      %2257 = vmatpush.bf16.msra.mxu0 %v1661
      %2258 = vmatmul.bf16.gmra.mxu0 %v628
      %v2259 = vpop.f32.mrf.mxu0
      %v2260 = vadd.f32 %v2247, %v2259
      %v2261 = vpop.f32.mrf.mxu0
      %2262 = vdwg.mxu0
      %2263 = vmatpush.bf16.msra.mxu0 %v1781
      %2264 = vmatpush.bf16.msra.mxu0 %v1773
      %2265 = vmatpush.bf16.msra.mxu0 %v1765
      %2266 = vmatpush.bf16.msra.mxu0 %v1757
      %2267 = vmatpush.bf16.msra.mxu0 %v1749
      %2268 = vmatpush.bf16.msra.mxu0 %v1741
      %2269 = vmatpush.bf16.msra.mxu0 %v1733
      %2270 = vmatpush.bf16.msra.mxu0 %v1725
      %2271 = vmatmul.bf16.gmra.mxu0 %v629
      %v2272 = vpop.f32.mrf.mxu0
      %v2273 = vadd.f32 %v2260, %v2272
      %v2274 = vpop.f32.mrf.mxu0
      %2275 = vdwg.mxu0
      %2276 = vmatpush.bf16.msra.mxu0 %v1845
      %2277 = vmatpush.bf16.msra.mxu0 %v1837
      %2278 = vmatpush.bf16.msra.mxu0 %v1829
      %2279 = vmatpush.bf16.msra.mxu0 %v1821
      %2280 = vmatpush.bf16.msra.mxu0 %v1813
      %2281 = vmatpush.bf16.msra.mxu0 %v1805
      %2282 = vmatpush.bf16.msra.mxu0 %v1797
      %2283 = vmatpush.bf16.msra.mxu0 %v1789
      %2284 = vmatmul.bf16.gmra.mxu0 %v630
      %v2285 = vpop.f32.mrf.mxu0
      %v2286 = vadd.f32 %v2273, %v2285
      %v2287 = vpop.f32.mrf.mxu0
      %2288 = vdwg.mxu0
      %2289 = vmatpush.bf16.msra.mxu0 %v1909
      %2290 = vmatpush.bf16.msra.mxu0 %v1901
      %2291 = vmatpush.bf16.msra.mxu0 %v1893
      %2292 = vmatpush.bf16.msra.mxu0 %v1885
      %2293 = vmatpush.bf16.msra.mxu0 %v1877
      %2294 = vmatpush.bf16.msra.mxu0 %v1869
      %2295 = vmatpush.bf16.msra.mxu0 %v1861
      %2296 = vmatpush.bf16.msra.mxu0 %v1853
      %2297 = vmatmul.bf16.gmra.mxu0 %v631
      %v2298 = vpop.f32.mrf.mxu0
      %v2299 = vadd.f32 %v2286, %v2298
      %v2300 = vpop.f32.mrf.mxu0
      %2301 = vdwg.mxu0
      %2302 = vmatpush.bf16.msra.mxu0 %v1654
      %2303 = vmatpush.bf16.msra.mxu0 %v1646
      %2304 = vmatpush.bf16.msra.mxu0 %v1638
      %2305 = vmatpush.bf16.msra.mxu0 %v1630
      %2306 = vmatpush.bf16.msra.mxu0 %v1622
      %2307 = vmatpush.bf16.msra.mxu0 %v1614
      %2308 = vmatpush.bf16.msra.mxu0 %v1606
      %2309 = vmatpush.bf16.msra.mxu0 %v1598
      %2310 = vmatmul.bf16.gmra.mxu0 %v627
      %v2311 = vpop.f32.mrf.mxu0
      %v2312 = vadd.f32 0.0, %v2311
      %v2313 = vpop.f32.mrf.mxu0
      %2314 = vdwg.mxu0
      %2315 = vmatpush.bf16.msra.mxu0 %v1718
      %2316 = vmatpush.bf16.msra.mxu0 %v1710
      %2317 = vmatpush.bf16.msra.mxu0 %v1702
      %2318 = vmatpush.bf16.msra.mxu0 %v1694
      %2319 = vmatpush.bf16.msra.mxu0 %v1686
      %2320 = vmatpush.bf16.msra.mxu0 %v1678
      %2321 = vmatpush.bf16.msra.mxu0 %v1670
      %2322 = vmatpush.bf16.msra.mxu0 %v1662
      %2323 = vmatmul.bf16.gmra.mxu0 %v628
      %v2324 = vpop.f32.mrf.mxu0
      %v2325 = vadd.f32 %v2312, %v2324
      %v2326 = vpop.f32.mrf.mxu0
      %2327 = vdwg.mxu0
      %2328 = vmatpush.bf16.msra.mxu0 %v1782
      %2329 = vmatpush.bf16.msra.mxu0 %v1774
      %2330 = vmatpush.bf16.msra.mxu0 %v1766
      %2331 = vmatpush.bf16.msra.mxu0 %v1758
      %2332 = vmatpush.bf16.msra.mxu0 %v1750
      %2333 = vmatpush.bf16.msra.mxu0 %v1742
      %2334 = vmatpush.bf16.msra.mxu0 %v1734
      %2335 = vmatpush.bf16.msra.mxu0 %v1726
      %2336 = vmatmul.bf16.gmra.mxu0 %v629
      %v2337 = vpop.f32.mrf.mxu0
      %v2338 = vadd.f32 %v2325, %v2337
      %v2339 = vpop.f32.mrf.mxu0
      %2340 = vdwg.mxu0
      %2341 = vmatpush.bf16.msra.mxu0 %v1846
      %2342 = vmatpush.bf16.msra.mxu0 %v1838
      %2343 = vmatpush.bf16.msra.mxu0 %v1830
      %2344 = vmatpush.bf16.msra.mxu0 %v1822
      %2345 = vmatpush.bf16.msra.mxu0 %v1814
      %2346 = vmatpush.bf16.msra.mxu0 %v1806
      %2347 = vmatpush.bf16.msra.mxu0 %v1798
      %2348 = vmatpush.bf16.msra.mxu0 %v1790
      %2349 = vmatmul.bf16.gmra.mxu0 %v630
      %v2350 = vpop.f32.mrf.mxu0
      %v2351 = vadd.f32 %v2338, %v2350
      %v2352 = vpop.f32.mrf.mxu0
      %2353 = vdwg.mxu0
      %2354 = vmatpush.bf16.msra.mxu0 %v1910
      %2355 = vmatpush.bf16.msra.mxu0 %v1902
      %2356 = vmatpush.bf16.msra.mxu0 %v1894
      %2357 = vmatpush.bf16.msra.mxu0 %v1886
      %2358 = vmatpush.bf16.msra.mxu0 %v1878
      %2359 = vmatpush.bf16.msra.mxu0 %v1870
      %2360 = vmatpush.bf16.msra.mxu0 %v1862
      %2361 = vmatpush.bf16.msra.mxu0 %v1854
      %2362 = vmatmul.bf16.gmra.mxu0 %v631
      %v2363 = vpop.f32.mrf.mxu0
      %v2364 = vadd.f32 %v2351, %v2363
      %v2365 = vpop.f32.mrf.mxu0
      %2366 = vdwg.mxu0
      %2367 = vmatpush.bf16.msra.mxu0 %v1655
      %2368 = vmatpush.bf16.msra.mxu0 %v1647
      %2369 = vmatpush.bf16.msra.mxu0 %v1639
      %2370 = vmatpush.bf16.msra.mxu0 %v1631
      %2371 = vmatpush.bf16.msra.mxu0 %v1623
      %2372 = vmatpush.bf16.msra.mxu0 %v1615
      %2373 = vmatpush.bf16.msra.mxu0 %v1607
      %2374 = vmatpush.bf16.msra.mxu0 %v1599
      %2375 = vmatmul.bf16.gmra.mxu0 %v627
      %v2376 = vpop.f32.mrf.mxu0
      %v2377 = vadd.f32 0.0, %v2376
      %v2378 = vpop.f32.mrf.mxu0
      %2379 = vdwg.mxu0
      %2380 = vmatpush.bf16.msra.mxu0 %v1719
      %2381 = vmatpush.bf16.msra.mxu0 %v1711
      %2382 = vmatpush.bf16.msra.mxu0 %v1703
      %2383 = vmatpush.bf16.msra.mxu0 %v1695
      %2384 = vmatpush.bf16.msra.mxu0 %v1687
      %2385 = vmatpush.bf16.msra.mxu0 %v1679
      %2386 = vmatpush.bf16.msra.mxu0 %v1671
      %2387 = vmatpush.bf16.msra.mxu0 %v1663
      %2388 = vmatmul.bf16.gmra.mxu0 %v628
      %v2389 = vpop.f32.mrf.mxu0
      %v2390 = vadd.f32 %v2377, %v2389
      %v2391 = vpop.f32.mrf.mxu0
      %2392 = vdwg.mxu0
      %2393 = vmatpush.bf16.msra.mxu0 %v1783
      %2394 = vmatpush.bf16.msra.mxu0 %v1775
      %2395 = vmatpush.bf16.msra.mxu0 %v1767
      %2396 = vmatpush.bf16.msra.mxu0 %v1759
      %2397 = vmatpush.bf16.msra.mxu0 %v1751
      %2398 = vmatpush.bf16.msra.mxu0 %v1743
      %2399 = vmatpush.bf16.msra.mxu0 %v1735
      %2400 = vmatpush.bf16.msra.mxu0 %v1727
      %2401 = vmatmul.bf16.gmra.mxu0 %v629
      %v2402 = vpop.f32.mrf.mxu0
      %v2403 = vadd.f32 %v2390, %v2402
      %v2404 = vpop.f32.mrf.mxu0
      %2405 = vdwg.mxu0
      %2406 = vmatpush.bf16.msra.mxu0 %v1847
      %2407 = vmatpush.bf16.msra.mxu0 %v1839
      %2408 = vmatpush.bf16.msra.mxu0 %v1831
      %2409 = vmatpush.bf16.msra.mxu0 %v1823
      %2410 = vmatpush.bf16.msra.mxu0 %v1815
      %2411 = vmatpush.bf16.msra.mxu0 %v1807
      %2412 = vmatpush.bf16.msra.mxu0 %v1799
      %2413 = vmatpush.bf16.msra.mxu0 %v1791
      %2414 = vmatmul.bf16.gmra.mxu0 %v630
      %v2415 = vpop.f32.mrf.mxu0
      %v2416 = vadd.f32 %v2403, %v2415
      %v2417 = vpop.f32.mrf.mxu0
      %2418 = vdwg.mxu0
      %2419 = vmatpush.bf16.msra.mxu0 %v1911
      %2420 = vmatpush.bf16.msra.mxu0 %v1903
      %2421 = vmatpush.bf16.msra.mxu0 %v1895
      %2422 = vmatpush.bf16.msra.mxu0 %v1887
      %2423 = vmatpush.bf16.msra.mxu0 %v1879
      %2424 = vmatpush.bf16.msra.mxu0 %v1871
      %2425 = vmatpush.bf16.msra.mxu0 %v1863
      %2426 = vmatpush.bf16.msra.mxu0 %v1855
      %2427 = vmatmul.bf16.gmra.mxu0 %v631
      %v2428 = vpop.f32.mrf.mxu0
      %v2429 = vadd.f32 %v2416, %v2428
      %v2430 = vpop.f32.mrf.mxu0
      %2431 = vdwg.mxu0
      %2432 = vmatpush.bf16.msra.mxu0 %v1656
      %2433 = vmatpush.bf16.msra.mxu0 %v1648
      %2434 = vmatpush.bf16.msra.mxu0 %v1640
      %2435 = vmatpush.bf16.msra.mxu0 %v1632
      %2436 = vmatpush.bf16.msra.mxu0 %v1624
      %2437 = vmatpush.bf16.msra.mxu0 %v1616
      %2438 = vmatpush.bf16.msra.mxu0 %v1608
      %2439 = vmatpush.bf16.msra.mxu0 %v1600
      %2440 = vmatmul.bf16.gmra.mxu0 %v627
      %v2441 = vpop.f32.mrf.mxu0
      %v2442 = vadd.f32 0.0, %v2441
      %v2443 = vpop.f32.mrf.mxu0
      %2444 = vdwg.mxu0
      %2445 = vmatpush.bf16.msra.mxu0 %v1720
      %2446 = vmatpush.bf16.msra.mxu0 %v1712
      %2447 = vmatpush.bf16.msra.mxu0 %v1704
      %2448 = vmatpush.bf16.msra.mxu0 %v1696
      %2449 = vmatpush.bf16.msra.mxu0 %v1688
      %2450 = vmatpush.bf16.msra.mxu0 %v1680
      %2451 = vmatpush.bf16.msra.mxu0 %v1672
      %2452 = vmatpush.bf16.msra.mxu0 %v1664
      %2453 = vmatmul.bf16.gmra.mxu0 %v628
      %v2454 = vpop.f32.mrf.mxu0
      %v2455 = vadd.f32 %v2442, %v2454
      %v2456 = vpop.f32.mrf.mxu0
      %2457 = vdwg.mxu0
      %2458 = vmatpush.bf16.msra.mxu0 %v1784
      %2459 = vmatpush.bf16.msra.mxu0 %v1776
      %2460 = vmatpush.bf16.msra.mxu0 %v1768
      %2461 = vmatpush.bf16.msra.mxu0 %v1760
      %2462 = vmatpush.bf16.msra.mxu0 %v1752
      %2463 = vmatpush.bf16.msra.mxu0 %v1744
      %2464 = vmatpush.bf16.msra.mxu0 %v1736
      %2465 = vmatpush.bf16.msra.mxu0 %v1728
      %2466 = vmatmul.bf16.gmra.mxu0 %v629
      %v2467 = vpop.f32.mrf.mxu0
      %v2468 = vadd.f32 %v2455, %v2467
      %v2469 = vpop.f32.mrf.mxu0
      %2470 = vdwg.mxu0
      %2471 = vmatpush.bf16.msra.mxu0 %v1848
      %2472 = vmatpush.bf16.msra.mxu0 %v1840
      %2473 = vmatpush.bf16.msra.mxu0 %v1832
      %2474 = vmatpush.bf16.msra.mxu0 %v1824
      %2475 = vmatpush.bf16.msra.mxu0 %v1816
      %2476 = vmatpush.bf16.msra.mxu0 %v1808
      %2477 = vmatpush.bf16.msra.mxu0 %v1800
      %2478 = vmatpush.bf16.msra.mxu0 %v1792
      %2479 = vmatmul.bf16.gmra.mxu0 %v630
      %v2480 = vpop.f32.mrf.mxu0
      %v2481 = vadd.f32 %v2468, %v2480
      %v2482 = vpop.f32.mrf.mxu0
      %2483 = vdwg.mxu0
      %2484 = vmatpush.bf16.msra.mxu0 %v1912
      %2485 = vmatpush.bf16.msra.mxu0 %v1904
      %2486 = vmatpush.bf16.msra.mxu0 %v1896
      %2487 = vmatpush.bf16.msra.mxu0 %v1888
      %2488 = vmatpush.bf16.msra.mxu0 %v1880
      %2489 = vmatpush.bf16.msra.mxu0 %v1872
      %2490 = vmatpush.bf16.msra.mxu0 %v1864
      %2491 = vmatpush.bf16.msra.mxu0 %v1856
      %2492 = vmatmul.bf16.gmra.mxu0 %v631
      %v2493 = vpop.f32.mrf.mxu0
      %v2494 = vadd.f32 %v2481, %v2493
      %v2495 = vpop.f32.mrf.mxu0
      %2496 = vdwg.mxu0
      %2497 = vmatpush.bf16.msra.mxu0 %v1657
      %2498 = vmatpush.bf16.msra.mxu0 %v1649
      %2499 = vmatpush.bf16.msra.mxu0 %v1641
      %2500 = vmatpush.bf16.msra.mxu0 %v1633
      %2501 = vmatpush.bf16.msra.mxu0 %v1625
      %2502 = vmatpush.bf16.msra.mxu0 %v1617
      %2503 = vmatpush.bf16.msra.mxu0 %v1609
      %2504 = vmatpush.bf16.msra.mxu0 %v1601
      %2505 = vmatmul.bf16.gmra.mxu0 %v627
      %v2506 = vpop.f32.mrf.mxu0
      %v2507 = vadd.f32 0.0, %v2506
      %v2508 = vpop.f32.mrf.mxu0
      %2509 = vdwg.mxu0
      %2510 = vmatpush.bf16.msra.mxu0 %v1721
      %2511 = vmatpush.bf16.msra.mxu0 %v1713
      %2512 = vmatpush.bf16.msra.mxu0 %v1705
      %2513 = vmatpush.bf16.msra.mxu0 %v1697
      %2514 = vmatpush.bf16.msra.mxu0 %v1689
      %2515 = vmatpush.bf16.msra.mxu0 %v1681
      %2516 = vmatpush.bf16.msra.mxu0 %v1673
      %2517 = vmatpush.bf16.msra.mxu0 %v1665
      %2518 = vmatmul.bf16.gmra.mxu0 %v628
      %v2519 = vpop.f32.mrf.mxu0
      %v2520 = vadd.f32 %v2507, %v2519
      %v2521 = vpop.f32.mrf.mxu0
      %2522 = vdwg.mxu0
      %2523 = vmatpush.bf16.msra.mxu0 %v1785
      %2524 = vmatpush.bf16.msra.mxu0 %v1777
      %2525 = vmatpush.bf16.msra.mxu0 %v1769
      %2526 = vmatpush.bf16.msra.mxu0 %v1761
      %2527 = vmatpush.bf16.msra.mxu0 %v1753
      %2528 = vmatpush.bf16.msra.mxu0 %v1745
      %2529 = vmatpush.bf16.msra.mxu0 %v1737
      %2530 = vmatpush.bf16.msra.mxu0 %v1729
      %2531 = vmatmul.bf16.gmra.mxu0 %v629
      %v2532 = vpop.f32.mrf.mxu0
      %v2533 = vadd.f32 %v2520, %v2532
      %v2534 = vpop.f32.mrf.mxu0
      %2535 = vdwg.mxu0
      %2536 = vmatpush.bf16.msra.mxu0 %v1849
      %2537 = vmatpush.bf16.msra.mxu0 %v1841
      %2538 = vmatpush.bf16.msra.mxu0 %v1833
      %2539 = vmatpush.bf16.msra.mxu0 %v1825
      %2540 = vmatpush.bf16.msra.mxu0 %v1817
      %2541 = vmatpush.bf16.msra.mxu0 %v1809
      %2542 = vmatpush.bf16.msra.mxu0 %v1801
      %2543 = vmatpush.bf16.msra.mxu0 %v1793
      %2544 = vmatmul.bf16.gmra.mxu0 %v630
      %v2545 = vpop.f32.mrf.mxu0
      %v2546 = vadd.f32 %v2533, %v2545
      %v2547 = vpop.f32.mrf.mxu0
      %2548 = vdwg.mxu0
      %2549 = vmatpush.bf16.msra.mxu0 %v1913
      %2550 = vmatpush.bf16.msra.mxu0 %v1905
      %2551 = vmatpush.bf16.msra.mxu0 %v1897
      %2552 = vmatpush.bf16.msra.mxu0 %v1889
      %2553 = vmatpush.bf16.msra.mxu0 %v1881
      %2554 = vmatpush.bf16.msra.mxu0 %v1873
      %2555 = vmatpush.bf16.msra.mxu0 %v1865
      %2556 = vmatpush.bf16.msra.mxu0 %v1857
      %2557 = vmatmul.bf16.gmra.mxu0 %v631
      %v2558 = vpop.f32.mrf.mxu0
      %v2559 = vadd.f32 %v2546, %v2558
      %v2560 = vpop.f32.mrf.mxu0
      %2561 = vdwg.mxu0
      %2562 = vmatpush.bf16.msra.mxu0 %v1658
      %2563 = vmatpush.bf16.msra.mxu0 %v1650
      %2564 = vmatpush.bf16.msra.mxu0 %v1642
      %2565 = vmatpush.bf16.msra.mxu0 %v1634
      %2566 = vmatpush.bf16.msra.mxu0 %v1626
      %2567 = vmatpush.bf16.msra.mxu0 %v1618
      %2568 = vmatpush.bf16.msra.mxu0 %v1610
      %2569 = vmatpush.bf16.msra.mxu0 %v1602
      %2570 = vmatmul.bf16.gmra.mxu0 %v627
      %v2571 = vpop.f32.mrf.mxu0
      %v2572 = vadd.f32 0.0, %v2571
      %v2573 = vpop.f32.mrf.mxu0
      %2574 = vdwg.mxu0
      %2575 = vmatpush.bf16.msra.mxu0 %v1722
      %2576 = vmatpush.bf16.msra.mxu0 %v1714
      %2577 = vmatpush.bf16.msra.mxu0 %v1706
      %2578 = vmatpush.bf16.msra.mxu0 %v1698
      %2579 = vmatpush.bf16.msra.mxu0 %v1690
      %2580 = vmatpush.bf16.msra.mxu0 %v1682
      %2581 = vmatpush.bf16.msra.mxu0 %v1674
      %2582 = vmatpush.bf16.msra.mxu0 %v1666
      %2583 = vmatmul.bf16.gmra.mxu0 %v628
      %v2584 = vpop.f32.mrf.mxu0
      %v2585 = vadd.f32 %v2572, %v2584
      %v2586 = vpop.f32.mrf.mxu0
      %2587 = vdwg.mxu0
      %2588 = vmatpush.bf16.msra.mxu0 %v1786
      %2589 = vmatpush.bf16.msra.mxu0 %v1778
      %2590 = vmatpush.bf16.msra.mxu0 %v1770
      %2591 = vmatpush.bf16.msra.mxu0 %v1762
      %2592 = vmatpush.bf16.msra.mxu0 %v1754
      %2593 = vmatpush.bf16.msra.mxu0 %v1746
      %2594 = vmatpush.bf16.msra.mxu0 %v1738
      %2595 = vmatpush.bf16.msra.mxu0 %v1730
      %2596 = vmatmul.bf16.gmra.mxu0 %v629
      %v2597 = vpop.f32.mrf.mxu0
      %v2598 = vadd.f32 %v2585, %v2597
      %v2599 = vpop.f32.mrf.mxu0
      %2600 = vdwg.mxu0
      %2601 = vmatpush.bf16.msra.mxu0 %v1850
      %2602 = vmatpush.bf16.msra.mxu0 %v1842
      %2603 = vmatpush.bf16.msra.mxu0 %v1834
      %2604 = vmatpush.bf16.msra.mxu0 %v1826
      %2605 = vmatpush.bf16.msra.mxu0 %v1818
      %2606 = vmatpush.bf16.msra.mxu0 %v1810
      %2607 = vmatpush.bf16.msra.mxu0 %v1802
      %2608 = vmatpush.bf16.msra.mxu0 %v1794
      %2609 = vmatmul.bf16.gmra.mxu0 %v630
      %v2610 = vpop.f32.mrf.mxu0
      %v2611 = vadd.f32 %v2598, %v2610
      %v2612 = vpop.f32.mrf.mxu0
      %2613 = vdwg.mxu0
      %2614 = vmatpush.bf16.msra.mxu0 %v1914
      %2615 = vmatpush.bf16.msra.mxu0 %v1906
      %2616 = vmatpush.bf16.msra.mxu0 %v1898
      %2617 = vmatpush.bf16.msra.mxu0 %v1890
      %2618 = vmatpush.bf16.msra.mxu0 %v1882
      %2619 = vmatpush.bf16.msra.mxu0 %v1874
      %2620 = vmatpush.bf16.msra.mxu0 %v1866
      %2621 = vmatpush.bf16.msra.mxu0 %v1858
      %2622 = vmatmul.bf16.gmra.mxu0 %v631
      %v2623 = vpop.f32.mrf.mxu0
      %v2624 = vadd.f32 %v2611, %v2623
      %v2625 = vpop.f32.mrf.mxu0
      %2626 = vdwg.mxu0
      %2627 = vmatpush.bf16.msra.mxu0 %v1659
      %2628 = vmatpush.bf16.msra.mxu0 %v1651
      %2629 = vmatpush.bf16.msra.mxu0 %v1643
      %2630 = vmatpush.bf16.msra.mxu0 %v1635
      %2631 = vmatpush.bf16.msra.mxu0 %v1627
      %2632 = vmatpush.bf16.msra.mxu0 %v1619
      %2633 = vmatpush.bf16.msra.mxu0 %v1611
      %2634 = vmatpush.bf16.msra.mxu0 %v1603
      %2635 = vmatmul.bf16.gmra.mxu0 %v627
      %v2636 = vpop.f32.mrf.mxu0
      %v2637 = vadd.f32 0.0, %v2636
      %v2638 = vpop.f32.mrf.mxu0
      %2639 = vdwg.mxu0
      %2640 = vmatpush.bf16.msra.mxu0 %v1723
      %2641 = vmatpush.bf16.msra.mxu0 %v1715
      %2642 = vmatpush.bf16.msra.mxu0 %v1707
      %2643 = vmatpush.bf16.msra.mxu0 %v1699
      %2644 = vmatpush.bf16.msra.mxu0 %v1691
      %2645 = vmatpush.bf16.msra.mxu0 %v1683
      %2646 = vmatpush.bf16.msra.mxu0 %v1675
      %2647 = vmatpush.bf16.msra.mxu0 %v1667
      %2648 = vmatmul.bf16.gmra.mxu0 %v628
      %v2649 = vpop.f32.mrf.mxu0
      %v2650 = vadd.f32 %v2637, %v2649
      %v2651 = vpop.f32.mrf.mxu0
      %2652 = vdwg.mxu0
      %2653 = vmatpush.bf16.msra.mxu0 %v1787
      %2654 = vmatpush.bf16.msra.mxu0 %v1779
      %2655 = vmatpush.bf16.msra.mxu0 %v1771
      %2656 = vmatpush.bf16.msra.mxu0 %v1763
      %2657 = vmatpush.bf16.msra.mxu0 %v1755
      %2658 = vmatpush.bf16.msra.mxu0 %v1747
      %2659 = vmatpush.bf16.msra.mxu0 %v1739
      %2660 = vmatpush.bf16.msra.mxu0 %v1731
      %2661 = vmatmul.bf16.gmra.mxu0 %v629
      %v2662 = vpop.f32.mrf.mxu0
      %v2663 = vadd.f32 %v2650, %v2662
      %v2664 = vpop.f32.mrf.mxu0
      %2665 = vdwg.mxu0
      %2666 = vmatpush.bf16.msra.mxu0 %v1851
      %2667 = vmatpush.bf16.msra.mxu0 %v1843
      %2668 = vmatpush.bf16.msra.mxu0 %v1835
      %2669 = vmatpush.bf16.msra.mxu0 %v1827
      %2670 = vmatpush.bf16.msra.mxu0 %v1819
      %2671 = vmatpush.bf16.msra.mxu0 %v1811
      %2672 = vmatpush.bf16.msra.mxu0 %v1803
      %2673 = vmatpush.bf16.msra.mxu0 %v1795
      %2674 = vmatmul.bf16.gmra.mxu0 %v630
      %v2675 = vpop.f32.mrf.mxu0
      %v2676 = vadd.f32 %v2663, %v2675
      %v2677 = vpop.f32.mrf.mxu0
      %2678 = vdwg.mxu0
      %2679 = vmatpush.bf16.msra.mxu0 %v1915
      %2680 = vmatpush.bf16.msra.mxu0 %v1907
      %2681 = vmatpush.bf16.msra.mxu0 %v1899
      %2682 = vmatpush.bf16.msra.mxu0 %v1891
      %2683 = vmatpush.bf16.msra.mxu0 %v1883
      %2684 = vmatpush.bf16.msra.mxu0 %v1875
      %2685 = vmatpush.bf16.msra.mxu0 %v1867
      %2686 = vmatpush.bf16.msra.mxu0 %v1859
      %2687 = vmatmul.bf16.gmra.mxu0 %v631
      %v2688 = vpop.f32.mrf.mxu0
      %v2689 = vadd.f32 %v2676, %v2688
      %v2690 = vpop.f32.mrf.mxu0
      %2691 = vdwg.mxu0
      %2692 = vmatpush.bf16.msra.mxu0 %v1660
      %2693 = vmatpush.bf16.msra.mxu0 %v1652
      %2694 = vmatpush.bf16.msra.mxu0 %v1644
      %2695 = vmatpush.bf16.msra.mxu0 %v1636
      %2696 = vmatpush.bf16.msra.mxu0 %v1628
      %2697 = vmatpush.bf16.msra.mxu0 %v1620
      %2698 = vmatpush.bf16.msra.mxu0 %v1612
      %2699 = vmatpush.bf16.msra.mxu0 %v1604
      %2700 = vmatmul.bf16.gmra.mxu0 %v627
      %v2701 = vpop.f32.mrf.mxu0
      %v2702 = vadd.f32 0.0, %v2701
      %v2703 = vpop.f32.mrf.mxu0
      %2704 = vdwg.mxu0
      %2705 = vmatpush.bf16.msra.mxu0 %v1724
      %2706 = vmatpush.bf16.msra.mxu0 %v1716
      %2707 = vmatpush.bf16.msra.mxu0 %v1708
      %2708 = vmatpush.bf16.msra.mxu0 %v1700
      %2709 = vmatpush.bf16.msra.mxu0 %v1692
      %2710 = vmatpush.bf16.msra.mxu0 %v1684
      %2711 = vmatpush.bf16.msra.mxu0 %v1676
      %2712 = vmatpush.bf16.msra.mxu0 %v1668
      %2713 = vmatmul.bf16.gmra.mxu0 %v628
      %v2714 = vpop.f32.mrf.mxu0
      %v2715 = vadd.f32 %v2702, %v2714
      %v2716 = vpop.f32.mrf.mxu0
      %2717 = vdwg.mxu0
      %2718 = vmatpush.bf16.msra.mxu0 %v1788
      %2719 = vmatpush.bf16.msra.mxu0 %v1780
      %2720 = vmatpush.bf16.msra.mxu0 %v1772
      %2721 = vmatpush.bf16.msra.mxu0 %v1764
      %2722 = vmatpush.bf16.msra.mxu0 %v1756
      %2723 = vmatpush.bf16.msra.mxu0 %v1748
      %2724 = vmatpush.bf16.msra.mxu0 %v1740
      %2725 = vmatpush.bf16.msra.mxu0 %v1732
      %2726 = vmatmul.bf16.gmra.mxu0 %v629
      %v2727 = vpop.f32.mrf.mxu0
      %v2728 = vadd.f32 %v2715, %v2727
      %v2729 = vpop.f32.mrf.mxu0
      %2730 = vdwg.mxu0
      %2731 = vmatpush.bf16.msra.mxu0 %v1852
      %2732 = vmatpush.bf16.msra.mxu0 %v1844
      %2733 = vmatpush.bf16.msra.mxu0 %v1836
      %2734 = vmatpush.bf16.msra.mxu0 %v1828
      %2735 = vmatpush.bf16.msra.mxu0 %v1820
      %2736 = vmatpush.bf16.msra.mxu0 %v1812
      %2737 = vmatpush.bf16.msra.mxu0 %v1804
      %2738 = vmatpush.bf16.msra.mxu0 %v1796
      %2739 = vmatmul.bf16.gmra.mxu0 %v630
      %v2740 = vpop.f32.mrf.mxu0
      %v2741 = vadd.f32 %v2728, %v2740
      %v2742 = vpop.f32.mrf.mxu0
      %2743 = vdwg.mxu0
      %2744 = vmatpush.bf16.msra.mxu0 %v1916
      %2745 = vmatpush.bf16.msra.mxu0 %v1908
      %2746 = vmatpush.bf16.msra.mxu0 %v1900
      %2747 = vmatpush.bf16.msra.mxu0 %v1892
      %2748 = vmatpush.bf16.msra.mxu0 %v1884
      %2749 = vmatpush.bf16.msra.mxu0 %v1876
      %2750 = vmatpush.bf16.msra.mxu0 %v1868
      %2751 = vmatpush.bf16.msra.mxu0 %v1860
      %2752 = vmatmul.bf16.gmra.mxu0 %v631
      %v2753 = vpop.f32.mrf.mxu0
      %v2754 = vadd.f32 %v2741, %v2753
      %v2755 = vpop.f32.mrf.mxu0
      %2756 = vdwg.mxu0
      %v2757 = vadd.f32 %v288, %v2299
      %v2758 = vadd.f32 %v289, %v2364
      %v2759 = vadd.f32 %v290, %v2429
      %v2760 = vadd.f32 %v291, %v2494
      %v2761 = vadd.f32 %v292, %v2559
      %v2762 = vadd.f32 %v293, %v2624
      %v2763 = vadd.f32 %v294, %v2689
      %v2764 = vadd.f32 %v295, %v2754
      %2765 = vst [vmem:[#allocation2] sm:$0xff] %v2757
      %2766 = vst [vmem:[#allocation2 + $0x8] sm:$0xff] %v2758
      %2767 = vst [vmem:[#allocation2 + $0x10] sm:$0xff] %v2759
      %2768 = vst [vmem:[#allocation2 + $0x18] sm:$0xff] %v2760
      %2769 = vst [vmem:[#allocation2 + $0x20] sm:$0xff] %v2761
      %2770 = vst [vmem:[#allocation2 + $0x28] sm:$0xff] %v2762
      %2771 = vst [vmem:[#allocation2 + $0x30] sm:$0xff] %v2763
      %2772 = vst [vmem:[#allocation2 + $0x38] sm:$0xff] %v2764
      %p2773 = scmp.eq.s32.totalorder %s21, 4
      // Predicated region
      $region45: #{m2cnn_forward.13} parent=39 // pred_check
        %p2774 = pneg %p2773
      $region46: #{m2cnn_forward.13} parent=39 // pred_check_branch
        %2776 = sbr.rel (%p2774) target = $region48
      $region47: #{m2cnn_forward.13} parent=39 // pred_region
        %v2777 = vld [vmem:[#allocation2] sm:$0xff]
        %v2778 = vld [vmem:[#allocation2 + $0x8] sm:$0xff]
        %v2779 = vld [vmem:[#allocation2 + $0x10] sm:$0xff]
        %v2780 = vld [vmem:[#allocation2 + $0x18] sm:$0xff]
        %v2781 = vld [vmem:[#allocation2 + $0x20] sm:$0xff]
        %v2782 = vld [vmem:[#allocation2 + $0x28] sm:$0xff]
        %v2783 = vld [vmem:[#allocation2 + $0x30] sm:$0xff]
        %v2784 = vld [vmem:[#allocation2 + $0x38] sm:$0xff]
        %v2785 = vld [vmem:[%s2] sm:$0xff]
        %v2787 = vperm.slane %v2785, 0
        %v2788 = vperm.slane %v2785, 1
        %v2789 = vperm.slane %v2785, 2
        %v2790 = vperm.slane %v2785, 3
        %v2791 = vperm.slane %v2785, 4
        %v2792 = vperm.slane %v2785, 5
        %v2793 = vperm.slane %v2785, 6
        %v2794 = vperm.slane %v2785, 7
        %v2803 = vadd.f32 %v2777, %v2787
        %v2804 = vadd.f32 %v2778, %v2788
        %v2805 = vadd.f32 %v2779, %v2789
        %v2806 = vadd.f32 %v2780, %v2790
        %v2807 = vadd.f32 %v2781, %v2791
        %v2808 = vadd.f32 %v2782, %v2792
        %v2809 = vadd.f32 %v2783, %v2793
        %v2810 = vadd.f32 %v2784, %v2794
        %v2811 = vmul.f32 %v2803, 0.5
        %v2812 = vmul.f32 %v2804, 0.5
        %v2813 = vmul.f32 %v2805, 0.5
        %v2814 = vmul.f32 %v2806, 0.5
        %v2815 = vmul.f32 %v2807, 0.5
        %v2816 = vmul.f32 %v2808, 0.5
        %v2817 = vmul.f32 %v2809, 0.5
        %v2818 = vmul.f32 %v2810, 0.5
        %v2819 = vtanh.pop %v2811
        %v2820 = vtanh.pop %v2812
        %v2821 = vtanh.pop %v2813
        %v2822 = vtanh.pop %v2814
        %v2823 = vtanh.pop %v2815
        %v2824 = vtanh.pop %v2816
        %v2825 = vtanh.pop %v2817
        %v2826 = vtanh.pop %v2818
        %v2827 = vadd.f32 %v2819, 1.0
        %v2828 = vadd.f32 %v2820, 1.0
        %v2829 = vadd.f32 %v2821, 1.0
        %v2830 = vadd.f32 %v2822, 1.0
        %v2831 = vadd.f32 %v2823, 1.0
        %v2832 = vadd.f32 %v2824, 1.0
        %v2833 = vadd.f32 %v2825, 1.0
        %v2834 = vadd.f32 %v2826, 1.0
        %v2835 = vmul.f32 %v2827, 0.5
        %v2836 = vmul.f32 %v2828, 0.5
        %v2837 = vmul.f32 %v2829, 0.5
        %v2838 = vmul.f32 %v2830, 0.5
        %v2839 = vmul.f32 %v2831, 0.5
        %v2840 = vmul.f32 %v2832, 0.5
        %v2841 = vmul.f32 %v2833, 0.5
        %v2842 = vmul.f32 %v2834, 0.5
        %v2843 = vpack.c.bf16 %v2835, %v2835
        %v2844 = vpack.c.bf16 %v2836, %v2836
        %v2845 = vpack.c.bf16 %v2837, %v2837
        %v2846 = vpack.c.bf16 %v2838, %v2838
        %v2847 = vpack.c.bf16 %v2839, %v2839
        %v2848 = vpack.c.bf16 %v2840, %v2840
        %v2849 = vpack.c.bf16 %v2841, %v2841
        %v2850 = vpack.c.bf16 %v2842, %v2842
        %v2851 = vld [vmem:[%s3] sm:$0xf]
        %v2852 = vld [vmem:[%s3 + $0x4] sm:$0xf]
        %v2853 = vld [vmem:[%s3 + $0x8] sm:$0xf]
        %v2854 = vld [vmem:[%s3 + $0xc] sm:$0xf]
        %v2855 = vld [vmem:[%s3 + $0x10] sm:$0xf]
        %v2856 = vld [vmem:[%s3 + $0x14] sm:$0xf]
        %v2857 = vld [vmem:[%s3 + $0x18] sm:$0xf]
        %v2858 = vld [vmem:[%s3 + $0x1c] sm:$0xf]
        %v2859 = vld [vmem:[%s3 + $0x20] sm:$0xf]
        %v2860 = vld [vmem:[%s3 + $0x24] sm:$0xf]
        %v2861 = vld [vmem:[%s3 + $0x28] sm:$0xf]
        %v2862 = vld [vmem:[%s3 + $0x2c] sm:$0xf]
        %v2863 = vld [vmem:[%s3 + $0x30] sm:$0xf]
        %v2864 = vld [vmem:[%s3 + $0x34] sm:$0xf]
        %v2865 = vld [vmem:[%s3 + $0x38] sm:$0xf]
        %v2866 = vld [vmem:[%s3 + $0x3c] sm:$0xf]
        %v2867 = vld [vmem:[%s3 + $0x40] sm:$0xf]
        %v2868 = vld [vmem:[%s3 + $0x44] sm:$0xf]
        %v2869 = vld [vmem:[%s3 + $0x48] sm:$0xf]
        %v2870 = vld [vmem:[%s3 + $0x4c] sm:$0xf]
        %v2871 = vld [vmem:[%s3 + $0x50] sm:$0xf]
        %v2872 = vld [vmem:[%s3 + $0x54] sm:$0xf]
        %v2873 = vld [vmem:[%s3 + $0x58] sm:$0xf]
        %v2874 = vld [vmem:[%s3 + $0x5c] sm:$0xf]
        %v2875 = vld [vmem:[%s3 + $0x60] sm:$0xf]
        %v2876 = vld [vmem:[%s3 + $0x64] sm:$0xf]
        %v2877 = vld [vmem:[%s3 + $0x68] sm:$0xf]
        %v2878 = vld [vmem:[%s3 + $0x6c] sm:$0xf]
        %v2879 = vld [vmem:[%s3 + $0x70] sm:$0xf]
        %v2880 = vld [vmem:[%s3 + $0x74] sm:$0xf]
        %v2881 = vld [vmem:[%s3 + $0x78] sm:$0xf]
        %v2882 = vld [vmem:[%s3 + $0x7c] sm:$0xf]
        %v2883 = vld [vmem:[%s3 + $0x80] sm:$0xf]
        %v2884 = vld [vmem:[%s3 + $0x84] sm:$0xf]
        %v2885 = vld [vmem:[%s3 + $0x88] sm:$0xf]
        %v2886 = vld [vmem:[%s3 + $0x8c] sm:$0xf]
        %v2887 = vld [vmem:[%s3 + $0x90] sm:$0xf]
        %v2888 = vld [vmem:[%s3 + $0x94] sm:$0xf]
        %v2889 = vld [vmem:[%s3 + $0x98] sm:$0xf]
        %v2890 = vld [vmem:[%s3 + $0x9c] sm:$0xf]
        %v2891 = vld [vmem:[%s3 + $0xa0] sm:$0xf]
        %v2892 = vld [vmem:[%s3 + $0xa4] sm:$0xf]
        %v2893 = vld [vmem:[%s3 + $0xa8] sm:$0xf]
        %v2894 = vld [vmem:[%s3 + $0xac] sm:$0xf]
        %v2895 = vld [vmem:[%s3 + $0xb0] sm:$0xf]
        %v2896 = vld [vmem:[%s3 + $0xb4] sm:$0xf]
        %v2897 = vld [vmem:[%s3 + $0xb8] sm:$0xf]
        %v2898 = vld [vmem:[%s3 + $0xbc] sm:$0xf]
        %v2899 = vld [vmem:[%s3 + $0xc0] sm:$0xf]
        %v2900 = vld [vmem:[%s3 + $0xc4] sm:$0xf]
        %v2901 = vld [vmem:[%s3 + $0xc8] sm:$0xf]
        %v2902 = vld [vmem:[%s3 + $0xcc] sm:$0xf]
        %v2903 = vld [vmem:[%s3 + $0xd0] sm:$0xf]
        %v2904 = vld [vmem:[%s3 + $0xd4] sm:$0xf]
        %v2905 = vld [vmem:[%s3 + $0xd8] sm:$0xf]
        %v2906 = vld [vmem:[%s3 + $0xdc] sm:$0xf]
        %v2907 = vld [vmem:[%s3 + $0xe0] sm:$0xf]
        %v2908 = vld [vmem:[%s3 + $0xe4] sm:$0xf]
        %v2909 = vld [vmem:[%s3 + $0xe8] sm:$0xf]
        %v2910 = vld [vmem:[%s3 + $0xec] sm:$0xf]
        %v2911 = vld [vmem:[%s3 + $0xf0] sm:$0xf]
        %v2912 = vld [vmem:[%s3 + $0xf4] sm:$0xf]
        %v2913 = vld [vmem:[%s3 + $0xf8] sm:$0xf]
        %v2914 = vld [vmem:[%s3 + $0xfc] sm:$0xf]
        %v2915 = vld [vmem:[%s3 + $0x100] sm:$0xf]
        %v2916 = vld [vmem:[%s3 + $0x104] sm:$0xf]
        %v2917 = vld [vmem:[%s3 + $0x108] sm:$0xf]
        %v2918 = vld [vmem:[%s3 + $0x10c] sm:$0xf]
        %v2919 = vld [vmem:[%s3 + $0x110] sm:$0xf]
        %v2920 = vld [vmem:[%s3 + $0x114] sm:$0xf]
        %v2921 = vld [vmem:[%s3 + $0x118] sm:$0xf]
        %v2922 = vld [vmem:[%s3 + $0x11c] sm:$0xf]
        %v2923 = vld [vmem:[%s3 + $0x120] sm:$0xf]
        %v2924 = vld [vmem:[%s3 + $0x124] sm:$0xf]
        %v2925 = vld [vmem:[%s3 + $0x128] sm:$0xf]
        %v2926 = vld [vmem:[%s3 + $0x12c] sm:$0xf]
        %v2927 = vld [vmem:[%s3 + $0x130] sm:$0xf]
        %v2928 = vld [vmem:[%s3 + $0x134] sm:$0xf]
        %v2929 = vld [vmem:[%s3 + $0x138] sm:$0xf]
        %v2930 = vld [vmem:[%s3 + $0x13c] sm:$0xf]
        %v2931 = vld [vmem:[%s3 + $0x140] sm:$0xf]
        %v2932 = vld [vmem:[%s3 + $0x144] sm:$0xf]
        %v2933 = vld [vmem:[%s3 + $0x148] sm:$0xf]
        %v2934 = vld [vmem:[%s3 + $0x14c] sm:$0xf]
        %v2935 = vld [vmem:[%s3 + $0x150] sm:$0xf]
        %v2936 = vld [vmem:[%s3 + $0x154] sm:$0xf]
        %v2937 = vld [vmem:[%s3 + $0x158] sm:$0xf]
        %v2938 = vld [vmem:[%s3 + $0x15c] sm:$0xf]
        %v2939 = vld [vmem:[%s3 + $0x160] sm:$0xf]
        %v2940 = vld [vmem:[%s3 + $0x164] sm:$0xf]
        %v2941 = vld [vmem:[%s3 + $0x168] sm:$0xf]
        %v2942 = vld [vmem:[%s3 + $0x16c] sm:$0xf]
        %v2943 = vld [vmem:[%s3 + $0x170] sm:$0xf]
        %v2944 = vld [vmem:[%s3 + $0x174] sm:$0xf]
        %v2945 = vld [vmem:[%s3 + $0x178] sm:$0xf]
        %v2946 = vld [vmem:[%s3 + $0x17c] sm:$0xf]
        %v2947 = vld [vmem:[%s3 + $0x180] sm:$0xf]
        %v2948 = vld [vmem:[%s3 + $0x184] sm:$0xf]
        %v2949 = vld [vmem:[%s3 + $0x188] sm:$0xf]
        %v2950 = vld [vmem:[%s3 + $0x18c] sm:$0xf]
        %v2951 = vld [vmem:[%s3 + $0x190] sm:$0xf]
        %v2952 = vld [vmem:[%s3 + $0x194] sm:$0xf]
        %v2953 = vld [vmem:[%s3 + $0x198] sm:$0xf]
        %v2954 = vld [vmem:[%s3 + $0x19c] sm:$0xf]
        %v2955 = vld [vmem:[%s3 + $0x1a0] sm:$0xf]
        %v2956 = vld [vmem:[%s3 + $0x1a4] sm:$0xf]
        %v2957 = vld [vmem:[%s3 + $0x1a8] sm:$0xf]
        %v2958 = vld [vmem:[%s3 + $0x1ac] sm:$0xf]
        %v2959 = vld [vmem:[%s3 + $0x1b0] sm:$0xf]
        %v2960 = vld [vmem:[%s3 + $0x1b4] sm:$0xf]
        %v2961 = vld [vmem:[%s3 + $0x1b8] sm:$0xf]
        %v2962 = vld [vmem:[%s3 + $0x1bc] sm:$0xf]
        %v2963 = vld [vmem:[%s3 + $0x1c0] sm:$0xf]
        %v2964 = vld [vmem:[%s3 + $0x1c4] sm:$0xf]
        %v2965 = vld [vmem:[%s3 + $0x1c8] sm:$0xf]
        %v2966 = vld [vmem:[%s3 + $0x1cc] sm:$0xf]
        %v2967 = vld [vmem:[%s3 + $0x1d0] sm:$0xf]
        %v2968 = vld [vmem:[%s3 + $0x1d4] sm:$0xf]
        %v2969 = vld [vmem:[%s3 + $0x1d8] sm:$0xf]
        %v2970 = vld [vmem:[%s3 + $0x1dc] sm:$0xf]
        %v2971 = vld [vmem:[%s3 + $0x1e0] sm:$0xf]
        %v2972 = vld [vmem:[%s3 + $0x1e4] sm:$0xf]
        %v2973 = vld [vmem:[%s3 + $0x1e8] sm:$0xf]
        %v2974 = vld [vmem:[%s3 + $0x1ec] sm:$0xf]
        %v2975 = vld [vmem:[%s3 + $0x1f0] sm:$0xf]
        %v2976 = vld [vmem:[%s3 + $0x1f4] sm:$0xf]
        %v2977 = vld [vmem:[%s3 + $0x1f8] sm:$0xf]
        %v2978 = vld [vmem:[%s3 + $0x1fc] sm:$0xf]
        %v2979 = vld [vmem:[%s4] sm:$0x1]
        %v2981 = vperm.slane %v2979, 0
        %v3111 = vunpack.c.l.b16 %v2851
        %v3112 = vunpack.c.l.b16 %v2852
        %v3113 = vunpack.c.l.b16 %v2853
        %v3114 = vunpack.c.l.b16 %v2854
        %v3115 = vunpack.c.l.b16 %v2855
        %v3116 = vunpack.c.l.b16 %v2856
        %v3117 = vunpack.c.l.b16 %v2857
        %v3118 = vunpack.c.l.b16 %v2858
        %v3119 = vunpack.c.l.b16 %v2859
        %v3120 = vunpack.c.l.b16 %v2860
        %v3121 = vunpack.c.l.b16 %v2861
        %v3122 = vunpack.c.l.b16 %v2862
        %v3123 = vunpack.c.l.b16 %v2863
        %v3124 = vunpack.c.l.b16 %v2864
        %v3125 = vunpack.c.l.b16 %v2865
        %v3126 = vunpack.c.l.b16 %v2866
        %v3127 = vunpack.c.l.b16 %v2867
        %v3128 = vunpack.c.l.b16 %v2868
        %v3129 = vunpack.c.l.b16 %v2869
        %v3130 = vunpack.c.l.b16 %v2870
        %v3131 = vunpack.c.l.b16 %v2871
        %v3132 = vunpack.c.l.b16 %v2872
        %v3133 = vunpack.c.l.b16 %v2873
        %v3134 = vunpack.c.l.b16 %v2874
        %v3135 = vunpack.c.l.b16 %v2875
        %v3136 = vunpack.c.l.b16 %v2876
        %v3137 = vunpack.c.l.b16 %v2877
        %v3138 = vunpack.c.l.b16 %v2878
        %v3139 = vunpack.c.l.b16 %v2879
        %v3140 = vunpack.c.l.b16 %v2880
        %v3141 = vunpack.c.l.b16 %v2881
        %v3142 = vunpack.c.l.b16 %v2882
        %v3143 = vunpack.c.l.b16 %v2883
        %v3144 = vunpack.c.l.b16 %v2884
        %v3145 = vunpack.c.l.b16 %v2885
        %v3146 = vunpack.c.l.b16 %v2886
        %v3147 = vunpack.c.l.b16 %v2887
        %v3148 = vunpack.c.l.b16 %v2888
        %v3149 = vunpack.c.l.b16 %v2889
        %v3150 = vunpack.c.l.b16 %v2890
        %v3151 = vunpack.c.l.b16 %v2891
        %v3152 = vunpack.c.l.b16 %v2892
        %v3153 = vunpack.c.l.b16 %v2893
        %v3154 = vunpack.c.l.b16 %v2894
        %v3155 = vunpack.c.l.b16 %v2895
        %v3156 = vunpack.c.l.b16 %v2896
        %v3157 = vunpack.c.l.b16 %v2897
        %v3158 = vunpack.c.l.b16 %v2898
        %v3159 = vunpack.c.l.b16 %v2899
        %v3160 = vunpack.c.l.b16 %v2900
        %v3161 = vunpack.c.l.b16 %v2901
        %v3162 = vunpack.c.l.b16 %v2902
        %v3163 = vunpack.c.l.b16 %v2903
        %v3164 = vunpack.c.l.b16 %v2904
        %v3165 = vunpack.c.l.b16 %v2905
        %v3166 = vunpack.c.l.b16 %v2906
        %v3167 = vunpack.c.l.b16 %v2907
        %v3168 = vunpack.c.l.b16 %v2908
        %v3169 = vunpack.c.l.b16 %v2909
        %v3170 = vunpack.c.l.b16 %v2910
        %v3171 = vunpack.c.l.b16 %v2911
        %v3172 = vunpack.c.l.b16 %v2912
        %v3173 = vunpack.c.l.b16 %v2913
        %v3174 = vunpack.c.l.b16 %v2914
        %v3175 = vunpack.c.l.b16 %v2915
        %v3176 = vunpack.c.l.b16 %v2916
        %v3177 = vunpack.c.l.b16 %v2917
        %v3178 = vunpack.c.l.b16 %v2918
        %v3179 = vunpack.c.l.b16 %v2919
        %v3180 = vunpack.c.l.b16 %v2920
        %v3181 = vunpack.c.l.b16 %v2921
        %v3182 = vunpack.c.l.b16 %v2922
        %v3183 = vunpack.c.l.b16 %v2923
        %v3184 = vunpack.c.l.b16 %v2924
        %v3185 = vunpack.c.l.b16 %v2925
        %v3186 = vunpack.c.l.b16 %v2926
        %v3187 = vunpack.c.l.b16 %v2927
        %v3188 = vunpack.c.l.b16 %v2928
        %v3189 = vunpack.c.l.b16 %v2929
        %v3190 = vunpack.c.l.b16 %v2930
        %v3191 = vunpack.c.l.b16 %v2931
        %v3192 = vunpack.c.l.b16 %v2932
        %v3193 = vunpack.c.l.b16 %v2933
        %v3194 = vunpack.c.l.b16 %v2934
        %v3195 = vunpack.c.l.b16 %v2935
        %v3196 = vunpack.c.l.b16 %v2936
        %v3197 = vunpack.c.l.b16 %v2937
        %v3198 = vunpack.c.l.b16 %v2938
        %v3199 = vunpack.c.l.b16 %v2939
        %v3200 = vunpack.c.l.b16 %v2940
        %v3201 = vunpack.c.l.b16 %v2941
        %v3202 = vunpack.c.l.b16 %v2942
        %v3203 = vunpack.c.l.b16 %v2943
        %v3204 = vunpack.c.l.b16 %v2944
        %v3205 = vunpack.c.l.b16 %v2945
        %v3206 = vunpack.c.l.b16 %v2946
        %v3207 = vunpack.c.l.b16 %v2947
        %v3208 = vunpack.c.l.b16 %v2948
        %v3209 = vunpack.c.l.b16 %v2949
        %v3210 = vunpack.c.l.b16 %v2950
        %v3211 = vunpack.c.l.b16 %v2951
        %v3212 = vunpack.c.l.b16 %v2952
        %v3213 = vunpack.c.l.b16 %v2953
        %v3214 = vunpack.c.l.b16 %v2954
        %v3215 = vunpack.c.l.b16 %v2955
        %v3216 = vunpack.c.l.b16 %v2956
        %v3217 = vunpack.c.l.b16 %v2957
        %v3218 = vunpack.c.l.b16 %v2958
        %v3219 = vunpack.c.l.b16 %v2959
        %v3220 = vunpack.c.l.b16 %v2960
        %v3221 = vunpack.c.l.b16 %v2961
        %v3222 = vunpack.c.l.b16 %v2962
        %v3223 = vunpack.c.l.b16 %v2963
        %v3224 = vunpack.c.l.b16 %v2964
        %v3225 = vunpack.c.l.b16 %v2965
        %v3226 = vunpack.c.l.b16 %v2966
        %v3227 = vunpack.c.l.b16 %v2967
        %v3228 = vunpack.c.l.b16 %v2968
        %v3229 = vunpack.c.l.b16 %v2969
        %v3230 = vunpack.c.l.b16 %v2970
        %v3231 = vunpack.c.l.b16 %v2971
        %v3232 = vunpack.c.l.b16 %v2972
        %v3233 = vunpack.c.l.b16 %v2973
        %v3234 = vunpack.c.l.b16 %v2974
        %v3235 = vunpack.c.l.b16 %v2975
        %v3236 = vunpack.c.l.b16 %v2976
        %v3237 = vunpack.c.l.b16 %v2977
        %v3238 = vunpack.c.l.b16 %v2978
        %v3239 = vpack.c.b16 %v3112, %v3111
        %v3240 = vpack.c.b16 %v3114, %v3113
        %v3241 = vpack.c.b16 %v3116, %v3115
        %v3242 = vpack.c.b16 %v3118, %v3117
        %v3243 = vpack.c.b16 %v3120, %v3119
        %v3244 = vpack.c.b16 %v3122, %v3121
        %v3245 = vpack.c.b16 %v3124, %v3123
        %v3246 = vpack.c.b16 %v3126, %v3125
        %v3247 = vpack.c.b16 %v3128, %v3127
        %v3248 = vpack.c.b16 %v3130, %v3129
        %v3249 = vpack.c.b16 %v3132, %v3131
        %v3250 = vpack.c.b16 %v3134, %v3133
        %v3251 = vpack.c.b16 %v3136, %v3135
        %v3252 = vpack.c.b16 %v3138, %v3137
        %v3253 = vpack.c.b16 %v3140, %v3139
        %v3254 = vpack.c.b16 %v3142, %v3141
        %v3255 = vpack.c.b16 %v3144, %v3143
        %v3256 = vpack.c.b16 %v3146, %v3145
        %v3257 = vpack.c.b16 %v3148, %v3147
        %v3258 = vpack.c.b16 %v3150, %v3149
        %v3259 = vpack.c.b16 %v3152, %v3151
        %v3260 = vpack.c.b16 %v3154, %v3153
        %v3261 = vpack.c.b16 %v3156, %v3155
        %v3262 = vpack.c.b16 %v3158, %v3157
        %v3263 = vpack.c.b16 %v3160, %v3159
        %v3264 = vpack.c.b16 %v3162, %v3161
        %v3265 = vpack.c.b16 %v3164, %v3163
        %v3266 = vpack.c.b16 %v3166, %v3165
        %v3267 = vpack.c.b16 %v3168, %v3167
        %v3268 = vpack.c.b16 %v3170, %v3169
        %v3269 = vpack.c.b16 %v3172, %v3171
        %v3270 = vpack.c.b16 %v3174, %v3173
        %v3271 = vpack.c.b16 %v3176, %v3175
        %v3272 = vpack.c.b16 %v3178, %v3177
        %v3273 = vpack.c.b16 %v3180, %v3179
        %v3274 = vpack.c.b16 %v3182, %v3181
        %v3275 = vpack.c.b16 %v3184, %v3183
        %v3276 = vpack.c.b16 %v3186, %v3185
        %v3277 = vpack.c.b16 %v3188, %v3187
        %v3278 = vpack.c.b16 %v3190, %v3189
        %v3279 = vpack.c.b16 %v3192, %v3191
        %v3280 = vpack.c.b16 %v3194, %v3193
        %v3281 = vpack.c.b16 %v3196, %v3195
        %v3282 = vpack.c.b16 %v3198, %v3197
        %v3283 = vpack.c.b16 %v3200, %v3199
        %v3284 = vpack.c.b16 %v3202, %v3201
        %v3285 = vpack.c.b16 %v3204, %v3203
        %v3286 = vpack.c.b16 %v3206, %v3205
        %v3287 = vpack.c.b16 %v3208, %v3207
        %v3288 = vpack.c.b16 %v3210, %v3209
        %v3289 = vpack.c.b16 %v3212, %v3211
        %v3290 = vpack.c.b16 %v3214, %v3213
        %v3291 = vpack.c.b16 %v3216, %v3215
        %v3292 = vpack.c.b16 %v3218, %v3217
        %v3293 = vpack.c.b16 %v3220, %v3219
        %v3294 = vpack.c.b16 %v3222, %v3221
        %v3295 = vpack.c.b16 %v3224, %v3223
        %v3296 = vpack.c.b16 %v3226, %v3225
        %v3297 = vpack.c.b16 %v3228, %v3227
        %v3298 = vpack.c.b16 %v3230, %v3229
        %v3299 = vpack.c.b16 %v3232, %v3231
        %v3300 = vpack.c.b16 %v3234, %v3233
        %v3301 = vpack.c.b16 %v3236, %v3235
        %v3302 = vpack.c.b16 %v3238, %v3237
        %3367 = vmatpush.bf16.msra.mxu0 %v3246
        %3368 = vmatpush.bf16.msra.mxu0 %v3245
        %3369 = vmatpush.bf16.msra.mxu0 %v3244
        %3370 = vmatpush.bf16.msra.mxu0 %v3243
        %3371 = vmatpush.bf16.msra.mxu0 %v3242
        %3372 = vmatpush.bf16.msra.mxu0 %v3241
        %3373 = vmatpush.bf16.msra.mxu0 %v3240
        %3374 = vmatpush.bf16.msra.mxu0 %v3239
        %3375 = vmatmul.bf16.gmra.mxu0 %v2843
        %v3376 = vpop.f32.mrf.mxu0
        %v3377 = vadd.f32 %v2981, %v3376
        %v3378 = vpop.f32.mrf.mxu0
        %3379 = vdwg.mxu0
        %3380 = vmatpush.bf16.msra.mxu0 %v3254
        %3381 = vmatpush.bf16.msra.mxu0 %v3253
        %3382 = vmatpush.bf16.msra.mxu0 %v3252
        %3383 = vmatpush.bf16.msra.mxu0 %v3251
        %3384 = vmatpush.bf16.msra.mxu0 %v3250
        %3385 = vmatpush.bf16.msra.mxu0 %v3249
        %3386 = vmatpush.bf16.msra.mxu0 %v3248
        %3387 = vmatpush.bf16.msra.mxu0 %v3247
        %3388 = vmatmul.bf16.gmra.mxu0 %v2844
        %v3389 = vpop.f32.mrf.mxu0
        %v3390 = vadd.f32 %v3377, %v3389
        %v3391 = vpop.f32.mrf.mxu0
        %3392 = vdwg.mxu0
        %3393 = vmatpush.bf16.msra.mxu0 %v3262
        %3394 = vmatpush.bf16.msra.mxu0 %v3261
        %3395 = vmatpush.bf16.msra.mxu0 %v3260
        %3396 = vmatpush.bf16.msra.mxu0 %v3259
        %3397 = vmatpush.bf16.msra.mxu0 %v3258
        %3398 = vmatpush.bf16.msra.mxu0 %v3257
        %3399 = vmatpush.bf16.msra.mxu0 %v3256
        %3400 = vmatpush.bf16.msra.mxu0 %v3255
        %3401 = vmatmul.bf16.gmra.mxu0 %v2845
        %v3402 = vpop.f32.mrf.mxu0
        %v3403 = vadd.f32 %v3390, %v3402
        %v3404 = vpop.f32.mrf.mxu0
        %3405 = vdwg.mxu0
        %3406 = vmatpush.bf16.msra.mxu0 %v3270
        %3407 = vmatpush.bf16.msra.mxu0 %v3269
        %3408 = vmatpush.bf16.msra.mxu0 %v3268
        %3409 = vmatpush.bf16.msra.mxu0 %v3267
        %3410 = vmatpush.bf16.msra.mxu0 %v3266
        %3411 = vmatpush.bf16.msra.mxu0 %v3265
        %3412 = vmatpush.bf16.msra.mxu0 %v3264
        %3413 = vmatpush.bf16.msra.mxu0 %v3263
        %3414 = vmatmul.bf16.gmra.mxu0 %v2846
        %v3415 = vpop.f32.mrf.mxu0
        %v3416 = vadd.f32 %v3403, %v3415
        %v3417 = vpop.f32.mrf.mxu0
        %3418 = vdwg.mxu0
        %3419 = vmatpush.bf16.msra.mxu0 %v3278
        %3420 = vmatpush.bf16.msra.mxu0 %v3277
        %3421 = vmatpush.bf16.msra.mxu0 %v3276
        %3422 = vmatpush.bf16.msra.mxu0 %v3275
        %3423 = vmatpush.bf16.msra.mxu0 %v3274
        %3424 = vmatpush.bf16.msra.mxu0 %v3273
        %3425 = vmatpush.bf16.msra.mxu0 %v3272
        %3426 = vmatpush.bf16.msra.mxu0 %v3271
        %3427 = vmatmul.bf16.gmra.mxu0 %v2847
        %v3428 = vpop.f32.mrf.mxu0
        %v3429 = vadd.f32 %v3416, %v3428
        %v3430 = vpop.f32.mrf.mxu0
        %3431 = vdwg.mxu0
        %3432 = vmatpush.bf16.msra.mxu0 %v3286
        %3433 = vmatpush.bf16.msra.mxu0 %v3285
        %3434 = vmatpush.bf16.msra.mxu0 %v3284
        %3435 = vmatpush.bf16.msra.mxu0 %v3283
        %3436 = vmatpush.bf16.msra.mxu0 %v3282
        %3437 = vmatpush.bf16.msra.mxu0 %v3281
        %3438 = vmatpush.bf16.msra.mxu0 %v3280
        %3439 = vmatpush.bf16.msra.mxu0 %v3279
        %3440 = vmatmul.bf16.gmra.mxu0 %v2848
        %v3441 = vpop.f32.mrf.mxu0
        %v3442 = vadd.f32 %v3429, %v3441
        %v3443 = vpop.f32.mrf.mxu0
        %3444 = vdwg.mxu0
        %3445 = vmatpush.bf16.msra.mxu0 %v3294
        %3446 = vmatpush.bf16.msra.mxu0 %v3293
        %3447 = vmatpush.bf16.msra.mxu0 %v3292
        %3448 = vmatpush.bf16.msra.mxu0 %v3291
        %3449 = vmatpush.bf16.msra.mxu0 %v3290
        %3450 = vmatpush.bf16.msra.mxu0 %v3289
        %3451 = vmatpush.bf16.msra.mxu0 %v3288
        %3452 = vmatpush.bf16.msra.mxu0 %v3287
        %3453 = vmatmul.bf16.gmra.mxu0 %v2849
        %v3454 = vpop.f32.mrf.mxu0
        %v3455 = vadd.f32 %v3442, %v3454
        %v3456 = vpop.f32.mrf.mxu0
        %3457 = vdwg.mxu0
        %3458 = vmatpush.bf16.msra.mxu0 %v3302
        %3459 = vmatpush.bf16.msra.mxu0 %v3301
        %3460 = vmatpush.bf16.msra.mxu0 %v3300
        %3461 = vmatpush.bf16.msra.mxu0 %v3299
        %3462 = vmatpush.bf16.msra.mxu0 %v3298
        %3463 = vmatpush.bf16.msra.mxu0 %v3297
        %3464 = vmatpush.bf16.msra.mxu0 %v3296
        %3465 = vmatpush.bf16.msra.mxu0 %v3295
        %3466 = vmatmul.bf16.gmra.mxu0 %v2850
        %v3467 = vpop.f32.mrf.mxu0
        %v3468 = vadd.f32 %v3455, %v3467
        %v3469 = vpop.f32.mrf.mxu0
        %3470 = vdwg.mxu0
        %3471 = vst [vmem:[%s275] sm:$0xff] %v3468
      $region48: #{m2cnn_forward.13} parent=39 // pred_fallthru
        _
      %p3472 = scmp.lt.s32.totalorder %s20, 0
      %s3473 = scalar_select %p3472, %s20, 0
      %s3474 = smul.addr %s3473, 8
      %s3475 = scalar_lea.vmem %s5, %s3474
      // Predicated region
      $region49: #{m2cnn_forward.13} parent=39 // pred_check
        %p3476 = pneg %p163
      $region50: #{m2cnn_forward.13} parent=39 // pred_check_branch
        %3478 = sbr.rel (%p3476) target = $region52
      $region51: #{m2cnn_forward.13} parent=39 // pred_region
        _
      $region52: #{m2cnn_forward.13} parent=39 // pred_fallthru
        _
      // Predicated region
      $region53: #{m2cnn_forward.13} parent=39 // pred_check
        %p3479 = pneg %p163
      $region54: #{m2cnn_forward.13} parent=39 // pred_check_branch
        %3481 = sbr.rel (%p3479) target = $region56
      $region55: #{m2cnn_forward.13} parent=39 // pred_region
        %p3482 = scmp.lt.s32.totalorder %s20, 0
        %s3483 = scalar_select %p3482, %s20, 0
        %s3484 = smul.addr %s3483, 8
        %s3485 = scalar_lea.vmem %s5, %s3484
      $region56: #{m2cnn_forward.13} parent=39 // pred_fallthru
        _
    $region40: #{m2cnn_forward.13} parent=5 // pred_fallthru
      _
    %p3486 = scmp.le.s32.totalorder 2, %s11
    // Predicated region
    $region57: #{m2cnn_forward.13} parent=5 // pred_check
      %p3487 = pneg %p3486
    $region58: #{m2cnn_forward.13} parent=5 // pred_check_branch
      %3489 = sbr.rel (%p3487) target = $region60
    $region59: #{m2cnn_forward.13} parent=5 // pred_region
      %s3490 = ssub.s32 %s11, 2
    $region60: #{m2cnn_forward.13} parent=5 // pred_fallthru
      _
  $region6: #{m2cnn_forward.13} parent=0 // loop_footer
    %s15 = sadd.s32 1, %s11
  $region7: #{m2cnn_forward.13} parent=0 // loop_footer_branch
    %10 = sbr.rel target = $region3
  $region8: #{m2cnn_forward.13} parent=0 // loop_exit
    _

</llo_original>
